<compile_context>
chip_gen: v7x
topology: tpu7x:2x2x1
jax: 0.10.0
libtpu: 0.0.40
codegen_flags: <defaults>
</compile_context>

<pallas_src>
import math
import functools

import jax
import jax.numpy as jnp
from jax import lax
from jax.experimental import pallas as pl
from jax.experimental.pallas import tpu as pltpu

# ---------------------------------------------------------------------------
# Config (small, deterministic)
# ---------------------------------------------------------------------------
D_MODEL = 32
N_HEADS = 4
D_K = D_MODEL // N_HEADS
D_FF = 64
N_LAYERS = 2
BATCH = 2
TGT_LEN = 8
SRC_LEN = 8
EPS = 1e-6
NEG_INF = -1e9

# TODO(synk): dropout inside SublayerConnection / attention / FFN is identity
# here (eval-mode semantics); training-mode stochastic dropout not implemented.


# ---------------------------------------------------------------------------
# Fused decoder kernel: the whole forward in one pallas_call
# ---------------------------------------------------------------------------
def _decoder_kernel(
    x_ref, mem_ref, tmask_ref, smask_ref,
    sa_wqkv_ref, sa_bqkv_ref, sa_wo_ref, sa_bo_ref,
    ca_wq_ref, ca_bq_ref, ca_wkv_ref, ca_bkv_ref, ca_wo_ref, ca_bo_ref,
    w1_ref, b1_ref, w2_ref, b2_ref,
    lng_ref, lnb_ref,
    o_ref,
):
    f32 = jnp.float32
    x = x_ref[...].astype(f32)        # (B*T, D)
    mem = mem_ref[...].astype(f32)    # (B*S, D)
    inv_sqrt_dk = 1.0 / math.sqrt(D_K)

    def layer_norm(v, idx):
        # idx is a static Python int (layers are unrolled at trace time).
        g = lng_ref[idx]              # (1, D)
        b = lnb_ref[idx]              # (1, D)
        mean = jnp.mean(v, axis=-1, keepdims=True)
        var = jnp.sum((v - mean) ** 2, axis=-1, keepdims=True) / float(D_MODEL - 1)
        std = jnp.sqrt(var)
        return g * (v - mean) / (std + EPS) + b

    def mha(q2d, k2d, v2d, mask_ref, wo, bo, t_q, t_k):
        # q2d: (B*t_q, D), k2d/v2d: (B*t_k, D), wo: (D, D), bo: (1, D)
        # Heads are handled by static column slices; the output projection is
        # folded into the head loop: concat_h(o_h) @ Wo == sum_h o_h @ Wo[h].
        qs = q2d * inv_sqrt_dk
        rows = []
        for b in range(BATCH):
            mb = mask_ref[b]                                   # (t_q, t_k)
            acc = jnp.zeros((t_q, D_MODEL), f32)
            for h in range(N_HEADS):
                c0, c1 = h * D_K, (h + 1) * D_K
                qb = qs[b * t_q:(b + 1) * t_q, c0:c1]          # (t_q, dk)
                kb = k2d[b * t_k:(b + 1) * t_k, c0:c1]         # (t_k, dk)
                vb = v2d[b * t_k:(b + 1) * t_k, c0:c1]         # (t_k, dk)
                s = lax.dot_general(
                    qb, kb, (((1,), (1,)), ((), ())),
                    preferred_element_type=f32)                # (t_q, t_k)
                s = jnp.where(mb == 0.0, NEG_INF, s)           # masked_fill(mask==0, -1e9)
                s = s - jnp.max(s, axis=-1, keepdims=True)
                p = jnp.exp(s)
                p = p * pl.reciprocal(jnp.sum(p, axis=-1, keepdims=True),
                                      approx=True)
                oh = jnp.dot(p, vb, preferred_element_type=f32)          # (t_q, dk)
                acc = acc + jnp.dot(oh, wo[c0:c1, :],
                                    preferred_element_type=f32)          # (t_q, D)
            rows.append(acc + bo)
        return jnp.concatenate(rows, axis=0)                   # (B*t_q, D)

    for l in range(N_LAYERS):
        # ---- sublayer 0: self-attention (pre-norm + residual) ----
        xn = layer_norm(x, 3 * l + 0)
        qkv = jnp.dot(xn, sa_wqkv_ref[l], preferred_element_type=f32) + sa_bqkv_ref[l]
        q2d = qkv[:, 0:D_MODEL]
        k2d = qkv[:, D_MODEL:2 * D_MODEL]
        v2d = qkv[:, 2 * D_MODEL:3 * D_MODEL]
        x = x + mha(q2d, k2d, v2d, tmask_ref, sa_wo_ref[l], sa_bo_ref[l],
                    TGT_LEN, TGT_LEN)

        # ---- sublayer 1: source (cross) attention ----
        xn = layer_norm(x, 3 * l + 1)
        q2d = jnp.dot(xn, ca_wq_ref[l], preferred_element_type=f32) + ca_bq_ref[l]
        kv = jnp.dot(mem, ca_wkv_ref[l], preferred_element_type=f32) + ca_bkv_ref[l]
        k2d = kv[:, 0:D_MODEL]
        v2d = kv[:, D_MODEL:2 * D_MODEL]
        x = x + mha(q2d, k2d, v2d, smask_ref, ca_wo_ref[l], ca_bo_ref[l],
                    TGT_LEN, SRC_LEN)

        # ---- sublayer 2: position-wise feed-forward ----
        xn = layer_norm(x, 3 * l + 2)
        h = jnp.maximum(
            jnp.dot(xn, w1_ref[l], preferred_element_type=f32) + b1_ref[l], 0.0)
        x = x + jnp.dot(h, w2_ref[l], preferred_element_type=f32) + b2_ref[l]

    # final LayerNorm
    o_ref[...] = layer_norm(x, 3 * N_LAYERS).astype(o_ref.dtype)


# ---------------------------------------------------------------------------
# Wrapper: single pallas_call, whole-array VMEM specs, no grid
# ---------------------------------------------------------------------------
def decoder_forward(packed, x, memory, source_mask, target_mask):
    B, T, D = x.shape
    S = memory.shape[1]
    x2d = x.reshape(B * T, D)
    mem2d = memory.reshape(B * S, D)

    inputs = (
        x2d, mem2d, target_mask, source_mask,
        packed["sa_wqkv"], packed["sa_bqkv"], packed["sa_wo"], packed["sa_bo"],
        packed["ca_wq"], packed["ca_bq"], packed["ca_wkv"], packed["ca_bkv"],
        packed["ca_wo"], packed["ca_bo"],
        packed["w1"], packed["b1"], packed["w2"], packed["b2"],
        packed["ln_g"], packed["ln_b"],
    )
    vmem_spec = pl.BlockSpec(memory_space=pltpu.MemorySpace.VMEM)
    out = pl.pallas_call(
        _decoder_kernel,
        out_shape=jax.ShapeDtypeStruct((B * T, D), x.dtype),
        in_specs=[vmem_spec] * len(inputs),
        out_specs=vmem_spec,
    )(*inputs)
    return out.reshape(B, T, D)


# ---------------------------------------------------------------------------
# Deterministic parameter init (per-layer dicts) + packing into stacked slabs
# ---------------------------------------------------------------------------
def init_params(key):
    def dense(k, d_in, d_out):
        kw, kb = jax.random.split(k)
        # stored as (in, out) i.e. W^T relative to torch, bias as (1, out)
        w = jax.random.normal(kw, (d_in, d_out), jnp.float32) * 0.1
        b = jax.random.normal(kb, (1, d_out), jnp.float32) * 0.01
        return w, b

    def attn_params(k):
        ks = jax.random.split(k, 4)
        wq, bq = dense(ks[0], D_MODEL, D_MODEL)
        wk, bk = dense(ks[1], D_MODEL, D_MODEL)
        wv, bv = dense(ks[2], D_MODEL, D_MODEL)
        wo, bo = dense(ks[3], D_MODEL, D_MODEL)
        return dict(wq=wq, bq=bq, wk=wk, bk=bk, wv=wv, bv=bv, wo=wo, bo=bo)

    layers = []
    keys = jax.random.split(key, N_LAYERS + 1)
    for lk in keys[:N_LAYERS]:
        k1, k2, k3, k4 = jax.random.split(lk, 4)
        w1, b1 = dense(k3, D_MODEL, D_FF)
        w2, b2 = dense(k4, D_FF, D_MODEL)
        layers.append(
            dict(
                self_attn=attn_params(k1),
                src_attn=attn_params(k2),
                w1=w1, b1=b1, w2=w2, b2=b2,
                ln1_g=jnp.ones((1, D_MODEL), jnp.float32),
                ln1_b=jnp.zeros((1, D_MODEL), jnp.float32),
                ln2_g=jnp.ones((1, D_MODEL), jnp.float32),
                ln2_b=jnp.zeros((1, D_MODEL), jnp.float32),
                ln3_g=jnp.ones((1, D_MODEL), jnp.float32),
                ln3_b=jnp.zeros((1, D_MODEL), jnp.float32),
            )
        )
    return dict(
        layers=layers,
        norm_g=jnp.ones((1, D_MODEL), jnp.float32),
        norm_b=jnp.zeros((1, D_MODEL), jnp.float32),
    )


def pack_params(params):
    layers = params["layers"]

    def stack(fn):
        return jnp.stack([fn(lp) for lp in layers], axis=0)

    packed = dict(
        # self-attention: fused Q|K|V weights (D, 3D)
        sa_wqkv=stack(lambda lp: jnp.concatenate(
            [lp["self_attn"]["wq"], lp["self_attn"]["wk"], lp["self_attn"]["wv"]],
            axis=1)),
        sa_bqkv=stack(lambda lp: jnp.concatenate(
            [lp["self_attn"]["bq"], lp["self_attn"]["bk"], lp["self_attn"]["bv"]],
            axis=1)),
        sa_wo=stack(lambda lp: lp["self_attn"]["wo"]),
        sa_bo=stack(lambda lp: lp["self_attn"]["bo"]),
        # cross-attention: Q from x, fused K|V (D, 2D) from memory
        ca_wq=stack(lambda lp: lp["src_attn"]["wq"]),
        ca_bq=stack(lambda lp: lp["src_attn"]["bq"]),
        ca_wkv=stack(lambda lp: jnp.concatenate(
            [lp["src_attn"]["wk"], lp["src_attn"]["wv"]], axis=1)),
        ca_bkv=stack(lambda lp: jnp.concatenate(
            [lp["src_attn"]["bk"], lp["src_attn"]["bv"]], axis=1)),
        ca_wo=stack(lambda lp: lp["src_attn"]["wo"]),
        ca_bo=stack(lambda lp: lp["src_attn"]["bo"]),
        # FFN
        w1=stack(lambda lp: lp["w1"]), b1=stack(lambda lp: lp["b1"]),
        w2=stack(lambda lp: lp["w2"]), b2=stack(lambda lp: lp["b2"]),
        # LayerNorms: index 3*l+{0,1,2} per layer, 3*N_LAYERS for the final norm
        ln_g=jnp.stack(
            [lp[f"ln{i}_g"] for lp in layers for i in (1, 2, 3)]
            + [params["norm_g"]], axis=0),
        ln_b=jnp.stack(
            [lp[f"ln{i}_b"] for lp in layers for i in (1, 2, 3)]
            + [params["norm_b"]], axis=0),
    )
    return packed


# ---------------------------------------------------------------------------
if __name__ == "__main__":
    root = jax.random.PRNGKey(0)
    k_params, k_x, k_mem = jax.random.split(root, 3)

    params = init_params(k_params)
    packed = pack_params(params)

    x = jax.random.normal(k_x, (BATCH, TGT_LEN, D_MODEL), jnp.float32)
    memory = jax.random.normal(k_mem, (BATCH, SRC_LEN, D_MODEL), jnp.float32)

    # target mask: causal (subsequent) mask, broadcast over batch -> (B, T, T)
    causal = jnp.tril(jnp.ones((TGT_LEN, TGT_LEN), jnp.float32))
    target_mask = jnp.broadcast_to(causal[None], (BATCH, TGT_LEN, TGT_LEN))
    # source mask: all positions visible -> (B, Tq, Tk_src)
    source_mask = jnp.ones((BATCH, TGT_LEN, SRC_LEN), jnp.float32)

    fwd = jax.jit(functools.partial(decoder_forward, packed))
    out = jax.block_until_ready(fwd(x, memory, source_mask, target_mask))

    assert out.shape == (BATCH, TGT_LEN, D_MODEL)
    assert bool(jnp.all(jnp.isfinite(out)))
    print("KERNEL_OK")
</pallas_src>

<mosaic_0001>
module attributes {stable_mosaic.version = 11 : i64} {
  func.func @_decoder_kernel(%arg0: memref<16x32xf32, #tpu.memory_space<vmem>>, %arg1: memref<16x32xf32, #tpu.memory_space<vmem>>, %arg2: memref<2x8x8xf32, #tpu.memory_space<vmem>>, %arg3: memref<2x8x8xf32, #tpu.memory_space<vmem>>, %arg4: memref<2x32x96xf32, #tpu.memory_space<vmem>>, %arg5: memref<2x1x96xf32, #tpu.memory_space<vmem>>, %arg6: memref<2x32x32xf32, #tpu.memory_space<vmem>>, %arg7: memref<2x1x32xf32, #tpu.memory_space<vmem>>, %arg8: memref<2x32x32xf32, #tpu.memory_space<vmem>>, %arg9: memref<2x1x32xf32, #tpu.memory_space<vmem>>, %arg10: memref<2x32x64xf32, #tpu.memory_space<vmem>>, %arg11: memref<2x1x64xf32, #tpu.memory_space<vmem>>, %arg12: memref<2x32x32xf32, #tpu.memory_space<vmem>>, %arg13: memref<2x1x32xf32, #tpu.memory_space<vmem>>, %arg14: memref<2x32x64xf32, #tpu.memory_space<vmem>>, %arg15: memref<2x1x64xf32, #tpu.memory_space<vmem>>, %arg16: memref<2x64x32xf32, #tpu.memory_space<vmem>>, %arg17: memref<2x1x32xf32, #tpu.memory_space<vmem>>, %arg18: memref<7x1x32xf32, #tpu.memory_space<vmem>>, %arg19: memref<7x1x32xf32, #tpu.memory_space<vmem>>, %arg20: memref<16x32xf32, #tpu.memory_space<vmem>>) attributes {dimension_semantics = [], scalar_prefetch = 0 : i64, scratch_operands = 0 : i64, tpu.core_type = #tpu.core_type<tc>} {
    %c0 = arith.constant 0 : index
    %c0_0 = arith.constant 0 : index
    %0 = vector.load %arg0[%c0, %c0_0] : memref<16x32xf32, #tpu.memory_space<vmem>>, vector<16x32xf32>
    %c0_1 = arith.constant 0 : index
    %c0_2 = arith.constant 0 : index
    %1 = vector.load %arg1[%c0_1, %c0_2] : memref<16x32xf32, #tpu.memory_space<vmem>>, vector<16x32xf32>
    %c0_3 = arith.constant 0 : index
    %c0_4 = arith.constant 0 : index
    %c0_5 = arith.constant 0 : index
    %2 = vector.load %arg18[%c0_3, %c0_4, %c0_5] : memref<7x1x32xf32, #tpu.memory_space<vmem>>, vector<1x1x32xf32>
    %3 = vector.shape_cast %2 : vector<1x1x32xf32> to vector<1x32xf32>
    %c0_6 = arith.constant 0 : index
    %c0_7 = arith.constant 0 : index
    %c0_8 = arith.constant 0 : index
    %4 = vector.load %arg19[%c0_6, %c0_7, %c0_8] : memref<7x1x32xf32, #tpu.memory_space<vmem>>, vector<1x1x32xf32>
    %5 = vector.shape_cast %4 : vector<1x1x32xf32> to vector<1x32xf32>
    %cst = arith.constant dense<0.000000e+00> : vector<16xf32>
    %6 = vector.multi_reduction <add>, %0, %cst [1] : vector<16x32xf32> to vector<16xf32>
    %7 = vector.shape_cast %6 : vector<16xf32> to vector<16x1xf32>
    %cst_9 = arith.constant 3.200000e+01 : f32
    %8 = vector.broadcast %cst_9 : f32 to vector<16x1xf32>
    %9 = arith.divf %7, %8 : vector<16x1xf32>
    %10 = vector.broadcast %9 : vector<16x1xf32> to vector<16x32xf32>
    %11 = arith.subf %0, %10 : vector<16x32xf32>
    %12 = arith.mulf %11, %11 : vector<16x32xf32>
    %cst_10 = arith.constant dense<0.000000e+00> : vector<16xf32>
    %13 = vector.multi_reduction <add>, %12, %cst_10 [1] : vector<16x32xf32> to vector<16xf32>
    %14 = vector.shape_cast %13 : vector<16xf32> to vector<16x1xf32>
    %cst_11 = arith.constant 3.100000e+01 : f32
    %15 = vector.broadcast %cst_11 : f32 to vector<16x1xf32>
    %16 = arith.divf %14, %15 : vector<16x1xf32>
    %17 = math.sqrt %16 : vector<16x1xf32>
    %18 = vector.broadcast %9 : vector<16x1xf32> to vector<16x32xf32>
    %19 = arith.subf %0, %18 : vector<16x32xf32>
    %20 = vector.broadcast %3 : vector<1x32xf32> to vector<16x32xf32>
    %21 = arith.mulf %20, %19 : vector<16x32xf32>
    %cst_12 = arith.constant 9.99999997E-7 : f32
    %22 = vector.broadcast %cst_12 : f32 to vector<16x1xf32>
    %23 = arith.addf %17, %22 : vector<16x1xf32>
    %24 = vector.broadcast %23 : vector<16x1xf32> to vector<16x32xf32>
    %25 = arith.divf %21, %24 : vector<16x32xf32>
    %26 = vector.broadcast %5 : vector<1x32xf32> to vector<16x32xf32>
    %27 = arith.addf %25, %26 : vector<16x32xf32>
    %c0_13 = arith.constant 0 : index
    %c0_14 = arith.constant 0 : index
    %c0_15 = arith.constant 0 : index
    %28 = vector.load %arg4[%c0_13, %c0_14, %c0_15] : memref<2x32x96xf32, #tpu.memory_space<vmem>>, vector<1x32x96xf32>
    %29 = vector.shape_cast %28 : vector<1x32x96xf32> to vector<32x96xf32>
    %cst_16 = arith.constant dense<0.000000e+00> : vector<16x96xf32>
    %30 = tpu.matmul %27, %29, %cst_16 {dimension_numbers = #tpu.dot_dimension_numbers<[1], [0], [0], [1], [0, 0, 1, 1], [], []>} : vector<16x32xf32>, vector<32x96xf32>, vector<16x96xf32> -> vector<16x96xf32>
    %c0_17 = arith.constant 0 : index
    %c0_18 = arith.constant 0 : index
    %c0_19 = arith.constant 0 : index
    %31 = vector.load %arg5[%c0_17, %c0_18, %c0_19] : memref<2x1x96xf32, #tpu.memory_space<vmem>>, vector<1x1x96xf32>
    %32 = vector.shape_cast %31 : vector<1x1x96xf32> to vector<1x96xf32>
    %33 = vector.broadcast %32 : vector<1x96xf32> to vector<16x96xf32>
    %34 = arith.addf %30, %33 : vector<16x96xf32>
    %35 = vector.extract_strided_slice %34 {offsets = [0, 0], sizes = [16, 32], strides = [1, 1]} : vector<16x96xf32> to vector<16x32xf32>
    %36 = vector.extract_strided_slice %34 {offsets = [0, 32], sizes = [16, 32], strides = [1, 1]} : vector<16x96xf32> to vector<16x32xf32>
    %37 = vector.extract_strided_slice %34 {offsets = [0, 64], sizes = [16, 32], strides = [1, 1]} : vector<16x96xf32> to vector<16x32xf32>
    %c0_20 = arith.constant 0 : index
    %c0_21 = arith.constant 0 : index
    %c0_22 = arith.constant 0 : index
    %38 = vector.load %arg6[%c0_20, %c0_21, %c0_22] : memref<2x32x32xf32, #tpu.memory_space<vmem>>, vector<1x32x32xf32>
    %39 = vector.shape_cast %38 : vector<1x32x32xf32> to vector<32x32xf32>
    %c0_23 = arith.constant 0 : index
    %c0_24 = arith.constant 0 : index
    %c0_25 = arith.constant 0 : index
    %40 = vector.load %arg7[%c0_23, %c0_24, %c0_25] : memref<2x1x32xf32, #tpu.memory_space<vmem>>, vector<1x1x32xf32>
    %41 = vector.shape_cast %40 : vector<1x1x32xf32> to vector<1x32xf32>
    %cst_26 = arith.constant 0.353553385 : f32
    %42 = vector.broadcast %cst_26 : f32 to vector<16x32xf32>
    %43 = arith.mulf %35, %42 : vector<16x32xf32>
    %c0_27 = arith.constant 0 : index
    %c0_28 = arith.constant 0 : index
    %c0_29 = arith.constant 0 : index
    %44 = vector.load %arg2[%c0_27, %c0_28, %c0_29] : memref<2x8x8xf32, #tpu.memory_space<vmem>>, vector<1x8x8xf32>
    %45 = vector.shape_cast %44 : vector<1x8x8xf32> to vector<8x8xf32>
    %cst_30 = arith.constant 0.000000e+00 : f32
    %46 = vector.broadcast %cst_30 : f32 to vector<8x32xf32>
    %47 = vector.extract_strided_slice %43 {offsets = [0, 0], sizes = [8, 8], strides = [1, 1]} : vector<16x32xf32> to vector<8x8xf32>
    %48 = vector.extract_strided_slice %36 {offsets = [0, 0], sizes = [8, 8], strides = [1, 1]} : vector<16x32xf32> to vector<8x8xf32>
    %49 = vector.extract_strided_slice %37 {offsets = [0, 0], sizes = [8, 8], strides = [1, 1]} : vector<16x32xf32> to vector<8x8xf32>
    %cst_31 = arith.constant dense<0.000000e+00> : vector<8x8xf32>
    %50 = tpu.matmul %47, %48, %cst_31 {dimension_numbers = #tpu.dot_dimension_numbers<[1], [1], [0], [0], [0, 0, 1, 0], [], []>} : vector<8x8xf32>, vector<8x8xf32>, vector<8x8xf32> -> vector<8x8xf32>
    %cst_32 = arith.constant 0.000000e+00 : f32
    %51 = vector.broadcast %cst_32 : f32 to vector<8x8xf32>
    %52 = arith.cmpf oeq, %45, %51 : vector<8x8xf32>
    %cst_33 = arith.constant -1.000000e+09 : f32
    %53 = vector.broadcast %cst_33 : f32 to vector<8x8xf32>
    %54 = arith.select %52, %53, %50 : vector<8x8xi1>, vector<8x8xf32>
    %cst_34 = arith.constant dense<0xFF800000> : vector<8xf32>
    %55 = vector.multi_reduction <maximumf>, %54, %cst_34 [1] : vector<8x8xf32> to vector<8xf32>
    %56 = vector.shape_cast %55 : vector<8xf32> to vector<8x1xf32>
    %57 = vector.broadcast %56 : vector<8x1xf32> to vector<8x8xf32>
    %58 = arith.subf %54, %57 : vector<8x8xf32>
    %59 = math.exp %58 : vector<8x8xf32>
    %cst_35 = arith.constant dense<0.000000e+00> : vector<8xf32>
    %60 = vector.multi_reduction <add>, %59, %cst_35 [1] : vector<8x8xf32> to vector<8xf32>
    %61 = vector.shape_cast %60 : vector<8xf32> to vector<8x1xf32>
    %62 = tpu.reciprocal %61 {approx = true} : vector<8x1xf32> -> vector<8x1xf32>
    %63 = vector.broadcast %62 : vector<8x1xf32> to vector<8x8xf32>
    %64 = arith.mulf %59, %63 : vector<8x8xf32>
    %cst_36 = arith.constant dense<0.000000e+00> : vector<8x8xf32>
    %65 = tpu.matmul %64, %49, %cst_36 {dimension_numbers = #tpu.dot_dimension_numbers<[1], [0], [0], [1], [0, 0, 1, 1], [], []>} : vector<8x8xf32>, vector<8x8xf32>, vector<8x8xf32> -> vector<8x8xf32>
    %66 = vector.extract_strided_slice %39 {offsets = [0, 0], sizes = [8, 32], strides = [1, 1]} : vector<32x32xf32> to vector<8x32xf32>
    %cst_37 = arith.constant dense<0.000000e+00> : vector<8x32xf32>
    %67 = tpu.matmul %65, %66, %cst_37 {dimension_numbers = #tpu.dot_dimension_numbers<[1], [0], [0], [1], [0, 0, 1, 1], [], []>} : vector<8x8xf32>, vector<8x32xf32>, vector<8x32xf32> -> vector<8x32xf32>
    %68 = arith.addf %46, %67 : vector<8x32xf32>
    %69 = vector.extract_strided_slice %43 {offsets = [0, 8], sizes = [8, 8], strides = [1, 1]} : vector<16x32xf32> to vector<8x8xf32>
    %70 = vector.extract_strided_slice %36 {offsets = [0, 8], sizes = [8, 8], strides = [1, 1]} : vector<16x32xf32> to vector<8x8xf32>
    %71 = vector.extract_strided_slice %37 {offsets = [0, 8], sizes = [8, 8], strides = [1, 1]} : vector<16x32xf32> to vector<8x8xf32>
    %cst_38 = arith.constant dense<0.000000e+00> : vector<8x8xf32>
    %72 = tpu.matmul %69, %70, %cst_38 {dimension_numbers = #tpu.dot_dimension_numbers<[1], [1], [0], [0], [0, 0, 1, 0], [], []>} : vector<8x8xf32>, vector<8x8xf32>, vector<8x8xf32> -> vector<8x8xf32>
    %cst_39 = arith.constant 0.000000e+00 : f32
    %73 = vector.broadcast %cst_39 : f32 to vector<8x8xf32>
    %74 = arith.cmpf oeq, %45, %73 : vector<8x8xf32>
    %cst_40 = arith.constant -1.000000e+09 : f32
    %75 = vector.broadcast %cst_40 : f32 to vector<8x8xf32>
    %76 = arith.select %74, %75, %72 : vector<8x8xi1>, vector<8x8xf32>
    %cst_41 = arith.constant dense<0xFF800000> : vector<8xf32>
    %77 = vector.multi_reduction <maximumf>, %76, %cst_41 [1] : vector<8x8xf32> to vector<8xf32>
    %78 = vector.shape_cast %77 : vector<8xf32> to vector<8x1xf32>
    %79 = vector.broadcast %78 : vector<8x1xf32> to vector<8x8xf32>
    %80 = arith.subf %76, %79 : vector<8x8xf32>
    %81 = math.exp %80 : vector<8x8xf32>
    %cst_42 = arith.constant dense<0.000000e+00> : vector<8xf32>
    %82 = vector.multi_reduction <add>, %81, %cst_42 [1] : vector<8x8xf32> to vector<8xf32>
    %83 = vector.shape_cast %82 : vector<8xf32> to vector<8x1xf32>
    %84 = tpu.reciprocal %83 {approx = true} : vector<8x1xf32> -> vector<8x1xf32>
    %85 = vector.broadcast %84 : vector<8x1xf32> to vector<8x8xf32>
    %86 = arith.mulf %81, %85 : vector<8x8xf32>
    %cst_43 = arith.constant dense<0.000000e+00> : vector<8x8xf32>
    %87 = tpu.matmul %86, %71, %cst_43 {dimension_numbers = #tpu.dot_dimension_numbers<[1], [0], [0], [1], [0, 0, 1, 1], [], []>} : vector<8x8xf32>, vector<8x8xf32>, vector<8x8xf32> -> vector<8x8xf32>
    %88 = vector.extract_strided_slice %39 {offsets = [8, 0], sizes = [8, 32], strides = [1, 1]} : vector<32x32xf32> to vector<8x32xf32>
    %cst_44 = arith.constant dense<0.000000e+00> : vector<8x32xf32>
    %89 = tpu.matmul %87, %88, %cst_44 {dimension_numbers = #tpu.dot_dimension_numbers<[1], [0], [0], [1], [0, 0, 1, 1], [], []>} : vector<8x8xf32>, vector<8x32xf32>, vector<8x32xf32> -> vector<8x32xf32>
    %90 = arith.addf %68, %89 : vector<8x32xf32>
    %91 = vector.extract_strided_slice %43 {offsets = [0, 16], sizes = [8, 8], strides = [1, 1]} : vector<16x32xf32> to vector<8x8xf32>
    %92 = vector.extract_strided_slice %36 {offsets = [0, 16], sizes = [8, 8], strides = [1, 1]} : vector<16x32xf32> to vector<8x8xf32>
    %93 = vector.extract_strided_slice %37 {offsets = [0, 16], sizes = [8, 8], strides = [1, 1]} : vector<16x32xf32> to vector<8x8xf32>
    %cst_45 = arith.constant dense<0.000000e+00> : vector<8x8xf32>
    %94 = tpu.matmul %91, %92, %cst_45 {dimension_numbers = #tpu.dot_dimension_numbers<[1], [1], [0], [0], [0, 0, 1, 0], [], []>} : vector<8x8xf32>, vector<8x8xf32>, vector<8x8xf32> -> vector<8x8xf32>
    %cst_46 = arith.constant 0.000000e+00 : f32
    %95 = vector.broadcast %cst_46 : f32 to vector<8x8xf32>
    %96 = arith.cmpf oeq, %45, %95 : vector<8x8xf32>
    %cst_47 = arith.constant -1.000000e+09 : f32
    %97 = vector.broadcast %cst_47 : f32 to vector<8x8xf32>
    %98 = arith.select %96, %97, %94 : vector<8x8xi1>, vector<8x8xf32>
    %cst_48 = arith.constant dense<0xFF800000> : vector<8xf32>
    %99 = vector.multi_reduction <maximumf>, %98, %cst_48 [1] : vector<8x8xf32> to vector<8xf32>
    %100 = vector.shape_cast %99 : vector<8xf32> to vector<8x1xf32>
    %101 = vector.broadcast %100 : vector<8x1xf32> to vector<8x8xf32>
    %102 = arith.subf %98, %101 : vector<8x8xf32>
    %103 = math.exp %102 : vector<8x8xf32>
    %cst_49 = arith.constant dense<0.000000e+00> : vector<8xf32>
    %104 = vector.multi_reduction <add>, %103, %cst_49 [1] : vector<8x8xf32> to vector<8xf32>
    %105 = vector.shape_cast %104 : vector<8xf32> to vector<8x1xf32>
    %106 = tpu.reciprocal %105 {approx = true} : vector<8x1xf32> -> vector<8x1xf32>
    %107 = vector.broadcast %106 : vector<8x1xf32> to vector<8x8xf32>
    %108 = arith.mulf %103, %107 : vector<8x8xf32>
    %cst_50 = arith.constant dense<0.000000e+00> : vector<8x8xf32>
    %109 = tpu.matmul %108, %93, %cst_50 {dimension_numbers = #tpu.dot_dimension_numbers<[1], [0], [0], [1], [0, 0, 1, 1], [], []>} : vector<8x8xf32>, vector<8x8xf32>, vector<8x8xf32> -> vector<8x8xf32>
    %110 = vector.extract_strided_slice %39 {offsets = [16, 0], sizes = [8, 32], strides = [1, 1]} : vector<32x32xf32> to vector<8x32xf32>
    %cst_51 = arith.constant dense<0.000000e+00> : vector<8x32xf32>
    %111 = tpu.matmul %109, %110, %cst_51 {dimension_numbers = #tpu.dot_dimension_numbers<[1], [0], [0], [1], [0, 0, 1, 1], [], []>} : vector<8x8xf32>, vector<8x32xf32>, vector<8x32xf32> -> vector<8x32xf32>
    %112 = arith.addf %90, %111 : vector<8x32xf32>
    %113 = vector.extract_strided_slice %43 {offsets = [0, 24], sizes = [8, 8], strides = [1, 1]} : vector<16x32xf32> to vector<8x8xf32>
    %114 = vector.extract_strided_slice %36 {offsets = [0, 24], sizes = [8, 8], strides = [1, 1]} : vector<16x32xf32> to vector<8x8xf32>
    %115 = vector.extract_strided_slice %37 {offsets = [0, 24], sizes = [8, 8], strides = [1, 1]} : vector<16x32xf32> to vector<8x8xf32>
    %cst_52 = arith.constant dense<0.000000e+00> : vector<8x8xf32>
    %116 = tpu.matmul %113, %114, %cst_52 {dimension_numbers = #tpu.dot_dimension_numbers<[1], [1], [0], [0], [0, 0, 1, 0], [], []>} : vector<8x8xf32>, vector<8x8xf32>, vector<8x8xf32> -> vector<8x8xf32>
    %cst_53 = arith.constant 0.000000e+00 : f32
    %117 = vector.broadcast %cst_53 : f32 to vector<8x8xf32>
    %118 = arith.cmpf oeq, %45, %117 : vector<8x8xf32>
    %cst_54 = arith.constant -1.000000e+09 : f32
    %119 = vector.broadcast %cst_54 : f32 to vector<8x8xf32>
    %120 = arith.select %118, %119, %116 : vector<8x8xi1>, vector<8x8xf32>
    %cst_55 = arith.constant dense<0xFF800000> : vector<8xf32>
    %121 = vector.multi_reduction <maximumf>, %120, %cst_55 [1] : vector<8x8xf32> to vector<8xf32>
    %122 = vector.shape_cast %121 : vector<8xf32> to vector<8x1xf32>
    %123 = vector.broadcast %122 : vector<8x1xf32> to vector<8x8xf32>
    %124 = arith.subf %120, %123 : vector<8x8xf32>
    %125 = math.exp %124 : vector<8x8xf32>
    %cst_56 = arith.constant dense<0.000000e+00> : vector<8xf32>
    %126 = vector.multi_reduction <add>, %125, %cst_56 [1] : vector<8x8xf32> to vector<8xf32>
    %127 = vector.shape_cast %126 : vector<8xf32> to vector<8x1xf32>
    %128 = tpu.reciprocal %127 {approx = true} : vector<8x1xf32> -> vector<8x1xf32>
    %129 = vector.broadcast %128 : vector<8x1xf32> to vector<8x8xf32>
    %130 = arith.mulf %125, %129 : vector<8x8xf32>
    %cst_57 = arith.constant dense<0.000000e+00> : vector<8x8xf32>
    %131 = tpu.matmul %130, %115, %cst_57 {dimension_numbers = #tpu.dot_dimension_numbers<[1], [0], [0], [1], [0, 0, 1, 1], [], []>} : vector<8x8xf32>, vector<8x8xf32>, vector<8x8xf32> -> vector<8x8xf32>
    %132 = vector.extract_strided_slice %39 {offsets = [24, 0], sizes = [8, 32], strides = [1, 1]} : vector<32x32xf32> to vector<8x32xf32>
    %cst_58 = arith.constant dense<0.000000e+00> : vector<8x32xf32>
    %133 = tpu.matmul %131, %132, %cst_58 {dimension_numbers = #tpu.dot_dimension_numbers<[1], [0], [0], [1], [0, 0, 1, 1], [], []>} : vector<8x8xf32>, vector<8x32xf32>, vector<8x32xf32> -> vector<8x32xf32>
    %134 = arith.addf %112, %133 : vector<8x32xf32>
    %135 = vector.broadcast %41 : vector<1x32xf32> to vector<8x32xf32>
    %136 = arith.addf %134, %135 : vector<8x32xf32>
    %c1 = arith.constant 1 : index
    %c0_59 = arith.constant 0 : index
    %c0_60 = arith.constant 0 : index
    %137 = vector.load %arg2[%c1, %c0_59, %c0_60] : memref<2x8x8xf32, #tpu.memory_space<vmem>>, vector<1x8x8xf32>
    %138 = vector.shape_cast %137 : vector<1x8x8xf32> to vector<8x8xf32>
    %cst_61 = arith.constant 0.000000e+00 : f32
    %139 = vector.broadcast %cst_61 : f32 to vector<8x32xf32>
    %140 = vector.extract_strided_slice %43 {offsets = [8, 0], sizes = [8, 8], strides = [1, 1]} : vector<16x32xf32> to vector<8x8xf32>
    %141 = vector.extract_strided_slice %36 {offsets = [8, 0], sizes = [8, 8], strides = [1, 1]} : vector<16x32xf32> to vector<8x8xf32>
    %142 = vector.extract_strided_slice %37 {offsets = [8, 0], sizes = [8, 8], strides = [1, 1]} : vector<16x32xf32> to vector<8x8xf32>
    %cst_62 = arith.constant dense<0.000000e+00> : vector<8x8xf32>
    %143 = tpu.matmul %140, %141, %cst_62 {dimension_numbers = #tpu.dot_dimension_numbers<[1], [1], [0], [0], [0, 0, 1, 0], [], []>} : vector<8x8xf32>, vector<8x8xf32>, vector<8x8xf32> -> vector<8x8xf32>
    %cst_63 = arith.constant 0.000000e+00 : f32
    %144 = vector.broadcast %cst_63 : f32 to vector<8x8xf32>
    %145 = arith.cmpf oeq, %138, %144 : vector<8x8xf32>
    %cst_64 = arith.constant -1.000000e+09 : f32
    %146 = vector.broadcast %cst_64 : f32 to vector<8x8xf32>
    %147 = arith.select %145, %146, %143 : vector<8x8xi1>, vector<8x8xf32>
    %cst_65 = arith.constant dense<0xFF800000> : vector<8xf32>
    %148 = vector.multi_reduction <maximumf>, %147, %cst_65 [1] : vector<8x8xf32> to vector<8xf32>
    %149 = vector.shape_cast %148 : vector<8xf32> to vector<8x1xf32>
    %150 = vector.broadcast %149 : vector<8x1xf32> to vector<8x8xf32>
    %151 = arith.subf %147, %150 : vector<8x8xf32>
    %152 = math.exp %151 : vector<8x8xf32>
    %cst_66 = arith.constant dense<0.000000e+00> : vector<8xf32>
    %153 = vector.multi_reduction <add>, %152, %cst_66 [1] : vector<8x8xf32> to vector<8xf32>
    %154 = vector.shape_cast %153 : vector<8xf32> to vector<8x1xf32>
    %155 = tpu.reciprocal %154 {approx = true} : vector<8x1xf32> -> vector<8x1xf32>
    %156 = vector.broadcast %155 : vector<8x1xf32> to vector<8x8xf32>
    %157 = arith.mulf %152, %156 : vector<8x8xf32>
    %cst_67 = arith.constant dense<0.000000e+00> : vector<8x8xf32>
    %158 = tpu.matmul %157, %142, %cst_67 {dimension_numbers = #tpu.dot_dimension_numbers<[1], [0], [0], [1], [0, 0, 1, 1], [], []>} : vector<8x8xf32>, vector<8x8xf32>, vector<8x8xf32> -> vector<8x8xf32>
    %159 = vector.extract_strided_slice %39 {offsets = [0, 0], sizes = [8, 32], strides = [1, 1]} : vector<32x32xf32> to vector<8x32xf32>
    %cst_68 = arith.constant dense<0.000000e+00> : vector<8x32xf32>
    %160 = tpu.matmul %158, %159, %cst_68 {dimension_numbers = #tpu.dot_dimension_numbers<[1], [0], [0], [1], [0, 0, 1, 1], [], []>} : vector<8x8xf32>, vector<8x32xf32>, vector<8x32xf32> -> vector<8x32xf32>
    %161 = arith.addf %139, %160 : vector<8x32xf32>
    %162 = vector.extract_strided_slice %43 {offsets = [8, 8], sizes = [8, 8], strides = [1, 1]} : vector<16x32xf32> to vector<8x8xf32>
    %163 = vector.extract_strided_slice %36 {offsets = [8, 8], sizes = [8, 8], strides = [1, 1]} : vector<16x32xf32> to vector<8x8xf32>
    %164 = vector.extract_strided_slice %37 {offsets = [8, 8], sizes = [8, 8], strides = [1, 1]} : vector<16x32xf32> to vector<8x8xf32>
    %cst_69 = arith.constant dense<0.000000e+00> : vector<8x8xf32>
    %165 = tpu.matmul %162, %163, %cst_69 {dimension_numbers = #tpu.dot_dimension_numbers<[1], [1], [0], [0], [0, 0, 1, 0], [], []>} : vector<8x8xf32>, vector<8x8xf32>, vector<8x8xf32> -> vector<8x8xf32>
    %cst_70 = arith.constant 0.000000e+00 : f32
    %166 = vector.broadcast %cst_70 : f32 to vector<8x8xf32>
    %167 = arith.cmpf oeq, %138, %166 : vector<8x8xf32>
    %cst_71 = arith.constant -1.000000e+09 : f32
    %168 = vector.broadcast %cst_71 : f32 to vector<8x8xf32>
    %169 = arith.select %167, %168, %165 : vector<8x8xi1>, vector<8x8xf32>
    %cst_72 = arith.constant dense<0xFF800000> : vector<8xf32>
    %170 = vector.multi_reduction <maximumf>, %169, %cst_72 [1] : vector<8x8xf32> to vector<8xf32>
    %171 = vector.shape_cast %170 : vector<8xf32> to vector<8x1xf32>
    %172 = vector.broadcast %171 : vector<8x1xf32> to vector<8x8xf32>
    %173 = arith.subf %169, %172 : vector<8x8xf32>
    %174 = math.exp %173 : vector<8x8xf32>
    %cst_73 = arith.constant dense<0.000000e+00> : vector<8xf32>
    %175 = vector.multi_reduction <add>, %174, %cst_73 [1] : vector<8x8xf32> to vector<8xf32>
    %176 = vector.shape_cast %175 : vector<8xf32> to vector<8x1xf32>
    %177 = tpu.reciprocal %176 {approx = true} : vector<8x1xf32> -> vector<8x1xf32>
    %178 = vector.broadcast %177 : vector<8x1xf32> to vector<8x8xf32>
    %179 = arith.mulf %174, %178 : vector<8x8xf32>
    %cst_74 = arith.constant dense<0.000000e+00> : vector<8x8xf32>
    %180 = tpu.matmul %179, %164, %cst_74 {dimension_numbers = #tpu.dot_dimension_numbers<[1], [0], [0], [1], [0, 0, 1, 1], [], []>} : vector<8x8xf32>, vector<8x8xf32>, vector<8x8xf32> -> vector<8x8xf32>
    %181 = vector.extract_strided_slice %39 {offsets = [8, 0], sizes = [8, 32], strides = [1, 1]} : vector<32x32xf32> to vector<8x32xf32>
    %cst_75 = arith.constant dense<0.000000e+00> : vector<8x32xf32>
    %182 = tpu.matmul %180, %181, %cst_75 {dimension_numbers = #tpu.dot_dimension_numbers<[1], [0], [0], [1], [0, 0, 1, 1], [], []>} : vector<8x8xf32>, vector<8x32xf32>, vector<8x32xf32> -> vector<8x32xf32>
    %183 = arith.addf %161, %182 : vector<8x32xf32>
    %184 = vector.extract_strided_slice %43 {offsets = [8, 16], sizes = [8, 8], strides = [1, 1]} : vector<16x32xf32> to vector<8x8xf32>
    %185 = vector.extract_strided_slice %36 {offsets = [8, 16], sizes = [8, 8], strides = [1, 1]} : vector<16x32xf32> to vector<8x8xf32>
    %186 = vector.extract_strided_slice %37 {offsets = [8, 16], sizes = [8, 8], strides = [1, 1]} : vector<16x32xf32> to vector<8x8xf32>
    %cst_76 = arith.constant dense<0.000000e+00> : vector<8x8xf32>
    %187 = tpu.matmul %184, %185, %cst_76 {dimension_numbers = #tpu.dot_dimension_numbers<[1], [1], [0], [0], [0, 0, 1, 0], [], []>} : vector<8x8xf32>, vector<8x8xf32>, vector<8x8xf32> -> vector<8x8xf32>
    %cst_77 = arith.constant 0.000000e+00 : f32
    %188 = vector.broadcast %cst_77 : f32 to vector<8x8xf32>
    %189 = arith.cmpf oeq, %138, %188 : vector<8x8xf32>
    %cst_78 = arith.constant -1.000000e+09 : f32
    %190 = vector.broadcast %cst_78 : f32 to vector<8x8xf32>
    %191 = arith.select %189, %190, %187 : vector<8x8xi1>, vector<8x8xf32>
    %cst_79 = arith.constant dense<0xFF800000> : vector<8xf32>
    %192 = vector.multi_reduction <maximumf>, %191, %cst_79 [1] : vector<8x8xf32> to vector<8xf32>
    %193 = vector.shape_cast %192 : vector<8xf32> to vector<8x1xf32>
    %194 = vector.broadcast %193 : vector<8x1xf32> to vector<8x8xf32>
    %195 = arith.subf %191, %194 : vector<8x8xf32>
    %196 = math.exp %195 : vector<8x8xf32>
    %cst_80 = arith.constant dense<0.000000e+00> : vector<8xf32>
    %197 = vector.multi_reduction <add>, %196, %cst_80 [1] : vector<8x8xf32> to vector<8xf32>
    %198 = vector.shape_cast %197 : vector<8xf32> to vector<8x1xf32>
    %199 = tpu.reciprocal %198 {approx = true} : vector<8x1xf32> -> vector<8x1xf32>
    %200 = vector.broadcast %199 : vector<8x1xf32> to vector<8x8xf32>
    %201 = arith.mulf %196, %200 : vector<8x8xf32>
    %cst_81 = arith.constant dense<0.000000e+00> : vector<8x8xf32>
    %202 = tpu.matmul %201, %186, %cst_81 {dimension_numbers = #tpu.dot_dimension_numbers<[1], [0], [0], [1], [0, 0, 1, 1], [], []>} : vector<8x8xf32>, vector<8x8xf32>, vector<8x8xf32> -> vector<8x8xf32>
    %203 = vector.extract_strided_slice %39 {offsets = [16, 0], sizes = [8, 32], strides = [1, 1]} : vector<32x32xf32> to vector<8x32xf32>
    %cst_82 = arith.constant dense<0.000000e+00> : vector<8x32xf32>
    %204 = tpu.matmul %202, %203, %cst_82 {dimension_numbers = #tpu.dot_dimension_numbers<[1], [0], [0], [1], [0, 0, 1, 1], [], []>} : vector<8x8xf32>, vector<8x32xf32>, vector<8x32xf32> -> vector<8x32xf32>
    %205 = arith.addf %183, %204 : vector<8x32xf32>
    %206 = vector.extract_strided_slice %43 {offsets = [8, 24], sizes = [8, 8], strides = [1, 1]} : vector<16x32xf32> to vector<8x8xf32>
    %207 = vector.extract_strided_slice %36 {offsets = [8, 24], sizes = [8, 8], strides = [1, 1]} : vector<16x32xf32> to vector<8x8xf32>
    %208 = vector.extract_strided_slice %37 {offsets = [8, 24], sizes = [8, 8], strides = [1, 1]} : vector<16x32xf32> to vector<8x8xf32>
    %cst_83 = arith.constant dense<0.000000e+00> : vector<8x8xf32>
    %209 = tpu.matmul %206, %207, %cst_83 {dimension_numbers = #tpu.dot_dimension_numbers<[1], [1], [0], [0], [0, 0, 1, 0], [], []>} : vector<8x8xf32>, vector<8x8xf32>, vector<8x8xf32> -> vector<8x8xf32>
    %cst_84 = arith.constant 0.000000e+00 : f32
    %210 = vector.broadcast %cst_84 : f32 to vector<8x8xf32>
    %211 = arith.cmpf oeq, %138, %210 : vector<8x8xf32>
    %cst_85 = arith.constant -1.000000e+09 : f32
    %212 = vector.broadcast %cst_85 : f32 to vector<8x8xf32>
    %213 = arith.select %211, %212, %209 : vector<8x8xi1>, vector<8x8xf32>
    %cst_86 = arith.constant dense<0xFF800000> : vector<8xf32>
    %214 = vector.multi_reduction <maximumf>, %213, %cst_86 [1] : vector<8x8xf32> to vector<8xf32>
    %215 = vector.shape_cast %214 : vector<8xf32> to vector<8x1xf32>
    %216 = vector.broadcast %215 : vector<8x1xf32> to vector<8x8xf32>
    %217 = arith.subf %213, %216 : vector<8x8xf32>
    %218 = math.exp %217 : vector<8x8xf32>
    %cst_87 = arith.constant dense<0.000000e+00> : vector<8xf32>
    %219 = vector.multi_reduction <add>, %218, %cst_87 [1] : vector<8x8xf32> to vector<8xf32>
    %220 = vector.shape_cast %219 : vector<8xf32> to vector<8x1xf32>
    %221 = tpu.reciprocal %220 {approx = true} : vector<8x1xf32> -> vector<8x1xf32>
    %222 = vector.broadcast %221 : vector<8x1xf32> to vector<8x8xf32>
    %223 = arith.mulf %218, %222 : vector<8x8xf32>
    %cst_88 = arith.constant dense<0.000000e+00> : vector<8x8xf32>
    %224 = tpu.matmul %223, %208, %cst_88 {dimension_numbers = #tpu.dot_dimension_numbers<[1], [0], [0], [1], [0, 0, 1, 1], [], []>} : vector<8x8xf32>, vector<8x8xf32>, vector<8x8xf32> -> vector<8x8xf32>
    %225 = vector.extract_strided_slice %39 {offsets = [24, 0], sizes = [8, 32], strides = [1, 1]} : vector<32x32xf32> to vector<8x32xf32>
    %cst_89 = arith.constant dense<0.000000e+00> : vector<8x32xf32>
    %226 = tpu.matmul %224, %225, %cst_89 {dimension_numbers = #tpu.dot_dimension_numbers<[1], [0], [0], [1], [0, 0, 1, 1], [], []>} : vector<8x8xf32>, vector<8x32xf32>, vector<8x32xf32> -> vector<8x32xf32>
    %227 = arith.addf %205, %226 : vector<8x32xf32>
    %228 = vector.broadcast %41 : vector<1x32xf32> to vector<8x32xf32>
    %229 = arith.addf %227, %228 : vector<8x32xf32>
    %230 = tpu.concatenate %136, %229 in 0 : vector<8x32xf32>, vector<8x32xf32> -> vector<16x32xf32>
    %231 = arith.addf %0, %230 : vector<16x32xf32>
    %c1_90 = arith.constant 1 : index
    %c0_91 = arith.constant 0 : index
    %c0_92 = arith.constant 0 : index
    %232 = vector.load %arg18[%c1_90, %c0_91, %c0_92] : memref<7x1x32xf32, #tpu.memory_space<vmem>>, vector<1x1x32xf32>
    %233 = vector.shape_cast %232 : vector<1x1x32xf32> to vector<1x32xf32>
    %c1_93 = arith.constant 1 : index
    %c0_94 = arith.constant 0 : index
    %c0_95 = arith.constant 0 : index
    %234 = vector.load %arg19[%c1_93, %c0_94, %c0_95] : memref<7x1x32xf32, #tpu.memory_space<vmem>>, vector<1x1x32xf32>
    %235 = vector.shape_cast %234 : vector<1x1x32xf32> to vector<1x32xf32>
    %cst_96 = arith.constant dense<0.000000e+00> : vector<16xf32>
    %236 = vector.multi_reduction <add>, %231, %cst_96 [1] : vector<16x32xf32> to vector<16xf32>
    %237 = vector.shape_cast %236 : vector<16xf32> to vector<16x1xf32>
    %cst_97 = arith.constant 3.200000e+01 : f32
    %238 = vector.broadcast %cst_97 : f32 to vector<16x1xf32>
    %239 = arith.divf %237, %238 : vector<16x1xf32>
    %240 = vector.broadcast %239 : vector<16x1xf32> to vector<16x32xf32>
    %241 = arith.subf %231, %240 : vector<16x32xf32>
    %242 = arith.mulf %241, %241 : vector<16x32xf32>
    %cst_98 = arith.constant dense<0.000000e+00> : vector<16xf32>
    %243 = vector.multi_reduction <add>, %242, %cst_98 [1] : vector<16x32xf32> to vector<16xf32>
    %244 = vector.shape_cast %243 : vector<16xf32> to vector<16x1xf32>
    %cst_99 = arith.constant 3.100000e+01 : f32
    %245 = vector.broadcast %cst_99 : f32 to vector<16x1xf32>
    %246 = arith.divf %244, %245 : vector<16x1xf32>
    %247 = math.sqrt %246 : vector<16x1xf32>
    %248 = vector.broadcast %239 : vector<16x1xf32> to vector<16x32xf32>
    %249 = arith.subf %231, %248 : vector<16x32xf32>
    %250 = vector.broadcast %233 : vector<1x32xf32> to vector<16x32xf32>
    %251 = arith.mulf %250, %249 : vector<16x32xf32>
    %cst_100 = arith.constant 9.99999997E-7 : f32
    %252 = vector.broadcast %cst_100 : f32 to vector<16x1xf32>
    %253 = arith.addf %247, %252 : vector<16x1xf32>
    %254 = vector.broadcast %253 : vector<16x1xf32> to vector<16x32xf32>
    %255 = arith.divf %251, %254 : vector<16x32xf32>
    %256 = vector.broadcast %235 : vector<1x32xf32> to vector<16x32xf32>
    %257 = arith.addf %255, %256 : vector<16x32xf32>
    %c0_101 = arith.constant 0 : index
    %c0_102 = arith.constant 0 : index
    %c0_103 = arith.constant 0 : index
    %258 = vector.load %arg8[%c0_101, %c0_102, %c0_103] : memref<2x32x32xf32, #tpu.memory_space<vmem>>, vector<1x32x32xf32>
    %259 = vector.shape_cast %258 : vector<1x32x32xf32> to vector<32x32xf32>
    %cst_104 = arith.constant dense<0.000000e+00> : vector<16x32xf32>
    %260 = tpu.matmul %257, %259, %cst_104 {dimension_numbers = #tpu.dot_dimension_numbers<[1], [0], [0], [1], [0, 0, 1, 1], [], []>} : vector<16x32xf32>, vector<32x32xf32>, vector<16x32xf32> -> vector<16x32xf32>
    %c0_105 = arith.constant 0 : index
    %c0_106 = arith.constant 0 : index
    %c0_107 = arith.constant 0 : index
    %261 = vector.load %arg9[%c0_105, %c0_106, %c0_107] : memref<2x1x32xf32, #tpu.memory_space<vmem>>, vector<1x1x32xf32>
    %262 = vector.shape_cast %261 : vector<1x1x32xf32> to vector<1x32xf32>
    %263 = vector.broadcast %262 : vector<1x32xf32> to vector<16x32xf32>
    %264 = arith.addf %260, %263 : vector<16x32xf32>
    %c0_108 = arith.constant 0 : index
    %c0_109 = arith.constant 0 : index
    %c0_110 = arith.constant 0 : index
    %265 = vector.load %arg10[%c0_108, %c0_109, %c0_110] : memref<2x32x64xf32, #tpu.memory_space<vmem>>, vector<1x32x64xf32>
    %266 = vector.shape_cast %265 : vector<1x32x64xf32> to vector<32x64xf32>
    %cst_111 = arith.constant dense<0.000000e+00> : vector<16x64xf32>
    %267 = tpu.matmul %1, %266, %cst_111 {dimension_numbers = #tpu.dot_dimension_numbers<[1], [0], [0], [1], [0, 0, 1, 1], [], []>} : vector<16x32xf32>, vector<32x64xf32>, vector<16x64xf32> -> vector<16x64xf32>
    %c0_112 = arith.constant 0 : index
    %c0_113 = arith.constant 0 : index
    %c0_114 = arith.constant 0 : index
    %268 = vector.load %arg11[%c0_112, %c0_113, %c0_114] : memref<2x1x64xf32, #tpu.memory_space<vmem>>, vector<1x1x64xf32>
    %269 = vector.shape_cast %268 : vector<1x1x64xf32> to vector<1x64xf32>
    %270 = vector.broadcast %269 : vector<1x64xf32> to vector<16x64xf32>
    %271 = arith.addf %267, %270 : vector<16x64xf32>
    %272 = vector.extract_strided_slice %271 {offsets = [0, 0], sizes = [16, 32], strides = [1, 1]} : vector<16x64xf32> to vector<16x32xf32>
    %273 = vector.extract_strided_slice %271 {offsets = [0, 32], sizes = [16, 32], strides = [1, 1]} : vector<16x64xf32> to vector<16x32xf32>
    %c0_115 = arith.constant 0 : index
    %c0_116 = arith.constant 0 : index
    %c0_117 = arith.constant 0 : index
    %274 = vector.load %arg12[%c0_115, %c0_116, %c0_117] : memref<2x32x32xf32, #tpu.memory_space<vmem>>, vector<1x32x32xf32>
    %275 = vector.shape_cast %274 : vector<1x32x32xf32> to vector<32x32xf32>
    %c0_118 = arith.constant 0 : index
    %c0_119 = arith.constant 0 : index
    %c0_120 = arith.constant 0 : index
    %276 = vector.load %arg13[%c0_118, %c0_119, %c0_120] : memref<2x1x32xf32, #tpu.memory_space<vmem>>, vector<1x1x32xf32>
    %277 = vector.shape_cast %276 : vector<1x1x32xf32> to vector<1x32xf32>
    %cst_121 = arith.constant 0.353553385 : f32
    %278 = vector.broadcast %cst_121 : f32 to vector<16x32xf32>
    %279 = arith.mulf %264, %278 : vector<16x32xf32>
    %c0_122 = arith.constant 0 : index
    %c0_123 = arith.constant 0 : index
    %c0_124 = arith.constant 0 : index
    %280 = vector.load %arg3[%c0_122, %c0_123, %c0_124] : memref<2x8x8xf32, #tpu.memory_space<vmem>>, vector<1x8x8xf32>
    %281 = vector.shape_cast %280 : vector<1x8x8xf32> to vector<8x8xf32>
    %cst_125 = arith.constant 0.000000e+00 : f32
    %282 = vector.broadcast %cst_125 : f32 to vector<8x32xf32>
    %283 = vector.extract_strided_slice %279 {offsets = [0, 0], sizes = [8, 8], strides = [1, 1]} : vector<16x32xf32> to vector<8x8xf32>
    %284 = vector.extract_strided_slice %272 {offsets = [0, 0], sizes = [8, 8], strides = [1, 1]} : vector<16x32xf32> to vector<8x8xf32>
    %285 = vector.extract_strided_slice %273 {offsets = [0, 0], sizes = [8, 8], strides = [1, 1]} : vector<16x32xf32> to vector<8x8xf32>
    %cst_126 = arith.constant dense<0.000000e+00> : vector<8x8xf32>
    %286 = tpu.matmul %283, %284, %cst_126 {dimension_numbers = #tpu.dot_dimension_numbers<[1], [1], [0], [0], [0, 0, 1, 0], [], []>} : vector<8x8xf32>, vector<8x8xf32>, vector<8x8xf32> -> vector<8x8xf32>
    %cst_127 = arith.constant 0.000000e+00 : f32
    %287 = vector.broadcast %cst_127 : f32 to vector<8x8xf32>
    %288 = arith.cmpf oeq, %281, %287 : vector<8x8xf32>
    %cst_128 = arith.constant -1.000000e+09 : f32
    %289 = vector.broadcast %cst_128 : f32 to vector<8x8xf32>
    %290 = arith.select %288, %289, %286 : vector<8x8xi1>, vector<8x8xf32>
    %cst_129 = arith.constant dense<0xFF800000> : vector<8xf32>
    %291 = vector.multi_reduction <maximumf>, %290, %cst_129 [1] : vector<8x8xf32> to vector<8xf32>
    %292 = vector.shape_cast %291 : vector<8xf32> to vector<8x1xf32>
    %293 = vector.broadcast %292 : vector<8x1xf32> to vector<8x8xf32>
    %294 = arith.subf %290, %293 : vector<8x8xf32>
    %295 = math.exp %294 : vector<8x8xf32>
    %cst_130 = arith.constant dense<0.000000e+00> : vector<8xf32>
    %296 = vector.multi_reduction <add>, %295, %cst_130 [1] : vector<8x8xf32> to vector<8xf32>
    %297 = vector.shape_cast %296 : vector<8xf32> to vector<8x1xf32>
    %298 = tpu.reciprocal %297 {approx = true} : vector<8x1xf32> -> vector<8x1xf32>
    %299 = vector.broadcast %298 : vector<8x1xf32> to vector<8x8xf32>
    %300 = arith.mulf %295, %299 : vector<8x8xf32>
    %cst_131 = arith.constant dense<0.000000e+00> : vector<8x8xf32>
    %301 = tpu.matmul %300, %285, %cst_131 {dimension_numbers = #tpu.dot_dimension_numbers<[1], [0], [0], [1], [0, 0, 1, 1], [], []>} : vector<8x8xf32>, vector<8x8xf32>, vector<8x8xf32> -> vector<8x8xf32>
    %302 = vector.extract_strided_slice %275 {offsets = [0, 0], sizes = [8, 32], strides = [1, 1]} : vector<32x32xf32> to vector<8x32xf32>
    %cst_132 = arith.constant dense<0.000000e+00> : vector<8x32xf32>
    %303 = tpu.matmul %301, %302, %cst_132 {dimension_numbers = #tpu.dot_dimension_numbers<[1], [0], [0], [1], [0, 0, 1, 1], [], []>} : vector<8x8xf32>, vector<8x32xf32>, vector<8x32xf32> -> vector<8x32xf32>
    %304 = arith.addf %282, %303 : vector<8x32xf32>
    %305 = vector.extract_strided_slice %279 {offsets = [0, 8], sizes = [8, 8], strides = [1, 1]} : vector<16x32xf32> to vector<8x8xf32>
    %306 = vector.extract_strided_slice %272 {offsets = [0, 8], sizes = [8, 8], strides = [1, 1]} : vector<16x32xf32> to vector<8x8xf32>
    %307 = vector.extract_strided_slice %273 {offsets = [0, 8], sizes = [8, 8], strides = [1, 1]} : vector<16x32xf32> to vector<8x8xf32>
    %cst_133 = arith.constant dense<0.000000e+00> : vector<8x8xf32>
    %308 = tpu.matmul %305, %306, %cst_133 {dimension_numbers = #tpu.dot_dimension_numbers<[1], [1], [0], [0], [0, 0, 1, 0], [], []>} : vector<8x8xf32>, vector<8x8xf32>, vector<8x8xf32> -> vector<8x8xf32>
    %cst_134 = arith.constant 0.000000e+00 : f32
    %309 = vector.broadcast %cst_134 : f32 to vector<8x8xf32>
    %310 = arith.cmpf oeq, %281, %309 : vector<8x8xf32>
    %cst_135 = arith.constant -1.000000e+09 : f32
    %311 = vector.broadcast %cst_135 : f32 to vector<8x8xf32>
    %312 = arith.select %310, %311, %308 : vector<8x8xi1>, vector<8x8xf32>
    %cst_136 = arith.constant dense<0xFF800000> : vector<8xf32>
    %313 = vector.multi_reduction <maximumf>, %312, %cst_136 [1] : vector<8x8xf32> to vector<8xf32>
    %314 = vector.shape_cast %313 : vector<8xf32> to vector<8x1xf32>
    %315 = vector.broadcast %314 : vector<8x1xf32> to vector<8x8xf32>
    %316 = arith.subf %312, %315 : vector<8x8xf32>
    %317 = math.exp %316 : vector<8x8xf32>
    %cst_137 = arith.constant dense<0.000000e+00> : vector<8xf32>
    %318 = vector.multi_reduction <add>, %317, %cst_137 [1] : vector<8x8xf32> to vector<8xf32>
    %319 = vector.shape_cast %318 : vector<8xf32> to vector<8x1xf32>
    %320 = tpu.reciprocal %319 {approx = true} : vector<8x1xf32> -> vector<8x1xf32>
    %321 = vector.broadcast %320 : vector<8x1xf32> to vector<8x8xf32>
    %322 = arith.mulf %317, %321 : vector<8x8xf32>
    %cst_138 = arith.constant dense<0.000000e+00> : vector<8x8xf32>
    %323 = tpu.matmul %322, %307, %cst_138 {dimension_numbers = #tpu.dot_dimension_numbers<[1], [0], [0], [1], [0, 0, 1, 1], [], []>} : vector<8x8xf32>, vector<8x8xf32>, vector<8x8xf32> -> vector<8x8xf32>
    %324 = vector.extract_strided_slice %275 {offsets = [8, 0], sizes = [8, 32], strides = [1, 1]} : vector<32x32xf32> to vector<8x32xf32>
    %cst_139 = arith.constant dense<0.000000e+00> : vector<8x32xf32>
    %325 = tpu.matmul %323, %324, %cst_139 {dimension_numbers = #tpu.dot_dimension_numbers<[1], [0], [0], [1], [0, 0, 1, 1], [], []>} : vector<8x8xf32>, vector<8x32xf32>, vector<8x32xf32> -> vector<8x32xf32>
    %326 = arith.addf %304, %325 : vector<8x32xf32>
    %327 = vector.extract_strided_slice %279 {offsets = [0, 16], sizes = [8, 8], strides = [1, 1]} : vector<16x32xf32> to vector<8x8xf32>
    %328 = vector.extract_strided_slice %272 {offsets = [0, 16], sizes = [8, 8], strides = [1, 1]} : vector<16x32xf32> to vector<8x8xf32>
    %329 = vector.extract_strided_slice %273 {offsets = [0, 16], sizes = [8, 8], strides = [1, 1]} : vector<16x32xf32> to vector<8x8xf32>
    %cst_140 = arith.constant dense<0.000000e+00> : vector<8x8xf32>
    %330 = tpu.matmul %327, %328, %cst_140 {dimension_numbers = #tpu.dot_dimension_numbers<[1], [1], [0], [0], [0, 0, 1, 0], [], []>} : vector<8x8xf32>, vector<8x8xf32>, vector<8x8xf32> -> vector<8x8xf32>
    %cst_141 = arith.constant 0.000000e+00 : f32
    %331 = vector.broadcast %cst_141 : f32 to vector<8x8xf32>
    %332 = arith.cmpf oeq, %281, %331 : vector<8x8xf32>
    %cst_142 = arith.constant -1.000000e+09 : f32
    %333 = vector.broadcast %cst_142 : f32 to vector<8x8xf32>
    %334 = arith.select %332, %333, %330 : vector<8x8xi1>, vector<8x8xf32>
    %cst_143 = arith.constant dense<0xFF800000> : vector<8xf32>
    %335 = vector.multi_reduction <maximumf>, %334, %cst_143 [1] : vector<8x8xf32> to vector<8xf32>
    %336 = vector.shape_cast %335 : vector<8xf32> to vector<8x1xf32>
    %337 = vector.broadcast %336 : vector<8x1xf32> to vector<8x8xf32>
    %338 = arith.subf %334, %337 : vector<8x8xf32>
    %339 = math.exp %338 : vector<8x8xf32>
    %cst_144 = arith.constant dense<0.000000e+00> : vector<8xf32>
    %340 = vector.multi_reduction <add>, %339, %cst_144 [1] : vector<8x8xf32> to vector<8xf32>
    %341 = vector.shape_cast %340 : vector<8xf32> to vector<8x1xf32>
    %342 = tpu.reciprocal %341 {approx = true} : vector<8x1xf32> -> vector<8x1xf32>
    %343 = vector.broadcast %342 : vector<8x1xf32> to vector<8x8xf32>
    %344 = arith.mulf %339, %343 : vector<8x8xf32>
    %cst_145 = arith.constant dense<0.000000e+00> : vector<8x8xf32>
    %345 = tpu.matmul %344, %329, %cst_145 {dimension_numbers = #tpu.dot_dimension_numbers<[1], [0], [0], [1], [0, 0, 1, 1], [], []>} : vector<8x8xf32>, vector<8x8xf32>, vector<8x8xf32> -> vector<8x8xf32>
    %346 = vector.extract_strided_slice %275 {offsets = [16, 0], sizes = [8, 32], strides = [1, 1]} : vector<32x32xf32> to vector<8x32xf32>
    %cst_146 = arith.constant dense<0.000000e+00> : vector<8x32xf32>
    %347 = tpu.matmul %345, %346, %cst_146 {dimension_numbers = #tpu.dot_dimension_numbers<[1], [0], [0], [1], [0, 0, 1, 1], [], []>} : vector<8x8xf32>, vector<8x32xf32>, vector<8x32xf32> -> vector<8x32xf32>
    %348 = arith.addf %326, %347 : vector<8x32xf32>
    %349 = vector.extract_strided_slice %279 {offsets = [0, 24], sizes = [8, 8], strides = [1, 1]} : vector<16x32xf32> to vector<8x8xf32>
    %350 = vector.extract_strided_slice %272 {offsets = [0, 24], sizes = [8, 8], strides = [1, 1]} : vector<16x32xf32> to vector<8x8xf32>
    %351 = vector.extract_strided_slice %273 {offsets = [0, 24], sizes = [8, 8], strides = [1, 1]} : vector<16x32xf32> to vector<8x8xf32>
    %cst_147 = arith.constant dense<0.000000e+00> : vector<8x8xf32>
    %352 = tpu.matmul %349, %350, %cst_147 {dimension_numbers = #tpu.dot_dimension_numbers<[1], [1], [0], [0], [0, 0, 1, 0], [], []>} : vector<8x8xf32>, vector<8x8xf32>, vector<8x8xf32> -> vector<8x8xf32>
    %cst_148 = arith.constant 0.000000e+00 : f32
    %353 = vector.broadcast %cst_148 : f32 to vector<8x8xf32>
    %354 = arith.cmpf oeq, %281, %353 : vector<8x8xf32>
    %cst_149 = arith.constant -1.000000e+09 : f32
    %355 = vector.broadcast %cst_149 : f32 to vector<8x8xf32>
    %356 = arith.select %354, %355, %352 : vector<8x8xi1>, vector<8x8xf32>
    %cst_150 = arith.constant dense<0xFF800000> : vector<8xf32>
    %357 = vector.multi_reduction <maximumf>, %356, %cst_150 [1] : vector<8x8xf32> to vector<8xf32>
    %358 = vector.shape_cast %357 : vector<8xf32> to vector<8x1xf32>
    %359 = vector.broadcast %358 : vector<8x1xf32> to vector<8x8xf32>
    %360 = arith.subf %356, %359 : vector<8x8xf32>
    %361 = math.exp %360 : vector<8x8xf32>
    %cst_151 = arith.constant dense<0.000000e+00> : vector<8xf32>
    %362 = vector.multi_reduction <add>, %361, %cst_151 [1] : vector<8x8xf32> to vector<8xf32>
    %363 = vector.shape_cast %362 : vector<8xf32> to vector<8x1xf32>
    %364 = tpu.reciprocal %363 {approx = true} : vector<8x1xf32> -> vector<8x1xf32>
    %365 = vector.broadcast %364 : vector<8x1xf32> to vector<8x8xf32>
    %366 = arith.mulf %361, %365 : vector<8x8xf32>
    %cst_152 = arith.constant dense<0.000000e+00> : vector<8x8xf32>
    %367 = tpu.matmul %366, %351, %cst_152 {dimension_numbers = #tpu.dot_dimension_numbers<[1], [0], [0], [1], [0, 0, 1, 1], [], []>} : vector<8x8xf32>, vector<8x8xf32>, vector<8x8xf32> -> vector<8x8xf32>
    %368 = vector.extract_strided_slice %275 {offsets = [24, 0], sizes = [8, 32], strides = [1, 1]} : vector<32x32xf32> to vector<8x32xf32>
    %cst_153 = arith.constant dense<0.000000e+00> : vector<8x32xf32>
    %369 = tpu.matmul %367, %368, %cst_153 {dimension_numbers = #tpu.dot_dimension_numbers<[1], [0], [0], [1], [0, 0, 1, 1], [], []>} : vector<8x8xf32>, vector<8x32xf32>, vector<8x32xf32> -> vector<8x32xf32>
    %370 = arith.addf %348, %369 : vector<8x32xf32>
    %371 = vector.broadcast %277 : vector<1x32xf32> to vector<8x32xf32>
    %372 = arith.addf %370, %371 : vector<8x32xf32>
    %c1_154 = arith.constant 1 : index
    %c0_155 = arith.constant 0 : index
    %c0_156 = arith.constant 0 : index
    %373 = vector.load %arg3[%c1_154, %c0_155, %c0_156] : memref<2x8x8xf32, #tpu.memory_space<vmem>>, vector<1x8x8xf32>
    %374 = vector.shape_cast %373 : vector<1x8x8xf32> to vector<8x8xf32>
    %cst_157 = arith.constant 0.000000e+00 : f32
    %375 = vector.broadcast %cst_157 : f32 to vector<8x32xf32>
    %376 = vector.extract_strided_slice %279 {offsets = [8, 0], sizes = [8, 8], strides = [1, 1]} : vector<16x32xf32> to vector<8x8xf32>
    %377 = vector.extract_strided_slice %272 {offsets = [8, 0], sizes = [8, 8], strides = [1, 1]} : vector<16x32xf32> to vector<8x8xf32>
    %378 = vector.extract_strided_slice %273 {offsets = [8, 0], sizes = [8, 8], strides = [1, 1]} : vector<16x32xf32> to vector<8x8xf32>
    %cst_158 = arith.constant dense<0.000000e+00> : vector<8x8xf32>
    %379 = tpu.matmul %376, %377, %cst_158 {dimension_numbers = #tpu.dot_dimension_numbers<[1], [1], [0], [0], [0, 0, 1, 0], [], []>} : vector<8x8xf32>, vector<8x8xf32>, vector<8x8xf32> -> vector<8x8xf32>
    %cst_159 = arith.constant 0.000000e+00 : f32
    %380 = vector.broadcast %cst_159 : f32 to vector<8x8xf32>
    %381 = arith.cmpf oeq, %374, %380 : vector<8x8xf32>
    %cst_160 = arith.constant -1.000000e+09 : f32
    %382 = vector.broadcast %cst_160 : f32 to vector<8x8xf32>
    %383 = arith.select %381, %382, %379 : vector<8x8xi1>, vector<8x8xf32>
    %cst_161 = arith.constant dense<0xFF800000> : vector<8xf32>
    %384 = vector.multi_reduction <maximumf>, %383, %cst_161 [1] : vector<8x8xf32> to vector<8xf32>
    %385 = vector.shape_cast %384 : vector<8xf32> to vector<8x1xf32>
    %386 = vector.broadcast %385 : vector<8x1xf32> to vector<8x8xf32>
    %387 = arith.subf %383, %386 : vector<8x8xf32>
    %388 = math.exp %387 : vector<8x8xf32>
    %cst_162 = arith.constant dense<0.000000e+00> : vector<8xf32>
    %389 = vector.multi_reduction <add>, %388, %cst_162 [1] : vector<8x8xf32> to vector<8xf32>
    %390 = vector.shape_cast %389 : vector<8xf32> to vector<8x1xf32>
    %391 = tpu.reciprocal %390 {approx = true} : vector<8x1xf32> -> vector<8x1xf32>
    %392 = vector.broadcast %391 : vector<8x1xf32> to vector<8x8xf32>
    %393 = arith.mulf %388, %392 : vector<8x8xf32>
    %cst_163 = arith.constant dense<0.000000e+00> : vector<8x8xf32>
    %394 = tpu.matmul %393, %378, %cst_163 {dimension_numbers = #tpu.dot_dimension_numbers<[1], [0], [0], [1], [0, 0, 1, 1], [], []>} : vector<8x8xf32>, vector<8x8xf32>, vector<8x8xf32> -> vector<8x8xf32>
    %395 = vector.extract_strided_slice %275 {offsets = [0, 0], sizes = [8, 32], strides = [1, 1]} : vector<32x32xf32> to vector<8x32xf32>
    %cst_164 = arith.constant dense<0.000000e+00> : vector<8x32xf32>
    %396 = tpu.matmul %394, %395, %cst_164 {dimension_numbers = #tpu.dot_dimension_numbers<[1], [0], [0], [1], [0, 0, 1, 1], [], []>} : vector<8x8xf32>, vector<8x32xf32>, vector<8x32xf32> -> vector<8x32xf32>
    %397 = arith.addf %375, %396 : vector<8x32xf32>
    %398 = vector.extract_strided_slice %279 {offsets = [8, 8], sizes = [8, 8], strides = [1, 1]} : vector<16x32xf32> to vector<8x8xf32>
    %399 = vector.extract_strided_slice %272 {offsets = [8, 8], sizes = [8, 8], strides = [1, 1]} : vector<16x32xf32> to vector<8x8xf32>
    %400 = vector.extract_strided_slice %273 {offsets = [8, 8], sizes = [8, 8], strides = [1, 1]} : vector<16x32xf32> to vector<8x8xf32>
    %cst_165 = arith.constant dense<0.000000e+00> : vector<8x8xf32>
    %401 = tpu.matmul %398, %399, %cst_165 {dimension_numbers = #tpu.dot_dimension_numbers<[1], [1], [0], [0], [0, 0, 1, 0], [], []>} : vector<8x8xf32>, vector<8x8xf32>, vector<8x8xf32> -> vector<8x8xf32>
    %cst_166 = arith.constant 0.000000e+00 : f32
    %402 = vector.broadcast %cst_166 : f32 to vector<8x8xf32>
    %403 = arith.cmpf oeq, %374, %402 : vector<8x8xf32>
    %cst_167 = arith.constant -1.000000e+09 : f32
    %404 = vector.broadcast %cst_167 : f32 to vector<8x8xf32>
    %405 = arith.select %403, %404, %401 : vector<8x8xi1>, vector<8x8xf32>
    %cst_168 = arith.constant dense<0xFF800000> : vector<8xf32>
    %406 = vector.multi_reduction <maximumf>, %405, %cst_168 [1] : vector<8x8xf32> to vector<8xf32>
    %407 = vector.shape_cast %406 : vector<8xf32> to vector<8x1xf32>
    %408 = vector.broadcast %407 : vector<8x1xf32> to vector<8x8xf32>
    %409 = arith.subf %405, %408 : vector<8x8xf32>
    %410 = math.exp %409 : vector<8x8xf32>
    %cst_169 = arith.constant dense<0.000000e+00> : vector<8xf32>
    %411 = vector.multi_reduction <add>, %410, %cst_169 [1] : vector<8x8xf32> to vector<8xf32>
    %412 = vector.shape_cast %411 : vector<8xf32> to vector<8x1xf32>
    %413 = tpu.reciprocal %412 {approx = true} : vector<8x1xf32> -> vector<8x1xf32>
    %414 = vector.broadcast %413 : vector<8x1xf32> to vector<8x8xf32>
    %415 = arith.mulf %410, %414 : vector<8x8xf32>
    %cst_170 = arith.constant dense<0.000000e+00> : vector<8x8xf32>
    %416 = tpu.matmul %415, %400, %cst_170 {dimension_numbers = #tpu.dot_dimension_numbers<[1], [0], [0], [1], [0, 0, 1, 1], [], []>} : vector<8x8xf32>, vector<8x8xf32>, vector<8x8xf32> -> vector<8x8xf32>
    %417 = vector.extract_strided_slice %275 {offsets = [8, 0], sizes = [8, 32], strides = [1, 1]} : vector<32x32xf32> to vector<8x32xf32>
    %cst_171 = arith.constant dense<0.000000e+00> : vector<8x32xf32>
    %418 = tpu.matmul %416, %417, %cst_171 {dimension_numbers = #tpu.dot_dimension_numbers<[1], [0], [0], [1], [0, 0, 1, 1], [], []>} : vector<8x8xf32>, vector<8x32xf32>, vector<8x32xf32> -> vector<8x32xf32>
    %419 = arith.addf %397, %418 : vector<8x32xf32>
    %420 = vector.extract_strided_slice %279 {offsets = [8, 16], sizes = [8, 8], strides = [1, 1]} : vector<16x32xf32> to vector<8x8xf32>
    %421 = vector.extract_strided_slice %272 {offsets = [8, 16], sizes = [8, 8], strides = [1, 1]} : vector<16x32xf32> to vector<8x8xf32>
    %422 = vector.extract_strided_slice %273 {offsets = [8, 16], sizes = [8, 8], strides = [1, 1]} : vector<16x32xf32> to vector<8x8xf32>
    %cst_172 = arith.constant dense<0.000000e+00> : vector<8x8xf32>
    %423 = tpu.matmul %420, %421, %cst_172 {dimension_numbers = #tpu.dot_dimension_numbers<[1], [1], [0], [0], [0, 0, 1, 0], [], []>} : vector<8x8xf32>, vector<8x8xf32>, vector<8x8xf32> -> vector<8x8xf32>
    %cst_173 = arith.constant 0.000000e+00 : f32
    %424 = vector.broadcast %cst_173 : f32 to vector<8x8xf32>
    %425 = arith.cmpf oeq, %374, %424 : vector<8x8xf32>
    %cst_174 = arith.constant -1.000000e+09 : f32
    %426 = vector.broadcast %cst_174 : f32 to vector<8x8xf32>
    %427 = arith.select %425, %426, %423 : vector<8x8xi1>, vector<8x8xf32>
    %cst_175 = arith.constant dense<0xFF800000> : vector<8xf32>
    %428 = vector.multi_reduction <maximumf>, %427, %cst_175 [1] : vector<8x8xf32> to vector<8xf32>
    %429 = vector.shape_cast %428 : vector<8xf32> to vector<8x1xf32>
    %430 = vector.broadcast %429 : vector<8x1xf32> to vector<8x8xf32>
    %431 = arith.subf %427, %430 : vector<8x8xf32>
    %432 = math.exp %431 : vector<8x8xf32>
    %cst_176 = arith.constant dense<0.000000e+00> : vector<8xf32>
    %433 = vector.multi_reduction <add>, %432, %cst_176 [1] : vector<8x8xf32> to vector<8xf32>
    %434 = vector.shape_cast %433 : vector<8xf32> to vector<8x1xf32>
    %435 = tpu.reciprocal %434 {approx = true} : vector<8x1xf32> -> vector<8x1xf32>
    %436 = vector.broadcast %435 : vector<8x1xf32> to vector<8x8xf32>
    %437 = arith.mulf %432, %436 : vector<8x8xf32>
    %cst_177 = arith.constant dense<0.000000e+00> : vector<8x8xf32>
    %438 = tpu.matmul %437, %422, %cst_177 {dimension_numbers = #tpu.dot_dimension_numbers<[1], [0], [0], [1], [0, 0, 1, 1], [], []>} : vector<8x8xf32>, vector<8x8xf32>, vector<8x8xf32> -> vector<8x8xf32>
    %439 = vector.extract_strided_slice %275 {offsets = [16, 0], sizes = [8, 32], strides = [1, 1]} : vector<32x32xf32> to vector<8x32xf32>
    %cst_178 = arith.constant dense<0.000000e+00> : vector<8x32xf32>
    %440 = tpu.matmul %438, %439, %cst_178 {dimension_numbers = #tpu.dot_dimension_numbers<[1], [0], [0], [1], [0, 0, 1, 1], [], []>} : vector<8x8xf32>, vector<8x32xf32>, vector<8x32xf32> -> vector<8x32xf32>
    %441 = arith.addf %419, %440 : vector<8x32xf32>
    %442 = vector.extract_strided_slice %279 {offsets = [8, 24], sizes = [8, 8], strides = [1, 1]} : vector<16x32xf32> to vector<8x8xf32>
    %443 = vector.extract_strided_slice %272 {offsets = [8, 24], sizes = [8, 8], strides = [1, 1]} : vector<16x32xf32> to vector<8x8xf32>
    %444 = vector.extract_strided_slice %273 {offsets = [8, 24], sizes = [8, 8], strides = [1, 1]} : vector<16x32xf32> to vector<8x8xf32>
    %cst_179 = arith.constant dense<0.000000e+00> : vector<8x8xf32>
    %445 = tpu.matmul %442, %443, %cst_179 {dimension_numbers = #tpu.dot_dimension_numbers<[1], [1], [0], [0], [0, 0, 1, 0], [], []>} : vector<8x8xf32>, vector<8x8xf32>, vector<8x8xf32> -> vector<8x8xf32>
    %cst_180 = arith.constant 0.000000e+00 : f32
    %446 = vector.broadcast %cst_180 : f32 to vector<8x8xf32>
    %447 = arith.cmpf oeq, %374, %446 : vector<8x8xf32>
    %cst_181 = arith.constant -1.000000e+09 : f32
    %448 = vector.broadcast %cst_181 : f32 to vector<8x8xf32>
    %449 = arith.select %447, %448, %445 : vector<8x8xi1>, vector<8x8xf32>
    %cst_182 = arith.constant dense<0xFF800000> : vector<8xf32>
    %450 = vector.multi_reduction <maximumf>, %449, %cst_182 [1] : vector<8x8xf32> to vector<8xf32>
    %451 = vector.shape_cast %450 : vector<8xf32> to vector<8x1xf32>
    %452 = vector.broadcast %451 : vector<8x1xf32> to vector<8x8xf32>
    %453 = arith.subf %449, %452 : vector<8x8xf32>
    %454 = math.exp %453 : vector<8x8xf32>
    %cst_183 = arith.constant dense<0.000000e+00> : vector<8xf32>
    %455 = vector.multi_reduction <add>, %454, %cst_183 [1] : vector<8x8xf32> to vector<8xf32>
    %456 = vector.shape_cast %455 : vector<8xf32> to vector<8x1xf32>
    %457 = tpu.reciprocal %456 {approx = true} : vector<8x1xf32> -> vector<8x1xf32>
    %458 = vector.broadcast %457 : vector<8x1xf32> to vector<8x8xf32>
    %459 = arith.mulf %454, %458 : vector<8x8xf32>
    %cst_184 = arith.constant dense<0.000000e+00> : vector<8x8xf32>
    %460 = tpu.matmul %459, %444, %cst_184 {dimension_numbers = #tpu.dot_dimension_numbers<[1], [0], [0], [1], [0, 0, 1, 1], [], []>} : vector<8x8xf32>, vector<8x8xf32>, vector<8x8xf32> -> vector<8x8xf32>
    %461 = vector.extract_strided_slice %275 {offsets = [24, 0], sizes = [8, 32], strides = [1, 1]} : vector<32x32xf32> to vector<8x32xf32>
    %cst_185 = arith.constant dense<0.000000e+00> : vector<8x32xf32>
    %462 = tpu.matmul %460, %461, %cst_185 {dimension_numbers = #tpu.dot_dimension_numbers<[1], [0], [0], [1], [0, 0, 1, 1], [], []>} : vector<8x8xf32>, vector<8x32xf32>, vector<8x32xf32> -> vector<8x32xf32>
    %463 = arith.addf %441, %462 : vector<8x32xf32>
    %464 = vector.broadcast %277 : vector<1x32xf32> to vector<8x32xf32>
    %465 = arith.addf %463, %464 : vector<8x32xf32>
    %466 = tpu.concatenate %372, %465 in 0 : vector<8x32xf32>, vector<8x32xf32> -> vector<16x32xf32>
    %467 = arith.addf %231, %466 : vector<16x32xf32>
    %c2 = arith.constant 2 : index
    %c0_186 = arith.constant 0 : index
    %c0_187 = arith.constant 0 : index
    %468 = vector.load %arg18[%c2, %c0_186, %c0_187] : memref<7x1x32xf32, #tpu.memory_space<vmem>>, vector<1x1x32xf32>
    %469 = vector.shape_cast %468 : vector<1x1x32xf32> to vector<1x32xf32>
    %c2_188 = arith.constant 2 : index
    %c0_189 = arith.constant 0 : index
    %c0_190 = arith.constant 0 : index
    %470 = vector.load %arg19[%c2_188, %c0_189, %c0_190] : memref<7x1x32xf32, #tpu.memory_space<vmem>>, vector<1x1x32xf32>
    %471 = vector.shape_cast %470 : vector<1x1x32xf32> to vector<1x32xf32>
    %cst_191 = arith.constant dense<0.000000e+00> : vector<16xf32>
    %472 = vector.multi_reduction <add>, %467, %cst_191 [1] : vector<16x32xf32> to vector<16xf32>
    %473 = vector.shape_cast %472 : vector<16xf32> to vector<16x1xf32>
    %cst_192 = arith.constant 3.200000e+01 : f32
    %474 = vector.broadcast %cst_192 : f32 to vector<16x1xf32>
    %475 = arith.divf %473, %474 : vector<16x1xf32>
    %476 = vector.broadcast %475 : vector<16x1xf32> to vector<16x32xf32>
    %477 = arith.subf %467, %476 : vector<16x32xf32>
    %478 = arith.mulf %477, %477 : vector<16x32xf32>
    %cst_193 = arith.constant dense<0.000000e+00> : vector<16xf32>
    %479 = vector.multi_reduction <add>, %478, %cst_193 [1] : vector<16x32xf32> to vector<16xf32>
    %480 = vector.shape_cast %479 : vector<16xf32> to vector<16x1xf32>
    %cst_194 = arith.constant 3.100000e+01 : f32
    %481 = vector.broadcast %cst_194 : f32 to vector<16x1xf32>
    %482 = arith.divf %480, %481 : vector<16x1xf32>
    %483 = math.sqrt %482 : vector<16x1xf32>
    %484 = vector.broadcast %475 : vector<16x1xf32> to vector<16x32xf32>
    %485 = arith.subf %467, %484 : vector<16x32xf32>
    %486 = vector.broadcast %469 : vector<1x32xf32> to vector<16x32xf32>
    %487 = arith.mulf %486, %485 : vector<16x32xf32>
    %cst_195 = arith.constant 9.99999997E-7 : f32
    %488 = vector.broadcast %cst_195 : f32 to vector<16x1xf32>
    %489 = arith.addf %483, %488 : vector<16x1xf32>
    %490 = vector.broadcast %489 : vector<16x1xf32> to vector<16x32xf32>
    %491 = arith.divf %487, %490 : vector<16x32xf32>
    %492 = vector.broadcast %471 : vector<1x32xf32> to vector<16x32xf32>
    %493 = arith.addf %491, %492 : vector<16x32xf32>
    %c0_196 = arith.constant 0 : index
    %c0_197 = arith.constant 0 : index
    %c0_198 = arith.constant 0 : index
    %494 = vector.load %arg14[%c0_196, %c0_197, %c0_198] : memref<2x32x64xf32, #tpu.memory_space<vmem>>, vector<1x32x64xf32>
    %495 = vector.shape_cast %494 : vector<1x32x64xf32> to vector<32x64xf32>
    %cst_199 = arith.constant dense<0.000000e+00> : vector<16x64xf32>
    %496 = tpu.matmul %493, %495, %cst_199 {dimension_numbers = #tpu.dot_dimension_numbers<[1], [0], [0], [1], [0, 0, 1, 1], [], []>} : vector<16x32xf32>, vector<32x64xf32>, vector<16x64xf32> -> vector<16x64xf32>
    %c0_200 = arith.constant 0 : index
    %c0_201 = arith.constant 0 : index
    %c0_202 = arith.constant 0 : index
    %497 = vector.load %arg15[%c0_200, %c0_201, %c0_202] : memref<2x1x64xf32, #tpu.memory_space<vmem>>, vector<1x1x64xf32>
    %498 = vector.shape_cast %497 : vector<1x1x64xf32> to vector<1x64xf32>
    %499 = vector.broadcast %498 : vector<1x64xf32> to vector<16x64xf32>
    %500 = arith.addf %496, %499 : vector<16x64xf32>
    %cst_203 = arith.constant 0.000000e+00 : f32
    %501 = vector.broadcast %cst_203 : f32 to vector<16x64xf32>
    %502 = arith.maximumf %500, %501 : vector<16x64xf32>
    %c0_204 = arith.constant 0 : index
    %c0_205 = arith.constant 0 : index
    %c0_206 = arith.constant 0 : index
    %503 = vector.load %arg16[%c0_204, %c0_205, %c0_206] : memref<2x64x32xf32, #tpu.memory_space<vmem>>, vector<1x64x32xf32>
    %504 = vector.shape_cast %503 : vector<1x64x32xf32> to vector<64x32xf32>
    %cst_207 = arith.constant dense<0.000000e+00> : vector<16x32xf32>
    %505 = tpu.matmul %502, %504, %cst_207 {dimension_numbers = #tpu.dot_dimension_numbers<[1], [0], [0], [1], [0, 0, 1, 1], [], []>} : vector<16x64xf32>, vector<64x32xf32>, vector<16x32xf32> -> vector<16x32xf32>
    %506 = arith.addf %467, %505 : vector<16x32xf32>
    %c0_208 = arith.constant 0 : index
    %c0_209 = arith.constant 0 : index
    %c0_210 = arith.constant 0 : index
    %507 = vector.load %arg17[%c0_208, %c0_209, %c0_210] : memref<2x1x32xf32, #tpu.memory_space<vmem>>, vector<1x1x32xf32>
    %508 = vector.shape_cast %507 : vector<1x1x32xf32> to vector<1x32xf32>
    %509 = vector.broadcast %508 : vector<1x32xf32> to vector<16x32xf32>
    %510 = arith.addf %506, %509 : vector<16x32xf32>
    %c3 = arith.constant 3 : index
    %c0_211 = arith.constant 0 : index
    %c0_212 = arith.constant 0 : index
    %511 = vector.load %arg18[%c3, %c0_211, %c0_212] : memref<7x1x32xf32, #tpu.memory_space<vmem>>, vector<1x1x32xf32>
    %512 = vector.shape_cast %511 : vector<1x1x32xf32> to vector<1x32xf32>
    %c3_213 = arith.constant 3 : index
    %c0_214 = arith.constant 0 : index
    %c0_215 = arith.constant 0 : index
    %513 = vector.load %arg19[%c3_213, %c0_214, %c0_215] : memref<7x1x32xf32, #tpu.memory_space<vmem>>, vector<1x1x32xf32>
    %514 = vector.shape_cast %513 : vector<1x1x32xf32> to vector<1x32xf32>
    %cst_216 = arith.constant dense<0.000000e+00> : vector<16xf32>
    %515 = vector.multi_reduction <add>, %510, %cst_216 [1] : vector<16x32xf32> to vector<16xf32>
    %516 = vector.shape_cast %515 : vector<16xf32> to vector<16x1xf32>
    %cst_217 = arith.constant 3.200000e+01 : f32
    %517 = vector.broadcast %cst_217 : f32 to vector<16x1xf32>
    %518 = arith.divf %516, %517 : vector<16x1xf32>
    %519 = vector.broadcast %518 : vector<16x1xf32> to vector<16x32xf32>
    %520 = arith.subf %510, %519 : vector<16x32xf32>
    %521 = arith.mulf %520, %520 : vector<16x32xf32>
    %cst_218 = arith.constant dense<0.000000e+00> : vector<16xf32>
    %522 = vector.multi_reduction <add>, %521, %cst_218 [1] : vector<16x32xf32> to vector<16xf32>
    %523 = vector.shape_cast %522 : vector<16xf32> to vector<16x1xf32>
    %cst_219 = arith.constant 3.100000e+01 : f32
    %524 = vector.broadcast %cst_219 : f32 to vector<16x1xf32>
    %525 = arith.divf %523, %524 : vector<16x1xf32>
    %526 = math.sqrt %525 : vector<16x1xf32>
    %527 = vector.broadcast %518 : vector<16x1xf32> to vector<16x32xf32>
    %528 = arith.subf %510, %527 : vector<16x32xf32>
    %529 = vector.broadcast %512 : vector<1x32xf32> to vector<16x32xf32>
    %530 = arith.mulf %529, %528 : vector<16x32xf32>
    %cst_220 = arith.constant 9.99999997E-7 : f32
    %531 = vector.broadcast %cst_220 : f32 to vector<16x1xf32>
    %532 = arith.addf %526, %531 : vector<16x1xf32>
    %533 = vector.broadcast %532 : vector<16x1xf32> to vector<16x32xf32>
    %534 = arith.divf %530, %533 : vector<16x32xf32>
    %535 = vector.broadcast %514 : vector<1x32xf32> to vector<16x32xf32>
    %536 = arith.addf %534, %535 : vector<16x32xf32>
    %c1_221 = arith.constant 1 : index
    %c0_222 = arith.constant 0 : index
    %c0_223 = arith.constant 0 : index
    %537 = vector.load %arg4[%c1_221, %c0_222, %c0_223] : memref<2x32x96xf32, #tpu.memory_space<vmem>>, vector<1x32x96xf32>
    %538 = vector.shape_cast %537 : vector<1x32x96xf32> to vector<32x96xf32>
    %cst_224 = arith.constant dense<0.000000e+00> : vector<16x96xf32>
    %539 = tpu.matmul %536, %538, %cst_224 {dimension_numbers = #tpu.dot_dimension_numbers<[1], [0], [0], [1], [0, 0, 1, 1], [], []>} : vector<16x32xf32>, vector<32x96xf32>, vector<16x96xf32> -> vector<16x96xf32>
    %c1_225 = arith.constant 1 : index
    %c0_226 = arith.constant 0 : index
    %c0_227 = arith.constant 0 : index
    %540 = vector.load %arg5[%c1_225, %c0_226, %c0_227] : memref<2x1x96xf32, #tpu.memory_space<vmem>>, vector<1x1x96xf32>
    %541 = vector.shape_cast %540 : vector<1x1x96xf32> to vector<1x96xf32>
    %542 = vector.broadcast %541 : vector<1x96xf32> to vector<16x96xf32>
    %543 = arith.addf %539, %542 : vector<16x96xf32>
    %544 = vector.extract_strided_slice %543 {offsets = [0, 0], sizes = [16, 32], strides = [1, 1]} : vector<16x96xf32> to vector<16x32xf32>
    %545 = vector.extract_strided_slice %543 {offsets = [0, 32], sizes = [16, 32], strides = [1, 1]} : vector<16x96xf32> to vector<16x32xf32>
    %546 = vector.extract_strided_slice %543 {offsets = [0, 64], sizes = [16, 32], strides = [1, 1]} : vector<16x96xf32> to vector<16x32xf32>
    %c1_228 = arith.constant 1 : index
    %c0_229 = arith.constant 0 : index
    %c0_230 = arith.constant 0 : index
    %547 = vector.load %arg6[%c1_228, %c0_229, %c0_230] : memref<2x32x32xf32, #tpu.memory_space<vmem>>, vector<1x32x32xf32>
    %548 = vector.shape_cast %547 : vector<1x32x32xf32> to vector<32x32xf32>
    %c1_231 = arith.constant 1 : index
    %c0_232 = arith.constant 0 : index
    %c0_233 = arith.constant 0 : index
    %549 = vector.load %arg7[%c1_231, %c0_232, %c0_233] : memref<2x1x32xf32, #tpu.memory_space<vmem>>, vector<1x1x32xf32>
    %550 = vector.shape_cast %549 : vector<1x1x32xf32> to vector<1x32xf32>
    %cst_234 = arith.constant 0.353553385 : f32
    %551 = vector.broadcast %cst_234 : f32 to vector<16x32xf32>
    %552 = arith.mulf %544, %551 : vector<16x32xf32>
    %c0_235 = arith.constant 0 : index
    %c0_236 = arith.constant 0 : index
    %c0_237 = arith.constant 0 : index
    %553 = vector.load %arg2[%c0_235, %c0_236, %c0_237] : memref<2x8x8xf32, #tpu.memory_space<vmem>>, vector<1x8x8xf32>
    %554 = vector.shape_cast %553 : vector<1x8x8xf32> to vector<8x8xf32>
    %cst_238 = arith.constant 0.000000e+00 : f32
    %555 = vector.broadcast %cst_238 : f32 to vector<8x32xf32>
    %556 = vector.extract_strided_slice %552 {offsets = [0, 0], sizes = [8, 8], strides = [1, 1]} : vector<16x32xf32> to vector<8x8xf32>
    %557 = vector.extract_strided_slice %545 {offsets = [0, 0], sizes = [8, 8], strides = [1, 1]} : vector<16x32xf32> to vector<8x8xf32>
    %558 = vector.extract_strided_slice %546 {offsets = [0, 0], sizes = [8, 8], strides = [1, 1]} : vector<16x32xf32> to vector<8x8xf32>
    %cst_239 = arith.constant dense<0.000000e+00> : vector<8x8xf32>
    %559 = tpu.matmul %556, %557, %cst_239 {dimension_numbers = #tpu.dot_dimension_numbers<[1], [1], [0], [0], [0, 0, 1, 0], [], []>} : vector<8x8xf32>, vector<8x8xf32>, vector<8x8xf32> -> vector<8x8xf32>
    %cst_240 = arith.constant 0.000000e+00 : f32
    %560 = vector.broadcast %cst_240 : f32 to vector<8x8xf32>
    %561 = arith.cmpf oeq, %554, %560 : vector<8x8xf32>
    %cst_241 = arith.constant -1.000000e+09 : f32
    %562 = vector.broadcast %cst_241 : f32 to vector<8x8xf32>
    %563 = arith.select %561, %562, %559 : vector<8x8xi1>, vector<8x8xf32>
    %cst_242 = arith.constant dense<0xFF800000> : vector<8xf32>
    %564 = vector.multi_reduction <maximumf>, %563, %cst_242 [1] : vector<8x8xf32> to vector<8xf32>
    %565 = vector.shape_cast %564 : vector<8xf32> to vector<8x1xf32>
    %566 = vector.broadcast %565 : vector<8x1xf32> to vector<8x8xf32>
    %567 = arith.subf %563, %566 : vector<8x8xf32>
    %568 = math.exp %567 : vector<8x8xf32>
    %cst_243 = arith.constant dense<0.000000e+00> : vector<8xf32>
    %569 = vector.multi_reduction <add>, %568, %cst_243 [1] : vector<8x8xf32> to vector<8xf32>
    %570 = vector.shape_cast %569 : vector<8xf32> to vector<8x1xf32>
    %571 = tpu.reciprocal %570 {approx = true} : vector<8x1xf32> -> vector<8x1xf32>
    %572 = vector.broadcast %571 : vector<8x1xf32> to vector<8x8xf32>
    %573 = arith.mulf %568, %572 : vector<8x8xf32>
    %cst_244 = arith.constant dense<0.000000e+00> : vector<8x8xf32>
    %574 = tpu.matmul %573, %558, %cst_244 {dimension_numbers = #tpu.dot_dimension_numbers<[1], [0], [0], [1], [0, 0, 1, 1], [], []>} : vector<8x8xf32>, vector<8x8xf32>, vector<8x8xf32> -> vector<8x8xf32>
    %575 = vector.extract_strided_slice %548 {offsets = [0, 0], sizes = [8, 32], strides = [1, 1]} : vector<32x32xf32> to vector<8x32xf32>
    %cst_245 = arith.constant dense<0.000000e+00> : vector<8x32xf32>
    %576 = tpu.matmul %574, %575, %cst_245 {dimension_numbers = #tpu.dot_dimension_numbers<[1], [0], [0], [1], [0, 0, 1, 1], [], []>} : vector<8x8xf32>, vector<8x32xf32>, vector<8x32xf32> -> vector<8x32xf32>
    %577 = arith.addf %555, %576 : vector<8x32xf32>
    %578 = vector.extract_strided_slice %552 {offsets = [0, 8], sizes = [8, 8], strides = [1, 1]} : vector<16x32xf32> to vector<8x8xf32>
    %579 = vector.extract_strided_slice %545 {offsets = [0, 8], sizes = [8, 8], strides = [1, 1]} : vector<16x32xf32> to vector<8x8xf32>
    %580 = vector.extract_strided_slice %546 {offsets = [0, 8], sizes = [8, 8], strides = [1, 1]} : vector<16x32xf32> to vector<8x8xf32>
    %cst_246 = arith.constant dense<0.000000e+00> : vector<8x8xf32>
    %581 = tpu.matmul %578, %579, %cst_246 {dimension_numbers = #tpu.dot_dimension_numbers<[1], [1], [0], [0], [0, 0, 1, 0], [], []>} : vector<8x8xf32>, vector<8x8xf32>, vector<8x8xf32> -> vector<8x8xf32>
    %cst_247 = arith.constant 0.000000e+00 : f32
    %582 = vector.broadcast %cst_247 : f32 to vector<8x8xf32>
    %583 = arith.cmpf oeq, %554, %582 : vector<8x8xf32>
    %cst_248 = arith.constant -1.000000e+09 : f32
    %584 = vector.broadcast %cst_248 : f32 to vector<8x8xf32>
    %585 = arith.select %583, %584, %581 : vector<8x8xi1>, vector<8x8xf32>
    %cst_249 = arith.constant dense<0xFF800000> : vector<8xf32>
    %586 = vector.multi_reduction <maximumf>, %585, %cst_249 [1] : vector<8x8xf32> to vector<8xf32>
    %587 = vector.shape_cast %586 : vector<8xf32> to vector<8x1xf32>
    %588 = vector.broadcast %587 : vector<8x1xf32> to vector<8x8xf32>
    %589 = arith.subf %585, %588 : vector<8x8xf32>
    %590 = math.exp %589 : vector<8x8xf32>
    %cst_250 = arith.constant dense<0.000000e+00> : vector<8xf32>
    %591 = vector.multi_reduction <add>, %590, %cst_250 [1] : vector<8x8xf32> to vector<8xf32>
    %592 = vector.shape_cast %591 : vector<8xf32> to vector<8x1xf32>
    %593 = tpu.reciprocal %592 {approx = true} : vector<8x1xf32> -> vector<8x1xf32>
    %594 = vector.broadcast %593 : vector<8x1xf32> to vector<8x8xf32>
    %595 = arith.mulf %590, %594 : vector<8x8xf32>
    %cst_251 = arith.constant dense<0.000000e+00> : vector<8x8xf32>
    %596 = tpu.matmul %595, %580, %cst_251 {dimension_numbers = #tpu.dot_dimension_numbers<[1], [0], [0], [1], [0, 0, 1, 1], [], []>} : vector<8x8xf32>, vector<8x8xf32>, vector<8x8xf32> -> vector<8x8xf32>
    %597 = vector.extract_strided_slice %548 {offsets = [8, 0], sizes = [8, 32], strides = [1, 1]} : vector<32x32xf32> to vector<8x32xf32>
    %cst_252 = arith.constant dense<0.000000e+00> : vector<8x32xf32>
    %598 = tpu.matmul %596, %597, %cst_252 {dimension_numbers = #tpu.dot_dimension_numbers<[1], [0], [0], [1], [0, 0, 1, 1], [], []>} : vector<8x8xf32>, vector<8x32xf32>, vector<8x32xf32> -> vector<8x32xf32>
    %599 = arith.addf %577, %598 : vector<8x32xf32>
    %600 = vector.extract_strided_slice %552 {offsets = [0, 16], sizes = [8, 8], strides = [1, 1]} : vector<16x32xf32> to vector<8x8xf32>
    %601 = vector.extract_strided_slice %545 {offsets = [0, 16], sizes = [8, 8], strides = [1, 1]} : vector<16x32xf32> to vector<8x8xf32>
    %602 = vector.extract_strided_slice %546 {offsets = [0, 16], sizes = [8, 8], strides = [1, 1]} : vector<16x32xf32> to vector<8x8xf32>
    %cst_253 = arith.constant dense<0.000000e+00> : vector<8x8xf32>
    %603 = tpu.matmul %600, %601, %cst_253 {dimension_numbers = #tpu.dot_dimension_numbers<[1], [1], [0], [0], [0, 0, 1, 0], [], []>} : vector<8x8xf32>, vector<8x8xf32>, vector<8x8xf32> -> vector<8x8xf32>
    %cst_254 = arith.constant 0.000000e+00 : f32
    %604 = vector.broadcast %cst_254 : f32 to vector<8x8xf32>
    %605 = arith.cmpf oeq, %554, %604 : vector<8x8xf32>
    %cst_255 = arith.constant -1.000000e+09 : f32
    %606 = vector.broadcast %cst_255 : f32 to vector<8x8xf32>
    %607 = arith.select %605, %606, %603 : vector<8x8xi1>, vector<8x8xf32>
    %cst_256 = arith.constant dense<0xFF800000> : vector<8xf32>
    %608 = vector.multi_reduction <maximumf>, %607, %cst_256 [1] : vector<8x8xf32> to vector<8xf32>
    %609 = vector.shape_cast %608 : vector<8xf32> to vector<8x1xf32>
    %610 = vector.broadcast %609 : vector<8x1xf32> to vector<8x8xf32>
    %611 = arith.subf %607, %610 : vector<8x8xf32>
    %612 = math.exp %611 : vector<8x8xf32>
    %cst_257 = arith.constant dense<0.000000e+00> : vector<8xf32>
    %613 = vector.multi_reduction <add>, %612, %cst_257 [1] : vector<8x8xf32> to vector<8xf32>
    %614 = vector.shape_cast %613 : vector<8xf32> to vector<8x1xf32>
    %615 = tpu.reciprocal %614 {approx = true} : vector<8x1xf32> -> vector<8x1xf32>
    %616 = vector.broadcast %615 : vector<8x1xf32> to vector<8x8xf32>
    %617 = arith.mulf %612, %616 : vector<8x8xf32>
    %cst_258 = arith.constant dense<0.000000e+00> : vector<8x8xf32>
    %618 = tpu.matmul %617, %602, %cst_258 {dimension_numbers = #tpu.dot_dimension_numbers<[1], [0], [0], [1], [0, 0, 1, 1], [], []>} : vector<8x8xf32>, vector<8x8xf32>, vector<8x8xf32> -> vector<8x8xf32>
    %619 = vector.extract_strided_slice %548 {offsets = [16, 0], sizes = [8, 32], strides = [1, 1]} : vector<32x32xf32> to vector<8x32xf32>
    %cst_259 = arith.constant dense<0.000000e+00> : vector<8x32xf32>
    %620 = tpu.matmul %618, %619, %cst_259 {dimension_numbers = #tpu.dot_dimension_numbers<[1], [0], [0], [1], [0, 0, 1, 1], [], []>} : vector<8x8xf32>, vector<8x32xf32>, vector<8x32xf32> -> vector<8x32xf32>
    %621 = arith.addf %599, %620 : vector<8x32xf32>
    %622 = vector.extract_strided_slice %552 {offsets = [0, 24], sizes = [8, 8], strides = [1, 1]} : vector<16x32xf32> to vector<8x8xf32>
    %623 = vector.extract_strided_slice %545 {offsets = [0, 24], sizes = [8, 8], strides = [1, 1]} : vector<16x32xf32> to vector<8x8xf32>
    %624 = vector.extract_strided_slice %546 {offsets = [0, 24], sizes = [8, 8], strides = [1, 1]} : vector<16x32xf32> to vector<8x8xf32>
    %cst_260 = arith.constant dense<0.000000e+00> : vector<8x8xf32>
    %625 = tpu.matmul %622, %623, %cst_260 {dimension_numbers = #tpu.dot_dimension_numbers<[1], [1], [0], [0], [0, 0, 1, 0], [], []>} : vector<8x8xf32>, vector<8x8xf32>, vector<8x8xf32> -> vector<8x8xf32>
    %cst_261 = arith.constant 0.000000e+00 : f32
    %626 = vector.broadcast %cst_261 : f32 to vector<8x8xf32>
    %627 = arith.cmpf oeq, %554, %626 : vector<8x8xf32>
    %cst_262 = arith.constant -1.000000e+09 : f32
    %628 = vector.broadcast %cst_262 : f32 to vector<8x8xf32>
    %629 = arith.select %627, %628, %625 : vector<8x8xi1>, vector<8x8xf32>
    %cst_263 = arith.constant dense<0xFF800000> : vector<8xf32>
    %630 = vector.multi_reduction <maximumf>, %629, %cst_263 [1] : vector<8x8xf32> to vector<8xf32>
    %631 = vector.shape_cast %630 : vector<8xf32> to vector<8x1xf32>
    %632 = vector.broadcast %631 : vector<8x1xf32> to vector<8x8xf32>
    %633 = arith.subf %629, %632 : vector<8x8xf32>
    %634 = math.exp %633 : vector<8x8xf32>
    %cst_264 = arith.constant dense<0.000000e+00> : vector<8xf32>
    %635 = vector.multi_reduction <add>, %634, %cst_264 [1] : vector<8x8xf32> to vector<8xf32>
    %636 = vector.shape_cast %635 : vector<8xf32> to vector<8x1xf32>
    %637 = tpu.reciprocal %636 {approx = true} : vector<8x1xf32> -> vector<8x1xf32>
    %638 = vector.broadcast %637 : vector<8x1xf32> to vector<8x8xf32>
    %639 = arith.mulf %634, %638 : vector<8x8xf32>
    %cst_265 = arith.constant dense<0.000000e+00> : vector<8x8xf32>
    %640 = tpu.matmul %639, %624, %cst_265 {dimension_numbers = #tpu.dot_dimension_numbers<[1], [0], [0], [1], [0, 0, 1, 1], [], []>} : vector<8x8xf32>, vector<8x8xf32>, vector<8x8xf32> -> vector<8x8xf32>
    %641 = vector.extract_strided_slice %548 {offsets = [24, 0], sizes = [8, 32], strides = [1, 1]} : vector<32x32xf32> to vector<8x32xf32>
    %cst_266 = arith.constant dense<0.000000e+00> : vector<8x32xf32>
    %642 = tpu.matmul %640, %641, %cst_266 {dimension_numbers = #tpu.dot_dimension_numbers<[1], [0], [0], [1], [0, 0, 1, 1], [], []>} : vector<8x8xf32>, vector<8x32xf32>, vector<8x32xf32> -> vector<8x32xf32>
    %643 = arith.addf %621, %642 : vector<8x32xf32>
    %644 = vector.broadcast %550 : vector<1x32xf32> to vector<8x32xf32>
    %645 = arith.addf %643, %644 : vector<8x32xf32>
    %c1_267 = arith.constant 1 : index
    %c0_268 = arith.constant 0 : index
    %c0_269 = arith.constant 0 : index
    %646 = vector.load %arg2[%c1_267, %c0_268, %c0_269] : memref<2x8x8xf32, #tpu.memory_space<vmem>>, vector<1x8x8xf32>
    %647 = vector.shape_cast %646 : vector<1x8x8xf32> to vector<8x8xf32>
    %cst_270 = arith.constant 0.000000e+00 : f32
    %648 = vector.broadcast %cst_270 : f32 to vector<8x32xf32>
    %649 = vector.extract_strided_slice %552 {offsets = [8, 0], sizes = [8, 8], strides = [1, 1]} : vector<16x32xf32> to vector<8x8xf32>
    %650 = vector.extract_strided_slice %545 {offsets = [8, 0], sizes = [8, 8], strides = [1, 1]} : vector<16x32xf32> to vector<8x8xf32>
    %651 = vector.extract_strided_slice %546 {offsets = [8, 0], sizes = [8, 8], strides = [1, 1]} : vector<16x32xf32> to vector<8x8xf32>
    %cst_271 = arith.constant dense<0.000000e+00> : vector<8x8xf32>
    %652 = tpu.matmul %649, %650, %cst_271 {dimension_numbers = #tpu.dot_dimension_numbers<[1], [1], [0], [0], [0, 0, 1, 0], [], []>} : vector<8x8xf32>, vector<8x8xf32>, vector<8x8xf32> -> vector<8x8xf32>
    %cst_272 = arith.constant 0.000000e+00 : f32
    %653 = vector.broadcast %cst_272 : f32 to vector<8x8xf32>
    %654 = arith.cmpf oeq, %647, %653 : vector<8x8xf32>
    %cst_273 = arith.constant -1.000000e+09 : f32
    %655 = vector.broadcast %cst_273 : f32 to vector<8x8xf32>
    %656 = arith.select %654, %655, %652 : vector<8x8xi1>, vector<8x8xf32>
    %cst_274 = arith.constant dense<0xFF800000> : vector<8xf32>
    %657 = vector.multi_reduction <maximumf>, %656, %cst_274 [1] : vector<8x8xf32> to vector<8xf32>
    %658 = vector.shape_cast %657 : vector<8xf32> to vector<8x1xf32>
    %659 = vector.broadcast %658 : vector<8x1xf32> to vector<8x8xf32>
    %660 = arith.subf %656, %659 : vector<8x8xf32>
    %661 = math.exp %660 : vector<8x8xf32>
    %cst_275 = arith.constant dense<0.000000e+00> : vector<8xf32>
    %662 = vector.multi_reduction <add>, %661, %cst_275 [1] : vector<8x8xf32> to vector<8xf32>
    %663 = vector.shape_cast %662 : vector<8xf32> to vector<8x1xf32>
    %664 = tpu.reciprocal %663 {approx = true} : vector<8x1xf32> -> vector<8x1xf32>
    %665 = vector.broadcast %664 : vector<8x1xf32> to vector<8x8xf32>
    %666 = arith.mulf %661, %665 : vector<8x8xf32>
    %cst_276 = arith.constant dense<0.000000e+00> : vector<8x8xf32>
    %667 = tpu.matmul %666, %651, %cst_276 {dimension_numbers = #tpu.dot_dimension_numbers<[1], [0], [0], [1], [0, 0, 1, 1], [], []>} : vector<8x8xf32>, vector<8x8xf32>, vector<8x8xf32> -> vector<8x8xf32>
    %668 = vector.extract_strided_slice %548 {offsets = [0, 0], sizes = [8, 32], strides = [1, 1]} : vector<32x32xf32> to vector<8x32xf32>
    %cst_277 = arith.constant dense<0.000000e+00> : vector<8x32xf32>
    %669 = tpu.matmul %667, %668, %cst_277 {dimension_numbers = #tpu.dot_dimension_numbers<[1], [0], [0], [1], [0, 0, 1, 1], [], []>} : vector<8x8xf32>, vector<8x32xf32>, vector<8x32xf32> -> vector<8x32xf32>
    %670 = arith.addf %648, %669 : vector<8x32xf32>
    %671 = vector.extract_strided_slice %552 {offsets = [8, 8], sizes = [8, 8], strides = [1, 1]} : vector<16x32xf32> to vector<8x8xf32>
    %672 = vector.extract_strided_slice %545 {offsets = [8, 8], sizes = [8, 8], strides = [1, 1]} : vector<16x32xf32> to vector<8x8xf32>
    %673 = vector.extract_strided_slice %546 {offsets = [8, 8], sizes = [8, 8], strides = [1, 1]} : vector<16x32xf32> to vector<8x8xf32>
    %cst_278 = arith.constant dense<0.000000e+00> : vector<8x8xf32>
    %674 = tpu.matmul %671, %672, %cst_278 {dimension_numbers = #tpu.dot_dimension_numbers<[1], [1], [0], [0], [0, 0, 1, 0], [], []>} : vector<8x8xf32>, vector<8x8xf32>, vector<8x8xf32> -> vector<8x8xf32>
    %cst_279 = arith.constant 0.000000e+00 : f32
    %675 = vector.broadcast %cst_279 : f32 to vector<8x8xf32>
    %676 = arith.cmpf oeq, %647, %675 : vector<8x8xf32>
    %cst_280 = arith.constant -1.000000e+09 : f32
    %677 = vector.broadcast %cst_280 : f32 to vector<8x8xf32>
    %678 = arith.select %676, %677, %674 : vector<8x8xi1>, vector<8x8xf32>
    %cst_281 = arith.constant dense<0xFF800000> : vector<8xf32>
    %679 = vector.multi_reduction <maximumf>, %678, %cst_281 [1] : vector<8x8xf32> to vector<8xf32>
    %680 = vector.shape_cast %679 : vector<8xf32> to vector<8x1xf32>
    %681 = vector.broadcast %680 : vector<8x1xf32> to vector<8x8xf32>
    %682 = arith.subf %678, %681 : vector<8x8xf32>
    %683 = math.exp %682 : vector<8x8xf32>
    %cst_282 = arith.constant dense<0.000000e+00> : vector<8xf32>
    %684 = vector.multi_reduction <add>, %683, %cst_282 [1] : vector<8x8xf32> to vector<8xf32>
    %685 = vector.shape_cast %684 : vector<8xf32> to vector<8x1xf32>
    %686 = tpu.reciprocal %685 {approx = true} : vector<8x1xf32> -> vector<8x1xf32>
    %687 = vector.broadcast %686 : vector<8x1xf32> to vector<8x8xf32>
    %688 = arith.mulf %683, %687 : vector<8x8xf32>
    %cst_283 = arith.constant dense<0.000000e+00> : vector<8x8xf32>
    %689 = tpu.matmul %688, %673, %cst_283 {dimension_numbers = #tpu.dot_dimension_numbers<[1], [0], [0], [1], [0, 0, 1, 1], [], []>} : vector<8x8xf32>, vector<8x8xf32>, vector<8x8xf32> -> vector<8x8xf32>
    %690 = vector.extract_strided_slice %548 {offsets = [8, 0], sizes = [8, 32], strides = [1, 1]} : vector<32x32xf32> to vector<8x32xf32>
    %cst_284 = arith.constant dense<0.000000e+00> : vector<8x32xf32>
    %691 = tpu.matmul %689, %690, %cst_284 {dimension_numbers = #tpu.dot_dimension_numbers<[1], [0], [0], [1], [0, 0, 1, 1], [], []>} : vector<8x8xf32>, vector<8x32xf32>, vector<8x32xf32> -> vector<8x32xf32>
    %692 = arith.addf %670, %691 : vector<8x32xf32>
    %693 = vector.extract_strided_slice %552 {offsets = [8, 16], sizes = [8, 8], strides = [1, 1]} : vector<16x32xf32> to vector<8x8xf32>
    %694 = vector.extract_strided_slice %545 {offsets = [8, 16], sizes = [8, 8], strides = [1, 1]} : vector<16x32xf32> to vector<8x8xf32>
    %695 = vector.extract_strided_slice %546 {offsets = [8, 16], sizes = [8, 8], strides = [1, 1]} : vector<16x32xf32> to vector<8x8xf32>
    %cst_285 = arith.constant dense<0.000000e+00> : vector<8x8xf32>
    %696 = tpu.matmul %693, %694, %cst_285 {dimension_numbers = #tpu.dot_dimension_numbers<[1], [1], [0], [0], [0, 0, 1, 0], [], []>} : vector<8x8xf32>, vector<8x8xf32>, vector<8x8xf32> -> vector<8x8xf32>
    %cst_286 = arith.constant 0.000000e+00 : f32
    %697 = vector.broadcast %cst_286 : f32 to vector<8x8xf32>
    %698 = arith.cmpf oeq, %647, %697 : vector<8x8xf32>
    %cst_287 = arith.constant -1.000000e+09 : f32
    %699 = vector.broadcast %cst_287 : f32 to vector<8x8xf32>
    %700 = arith.select %698, %699, %696 : vector<8x8xi1>, vector<8x8xf32>
    %cst_288 = arith.constant dense<0xFF800000> : vector<8xf32>
    %701 = vector.multi_reduction <maximumf>, %700, %cst_288 [1] : vector<8x8xf32> to vector<8xf32>
    %702 = vector.shape_cast %701 : vector<8xf32> to vector<8x1xf32>
    %703 = vector.broadcast %702 : vector<8x1xf32> to vector<8x8xf32>
    %704 = arith.subf %700, %703 : vector<8x8xf32>
    %705 = math.exp %704 : vector<8x8xf32>
    %cst_289 = arith.constant dense<0.000000e+00> : vector<8xf32>
    %706 = vector.multi_reduction <add>, %705, %cst_289 [1] : vector<8x8xf32> to vector<8xf32>
    %707 = vector.shape_cast %706 : vector<8xf32> to vector<8x1xf32>
    %708 = tpu.reciprocal %707 {approx = true} : vector<8x1xf32> -> vector<8x1xf32>
    %709 = vector.broadcast %708 : vector<8x1xf32> to vector<8x8xf32>
    %710 = arith.mulf %705, %709 : vector<8x8xf32>
    %cst_290 = arith.constant dense<0.000000e+00> : vector<8x8xf32>
    %711 = tpu.matmul %710, %695, %cst_290 {dimension_numbers = #tpu.dot_dimension_numbers<[1], [0], [0], [1], [0, 0, 1, 1], [], []>} : vector<8x8xf32>, vector<8x8xf32>, vector<8x8xf32> -> vector<8x8xf32>
    %712 = vector.extract_strided_slice %548 {offsets = [16, 0], sizes = [8, 32], strides = [1, 1]} : vector<32x32xf32> to vector<8x32xf32>
    %cst_291 = arith.constant dense<0.000000e+00> : vector<8x32xf32>
    %713 = tpu.matmul %711, %712, %cst_291 {dimension_numbers = #tpu.dot_dimension_numbers<[1], [0], [0], [1], [0, 0, 1, 1], [], []>} : vector<8x8xf32>, vector<8x32xf32>, vector<8x32xf32> -> vector<8x32xf32>
    %714 = arith.addf %692, %713 : vector<8x32xf32>
    %715 = vector.extract_strided_slice %552 {offsets = [8, 24], sizes = [8, 8], strides = [1, 1]} : vector<16x32xf32> to vector<8x8xf32>
    %716 = vector.extract_strided_slice %545 {offsets = [8, 24], sizes = [8, 8], strides = [1, 1]} : vector<16x32xf32> to vector<8x8xf32>
    %717 = vector.extract_strided_slice %546 {offsets = [8, 24], sizes = [8, 8], strides = [1, 1]} : vector<16x32xf32> to vector<8x8xf32>
    %cst_292 = arith.constant dense<0.000000e+00> : vector<8x8xf32>
    %718 = tpu.matmul %715, %716, %cst_292 {dimension_numbers = #tpu.dot_dimension_numbers<[1], [1], [0], [0], [0, 0, 1, 0], [], []>} : vector<8x8xf32>, vector<8x8xf32>, vector<8x8xf32> -> vector<8x8xf32>
    %cst_293 = arith.constant 0.000000e+00 : f32
    %719 = vector.broadcast %cst_293 : f32 to vector<8x8xf32>
    %720 = arith.cmpf oeq, %647, %719 : vector<8x8xf32>
    %cst_294 = arith.constant -1.000000e+09 : f32
    %721 = vector.broadcast %cst_294 : f32 to vector<8x8xf32>
    %722 = arith.select %720, %721, %718 : vector<8x8xi1>, vector<8x8xf32>
    %cst_295 = arith.constant dense<0xFF800000> : vector<8xf32>
    %723 = vector.multi_reduction <maximumf>, %722, %cst_295 [1] : vector<8x8xf32> to vector<8xf32>
    %724 = vector.shape_cast %723 : vector<8xf32> to vector<8x1xf32>
    %725 = vector.broadcast %724 : vector<8x1xf32> to vector<8x8xf32>
    %726 = arith.subf %722, %725 : vector<8x8xf32>
    %727 = math.exp %726 : vector<8x8xf32>
    %cst_296 = arith.constant dense<0.000000e+00> : vector<8xf32>
    %728 = vector.multi_reduction <add>, %727, %cst_296 [1] : vector<8x8xf32> to vector<8xf32>
    %729 = vector.shape_cast %728 : vector<8xf32> to vector<8x1xf32>
    %730 = tpu.reciprocal %729 {approx = true} : vector<8x1xf32> -> vector<8x1xf32>
    %731 = vector.broadcast %730 : vector<8x1xf32> to vector<8x8xf32>
    %732 = arith.mulf %727, %731 : vector<8x8xf32>
    %cst_297 = arith.constant dense<0.000000e+00> : vector<8x8xf32>
    %733 = tpu.matmul %732, %717, %cst_297 {dimension_numbers = #tpu.dot_dimension_numbers<[1], [0], [0], [1], [0, 0, 1, 1], [], []>} : vector<8x8xf32>, vector<8x8xf32>, vector<8x8xf32> -> vector<8x8xf32>
    %734 = vector.extract_strided_slice %548 {offsets = [24, 0], sizes = [8, 32], strides = [1, 1]} : vector<32x32xf32> to vector<8x32xf32>
    %cst_298 = arith.constant dense<0.000000e+00> : vector<8x32xf32>
    %735 = tpu.matmul %733, %734, %cst_298 {dimension_numbers = #tpu.dot_dimension_numbers<[1], [0], [0], [1], [0, 0, 1, 1], [], []>} : vector<8x8xf32>, vector<8x32xf32>, vector<8x32xf32> -> vector<8x32xf32>
    %736 = arith.addf %714, %735 : vector<8x32xf32>
    %737 = vector.broadcast %550 : vector<1x32xf32> to vector<8x32xf32>
    %738 = arith.addf %736, %737 : vector<8x32xf32>
    %739 = tpu.concatenate %645, %738 in 0 : vector<8x32xf32>, vector<8x32xf32> -> vector<16x32xf32>
    %740 = arith.addf %510, %739 : vector<16x32xf32>
    %c4 = arith.constant 4 : index
    %c0_299 = arith.constant 0 : index
    %c0_300 = arith.constant 0 : index
    %741 = vector.load %arg18[%c4, %c0_299, %c0_300] : memref<7x1x32xf32, #tpu.memory_space<vmem>>, vector<1x1x32xf32>
    %742 = vector.shape_cast %741 : vector<1x1x32xf32> to vector<1x32xf32>
    %c4_301 = arith.constant 4 : index
    %c0_302 = arith.constant 0 : index
    %c0_303 = arith.constant 0 : index
    %743 = vector.load %arg19[%c4_301, %c0_302, %c0_303] : memref<7x1x32xf32, #tpu.memory_space<vmem>>, vector<1x1x32xf32>
    %744 = vector.shape_cast %743 : vector<1x1x32xf32> to vector<1x32xf32>
    %cst_304 = arith.constant dense<0.000000e+00> : vector<16xf32>
    %745 = vector.multi_reduction <add>, %740, %cst_304 [1] : vector<16x32xf32> to vector<16xf32>
    %746 = vector.shape_cast %745 : vector<16xf32> to vector<16x1xf32>
    %cst_305 = arith.constant 3.200000e+01 : f32
    %747 = vector.broadcast %cst_305 : f32 to vector<16x1xf32>
    %748 = arith.divf %746, %747 : vector<16x1xf32>
    %749 = vector.broadcast %748 : vector<16x1xf32> to vector<16x32xf32>
    %750 = arith.subf %740, %749 : vector<16x32xf32>
    %751 = arith.mulf %750, %750 : vector<16x32xf32>
    %cst_306 = arith.constant dense<0.000000e+00> : vector<16xf32>
    %752 = vector.multi_reduction <add>, %751, %cst_306 [1] : vector<16x32xf32> to vector<16xf32>
    %753 = vector.shape_cast %752 : vector<16xf32> to vector<16x1xf32>
    %cst_307 = arith.constant 3.100000e+01 : f32
    %754 = vector.broadcast %cst_307 : f32 to vector<16x1xf32>
    %755 = arith.divf %753, %754 : vector<16x1xf32>
    %756 = math.sqrt %755 : vector<16x1xf32>
    %757 = vector.broadcast %748 : vector<16x1xf32> to vector<16x32xf32>
    %758 = arith.subf %740, %757 : vector<16x32xf32>
    %759 = vector.broadcast %742 : vector<1x32xf32> to vector<16x32xf32>
    %760 = arith.mulf %759, %758 : vector<16x32xf32>
    %cst_308 = arith.constant 9.99999997E-7 : f32
    %761 = vector.broadcast %cst_308 : f32 to vector<16x1xf32>
    %762 = arith.addf %756, %761 : vector<16x1xf32>
    %763 = vector.broadcast %762 : vector<16x1xf32> to vector<16x32xf32>
    %764 = arith.divf %760, %763 : vector<16x32xf32>
    %765 = vector.broadcast %744 : vector<1x32xf32> to vector<16x32xf32>
    %766 = arith.addf %764, %765 : vector<16x32xf32>
    %c1_309 = arith.constant 1 : index
    %c0_310 = arith.constant 0 : index
    %c0_311 = arith.constant 0 : index
    %767 = vector.load %arg8[%c1_309, %c0_310, %c0_311] : memref<2x32x32xf32, #tpu.memory_space<vmem>>, vector<1x32x32xf32>
    %768 = vector.shape_cast %767 : vector<1x32x32xf32> to vector<32x32xf32>
    %cst_312 = arith.constant dense<0.000000e+00> : vector<16x32xf32>
    %769 = tpu.matmul %766, %768, %cst_312 {dimension_numbers = #tpu.dot_dimension_numbers<[1], [0], [0], [1], [0, 0, 1, 1], [], []>} : vector<16x32xf32>, vector<32x32xf32>, vector<16x32xf32> -> vector<16x32xf32>
    %c1_313 = arith.constant 1 : index
    %c0_314 = arith.constant 0 : index
    %c0_315 = arith.constant 0 : index
    %770 = vector.load %arg9[%c1_313, %c0_314, %c0_315] : memref<2x1x32xf32, #tpu.memory_space<vmem>>, vector<1x1x32xf32>
    %771 = vector.shape_cast %770 : vector<1x1x32xf32> to vector<1x32xf32>
    %772 = vector.broadcast %771 : vector<1x32xf32> to vector<16x32xf32>
    %773 = arith.addf %769, %772 : vector<16x32xf32>
    %c1_316 = arith.constant 1 : index
    %c0_317 = arith.constant 0 : index
    %c0_318 = arith.constant 0 : index
    %774 = vector.load %arg10[%c1_316, %c0_317, %c0_318] : memref<2x32x64xf32, #tpu.memory_space<vmem>>, vector<1x32x64xf32>
    %775 = vector.shape_cast %774 : vector<1x32x64xf32> to vector<32x64xf32>
    %cst_319 = arith.constant dense<0.000000e+00> : vector<16x64xf32>
    %776 = tpu.matmul %1, %775, %cst_319 {dimension_numbers = #tpu.dot_dimension_numbers<[1], [0], [0], [1], [0, 0, 1, 1], [], []>} : vector<16x32xf32>, vector<32x64xf32>, vector<16x64xf32> -> vector<16x64xf32>
    %c1_320 = arith.constant 1 : index
    %c0_321 = arith.constant 0 : index
    %c0_322 = arith.constant 0 : index
    %777 = vector.load %arg11[%c1_320, %c0_321, %c0_322] : memref<2x1x64xf32, #tpu.memory_space<vmem>>, vector<1x1x64xf32>
    %778 = vector.shape_cast %777 : vector<1x1x64xf32> to vector<1x64xf32>
    %779 = vector.broadcast %778 : vector<1x64xf32> to vector<16x64xf32>
    %780 = arith.addf %776, %779 : vector<16x64xf32>
    %781 = vector.extract_strided_slice %780 {offsets = [0, 0], sizes = [16, 32], strides = [1, 1]} : vector<16x64xf32> to vector<16x32xf32>
    %782 = vector.extract_strided_slice %780 {offsets = [0, 32], sizes = [16, 32], strides = [1, 1]} : vector<16x64xf32> to vector<16x32xf32>
    %c1_323 = arith.constant 1 : index
    %c0_324 = arith.constant 0 : index
    %c0_325 = arith.constant 0 : index
    %783 = vector.load %arg12[%c1_323, %c0_324, %c0_325] : memref<2x32x32xf32, #tpu.memory_space<vmem>>, vector<1x32x32xf32>
    %784 = vector.shape_cast %783 : vector<1x32x32xf32> to vector<32x32xf32>
    %c1_326 = arith.constant 1 : index
    %c0_327 = arith.constant 0 : index
    %c0_328 = arith.constant 0 : index
    %785 = vector.load %arg13[%c1_326, %c0_327, %c0_328] : memref<2x1x32xf32, #tpu.memory_space<vmem>>, vector<1x1x32xf32>
    %786 = vector.shape_cast %785 : vector<1x1x32xf32> to vector<1x32xf32>
    %cst_329 = arith.constant 0.353553385 : f32
    %787 = vector.broadcast %cst_329 : f32 to vector<16x32xf32>
    %788 = arith.mulf %773, %787 : vector<16x32xf32>
    %c0_330 = arith.constant 0 : index
    %c0_331 = arith.constant 0 : index
    %c0_332 = arith.constant 0 : index
    %789 = vector.load %arg3[%c0_330, %c0_331, %c0_332] : memref<2x8x8xf32, #tpu.memory_space<vmem>>, vector<1x8x8xf32>
    %790 = vector.shape_cast %789 : vector<1x8x8xf32> to vector<8x8xf32>
    %cst_333 = arith.constant 0.000000e+00 : f32
    %791 = vector.broadcast %cst_333 : f32 to vector<8x32xf32>
    %792 = vector.extract_strided_slice %788 {offsets = [0, 0], sizes = [8, 8], strides = [1, 1]} : vector<16x32xf32> to vector<8x8xf32>
    %793 = vector.extract_strided_slice %781 {offsets = [0, 0], sizes = [8, 8], strides = [1, 1]} : vector<16x32xf32> to vector<8x8xf32>
    %794 = vector.extract_strided_slice %782 {offsets = [0, 0], sizes = [8, 8], strides = [1, 1]} : vector<16x32xf32> to vector<8x8xf32>
    %cst_334 = arith.constant dense<0.000000e+00> : vector<8x8xf32>
    %795 = tpu.matmul %792, %793, %cst_334 {dimension_numbers = #tpu.dot_dimension_numbers<[1], [1], [0], [0], [0, 0, 1, 0], [], []>} : vector<8x8xf32>, vector<8x8xf32>, vector<8x8xf32> -> vector<8x8xf32>
    %cst_335 = arith.constant 0.000000e+00 : f32
    %796 = vector.broadcast %cst_335 : f32 to vector<8x8xf32>
    %797 = arith.cmpf oeq, %790, %796 : vector<8x8xf32>
    %cst_336 = arith.constant -1.000000e+09 : f32
    %798 = vector.broadcast %cst_336 : f32 to vector<8x8xf32>
    %799 = arith.select %797, %798, %795 : vector<8x8xi1>, vector<8x8xf32>
    %cst_337 = arith.constant dense<0xFF800000> : vector<8xf32>
    %800 = vector.multi_reduction <maximumf>, %799, %cst_337 [1] : vector<8x8xf32> to vector<8xf32>
    %801 = vector.shape_cast %800 : vector<8xf32> to vector<8x1xf32>
    %802 = vector.broadcast %801 : vector<8x1xf32> to vector<8x8xf32>
    %803 = arith.subf %799, %802 : vector<8x8xf32>
    %804 = math.exp %803 : vector<8x8xf32>
    %cst_338 = arith.constant dense<0.000000e+00> : vector<8xf32>
    %805 = vector.multi_reduction <add>, %804, %cst_338 [1] : vector<8x8xf32> to vector<8xf32>
    %806 = vector.shape_cast %805 : vector<8xf32> to vector<8x1xf32>
    %807 = tpu.reciprocal %806 {approx = true} : vector<8x1xf32> -> vector<8x1xf32>
    %808 = vector.broadcast %807 : vector<8x1xf32> to vector<8x8xf32>
    %809 = arith.mulf %804, %808 : vector<8x8xf32>
    %cst_339 = arith.constant dense<0.000000e+00> : vector<8x8xf32>
    %810 = tpu.matmul %809, %794, %cst_339 {dimension_numbers = #tpu.dot_dimension_numbers<[1], [0], [0], [1], [0, 0, 1, 1], [], []>} : vector<8x8xf32>, vector<8x8xf32>, vector<8x8xf32> -> vector<8x8xf32>
    %811 = vector.extract_strided_slice %784 {offsets = [0, 0], sizes = [8, 32], strides = [1, 1]} : vector<32x32xf32> to vector<8x32xf32>
    %cst_340 = arith.constant dense<0.000000e+00> : vector<8x32xf32>
    %812 = tpu.matmul %810, %811, %cst_340 {dimension_numbers = #tpu.dot_dimension_numbers<[1], [0], [0], [1], [0, 0, 1, 1], [], []>} : vector<8x8xf32>, vector<8x32xf32>, vector<8x32xf32> -> vector<8x32xf32>
    %813 = arith.addf %791, %812 : vector<8x32xf32>
    %814 = vector.extract_strided_slice %788 {offsets = [0, 8], sizes = [8, 8], strides = [1, 1]} : vector<16x32xf32> to vector<8x8xf32>
    %815 = vector.extract_strided_slice %781 {offsets = [0, 8], sizes = [8, 8], strides = [1, 1]} : vector<16x32xf32> to vector<8x8xf32>
    %816 = vector.extract_strided_slice %782 {offsets = [0, 8], sizes = [8, 8], strides = [1, 1]} : vector<16x32xf32> to vector<8x8xf32>
    %cst_341 = arith.constant dense<0.000000e+00> : vector<8x8xf32>
    %817 = tpu.matmul %814, %815, %cst_341 {dimension_numbers = #tpu.dot_dimension_numbers<[1], [1], [0], [0], [0, 0, 1, 0], [], []>} : vector<8x8xf32>, vector<8x8xf32>, vector<8x8xf32> -> vector<8x8xf32>
    %cst_342 = arith.constant 0.000000e+00 : f32
    %818 = vector.broadcast %cst_342 : f32 to vector<8x8xf32>
    %819 = arith.cmpf oeq, %790, %818 : vector<8x8xf32>
    %cst_343 = arith.constant -1.000000e+09 : f32
    %820 = vector.broadcast %cst_343 : f32 to vector<8x8xf32>
    %821 = arith.select %819, %820, %817 : vector<8x8xi1>, vector<8x8xf32>
    %cst_344 = arith.constant dense<0xFF800000> : vector<8xf32>
    %822 = vector.multi_reduction <maximumf>, %821, %cst_344 [1] : vector<8x8xf32> to vector<8xf32>
    %823 = vector.shape_cast %822 : vector<8xf32> to vector<8x1xf32>
    %824 = vector.broadcast %823 : vector<8x1xf32> to vector<8x8xf32>
    %825 = arith.subf %821, %824 : vector<8x8xf32>
    %826 = math.exp %825 : vector<8x8xf32>
    %cst_345 = arith.constant dense<0.000000e+00> : vector<8xf32>
    %827 = vector.multi_reduction <add>, %826, %cst_345 [1] : vector<8x8xf32> to vector<8xf32>
    %828 = vector.shape_cast %827 : vector<8xf32> to vector<8x1xf32>
    %829 = tpu.reciprocal %828 {approx = true} : vector<8x1xf32> -> vector<8x1xf32>
    %830 = vector.broadcast %829 : vector<8x1xf32> to vector<8x8xf32>
    %831 = arith.mulf %826, %830 : vector<8x8xf32>
    %cst_346 = arith.constant dense<0.000000e+00> : vector<8x8xf32>
    %832 = tpu.matmul %831, %816, %cst_346 {dimension_numbers = #tpu.dot_dimension_numbers<[1], [0], [0], [1], [0, 0, 1, 1], [], []>} : vector<8x8xf32>, vector<8x8xf32>, vector<8x8xf32> -> vector<8x8xf32>
    %833 = vector.extract_strided_slice %784 {offsets = [8, 0], sizes = [8, 32], strides = [1, 1]} : vector<32x32xf32> to vector<8x32xf32>
    %cst_347 = arith.constant dense<0.000000e+00> : vector<8x32xf32>
    %834 = tpu.matmul %832, %833, %cst_347 {dimension_numbers = #tpu.dot_dimension_numbers<[1], [0], [0], [1], [0, 0, 1, 1], [], []>} : vector<8x8xf32>, vector<8x32xf32>, vector<8x32xf32> -> vector<8x32xf32>
    %835 = arith.addf %813, %834 : vector<8x32xf32>
    %836 = vector.extract_strided_slice %788 {offsets = [0, 16], sizes = [8, 8], strides = [1, 1]} : vector<16x32xf32> to vector<8x8xf32>
    %837 = vector.extract_strided_slice %781 {offsets = [0, 16], sizes = [8, 8], strides = [1, 1]} : vector<16x32xf32> to vector<8x8xf32>
    %838 = vector.extract_strided_slice %782 {offsets = [0, 16], sizes = [8, 8], strides = [1, 1]} : vector<16x32xf32> to vector<8x8xf32>
    %cst_348 = arith.constant dense<0.000000e+00> : vector<8x8xf32>
    %839 = tpu.matmul %836, %837, %cst_348 {dimension_numbers = #tpu.dot_dimension_numbers<[1], [1], [0], [0], [0, 0, 1, 0], [], []>} : vector<8x8xf32>, vector<8x8xf32>, vector<8x8xf32> -> vector<8x8xf32>
    %cst_349 = arith.constant 0.000000e+00 : f32
    %840 = vector.broadcast %cst_349 : f32 to vector<8x8xf32>
    %841 = arith.cmpf oeq, %790, %840 : vector<8x8xf32>
    %cst_350 = arith.constant -1.000000e+09 : f32
    %842 = vector.broadcast %cst_350 : f32 to vector<8x8xf32>
    %843 = arith.select %841, %842, %839 : vector<8x8xi1>, vector<8x8xf32>
    %cst_351 = arith.constant dense<0xFF800000> : vector<8xf32>
    %844 = vector.multi_reduction <maximumf>, %843, %cst_351 [1] : vector<8x8xf32> to vector<8xf32>
    %845 = vector.shape_cast %844 : vector<8xf32> to vector<8x1xf32>
    %846 = vector.broadcast %845 : vector<8x1xf32> to vector<8x8xf32>
    %847 = arith.subf %843, %846 : vector<8x8xf32>
    %848 = math.exp %847 : vector<8x8xf32>
    %cst_352 = arith.constant dense<0.000000e+00> : vector<8xf32>
    %849 = vector.multi_reduction <add>, %848, %cst_352 [1] : vector<8x8xf32> to vector<8xf32>
    %850 = vector.shape_cast %849 : vector<8xf32> to vector<8x1xf32>
    %851 = tpu.reciprocal %850 {approx = true} : vector<8x1xf32> -> vector<8x1xf32>
    %852 = vector.broadcast %851 : vector<8x1xf32> to vector<8x8xf32>
    %853 = arith.mulf %848, %852 : vector<8x8xf32>
    %cst_353 = arith.constant dense<0.000000e+00> : vector<8x8xf32>
    %854 = tpu.matmul %853, %838, %cst_353 {dimension_numbers = #tpu.dot_dimension_numbers<[1], [0], [0], [1], [0, 0, 1, 1], [], []>} : vector<8x8xf32>, vector<8x8xf32>, vector<8x8xf32> -> vector<8x8xf32>
    %855 = vector.extract_strided_slice %784 {offsets = [16, 0], sizes = [8, 32], strides = [1, 1]} : vector<32x32xf32> to vector<8x32xf32>
    %cst_354 = arith.constant dense<0.000000e+00> : vector<8x32xf32>
    %856 = tpu.matmul %854, %855, %cst_354 {dimension_numbers = #tpu.dot_dimension_numbers<[1], [0], [0], [1], [0, 0, 1, 1], [], []>} : vector<8x8xf32>, vector<8x32xf32>, vector<8x32xf32> -> vector<8x32xf32>
    %857 = arith.addf %835, %856 : vector<8x32xf32>
    %858 = vector.extract_strided_slice %788 {offsets = [0, 24], sizes = [8, 8], strides = [1, 1]} : vector<16x32xf32> to vector<8x8xf32>
    %859 = vector.extract_strided_slice %781 {offsets = [0, 24], sizes = [8, 8], strides = [1, 1]} : vector<16x32xf32> to vector<8x8xf32>
    %860 = vector.extract_strided_slice %782 {offsets = [0, 24], sizes = [8, 8], strides = [1, 1]} : vector<16x32xf32> to vector<8x8xf32>
    %cst_355 = arith.constant dense<0.000000e+00> : vector<8x8xf32>
    %861 = tpu.matmul %858, %859, %cst_355 {dimension_numbers = #tpu.dot_dimension_numbers<[1], [1], [0], [0], [0, 0, 1, 0], [], []>} : vector<8x8xf32>, vector<8x8xf32>, vector<8x8xf32> -> vector<8x8xf32>
    %cst_356 = arith.constant 0.000000e+00 : f32
    %862 = vector.broadcast %cst_356 : f32 to vector<8x8xf32>
    %863 = arith.cmpf oeq, %790, %862 : vector<8x8xf32>
    %cst_357 = arith.constant -1.000000e+09 : f32
    %864 = vector.broadcast %cst_357 : f32 to vector<8x8xf32>
    %865 = arith.select %863, %864, %861 : vector<8x8xi1>, vector<8x8xf32>
    %cst_358 = arith.constant dense<0xFF800000> : vector<8xf32>
    %866 = vector.multi_reduction <maximumf>, %865, %cst_358 [1] : vector<8x8xf32> to vector<8xf32>
    %867 = vector.shape_cast %866 : vector<8xf32> to vector<8x1xf32>
    %868 = vector.broadcast %867 : vector<8x1xf32> to vector<8x8xf32>
    %869 = arith.subf %865, %868 : vector<8x8xf32>
    %870 = math.exp %869 : vector<8x8xf32>
    %cst_359 = arith.constant dense<0.000000e+00> : vector<8xf32>
    %871 = vector.multi_reduction <add>, %870, %cst_359 [1] : vector<8x8xf32> to vector<8xf32>
    %872 = vector.shape_cast %871 : vector<8xf32> to vector<8x1xf32>
    %873 = tpu.reciprocal %872 {approx = true} : vector<8x1xf32> -> vector<8x1xf32>
    %874 = vector.broadcast %873 : vector<8x1xf32> to vector<8x8xf32>
    %875 = arith.mulf %870, %874 : vector<8x8xf32>
    %cst_360 = arith.constant dense<0.000000e+00> : vector<8x8xf32>
    %876 = tpu.matmul %875, %860, %cst_360 {dimension_numbers = #tpu.dot_dimension_numbers<[1], [0], [0], [1], [0, 0, 1, 1], [], []>} : vector<8x8xf32>, vector<8x8xf32>, vector<8x8xf32> -> vector<8x8xf32>
    %877 = vector.extract_strided_slice %784 {offsets = [24, 0], sizes = [8, 32], strides = [1, 1]} : vector<32x32xf32> to vector<8x32xf32>
    %cst_361 = arith.constant dense<0.000000e+00> : vector<8x32xf32>
    %878 = tpu.matmul %876, %877, %cst_361 {dimension_numbers = #tpu.dot_dimension_numbers<[1], [0], [0], [1], [0, 0, 1, 1], [], []>} : vector<8x8xf32>, vector<8x32xf32>, vector<8x32xf32> -> vector<8x32xf32>
    %879 = arith.addf %857, %878 : vector<8x32xf32>
    %880 = vector.broadcast %786 : vector<1x32xf32> to vector<8x32xf32>
    %881 = arith.addf %879, %880 : vector<8x32xf32>
    %c1_362 = arith.constant 1 : index
    %c0_363 = arith.constant 0 : index
    %c0_364 = arith.constant 0 : index
    %882 = vector.load %arg3[%c1_362, %c0_363, %c0_364] : memref<2x8x8xf32, #tpu.memory_space<vmem>>, vector<1x8x8xf32>
    %883 = vector.shape_cast %882 : vector<1x8x8xf32> to vector<8x8xf32>
    %cst_365 = arith.constant 0.000000e+00 : f32
    %884 = vector.broadcast %cst_365 : f32 to vector<8x32xf32>
    %885 = vector.extract_strided_slice %788 {offsets = [8, 0], sizes = [8, 8], strides = [1, 1]} : vector<16x32xf32> to vector<8x8xf32>
    %886 = vector.extract_strided_slice %781 {offsets = [8, 0], sizes = [8, 8], strides = [1, 1]} : vector<16x32xf32> to vector<8x8xf32>
    %887 = vector.extract_strided_slice %782 {offsets = [8, 0], sizes = [8, 8], strides = [1, 1]} : vector<16x32xf32> to vector<8x8xf32>
    %cst_366 = arith.constant dense<0.000000e+00> : vector<8x8xf32>
    %888 = tpu.matmul %885, %886, %cst_366 {dimension_numbers = #tpu.dot_dimension_numbers<[1], [1], [0], [0], [0, 0, 1, 0], [], []>} : vector<8x8xf32>, vector<8x8xf32>, vector<8x8xf32> -> vector<8x8xf32>
    %cst_367 = arith.constant 0.000000e+00 : f32
    %889 = vector.broadcast %cst_367 : f32 to vector<8x8xf32>
    %890 = arith.cmpf oeq, %883, %889 : vector<8x8xf32>
    %cst_368 = arith.constant -1.000000e+09 : f32
    %891 = vector.broadcast %cst_368 : f32 to vector<8x8xf32>
    %892 = arith.select %890, %891, %888 : vector<8x8xi1>, vector<8x8xf32>
    %cst_369 = arith.constant dense<0xFF800000> : vector<8xf32>
    %893 = vector.multi_reduction <maximumf>, %892, %cst_369 [1] : vector<8x8xf32> to vector<8xf32>
    %894 = vector.shape_cast %893 : vector<8xf32> to vector<8x1xf32>
    %895 = vector.broadcast %894 : vector<8x1xf32> to vector<8x8xf32>
    %896 = arith.subf %892, %895 : vector<8x8xf32>
    %897 = math.exp %896 : vector<8x8xf32>
    %cst_370 = arith.constant dense<0.000000e+00> : vector<8xf32>
    %898 = vector.multi_reduction <add>, %897, %cst_370 [1] : vector<8x8xf32> to vector<8xf32>
    %899 = vector.shape_cast %898 : vector<8xf32> to vector<8x1xf32>
    %900 = tpu.reciprocal %899 {approx = true} : vector<8x1xf32> -> vector<8x1xf32>
    %901 = vector.broadcast %900 : vector<8x1xf32> to vector<8x8xf32>
    %902 = arith.mulf %897, %901 : vector<8x8xf32>
    %cst_371 = arith.constant dense<0.000000e+00> : vector<8x8xf32>
    %903 = tpu.matmul %902, %887, %cst_371 {dimension_numbers = #tpu.dot_dimension_numbers<[1], [0], [0], [1], [0, 0, 1, 1], [], []>} : vector<8x8xf32>, vector<8x8xf32>, vector<8x8xf32> -> vector<8x8xf32>
    %904 = vector.extract_strided_slice %784 {offsets = [0, 0], sizes = [8, 32], strides = [1, 1]} : vector<32x32xf32> to vector<8x32xf32>
    %cst_372 = arith.constant dense<0.000000e+00> : vector<8x32xf32>
    %905 = tpu.matmul %903, %904, %cst_372 {dimension_numbers = #tpu.dot_dimension_numbers<[1], [0], [0], [1], [0, 0, 1, 1], [], []>} : vector<8x8xf32>, vector<8x32xf32>, vector<8x32xf32> -> vector<8x32xf32>
    %906 = arith.addf %884, %905 : vector<8x32xf32>
    %907 = vector.extract_strided_slice %788 {offsets = [8, 8], sizes = [8, 8], strides = [1, 1]} : vector<16x32xf32> to vector<8x8xf32>
    %908 = vector.extract_strided_slice %781 {offsets = [8, 8], sizes = [8, 8], strides = [1, 1]} : vector<16x32xf32> to vector<8x8xf32>
    %909 = vector.extract_strided_slice %782 {offsets = [8, 8], sizes = [8, 8], strides = [1, 1]} : vector<16x32xf32> to vector<8x8xf32>
    %cst_373 = arith.constant dense<0.000000e+00> : vector<8x8xf32>
    %910 = tpu.matmul %907, %908, %cst_373 {dimension_numbers = #tpu.dot_dimension_numbers<[1], [1], [0], [0], [0, 0, 1, 0], [], []>} : vector<8x8xf32>, vector<8x8xf32>, vector<8x8xf32> -> vector<8x8xf32>
    %cst_374 = arith.constant 0.000000e+00 : f32
    %911 = vector.broadcast %cst_374 : f32 to vector<8x8xf32>
    %912 = arith.cmpf oeq, %883, %911 : vector<8x8xf32>
    %cst_375 = arith.constant -1.000000e+09 : f32
    %913 = vector.broadcast %cst_375 : f32 to vector<8x8xf32>
    %914 = arith.select %912, %913, %910 : vector<8x8xi1>, vector<8x8xf32>
    %cst_376 = arith.constant dense<0xFF800000> : vector<8xf32>
    %915 = vector.multi_reduction <maximumf>, %914, %cst_376 [1] : vector<8x8xf32> to vector<8xf32>
    %916 = vector.shape_cast %915 : vector<8xf32> to vector<8x1xf32>
    %917 = vector.broadcast %916 : vector<8x1xf32> to vector<8x8xf32>
    %918 = arith.subf %914, %917 : vector<8x8xf32>
    %919 = math.exp %918 : vector<8x8xf32>
    %cst_377 = arith.constant dense<0.000000e+00> : vector<8xf32>
    %920 = vector.multi_reduction <add>, %919, %cst_377 [1] : vector<8x8xf32> to vector<8xf32>
    %921 = vector.shape_cast %920 : vector<8xf32> to vector<8x1xf32>
    %922 = tpu.reciprocal %921 {approx = true} : vector<8x1xf32> -> vector<8x1xf32>
    %923 = vector.broadcast %922 : vector<8x1xf32> to vector<8x8xf32>
    %924 = arith.mulf %919, %923 : vector<8x8xf32>
    %cst_378 = arith.constant dense<0.000000e+00> : vector<8x8xf32>
    %925 = tpu.matmul %924, %909, %cst_378 {dimension_numbers = #tpu.dot_dimension_numbers<[1], [0], [0], [1], [0, 0, 1, 1], [], []>} : vector<8x8xf32>, vector<8x8xf32>, vector<8x8xf32> -> vector<8x8xf32>
    %926 = vector.extract_strided_slice %784 {offsets = [8, 0], sizes = [8, 32], strides = [1, 1]} : vector<32x32xf32> to vector<8x32xf32>
    %cst_379 = arith.constant dense<0.000000e+00> : vector<8x32xf32>
    %927 = tpu.matmul %925, %926, %cst_379 {dimension_numbers = #tpu.dot_dimension_numbers<[1], [0], [0], [1], [0, 0, 1, 1], [], []>} : vector<8x8xf32>, vector<8x32xf32>, vector<8x32xf32> -> vector<8x32xf32>
    %928 = arith.addf %906, %927 : vector<8x32xf32>
    %929 = vector.extract_strided_slice %788 {offsets = [8, 16], sizes = [8, 8], strides = [1, 1]} : vector<16x32xf32> to vector<8x8xf32>
    %930 = vector.extract_strided_slice %781 {offsets = [8, 16], sizes = [8, 8], strides = [1, 1]} : vector<16x32xf32> to vector<8x8xf32>
    %931 = vector.extract_strided_slice %782 {offsets = [8, 16], sizes = [8, 8], strides = [1, 1]} : vector<16x32xf32> to vector<8x8xf32>
    %cst_380 = arith.constant dense<0.000000e+00> : vector<8x8xf32>
    %932 = tpu.matmul %929, %930, %cst_380 {dimension_numbers = #tpu.dot_dimension_numbers<[1], [1], [0], [0], [0, 0, 1, 0], [], []>} : vector<8x8xf32>, vector<8x8xf32>, vector<8x8xf32> -> vector<8x8xf32>
    %cst_381 = arith.constant 0.000000e+00 : f32
    %933 = vector.broadcast %cst_381 : f32 to vector<8x8xf32>
    %934 = arith.cmpf oeq, %883, %933 : vector<8x8xf32>
    %cst_382 = arith.constant -1.000000e+09 : f32
    %935 = vector.broadcast %cst_382 : f32 to vector<8x8xf32>
    %936 = arith.select %934, %935, %932 : vector<8x8xi1>, vector<8x8xf32>
    %cst_383 = arith.constant dense<0xFF800000> : vector<8xf32>
    %937 = vector.multi_reduction <maximumf>, %936, %cst_383 [1] : vector<8x8xf32> to vector<8xf32>
    %938 = vector.shape_cast %937 : vector<8xf32> to vector<8x1xf32>
    %939 = vector.broadcast %938 : vector<8x1xf32> to vector<8x8xf32>
    %940 = arith.subf %936, %939 : vector<8x8xf32>
    %941 = math.exp %940 : vector<8x8xf32>
    %cst_384 = arith.constant dense<0.000000e+00> : vector<8xf32>
    %942 = vector.multi_reduction <add>, %941, %cst_384 [1] : vector<8x8xf32> to vector<8xf32>
    %943 = vector.shape_cast %942 : vector<8xf32> to vector<8x1xf32>
    %944 = tpu.reciprocal %943 {approx = true} : vector<8x1xf32> -> vector<8x1xf32>
    %945 = vector.broadcast %944 : vector<8x1xf32> to vector<8x8xf32>
    %946 = arith.mulf %941, %945 : vector<8x8xf32>
    %cst_385 = arith.constant dense<0.000000e+00> : vector<8x8xf32>
    %947 = tpu.matmul %946, %931, %cst_385 {dimension_numbers = #tpu.dot_dimension_numbers<[1], [0], [0], [1], [0, 0, 1, 1], [], []>} : vector<8x8xf32>, vector<8x8xf32>, vector<8x8xf32> -> vector<8x8xf32>
    %948 = vector.extract_strided_slice %784 {offsets = [16, 0], sizes = [8, 32], strides = [1, 1]} : vector<32x32xf32> to vector<8x32xf32>
    %cst_386 = arith.constant dense<0.000000e+00> : vector<8x32xf32>
    %949 = tpu.matmul %947, %948, %cst_386 {dimension_numbers = #tpu.dot_dimension_numbers<[1], [0], [0], [1], [0, 0, 1, 1], [], []>} : vector<8x8xf32>, vector<8x32xf32>, vector<8x32xf32> -> vector<8x32xf32>
    %950 = arith.addf %928, %949 : vector<8x32xf32>
    %951 = vector.extract_strided_slice %788 {offsets = [8, 24], sizes = [8, 8], strides = [1, 1]} : vector<16x32xf32> to vector<8x8xf32>
    %952 = vector.extract_strided_slice %781 {offsets = [8, 24], sizes = [8, 8], strides = [1, 1]} : vector<16x32xf32> to vector<8x8xf32>
    %953 = vector.extract_strided_slice %782 {offsets = [8, 24], sizes = [8, 8], strides = [1, 1]} : vector<16x32xf32> to vector<8x8xf32>
    %cst_387 = arith.constant dense<0.000000e+00> : vector<8x8xf32>
    %954 = tpu.matmul %951, %952, %cst_387 {dimension_numbers = #tpu.dot_dimension_numbers<[1], [1], [0], [0], [0, 0, 1, 0], [], []>} : vector<8x8xf32>, vector<8x8xf32>, vector<8x8xf32> -> vector<8x8xf32>
    %cst_388 = arith.constant 0.000000e+00 : f32
    %955 = vector.broadcast %cst_388 : f32 to vector<8x8xf32>
    %956 = arith.cmpf oeq, %883, %955 : vector<8x8xf32>
    %cst_389 = arith.constant -1.000000e+09 : f32
    %957 = vector.broadcast %cst_389 : f32 to vector<8x8xf32>
    %958 = arith.select %956, %957, %954 : vector<8x8xi1>, vector<8x8xf32>
    %cst_390 = arith.constant dense<0xFF800000> : vector<8xf32>
    %959 = vector.multi_reduction <maximumf>, %958, %cst_390 [1] : vector<8x8xf32> to vector<8xf32>
    %960 = vector.shape_cast %959 : vector<8xf32> to vector<8x1xf32>
    %961 = vector.broadcast %960 : vector<8x1xf32> to vector<8x8xf32>
    %962 = arith.subf %958, %961 : vector<8x8xf32>
    %963 = math.exp %962 : vector<8x8xf32>
    %cst_391 = arith.constant dense<0.000000e+00> : vector<8xf32>
    %964 = vector.multi_reduction <add>, %963, %cst_391 [1] : vector<8x8xf32> to vector<8xf32>
    %965 = vector.shape_cast %964 : vector<8xf32> to vector<8x1xf32>
    %966 = tpu.reciprocal %965 {approx = true} : vector<8x1xf32> -> vector<8x1xf32>
    %967 = vector.broadcast %966 : vector<8x1xf32> to vector<8x8xf32>
    %968 = arith.mulf %963, %967 : vector<8x8xf32>
    %cst_392 = arith.constant dense<0.000000e+00> : vector<8x8xf32>
    %969 = tpu.matmul %968, %953, %cst_392 {dimension_numbers = #tpu.dot_dimension_numbers<[1], [0], [0], [1], [0, 0, 1, 1], [], []>} : vector<8x8xf32>, vector<8x8xf32>, vector<8x8xf32> -> vector<8x8xf32>
    %970 = vector.extract_strided_slice %784 {offsets = [24, 0], sizes = [8, 32], strides = [1, 1]} : vector<32x32xf32> to vector<8x32xf32>
    %cst_393 = arith.constant dense<0.000000e+00> : vector<8x32xf32>
    %971 = tpu.matmul %969, %970, %cst_393 {dimension_numbers = #tpu.dot_dimension_numbers<[1], [0], [0], [1], [0, 0, 1, 1], [], []>} : vector<8x8xf32>, vector<8x32xf32>, vector<8x32xf32> -> vector<8x32xf32>
    %972 = arith.addf %950, %971 : vector<8x32xf32>
    %973 = vector.broadcast %786 : vector<1x32xf32> to vector<8x32xf32>
    %974 = arith.addf %972, %973 : vector<8x32xf32>
    %975 = tpu.concatenate %881, %974 in 0 : vector<8x32xf32>, vector<8x32xf32> -> vector<16x32xf32>
    %976 = arith.addf %740, %975 : vector<16x32xf32>
    %c5 = arith.constant 5 : index
    %c0_394 = arith.constant 0 : index
    %c0_395 = arith.constant 0 : index
    %977 = vector.load %arg18[%c5, %c0_394, %c0_395] : memref<7x1x32xf32, #tpu.memory_space<vmem>>, vector<1x1x32xf32>
    %978 = vector.shape_cast %977 : vector<1x1x32xf32> to vector<1x32xf32>
    %c5_396 = arith.constant 5 : index
    %c0_397 = arith.constant 0 : index
    %c0_398 = arith.constant 0 : index
    %979 = vector.load %arg19[%c5_396, %c0_397, %c0_398] : memref<7x1x32xf32, #tpu.memory_space<vmem>>, vector<1x1x32xf32>
    %980 = vector.shape_cast %979 : vector<1x1x32xf32> to vector<1x32xf32>
    %cst_399 = arith.constant dense<0.000000e+00> : vector<16xf32>
    %981 = vector.multi_reduction <add>, %976, %cst_399 [1] : vector<16x32xf32> to vector<16xf32>
    %982 = vector.shape_cast %981 : vector<16xf32> to vector<16x1xf32>
    %cst_400 = arith.constant 3.200000e+01 : f32
    %983 = vector.broadcast %cst_400 : f32 to vector<16x1xf32>
    %984 = arith.divf %982, %983 : vector<16x1xf32>
    %985 = vector.broadcast %984 : vector<16x1xf32> to vector<16x32xf32>
    %986 = arith.subf %976, %985 : vector<16x32xf32>
    %987 = arith.mulf %986, %986 : vector<16x32xf32>
    %cst_401 = arith.constant dense<0.000000e+00> : vector<16xf32>
    %988 = vector.multi_reduction <add>, %987, %cst_401 [1] : vector<16x32xf32> to vector<16xf32>
    %989 = vector.shape_cast %988 : vector<16xf32> to vector<16x1xf32>
    %cst_402 = arith.constant 3.100000e+01 : f32
    %990 = vector.broadcast %cst_402 : f32 to vector<16x1xf32>
    %991 = arith.divf %989, %990 : vector<16x1xf32>
    %992 = math.sqrt %991 : vector<16x1xf32>
    %993 = vector.broadcast %984 : vector<16x1xf32> to vector<16x32xf32>
    %994 = arith.subf %976, %993 : vector<16x32xf32>
    %995 = vector.broadcast %978 : vector<1x32xf32> to vector<16x32xf32>
    %996 = arith.mulf %995, %994 : vector<16x32xf32>
    %cst_403 = arith.constant 9.99999997E-7 : f32
    %997 = vector.broadcast %cst_403 : f32 to vector<16x1xf32>
    %998 = arith.addf %992, %997 : vector<16x1xf32>
    %999 = vector.broadcast %998 : vector<16x1xf32> to vector<16x32xf32>
    %1000 = arith.divf %996, %999 : vector<16x32xf32>
    %1001 = vector.broadcast %980 : vector<1x32xf32> to vector<16x32xf32>
    %1002 = arith.addf %1000, %1001 : vector<16x32xf32>
    %c1_404 = arith.constant 1 : index
    %c0_405 = arith.constant 0 : index
    %c0_406 = arith.constant 0 : index
    %1003 = vector.load %arg14[%c1_404, %c0_405, %c0_406] : memref<2x32x64xf32, #tpu.memory_space<vmem>>, vector<1x32x64xf32>
    %1004 = vector.shape_cast %1003 : vector<1x32x64xf32> to vector<32x64xf32>
    %cst_407 = arith.constant dense<0.000000e+00> : vector<16x64xf32>
    %1005 = tpu.matmul %1002, %1004, %cst_407 {dimension_numbers = #tpu.dot_dimension_numbers<[1], [0], [0], [1], [0, 0, 1, 1], [], []>} : vector<16x32xf32>, vector<32x64xf32>, vector<16x64xf32> -> vector<16x64xf32>
    %c1_408 = arith.constant 1 : index
    %c0_409 = arith.constant 0 : index
    %c0_410 = arith.constant 0 : index
    %1006 = vector.load %arg15[%c1_408, %c0_409, %c0_410] : memref<2x1x64xf32, #tpu.memory_space<vmem>>, vector<1x1x64xf32>
    %1007 = vector.shape_cast %1006 : vector<1x1x64xf32> to vector<1x64xf32>
    %1008 = vector.broadcast %1007 : vector<1x64xf32> to vector<16x64xf32>
    %1009 = arith.addf %1005, %1008 : vector<16x64xf32>
    %cst_411 = arith.constant 0.000000e+00 : f32
    %1010 = vector.broadcast %cst_411 : f32 to vector<16x64xf32>
    %1011 = arith.maximumf %1009, %1010 : vector<16x64xf32>
    %c1_412 = arith.constant 1 : index
    %c0_413 = arith.constant 0 : index
    %c0_414 = arith.constant 0 : index
    %1012 = vector.load %arg16[%c1_412, %c0_413, %c0_414] : memref<2x64x32xf32, #tpu.memory_space<vmem>>, vector<1x64x32xf32>
    %1013 = vector.shape_cast %1012 : vector<1x64x32xf32> to vector<64x32xf32>
    %cst_415 = arith.constant dense<0.000000e+00> : vector<16x32xf32>
    %1014 = tpu.matmul %1011, %1013, %cst_415 {dimension_numbers = #tpu.dot_dimension_numbers<[1], [0], [0], [1], [0, 0, 1, 1], [], []>} : vector<16x64xf32>, vector<64x32xf32>, vector<16x32xf32> -> vector<16x32xf32>
    %1015 = arith.addf %976, %1014 : vector<16x32xf32>
    %c1_416 = arith.constant 1 : index
    %c0_417 = arith.constant 0 : index
    %c0_418 = arith.constant 0 : index
    %1016 = vector.load %arg17[%c1_416, %c0_417, %c0_418] : memref<2x1x32xf32, #tpu.memory_space<vmem>>, vector<1x1x32xf32>
    %1017 = vector.shape_cast %1016 : vector<1x1x32xf32> to vector<1x32xf32>
    %1018 = vector.broadcast %1017 : vector<1x32xf32> to vector<16x32xf32>
    %1019 = arith.addf %1015, %1018 : vector<16x32xf32>
    %c6 = arith.constant 6 : index
    %c0_419 = arith.constant 0 : index
    %c0_420 = arith.constant 0 : index
    %1020 = vector.load %arg18[%c6, %c0_419, %c0_420] : memref<7x1x32xf32, #tpu.memory_space<vmem>>, vector<1x1x32xf32>
    %1021 = vector.shape_cast %1020 : vector<1x1x32xf32> to vector<1x32xf32>
    %c6_421 = arith.constant 6 : index
    %c0_422 = arith.constant 0 : index
    %c0_423 = arith.constant 0 : index
    %1022 = vector.load %arg19[%c6_421, %c0_422, %c0_423] : memref<7x1x32xf32, #tpu.memory_space<vmem>>, vector<1x1x32xf32>
    %1023 = vector.shape_cast %1022 : vector<1x1x32xf32> to vector<1x32xf32>
    %cst_424 = arith.constant dense<0.000000e+00> : vector<16xf32>
    %1024 = vector.multi_reduction <add>, %1019, %cst_424 [1] : vector<16x32xf32> to vector<16xf32>
    %1025 = vector.shape_cast %1024 : vector<16xf32> to vector<16x1xf32>
    %cst_425 = arith.constant 3.200000e+01 : f32
    %1026 = vector.broadcast %cst_425 : f32 to vector<16x1xf32>
    %1027 = arith.divf %1025, %1026 : vector<16x1xf32>
    %1028 = vector.broadcast %1027 : vector<16x1xf32> to vector<16x32xf32>
    %1029 = arith.subf %1019, %1028 : vector<16x32xf32>
    %1030 = arith.mulf %1029, %1029 : vector<16x32xf32>
    %cst_426 = arith.constant dense<0.000000e+00> : vector<16xf32>
    %1031 = vector.multi_reduction <add>, %1030, %cst_426 [1] : vector<16x32xf32> to vector<16xf32>
    %1032 = vector.shape_cast %1031 : vector<16xf32> to vector<16x1xf32>
    %cst_427 = arith.constant 3.100000e+01 : f32
    %1033 = vector.broadcast %cst_427 : f32 to vector<16x1xf32>
    %1034 = arith.divf %1032, %1033 : vector<16x1xf32>
    %1035 = math.sqrt %1034 : vector<16x1xf32>
    %1036 = vector.broadcast %1027 : vector<16x1xf32> to vector<16x32xf32>
    %1037 = arith.subf %1019, %1036 : vector<16x32xf32>
    %1038 = vector.broadcast %1021 : vector<1x32xf32> to vector<16x32xf32>
    %1039 = arith.mulf %1038, %1037 : vector<16x32xf32>
    %cst_428 = arith.constant 9.99999997E-7 : f32
    %1040 = vector.broadcast %cst_428 : f32 to vector<16x1xf32>
    %1041 = arith.addf %1035, %1040 : vector<16x1xf32>
    %1042 = vector.broadcast %1041 : vector<16x1xf32> to vector<16x32xf32>
    %1043 = arith.divf %1039, %1042 : vector<16x32xf32>
    %1044 = vector.broadcast %1023 : vector<1x32xf32> to vector<16x32xf32>
    %1045 = arith.addf %1043, %1044 : vector<16x32xf32>
    %c0_429 = arith.constant 0 : index
    %c0_430 = arith.constant 0 : index
    %1046 = vector.load %arg20[%c0_429, %c0_430] : memref<16x32xf32, #tpu.memory_space<vmem>>, vector<16x32xf32>
    tpu.vector_store %arg20[%c0_429, %c0_430], %1045 {strides = array<i32>} : memref<16x32xf32, #tpu.memory_space<vmem>>, vector<16x32xf32>,
    return
  }
}

</mosaic_0001>

<llo_original>
// kernel: decoder_forward.1
$region0: #{decoder_forward.1}
  #allocation0 [shape = 'u32[]', space=smem, size = 0x4, offset = 0x4, fixed_abs, tag = 'smem constant byte address 0x4 - core index']
  #allocation1 [shape = 'u32[144,128]{1,0:T(1,128)}', space=vmem, size = 0x12000, scoped, tag = 'internal scratch']
  %s0 = inlined_call_operand.vmem [shape: f32[16,32], index: 0, kind: input, shape index: {}]
  %s1 = inlined_call_operand.hbm [shape: f32[16,32], index: 1, kind: input, shape index: {}]
  %s2 = inlined_call_operand.hbm [shape: f32[2,8,8], index: 2, kind: input, shape index: {}]
  %s3 = inlined_call_operand.hbm [shape: f32[2,8,8], index: 3, kind: input, shape index: {}]
  %s4 = inlined_call_operand.hbm [shape: f32[2,32,96], index: 4, kind: input, shape index: {}]
  %s5 = inlined_call_operand.hbm [shape: f32[2,1,96], index: 5, kind: input, shape index: {}]
  %s6 = inlined_call_operand.hbm [shape: f32[2,32,32], index: 6, kind: input, shape index: {}]
  %s7 = inlined_call_operand.hbm [shape: f32[2,1,32], index: 7, kind: input, shape index: {}]
  %s8 = inlined_call_operand.hbm [shape: f32[2,32,32], index: 8, kind: input, shape index: {}]
  %s9 = inlined_call_operand.hbm [shape: f32[2,1,32], index: 9, kind: input, shape index: {}]
  %s10 = inlined_call_operand.hbm [shape: f32[2,32,64], index: 10, kind: input, shape index: {}]
  %s11 = inlined_call_operand.hbm [shape: f32[2,1,64], index: 11, kind: input, shape index: {}]
  %s12 = inlined_call_operand.hbm [shape: f32[2,32,32], index: 12, kind: input, shape index: {}]
  %s13 = inlined_call_operand.hbm [shape: f32[2,1,32], index: 13, kind: input, shape index: {}]
  %s14 = inlined_call_operand.vmem [shape: f32[2,32,64], index: 14, kind: input, shape index: {}]
  %s15 = inlined_call_operand.vmem [shape: f32[2,1,64], index: 15, kind: input, shape index: {}]
  %s16 = inlined_call_operand.hbm [shape: f32[2,64,32], index: 16, kind: input, shape index: {}]
  %s17 = inlined_call_operand.vmem [shape: f32[2,1,32], index: 17, kind: input, shape index: {}]
  %s18 = inlined_call_operand.vmem [shape: f32[7,1,32], index: 18, kind: input, shape index: {}]
  %s19 = inlined_call_operand.vmem [shape: f32[7,1,32], index: 19, kind: input, shape index: {}]
  %s20 = inlined_call_operand.hbm [shape: f32[16,32], index: 20, kind: output, shape index: {}]
  %s21 = sld [smem:[#allocation0]]
  $region146: #{decoder_forward.1} parent=0
    _
  %s23 = ssub.s32 1, %s21
  %s24 = scalar_select 0, %s23, %s21
  $region1: #{decoder_forward.1} parent=0
    #allocation2 [shape = 'u8[8192]{0}', space=vmem, size = 0x2000, scoped, tag = 'input window, operand 1, single buffered']
    #allocation3 [shape = 's32[1]{0}', space=sflag, size = 0x4, scoped, tag = 'scoped memory for decoder_forward.1']
    #allocation4 [shape = 's32[1]{0}', space=sflag, size = 0x4, scoped, tag = 'scoped memory for decoder_forward.1']
    #allocation5 [shape = 'u8[8192]{0}', space=vmem, size = 0x2000, scoped, tag = 'input window, operand 2, single buffered']
    #allocation6 [shape = 's32[1]{0}', space=sflag, size = 0x4, scoped, tag = 'scoped memory for decoder_forward.1']
    #allocation7 [shape = 'u8[8192]{0}', space=vmem, size = 0x2000, scoped, tag = 'input window, operand 3, single buffered']
    #allocation8 [shape = 'u8[32768]{0}', space=vmem, size = 0x8000, scoped, tag = 'input window, operand 4, single buffered']
    #allocation9 [shape = 's32[1]{0}', space=sflag, size = 0x4, scoped, tag = 'scoped memory for decoder_forward.1']
    #allocation10 [shape = 'u8[1024]{0}', space=vmem, size = 0x400, scoped, tag = 'input window, operand 5, single buffered']
    #allocation11 [shape = 'u8[32768]{0}', space=vmem, size = 0x8000, scoped, tag = 'input window, operand 6, single buffered']
    #allocation12 [shape = 's32[1]{0}', space=sflag, size = 0x4, scoped, tag = 'scoped memory for decoder_forward.1']
    #allocation13 [shape = 'u8[1024]{0}', space=vmem, size = 0x400, scoped, tag = 'input window, operand 7, single buffered']
    #allocation14 [shape = 'u8[32768]{0}', space=vmem, size = 0x8000, scoped, tag = 'input window, operand 8, single buffered']
    #allocation15 [shape = 's32[1]{0}', space=sflag, size = 0x4, scoped, tag = 'scoped memory for decoder_forward.1']
    #allocation16 [shape = 'u8[1024]{0}', space=vmem, size = 0x400, scoped, tag = 'input window, operand 9, single buffered']
    #allocation17 [shape = 'u8[32768]{0}', space=vmem, size = 0x8000, scoped, tag = 'input window, operand 10, single buffered']
    #allocation18 [shape = 's32[1]{0}', space=sflag, size = 0x4, scoped, tag = 'scoped memory for decoder_forward.1']
    #allocation19 [shape = 'u8[1024]{0}', space=vmem, size = 0x400, scoped, tag = 'input window, operand 11, single buffered']
    #allocation20 [shape = 'u8[32768]{0}', space=vmem, size = 0x8000, scoped, tag = 'input window, operand 12, single buffered']
    #allocation21 [shape = 's32[1]{0}', space=sflag, size = 0x4, scoped, tag = 'scoped memory for decoder_forward.1']
    #allocation22 [shape = 'u8[1024]{0}', space=vmem, size = 0x400, scoped, tag = 'input window, operand 13, single buffered']
    #allocation23 [shape = 'u8[65536]{0}', space=vmem, size = 0x10000, scoped, tag = 'input window, operand 16, single buffered']
    #allocation24 [shape = 's32[1]{0}', space=sflag, size = 0x4, scoped, tag = 'scoped memory for decoder_forward.1']
    #allocation25 [shape = 'u8[8192]{0}', space=vmem, size = 0x2000, scoped, tag = 'output window, operand 0, single buffered']
    %25 = vsyncpa [#allocation3], 0
    %26 = vsyncpa [#allocation6], 0
    %27 = vsyncpa [#allocation9], 0
    %28 = vsyncpa [#allocation12], 0
    %29 = vsyncpa [#allocation15], 0
    %30 = vsyncpa [#allocation18], 0
    %31 = vsyncpa [#allocation21], 0
    %32 = vsyncpa [#allocation24], 0
    %33 = vsyncpa [#allocation4], 0
    // Predicated region
    $region2: #{decoder_forward.1} parent=1 // pred_check
      _
    $region3: #{decoder_forward.1} parent=1 // pred_check_branch
      %35 = sbr.rel (0) target = $region5
    $region4: #{decoder_forward.1} parent=1 // pred_region
      _
    $region5: #{decoder_forward.1} parent=1 // pred_fallthru
      _
    // Predicated region
    $region6: #{decoder_forward.1} parent=1 // pred_check
      _
    $region7: #{decoder_forward.1} parent=1 // pred_check_branch
      %37 = sbr.rel (0) target = $region9
    $region8: #{decoder_forward.1} parent=1 // pred_region
      %s39 = ssub.s32 256, 256
      %40 = vsyncadd [#allocation3], %s39
      %s41 = sshll.u32 [#allocation2], 4
      %s42 = int_to_ptr.vmem [resolvable:$true] %s41
      %47 = dma.hbm_to_vmem [thread:$0]  %s1, 256, %s42, [#allocation3], 128, 128, 8
    $region9: #{decoder_forward.1} parent=1 // pred_fallthru
      _
    // Predicated region
    $region10: #{decoder_forward.1} parent=1 // pred_check
      _
    $region11: #{decoder_forward.1} parent=1 // pred_check_branch
      %49 = sbr.rel (0) target = $region13
    $region12: #{decoder_forward.1} parent=1 // pred_region
      %s51 = ssub.s32 256, 256
      %52 = vsyncadd [#allocation6], %s51
      %s53 = sshll.u32 [#allocation5], 4
      %s54 = int_to_ptr.vmem [resolvable:$true] %s53
      %59 = dma.hbm_to_vmem [thread:$0]  %s2, 256, %s54, [#allocation6], 128, 128, 8
    $region13: #{decoder_forward.1} parent=1 // pred_fallthru
      _
    // Predicated region
    $region14: #{decoder_forward.1} parent=1 // pred_check
      _
    $region15: #{decoder_forward.1} parent=1 // pred_check_branch
      %61 = sbr.rel (0) target = $region17
    $region16: #{decoder_forward.1} parent=1 // pred_region
      %s63 = ssub.s32 256, 256
      %64 = vsyncadd [#allocation6], %s63
      %s65 = sshll.u32 [#allocation7], 4
      %s66 = int_to_ptr.vmem [resolvable:$true] %s65
      %71 = dma.hbm_to_vmem [thread:$0]  %s3, 256, %s66, [#allocation6], 128, 128, 8
    $region17: #{decoder_forward.1} parent=1 // pred_fallthru
      _
    // Predicated region
    $region18: #{decoder_forward.1} parent=1 // pred_check
      _
    $region19: #{decoder_forward.1} parent=1 // pred_check_branch
      %73 = sbr.rel (0) target = $region21
    $region20: #{decoder_forward.1} parent=1 // pred_region
      %s75 = ssub.s32 1024, 1024
      %76 = vsyncadd [#allocation9], %s75
      %s77 = sshll.u32 [#allocation8], 4
      %s78 = int_to_ptr.vmem [resolvable:$true] %s77
      %83 = dma.hbm_to_vmem [thread:$0]  %s4, 1024, %s78, [#allocation9], 128, 128, 8
    $region21: #{decoder_forward.1} parent=1 // pred_fallthru
      _
    // Predicated region
    $region22: #{decoder_forward.1} parent=1 // pred_check
      _
    $region23: #{decoder_forward.1} parent=1 // pred_check_branch
      %85 = sbr.rel (0) target = $region25
    $region24: #{decoder_forward.1} parent=1 // pred_region
      %s87 = ssub.s32 32, 32
      %88 = vsyncadd [#allocation9], %s87
      %s89 = sshll.u32 [#allocation10], 4
      %s90 = int_to_ptr.vmem [resolvable:$true] %s89
      %95 = dma.hbm_to_vmem [thread:$0]  %s5, 32, %s90, [#allocation9], 16, 16, 1
    $region25: #{decoder_forward.1} parent=1 // pred_fallthru
      _
    // Predicated region
    $region26: #{decoder_forward.1} parent=1 // pred_check
      _
    $region27: #{decoder_forward.1} parent=1 // pred_check_branch
      %97 = sbr.rel (0) target = $region29
    $region28: #{decoder_forward.1} parent=1 // pred_region
      %s99 = ssub.s32 1024, 1024
      %100 = vsyncadd [#allocation12], %s99
      %s101 = sshll.u32 [#allocation11], 4
      %s102 = int_to_ptr.vmem [resolvable:$true] %s101
      %107 = dma.hbm_to_vmem [thread:$0]  %s6, 1024, %s102, [#allocation12], 128, 128, 8
    $region29: #{decoder_forward.1} parent=1 // pred_fallthru
      _
    // Predicated region
    $region30: #{decoder_forward.1} parent=1 // pred_check
      _
    $region31: #{decoder_forward.1} parent=1 // pred_check_branch
      %109 = sbr.rel (0) target = $region33
    $region32: #{decoder_forward.1} parent=1 // pred_region
      %s111 = ssub.s32 32, 32
      %112 = vsyncadd [#allocation12], %s111
      %s113 = sshll.u32 [#allocation13], 4
      %s114 = int_to_ptr.vmem [resolvable:$true] %s113
      %119 = dma.hbm_to_vmem [thread:$0]  %s7, 32, %s114, [#allocation12], 16, 16, 1
    $region33: #{decoder_forward.1} parent=1 // pred_fallthru
      _
    // Predicated region
    $region34: #{decoder_forward.1} parent=1 // pred_check
      _
    $region35: #{decoder_forward.1} parent=1 // pred_check_branch
      %121 = sbr.rel (0) target = $region37
    $region36: #{decoder_forward.1} parent=1 // pred_region
      %s123 = ssub.s32 1024, 1024
      %124 = vsyncadd [#allocation15], %s123
      %s125 = sshll.u32 [#allocation14], 4
      %s126 = int_to_ptr.vmem [resolvable:$true] %s125
      %131 = dma.hbm_to_vmem [thread:$0]  %s8, 1024, %s126, [#allocation15], 128, 128, 8
    $region37: #{decoder_forward.1} parent=1 // pred_fallthru
      _
    // Predicated region
    $region38: #{decoder_forward.1} parent=1 // pred_check
      _
    $region39: #{decoder_forward.1} parent=1 // pred_check_branch
      %133 = sbr.rel (0) target = $region41
    $region40: #{decoder_forward.1} parent=1 // pred_region
      %s135 = ssub.s32 32, 32
      %136 = vsyncadd [#allocation15], %s135
      %s137 = sshll.u32 [#allocation16], 4
      %s138 = int_to_ptr.vmem [resolvable:$true] %s137
      %143 = dma.hbm_to_vmem [thread:$0]  %s9, 32, %s138, [#allocation15], 16, 16, 1
    $region41: #{decoder_forward.1} parent=1 // pred_fallthru
      _
    // Predicated region
    $region42: #{decoder_forward.1} parent=1 // pred_check
      _
    $region43: #{decoder_forward.1} parent=1 // pred_check_branch
      %145 = sbr.rel (0) target = $region45
    $region44: #{decoder_forward.1} parent=1 // pred_region
      %s147 = ssub.s32 1024, 1024
      %148 = vsyncadd [#allocation18], %s147
      %s149 = sshll.u32 [#allocation17], 4
      %s150 = int_to_ptr.vmem [resolvable:$true] %s149
      %155 = dma.hbm_to_vmem [thread:$0]  %s10, 1024, %s150, [#allocation18], 128, 128, 8
    $region45: #{decoder_forward.1} parent=1 // pred_fallthru
      _
    // Predicated region
    $region46: #{decoder_forward.1} parent=1 // pred_check
      _
    $region47: #{decoder_forward.1} parent=1 // pred_check_branch
      %157 = sbr.rel (0) target = $region49
    $region48: #{decoder_forward.1} parent=1 // pred_region
      %s159 = ssub.s32 32, 32
      %160 = vsyncadd [#allocation18], %s159
      %s161 = sshll.u32 [#allocation19], 4
      %s162 = int_to_ptr.vmem [resolvable:$true] %s161
      %167 = dma.hbm_to_vmem [thread:$0]  %s11, 32, %s162, [#allocation18], 16, 16, 1
    $region49: #{decoder_forward.1} parent=1 // pred_fallthru
      _
    // Predicated region
    $region50: #{decoder_forward.1} parent=1 // pred_check
      _
    $region51: #{decoder_forward.1} parent=1 // pred_check_branch
      %169 = sbr.rel (0) target = $region53
    $region52: #{decoder_forward.1} parent=1 // pred_region
      %s171 = ssub.s32 1024, 1024
      %172 = vsyncadd [#allocation21], %s171
      %s173 = sshll.u32 [#allocation20], 4
      %s174 = int_to_ptr.vmem [resolvable:$true] %s173
      %179 = dma.hbm_to_vmem [thread:$0]  %s12, 1024, %s174, [#allocation21], 128, 128, 8
    $region53: #{decoder_forward.1} parent=1 // pred_fallthru
      _
    // Predicated region
    $region54: #{decoder_forward.1} parent=1 // pred_check
      _
    $region55: #{decoder_forward.1} parent=1 // pred_check_branch
      %181 = sbr.rel (0) target = $region57
    $region56: #{decoder_forward.1} parent=1 // pred_region
      %s183 = ssub.s32 32, 32
      %184 = vsyncadd [#allocation21], %s183
      %s185 = sshll.u32 [#allocation22], 4
      %s186 = int_to_ptr.vmem [resolvable:$true] %s185
      %191 = dma.hbm_to_vmem [thread:$0]  %s13, 32, %s186, [#allocation21], 16, 16, 1
    $region57: #{decoder_forward.1} parent=1 // pred_fallthru
      _
    // Predicated region
    $region58: #{decoder_forward.1} parent=1 // pred_check
      _
    $region59: #{decoder_forward.1} parent=1 // pred_check_branch
      %193 = sbr.rel (0) target = $region61
    $region60: #{decoder_forward.1} parent=1 // pred_region
      _
    $region61: #{decoder_forward.1} parent=1 // pred_fallthru
      _
    // Predicated region
    $region62: #{decoder_forward.1} parent=1 // pred_check
      _
    $region63: #{decoder_forward.1} parent=1 // pred_check_branch
      %195 = sbr.rel (0) target = $region65
    $region64: #{decoder_forward.1} parent=1 // pred_region
      _
    $region65: #{decoder_forward.1} parent=1 // pred_fallthru
      _
    // Predicated region
    $region66: #{decoder_forward.1} parent=1 // pred_check
      _
    $region67: #{decoder_forward.1} parent=1 // pred_check_branch
      %197 = sbr.rel (0) target = $region69
    $region68: #{decoder_forward.1} parent=1 // pred_region
      %s199 = ssub.s32 2048, 2048
      %200 = vsyncadd [#allocation24], %s199
      %s201 = sshll.u32 [#allocation23], 4
      %s202 = int_to_ptr.vmem [resolvable:$true] %s201
      %207 = dma.hbm_to_vmem [thread:$0]  %s16, 2048, %s202, [#allocation24], 128, 128, 8
    $region69: #{decoder_forward.1} parent=1 // pred_fallthru
      _
    // Predicated region
    $region70: #{decoder_forward.1} parent=1 // pred_check
      _
    $region71: #{decoder_forward.1} parent=1 // pred_check_branch
      %209 = sbr.rel (0) target = $region73
    $region72: #{decoder_forward.1} parent=1 // pred_region
      _
    $region73: #{decoder_forward.1} parent=1 // pred_fallthru
      _
    // Predicated region
    $region74: #{decoder_forward.1} parent=1 // pred_check
      _
    $region75: #{decoder_forward.1} parent=1 // pred_check_branch
      %211 = sbr.rel (0) target = $region77
    $region76: #{decoder_forward.1} parent=1 // pred_region
      _
    $region77: #{decoder_forward.1} parent=1 // pred_fallthru
      _
    // Predicated region
    $region78: #{decoder_forward.1} parent=1 // pred_check
      _
    $region79: #{decoder_forward.1} parent=1 // pred_check_branch
      %213 = sbr.rel (0) target = $region81
    $region80: #{decoder_forward.1} parent=1 // pred_region
      _
    $region81: #{decoder_forward.1} parent=1 // pred_fallthru
      _
    // Predicated region
    $region82: #{decoder_forward.1} parent=1 // pred_check
      _
    $region83: #{decoder_forward.1} parent=1 // pred_check_branch
      %215 = sbr.rel (0) target = $region85
    $region84: #{decoder_forward.1} parent=1 // pred_region
      %216 = dma.done [#allocation3], 256
    $region85: #{decoder_forward.1} parent=1 // pred_fallthru
      _
    // Predicated region
    $region86: #{decoder_forward.1} parent=1 // pred_check
      _
    $region87: #{decoder_forward.1} parent=1 // pred_check_branch
      %218 = sbr.rel (0) target = $region89
    $region88: #{decoder_forward.1} parent=1 // pred_region
      %219 = dma.done [#allocation6], 256
    $region89: #{decoder_forward.1} parent=1 // pred_fallthru
      _
    // Predicated region
    $region90: #{decoder_forward.1} parent=1 // pred_check
      _
    $region91: #{decoder_forward.1} parent=1 // pred_check_branch
      %221 = sbr.rel (0) target = $region93
    $region92: #{decoder_forward.1} parent=1 // pred_region
      %222 = dma.done [#allocation6], 256
    $region93: #{decoder_forward.1} parent=1 // pred_fallthru
      _
    // Predicated region
    $region94: #{decoder_forward.1} parent=1 // pred_check
      _
    $region95: #{decoder_forward.1} parent=1 // pred_check_branch
      %224 = sbr.rel (0) target = $region97
    $region96: #{decoder_forward.1} parent=1 // pred_region
      %225 = dma.done [#allocation9], 1024
    $region97: #{decoder_forward.1} parent=1 // pred_fallthru
      _
    // Predicated region
    $region98: #{decoder_forward.1} parent=1 // pred_check
      _
    $region99: #{decoder_forward.1} parent=1 // pred_check_branch
      %227 = sbr.rel (0) target = $region101
    $region100: #{decoder_forward.1} parent=1 // pred_region
      %228 = dma.done [#allocation9], 32
    $region101: #{decoder_forward.1} parent=1 // pred_fallthru
      _
    // Predicated region
    $region102: #{decoder_forward.1} parent=1 // pred_check
      _
    $region103: #{decoder_forward.1} parent=1 // pred_check_branch
      %230 = sbr.rel (0) target = $region105
    $region104: #{decoder_forward.1} parent=1 // pred_region
      %231 = dma.done [#allocation12], 1024
    $region105: #{decoder_forward.1} parent=1 // pred_fallthru
      _
    // Predicated region
    $region106: #{decoder_forward.1} parent=1 // pred_check
      _
    $region107: #{decoder_forward.1} parent=1 // pred_check_branch
      %233 = sbr.rel (0) target = $region109
    $region108: #{decoder_forward.1} parent=1 // pred_region
      %234 = dma.done [#allocation12], 32
    $region109: #{decoder_forward.1} parent=1 // pred_fallthru
      _
    // Predicated region
    $region110: #{decoder_forward.1} parent=1 // pred_check
      _
    $region111: #{decoder_forward.1} parent=1 // pred_check_branch
      %236 = sbr.rel (0) target = $region113
    $region112: #{decoder_forward.1} parent=1 // pred_region
      %237 = dma.done [#allocation15], 1024
    $region113: #{decoder_forward.1} parent=1 // pred_fallthru
      _
    // Predicated region
    $region114: #{decoder_forward.1} parent=1 // pred_check
      _
    $region115: #{decoder_forward.1} parent=1 // pred_check_branch
      %239 = sbr.rel (0) target = $region117
    $region116: #{decoder_forward.1} parent=1 // pred_region
      %240 = dma.done [#allocation15], 32
    $region117: #{decoder_forward.1} parent=1 // pred_fallthru
      _
    // Predicated region
    $region118: #{decoder_forward.1} parent=1 // pred_check
      _
    $region119: #{decoder_forward.1} parent=1 // pred_check_branch
      %242 = sbr.rel (0) target = $region121
    $region120: #{decoder_forward.1} parent=1 // pred_region
      %243 = dma.done [#allocation18], 1024
    $region121: #{decoder_forward.1} parent=1 // pred_fallthru
      _
    // Predicated region
    $region122: #{decoder_forward.1} parent=1 // pred_check
      _
    $region123: #{decoder_forward.1} parent=1 // pred_check_branch
      %245 = sbr.rel (0) target = $region125
    $region124: #{decoder_forward.1} parent=1 // pred_region
      %246 = dma.done [#allocation18], 32
    $region125: #{decoder_forward.1} parent=1 // pred_fallthru
      _
    // Predicated region
    $region126: #{decoder_forward.1} parent=1 // pred_check
      _
    $region127: #{decoder_forward.1} parent=1 // pred_check_branch
      %248 = sbr.rel (0) target = $region129
    $region128: #{decoder_forward.1} parent=1 // pred_region
      %249 = dma.done [#allocation21], 1024
    $region129: #{decoder_forward.1} parent=1 // pred_fallthru
      _
    // Predicated region
    $region130: #{decoder_forward.1} parent=1 // pred_check
      _
    $region131: #{decoder_forward.1} parent=1 // pred_check_branch
      %251 = sbr.rel (0) target = $region133
    $region132: #{decoder_forward.1} parent=1 // pred_region
      %252 = dma.done [#allocation21], 32
    $region133: #{decoder_forward.1} parent=1 // pred_fallthru
      _
    // Predicated region
    $region134: #{decoder_forward.1} parent=1 // pred_check
      _
    $region135: #{decoder_forward.1} parent=1 // pred_check_branch
      %254 = sbr.rel (0) target = $region137
    $region136: #{decoder_forward.1} parent=1 // pred_region
      %255 = dma.done [#allocation24], 2048
    $region137: #{decoder_forward.1} parent=1 // pred_fallthru
      _
    %v256 = vld [vmem:[%s0] sm:$0xff]
    %v257 = vld [vmem:[%s0 + $0x8] sm:$0xff]
    %v258 = vld [vmem:[#allocation2] sm:$0xff]
    %v259 = vld [vmem:[#allocation2 + $0x8] sm:$0xff]
    %v260 = vld [vmem:[%s18] sm:$0x1]
    %v261 = vld [vmem:[%s19] sm:$0x1]
    %vm262 = vcmask 261120
    %v263 = vsel %vm262, %v256, 0.0
    %264 = vadd.xlane.f32.xlu0 %v263
    %v265 = vpop.xlane.xlu0 %264
    %v266 = vsel %vm262, %v257, 0.0
    %267 = vadd.xlane.f32.xlu0 %v266
    %v268 = vpop.xlane.xlu0 %267
    %v269 = vrcp.pop 32.0
    %v270 = vmul.f32 %v265, %v269
    %v271 = vmul.f32 %v268, %v269
    %v272 = vsub.f32 %v256, %v270
    %v273 = vsub.f32 %v257, %v271
    %v274 = vmul.f32 %v272, %v272
    %v275 = vmul.f32 %v273, %v273
    %v276 = vsel %vm262, %v274, 0.0
    %277 = vadd.xlane.f32.xlu0 %v276
    %v278 = vpop.xlane.xlu0 %277
    %v279 = vsel %vm262, %v275, 0.0
    %280 = vadd.xlane.f32.xlu0 %v279
    %v281 = vpop.xlane.xlu0 %280
    %v282 = vrcp.pop 31.0
    %v283 = vmul.f32 %v278, %v282
    %v284 = vmul.f32 %v281, %v282
    %v285 = vrsqrt.pop %v283
    %v286 = vmul.f32 %v283, %v285
    %vm287 = vcmp.eq.f32.partialorder %v283, inf
    %v288 = vsel %vm287, %v283, %v286
    %vm289 = vcmp.eq.f32.partialorder %v283, 0.0
    %v290 = vand.u32 %v283, 2147483648
    %v291 = vsel %vm289, %v290, %v288
    %v292 = vrsqrt.pop %v284
    %v293 = vmul.f32 %v284, %v292
    %vm294 = vcmp.eq.f32.partialorder %v284, inf
    %v295 = vsel %vm294, %v284, %v293
    %vm296 = vcmp.eq.f32.partialorder %v284, 0.0
    %v297 = vand.u32 %v284, 2147483648
    %v298 = vsel %vm296, %v297, %v295
    %v300 = vlaneseq
    %v301 = vshrl.u32 %v300, 7
    %v302 = vsub.s32 0, %v301
    %v303 = vrot.slane %v260, %v302
    %v305 = vmul.f32 %v303, %v272
    %v306 = vmul.f32 %v303, %v273
    %v307 = vadd.f32 %v291, 1e-06
    %v308 = vadd.f32 %v298, 1e-06
    %v309 = vrcp.pop %v307
    %v310 = vmul.f32 %v305, %v309
    %v311 = vrcp.pop %v308
    %v312 = vmul.f32 %v306, %v311
    %v314 = vlaneseq
    %v315 = vshrl.u32 %v314, 7
    %v316 = vsub.s32 0, %v315
    %v317 = vrot.slane %v261, %v316
    %v319 = vadd.f32 %v310, %v317
    %v320 = vadd.f32 %v312, %v317
    %v321 = vld [vmem:[#allocation8] sm:$0xff]
    %v322 = vld [vmem:[#allocation8 + $0x8] sm:$0xff]
    %v323 = vld [vmem:[#allocation8 + $0x10] sm:$0xff]
    %v324 = vld [vmem:[#allocation8 + $0x18] sm:$0xff]
    %v325 = vld [vmem:[#allocation10] sm:$0x1]
    %v327 = vlaneseq
    %v328 = vshrl.u32 %v327, 7
    %v329 = vsub.s32 0, %v328
    %v330 = vrot.slane %v325, %v329
    %v333 = vsel %vm262, %v319, 0
    %v336 = vsel %vm262, %v320, 0
    %338 = vmatprep.subr.mxu0 0.0
    %339 = vmatpush1.msra.mxu0 %v321
    %340 = vmatprep.subr.mxu0 0.0
    %341 = vmatpush1.msra.mxu0 %v322
    %342 = vmatprep.subr.mxu0 0.0
    %343 = vmatpush1.msra.mxu0 %v323
    %344 = vmatprep.subr.mxu0 0.0
    %345 = vmatpush1.msra.mxu0 %v324
    %346 = vmatprep.subr.mxu0 0.0
    %347 = vmatpush1.msra.mxu0 0.0
    %348 = vmatprep.subr.mxu0 0.0
    %349 = vmatpush1.msra.mxu0 0.0
    %350 = vmatprep.subr.mxu0 0.0
    %351 = vmatpush1.msra.mxu0 0.0
    %352 = vmatprep.subr.mxu0 0.0
    %353 = vmatpush1.msra.mxu0 0.0
    %354 = vmatprep.subr.mxu0 0.0
    %355 = vmatpush1.msra.mxu0 0.0
    %356 = vmatprep.subr.mxu0 0.0
    %357 = vmatpush1.msra.mxu0 0.0
    %358 = vmatprep.subr.mxu0 0.0
    %359 = vmatpush1.msra.mxu0 0.0
    %360 = vmatprep.subr.mxu0 0.0
    %361 = vmatpush1.msra.mxu0 0.0
    %362 = vmatprep.subr.mxu0 0.0
    %363 = vmatpush1.msra.mxu0 0.0
    %364 = vmatprep.subr.mxu0 0.0
    %365 = vmatpush1.msra.mxu0 0.0
    %366 = vmatprep.subr.mxu0 0.0
    %367 = vmatpush1.msra.mxu0 0.0
    %368 = vmatprep.subr.mxu0 0.0
    %369 = vmatpush1.msra.mxu0 0.0
    %370 = vmatprep.subr.mxu0 0.0
    %371 = vmatpush1.msra.mxu0 0.0
    %372 = vmatprep.subr.mxu0 0.0
    %373 = vmatpush1.msra.mxu0 0.0
    %374 = vmatprep.subr.mxu0 0.0
    %375 = vmatpush1.msra.mxu0 0.0
    %376 = vmatprep.subr.mxu0 0.0
    %377 = vmatpush1.msra.mxu0 0.0
    %378 = vmatprep.subr.mxu0 0.0
    %379 = vmatpush1.msra.mxu0 0.0
    %380 = vmatprep.subr.mxu0 0.0
    %381 = vmatpush1.msra.mxu0 0.0
    %382 = vmatprep.subr.mxu0 0.0
    %383 = vmatpush1.msra.mxu0 0.0
    %384 = vmatprep.subr.mxu0 0.0
    %385 = vmatpush1.msra.mxu0 0.0
    %386 = vmatprep.subr.mxu0 0.0
    %387 = vmatpush1.msra.mxu0 0.0
    %388 = vmatprep.subr.mxu0 0.0
    %389 = vmatpush1.msra.mxu0 0.0
    %390 = vmatprep.subr.mxu0 0.0
    %391 = vmatpush1.msra.mxu0 0.0
    %392 = vmatprep.subr.mxu0 0.0
    %393 = vmatpush1.msra.mxu0 0.0
    %394 = vmatprep.subr.mxu0 0.0
    %395 = vmatpush1.msra.mxu0 0.0
    %396 = vmatprep.subr.mxu0 0.0
    %397 = vmatpush1.msra.mxu0 0.0
    %398 = vmatprep.subr.mxu0 0.0
    %399 = vmatpush1.msra.mxu0 0.0
    %400 = vmatprep.subr.mxu0 0.0
    %401 = vmatpush1.msra.mxu0 0.0
    %402 = vmatprep.mubr.f32.mxu0 0.0
    %403 = vmatmul.mubr.f32.gmra.mrb[0].mxu0 %v333
    %v404 = vpop.f32.mrb[0].mxu0
    %v405 = vadd.f32 %v330, %v404
    %v406 = vpop.f32.mrb[0].mxu0
    %407 = vmatprep.mubr.f32.mxu0 0.0
    %408 = vmatmul.mubr.f32.gmra.mrb[0].mxu0 %v336
    %v409 = vpop.f32.mrb[0].mxu0
    %v410 = vadd.f32 %v330, %v409
    %v411 = vpop.f32.mrb[0].mxu0
    %412 = vdwg.mxu0
    %v413 = vld [vmem:[#allocation11] sm:$0xff]
    %v414 = vld [vmem:[#allocation11 + $0x8] sm:$0xff]
    %v415 = vld [vmem:[#allocation11 + $0x10] sm:$0xff]
    %v416 = vld [vmem:[#allocation11 + $0x18] sm:$0xff]
    %v417 = vld [vmem:[#allocation13] sm:$0x1]
    %v418 = vmul.f32 %v405, 0.35355338
    %v419 = vmul.f32 %v410, 0.35355338
    %v420 = vld [vmem:[#allocation5] sm:$0xff]
    %422 = vrot.lane.b32.xlu0 %v405, 96
    %v423 = vpop.permute.xlu0 %422
    %vm424 = vcmask 64512
    %v426 = vsel %vm424, %v418, 0
    %v428 = vsel %vm424, %v423, 0
    %430 = vmatprep.subr.mxu0 0.0
    %431 = vmatpush1.xpose.msra.mxu0 %v428
    %432 = vmatprep.subr.mxu0 0.0
    %433 = vmatpush1.xpose.msra.mxu0 0.0
    %434 = vmatprep.subr.mxu0 0.0
    %435 = vmatpush1.xpose.msra.mxu0 0.0
    %436 = vmatprep.subr.mxu0 0.0
    %437 = vmatpush1.xpose.msra.mxu0 0.0
    %438 = vmatprep.subr.mxu0 0.0
    %439 = vmatpush1.xpose.msra.mxu0 0.0
    %440 = vmatprep.subr.mxu0 0.0
    %441 = vmatpush1.xpose.msra.mxu0 0.0
    %442 = vmatprep.subr.mxu0 0.0
    %443 = vmatpush1.xpose.msra.mxu0 0.0
    %444 = vmatprep.subr.mxu0 0.0
    %445 = vmatpush1.xpose.msra.mxu0 0.0
    %446 = vmatprep.subr.mxu0 0.0
    %447 = vmatpush1.xpose.msra.mxu0 0.0
    %448 = vmatprep.subr.mxu0 0.0
    %449 = vmatpush1.xpose.msra.mxu0 0.0
    %450 = vmatprep.subr.mxu0 0.0
    %451 = vmatpush1.xpose.msra.mxu0 0.0
    %452 = vmatprep.subr.mxu0 0.0
    %453 = vmatpush1.xpose.msra.mxu0 0.0
    %454 = vmatprep.subr.mxu0 0.0
    %455 = vmatpush1.xpose.msra.mxu0 0.0
    %456 = vmatprep.subr.mxu0 0.0
    %457 = vmatpush1.xpose.msra.mxu0 0.0
    %458 = vmatprep.subr.mxu0 0.0
    %459 = vmatpush1.xpose.msra.mxu0 0.0
    %460 = vmatprep.subr.mxu0 0.0
    %461 = vmatpush1.xpose.msra.mxu0 0.0
    %462 = vmatprep.subr.mxu0 0.0
    %463 = vmatpush1.xpose.msra.mxu0 0.0
    %464 = vmatprep.subr.mxu0 0.0
    %465 = vmatpush1.xpose.msra.mxu0 0.0
    %466 = vmatprep.subr.mxu0 0.0
    %467 = vmatpush1.xpose.msra.mxu0 0.0
    %468 = vmatprep.subr.mxu0 0.0
    %469 = vmatpush1.xpose.msra.mxu0 0.0
    %470 = vmatprep.subr.mxu0 0.0
    %471 = vmatpush1.xpose.msra.mxu0 0.0
    %472 = vmatprep.subr.mxu0 0.0
    %473 = vmatpush1.xpose.msra.mxu0 0.0
    %474 = vmatprep.subr.mxu0 0.0
    %475 = vmatpush1.xpose.msra.mxu0 0.0
    %476 = vmatprep.subr.mxu0 0.0
    %477 = vmatpush1.xpose.msra.mxu0 0.0
    %478 = vmatprep.subr.mxu0 0.0
    %479 = vmatpush1.xpose.msra.mxu0 0.0
    %480 = vmatprep.subr.mxu0 0.0
    %481 = vmatpush1.xpose.msra.mxu0 0.0
    %482 = vmatprep.subr.mxu0 0.0
    %483 = vmatpush1.xpose.msra.mxu0 0.0
    %484 = vmatprep.subr.mxu0 0.0
    %485 = vmatpush1.xpose.msra.mxu0 0.0
    %486 = vmatprep.subr.mxu0 0.0
    %487 = vmatpush1.xpose.msra.mxu0 0.0
    %488 = vmatprep.subr.mxu0 0.0
    %489 = vmatpush1.xpose.msra.mxu0 0.0
    %490 = vmatprep.subr.mxu0 0.0
    %491 = vmatpush1.xpose.msra.mxu0 0.0
    %492 = vmatprep.subr.mxu0 0.0
    %493 = vmatpush1.xpose.msra.mxu0 0.0
    %494 = vmatprep.mubr.f32.mxu0 0.0
    %495 = vmatmul.mubr.f32.gmra.mrb[0].mxu0 %v426
    %v496 = vpop.f32.mrb[0].mxu0
    %v497 = vadd.f32 0.0, %v496
    %v498 = vpop.f32.mrb[0].mxu0
    %499 = vdwg.mxu0
    %vm500 = vcmp.eq.f32.partialorder %v420, 0.0
    %v501 = vsel %vm500, -1e+09, %v497
    %v502 = vsel %vm424, %v501, -inf
    %503 = vmax.xlane.f32.xlu0 %v502
    %v504 = vpop.xlane.xlu0 %503
    %v505 = vsub.f32 %v501, %v504
    %v506 = vmul.f32 %v505, 1.442695
    %v507 = vpow.pop %v506
    %v508 = vsel %vm424, %v507, 0.0
    %509 = vadd.xlane.f32.xlu0 %v508
    %v510 = vpop.xlane.xlu0 %509
    %v511 = vrcp.pop %v510
    %v512 = vmul.f32 %v507, %v511
    %513 = vrot.lane.b32.xlu0 %v405, 64
    %v514 = vpop.permute.xlu0 %513
    %v517 = vsel %vm424, %v512, 0
    %519 = vmatprep.subr.mxu0 0.0
    %520 = vmatpush1.msra.mxu0 %v514
    %521 = vmatprep.subr.mxu0 0.0
    %522 = vmatpush1.msra.mxu0 0.0
    %523 = vmatprep.subr.mxu0 0.0
    %524 = vmatpush1.msra.mxu0 0.0
    %525 = vmatprep.subr.mxu0 0.0
    %526 = vmatpush1.msra.mxu0 0.0
    %527 = vmatprep.subr.mxu0 0.0
    %528 = vmatpush1.msra.mxu0 0.0
    %529 = vmatprep.subr.mxu0 0.0
    %530 = vmatpush1.msra.mxu0 0.0
    %531 = vmatprep.subr.mxu0 0.0
    %532 = vmatpush1.msra.mxu0 0.0
    %533 = vmatprep.subr.mxu0 0.0
    %534 = vmatpush1.msra.mxu0 0.0
    %535 = vmatprep.subr.mxu0 0.0
    %536 = vmatpush1.msra.mxu0 0.0
    %537 = vmatprep.subr.mxu0 0.0
    %538 = vmatpush1.msra.mxu0 0.0
    %539 = vmatprep.subr.mxu0 0.0
    %540 = vmatpush1.msra.mxu0 0.0
    %541 = vmatprep.subr.mxu0 0.0
    %542 = vmatpush1.msra.mxu0 0.0
    %543 = vmatprep.subr.mxu0 0.0
    %544 = vmatpush1.msra.mxu0 0.0
    %545 = vmatprep.subr.mxu0 0.0
    %546 = vmatpush1.msra.mxu0 0.0
    %547 = vmatprep.subr.mxu0 0.0
    %548 = vmatpush1.msra.mxu0 0.0
    %549 = vmatprep.subr.mxu0 0.0
    %550 = vmatpush1.msra.mxu0 0.0
    %551 = vmatprep.subr.mxu0 0.0
    %552 = vmatpush1.msra.mxu0 0.0
    %553 = vmatprep.subr.mxu0 0.0
    %554 = vmatpush1.msra.mxu0 0.0
    %555 = vmatprep.subr.mxu0 0.0
    %556 = vmatpush1.msra.mxu0 0.0
    %557 = vmatprep.subr.mxu0 0.0
    %558 = vmatpush1.msra.mxu0 0.0
    %559 = vmatprep.subr.mxu0 0.0
    %560 = vmatpush1.msra.mxu0 0.0
    %561 = vmatprep.subr.mxu0 0.0
    %562 = vmatpush1.msra.mxu0 0.0
    %563 = vmatprep.subr.mxu0 0.0
    %564 = vmatpush1.msra.mxu0 0.0
    %565 = vmatprep.subr.mxu0 0.0
    %566 = vmatpush1.msra.mxu0 0.0
    %567 = vmatprep.subr.mxu0 0.0
    %568 = vmatpush1.msra.mxu0 0.0
    %569 = vmatprep.subr.mxu0 0.0
    %570 = vmatpush1.msra.mxu0 0.0
    %571 = vmatprep.subr.mxu0 0.0
    %572 = vmatpush1.msra.mxu0 0.0
    %573 = vmatprep.subr.mxu0 0.0
    %574 = vmatpush1.msra.mxu0 0.0
    %575 = vmatprep.subr.mxu0 0.0
    %576 = vmatpush1.msra.mxu0 0.0
    %577 = vmatprep.subr.mxu0 0.0
    %578 = vmatpush1.msra.mxu0 0.0
    %579 = vmatprep.subr.mxu0 0.0
    %580 = vmatpush1.msra.mxu0 0.0
    %581 = vmatprep.subr.mxu0 0.0
    %582 = vmatpush1.msra.mxu0 0.0
    %583 = vmatprep.mubr.f32.mxu0 0.0
    %584 = vmatmul.mubr.f32.gmra.mrb[0].mxu0 %v517
    %v585 = vpop.f32.mrb[0].mxu0
    %v586 = vadd.f32 0.0, %v585
    %v587 = vpop.f32.mrb[0].mxu0
    %588 = vdwg.mxu0
    %589 = vrot.lane.b32.xlu0 %v418, 120
    %v590 = vpop.permute.xlu0 %589
    %591 = vrot.lane.b32.xlu0 %v405, 88
    %v592 = vpop.permute.xlu0 %591
    %v593 = vsel %vm424, %v590, 0
    %v595 = vsel %vm424, %v592, 0
    %597 = vmatprep.subr.mxu0 0.0
    %598 = vmatpush1.xpose.msra.mxu0 %v595
    %599 = vmatprep.subr.mxu0 0.0
    %600 = vmatpush1.xpose.msra.mxu0 0.0
    %601 = vmatprep.subr.mxu0 0.0
    %602 = vmatpush1.xpose.msra.mxu0 0.0
    %603 = vmatprep.subr.mxu0 0.0
    %604 = vmatpush1.xpose.msra.mxu0 0.0
    %605 = vmatprep.subr.mxu0 0.0
    %606 = vmatpush1.xpose.msra.mxu0 0.0
    %607 = vmatprep.subr.mxu0 0.0
    %608 = vmatpush1.xpose.msra.mxu0 0.0
    %609 = vmatprep.subr.mxu0 0.0
    %610 = vmatpush1.xpose.msra.mxu0 0.0
    %611 = vmatprep.subr.mxu0 0.0
    %612 = vmatpush1.xpose.msra.mxu0 0.0
    %613 = vmatprep.subr.mxu0 0.0
    %614 = vmatpush1.xpose.msra.mxu0 0.0
    %615 = vmatprep.subr.mxu0 0.0
    %616 = vmatpush1.xpose.msra.mxu0 0.0
    %617 = vmatprep.subr.mxu0 0.0
    %618 = vmatpush1.xpose.msra.mxu0 0.0
    %619 = vmatprep.subr.mxu0 0.0
    %620 = vmatpush1.xpose.msra.mxu0 0.0
    %621 = vmatprep.subr.mxu0 0.0
    %622 = vmatpush1.xpose.msra.mxu0 0.0
    %623 = vmatprep.subr.mxu0 0.0
    %624 = vmatpush1.xpose.msra.mxu0 0.0
    %625 = vmatprep.subr.mxu0 0.0
    %626 = vmatpush1.xpose.msra.mxu0 0.0
    %627 = vmatprep.subr.mxu0 0.0
    %628 = vmatpush1.xpose.msra.mxu0 0.0
    %629 = vmatprep.subr.mxu0 0.0
    %630 = vmatpush1.xpose.msra.mxu0 0.0
    %631 = vmatprep.subr.mxu0 0.0
    %632 = vmatpush1.xpose.msra.mxu0 0.0
    %633 = vmatprep.subr.mxu0 0.0
    %634 = vmatpush1.xpose.msra.mxu0 0.0
    %635 = vmatprep.subr.mxu0 0.0
    %636 = vmatpush1.xpose.msra.mxu0 0.0
    %637 = vmatprep.subr.mxu0 0.0
    %638 = vmatpush1.xpose.msra.mxu0 0.0
    %639 = vmatprep.subr.mxu0 0.0
    %640 = vmatpush1.xpose.msra.mxu0 0.0
    %641 = vmatprep.subr.mxu0 0.0
    %642 = vmatpush1.xpose.msra.mxu0 0.0
    %643 = vmatprep.subr.mxu0 0.0
    %644 = vmatpush1.xpose.msra.mxu0 0.0
    %645 = vmatprep.subr.mxu0 0.0
    %646 = vmatpush1.xpose.msra.mxu0 0.0
    %647 = vmatprep.subr.mxu0 0.0
    %648 = vmatpush1.xpose.msra.mxu0 0.0
    %649 = vmatprep.subr.mxu0 0.0
    %650 = vmatpush1.xpose.msra.mxu0 0.0
    %651 = vmatprep.subr.mxu0 0.0
    %652 = vmatpush1.xpose.msra.mxu0 0.0
    %653 = vmatprep.subr.mxu0 0.0
    %654 = vmatpush1.xpose.msra.mxu0 0.0
    %655 = vmatprep.subr.mxu0 0.0
    %656 = vmatpush1.xpose.msra.mxu0 0.0
    %657 = vmatprep.subr.mxu0 0.0
    %658 = vmatpush1.xpose.msra.mxu0 0.0
    %659 = vmatprep.subr.mxu0 0.0
    %660 = vmatpush1.xpose.msra.mxu0 0.0
    %661 = vmatprep.mubr.f32.mxu0 0.0
    %662 = vmatmul.mubr.f32.gmra.mrb[0].mxu0 %v593
    %v663 = vpop.f32.mrb[0].mxu0
    %v664 = vadd.f32 0.0, %v663
    %v665 = vpop.f32.mrb[0].mxu0
    %666 = vdwg.mxu0
    %v667 = vsel %vm500, -1e+09, %v664
    %v668 = vsel %vm424, %v667, -inf
    %669 = vmax.xlane.f32.xlu0 %v668
    %v670 = vpop.xlane.xlu0 %669
    %v671 = vsub.f32 %v667, %v670
    %v672 = vmul.f32 %v671, 1.442695
    %v673 = vpow.pop %v672
    %v674 = vsel %vm424, %v673, 0.0
    %675 = vadd.xlane.f32.xlu0 %v674
    %v676 = vpop.xlane.xlu0 %675
    %v677 = vrcp.pop %v676
    %v678 = vmul.f32 %v673, %v677
    %679 = vrot.lane.b32.xlu0 %v405, 56
    %v680 = vpop.permute.xlu0 %679
    %v683 = vsel %vm424, %v678, 0
    %685 = vmatprep.subr.mxu0 0.0
    %686 = vmatpush1.msra.mxu0 %v680
    %687 = vmatprep.subr.mxu0 0.0
    %688 = vmatpush1.msra.mxu0 0.0
    %689 = vmatprep.subr.mxu0 0.0
    %690 = vmatpush1.msra.mxu0 0.0
    %691 = vmatprep.subr.mxu0 0.0
    %692 = vmatpush1.msra.mxu0 0.0
    %693 = vmatprep.subr.mxu0 0.0
    %694 = vmatpush1.msra.mxu0 0.0
    %695 = vmatprep.subr.mxu0 0.0
    %696 = vmatpush1.msra.mxu0 0.0
    %697 = vmatprep.subr.mxu0 0.0
    %698 = vmatpush1.msra.mxu0 0.0
    %699 = vmatprep.subr.mxu0 0.0
    %700 = vmatpush1.msra.mxu0 0.0
    %701 = vmatprep.subr.mxu0 0.0
    %702 = vmatpush1.msra.mxu0 0.0
    %703 = vmatprep.subr.mxu0 0.0
    %704 = vmatpush1.msra.mxu0 0.0
    %705 = vmatprep.subr.mxu0 0.0
    %706 = vmatpush1.msra.mxu0 0.0
    %707 = vmatprep.subr.mxu0 0.0
    %708 = vmatpush1.msra.mxu0 0.0
    %709 = vmatprep.subr.mxu0 0.0
    %710 = vmatpush1.msra.mxu0 0.0
    %711 = vmatprep.subr.mxu0 0.0
    %712 = vmatpush1.msra.mxu0 0.0
    %713 = vmatprep.subr.mxu0 0.0
    %714 = vmatpush1.msra.mxu0 0.0
    %715 = vmatprep.subr.mxu0 0.0
    %716 = vmatpush1.msra.mxu0 0.0
    %717 = vmatprep.subr.mxu0 0.0
    %718 = vmatpush1.msra.mxu0 0.0
    %719 = vmatprep.subr.mxu0 0.0
    %720 = vmatpush1.msra.mxu0 0.0
    %721 = vmatprep.subr.mxu0 0.0
    %722 = vmatpush1.msra.mxu0 0.0
    %723 = vmatprep.subr.mxu0 0.0
    %724 = vmatpush1.msra.mxu0 0.0
    %725 = vmatprep.subr.mxu0 0.0
    %726 = vmatpush1.msra.mxu0 0.0
    %727 = vmatprep.subr.mxu0 0.0
    %728 = vmatpush1.msra.mxu0 0.0
    %729 = vmatprep.subr.mxu0 0.0
    %730 = vmatpush1.msra.mxu0 0.0
    %731 = vmatprep.subr.mxu0 0.0
    %732 = vmatpush1.msra.mxu0 0.0
    %733 = vmatprep.subr.mxu0 0.0
    %734 = vmatpush1.msra.mxu0 0.0
    %735 = vmatprep.subr.mxu0 0.0
    %736 = vmatpush1.msra.mxu0 0.0
    %737 = vmatprep.subr.mxu0 0.0
    %738 = vmatpush1.msra.mxu0 0.0
    %739 = vmatprep.subr.mxu0 0.0
    %740 = vmatpush1.msra.mxu0 0.0
    %741 = vmatprep.subr.mxu0 0.0
    %742 = vmatpush1.msra.mxu0 0.0
    %743 = vmatprep.subr.mxu0 0.0
    %744 = vmatpush1.msra.mxu0 0.0
    %745 = vmatprep.subr.mxu0 0.0
    %746 = vmatpush1.msra.mxu0 0.0
    %747 = vmatprep.subr.mxu0 0.0
    %748 = vmatpush1.msra.mxu0 0.0
    %749 = vmatprep.mubr.f32.mxu0 0.0
    %750 = vmatmul.mubr.f32.gmra.mrb[0].mxu0 %v683
    %v751 = vpop.f32.mrb[0].mxu0
    %v752 = vadd.f32 0.0, %v751
    %v753 = vpop.f32.mrb[0].mxu0
    %754 = vdwg.mxu0
    %v756 = vsel %vm424, %v752, 0
    %758 = vmatprep.subr.mxu0 0.0
    %759 = vmatpush1.msra.mxu0 %v414
    %760 = vmatprep.subr.mxu0 0.0
    %761 = vmatpush1.msra.mxu0 0.0
    %762 = vmatprep.subr.mxu0 0.0
    %763 = vmatpush1.msra.mxu0 0.0
    %764 = vmatprep.subr.mxu0 0.0
    %765 = vmatpush1.msra.mxu0 0.0
    %766 = vmatprep.subr.mxu0 0.0
    %767 = vmatpush1.msra.mxu0 0.0
    %768 = vmatprep.subr.mxu0 0.0
    %769 = vmatpush1.msra.mxu0 0.0
    %770 = vmatprep.subr.mxu0 0.0
    %771 = vmatpush1.msra.mxu0 0.0
    %772 = vmatprep.subr.mxu0 0.0
    %773 = vmatpush1.msra.mxu0 0.0
    %774 = vmatprep.subr.mxu0 0.0
    %775 = vmatpush1.msra.mxu0 0.0
    %776 = vmatprep.subr.mxu0 0.0
    %777 = vmatpush1.msra.mxu0 0.0
    %778 = vmatprep.subr.mxu0 0.0
    %779 = vmatpush1.msra.mxu0 0.0
    %780 = vmatprep.subr.mxu0 0.0
    %781 = vmatpush1.msra.mxu0 0.0
    %782 = vmatprep.subr.mxu0 0.0
    %783 = vmatpush1.msra.mxu0 0.0
    %784 = vmatprep.subr.mxu0 0.0
    %785 = vmatpush1.msra.mxu0 0.0
    %786 = vmatprep.subr.mxu0 0.0
    %787 = vmatpush1.msra.mxu0 0.0
    %788 = vmatprep.subr.mxu0 0.0
    %789 = vmatpush1.msra.mxu0 0.0
    %790 = vmatprep.subr.mxu0 0.0
    %791 = vmatpush1.msra.mxu0 0.0
    %792 = vmatprep.subr.mxu0 0.0
    %793 = vmatpush1.msra.mxu0 0.0
    %794 = vmatprep.subr.mxu0 0.0
    %795 = vmatpush1.msra.mxu0 0.0
    %796 = vmatprep.subr.mxu0 0.0
    %797 = vmatpush1.msra.mxu0 0.0
    %798 = vmatprep.subr.mxu0 0.0
    %799 = vmatpush1.msra.mxu0 0.0
    %800 = vmatprep.subr.mxu0 0.0
    %801 = vmatpush1.msra.mxu0 0.0
    %802 = vmatprep.subr.mxu0 0.0
    %803 = vmatpush1.msra.mxu0 0.0
    %804 = vmatprep.subr.mxu0 0.0
    %805 = vmatpush1.msra.mxu0 0.0
    %806 = vmatprep.subr.mxu0 0.0
    %807 = vmatpush1.msra.mxu0 0.0
    %808 = vmatprep.subr.mxu0 0.0
    %809 = vmatpush1.msra.mxu0 0.0
    %810 = vmatprep.subr.mxu0 0.0
    %811 = vmatpush1.msra.mxu0 0.0
    %812 = vmatprep.subr.mxu0 0.0
    %813 = vmatpush1.msra.mxu0 0.0
    %814 = vmatprep.subr.mxu0 0.0
    %815 = vmatpush1.msra.mxu0 0.0
    %816 = vmatprep.subr.mxu0 0.0
    %817 = vmatpush1.msra.mxu0 0.0
    %818 = vmatprep.subr.mxu0 0.0
    %819 = vmatpush1.msra.mxu0 0.0
    %820 = vmatprep.subr.mxu0 0.0
    %821 = vmatpush1.msra.mxu0 0.0
    %822 = vmatprep.mubr.f32.mxu0 0.0
    %823 = vmatmul.mubr.f32.gmra.mrb[0].mxu0 %v756
    %v824 = vpop.f32.mrb[0].mxu0
    %v825 = vadd.f32 0.0, %v824
    %v826 = vpop.f32.mrb[0].mxu0
    %827 = vdwg.mxu0
    %v829 = vsel %vm424, %v586, 0
    %831 = vmatprep.subr.mxu0 0.0
    %832 = vmatpush1.msra.mxu0 %v413
    %833 = vmatprep.subr.mxu0 0.0
    %834 = vmatpush1.msra.mxu0 0.0
    %835 = vmatprep.subr.mxu0 0.0
    %836 = vmatpush1.msra.mxu0 0.0
    %837 = vmatprep.subr.mxu0 0.0
    %838 = vmatpush1.msra.mxu0 0.0
    %839 = vmatprep.subr.mxu0 0.0
    %840 = vmatpush1.msra.mxu0 0.0
    %841 = vmatprep.subr.mxu0 0.0
    %842 = vmatpush1.msra.mxu0 0.0
    %843 = vmatprep.subr.mxu0 0.0
    %844 = vmatpush1.msra.mxu0 0.0
    %845 = vmatprep.subr.mxu0 0.0
    %846 = vmatpush1.msra.mxu0 0.0
    %847 = vmatprep.subr.mxu0 0.0
    %848 = vmatpush1.msra.mxu0 0.0
    %849 = vmatprep.subr.mxu0 0.0
    %850 = vmatpush1.msra.mxu0 0.0
    %851 = vmatprep.subr.mxu0 0.0
    %852 = vmatpush1.msra.mxu0 0.0
    %853 = vmatprep.subr.mxu0 0.0
    %854 = vmatpush1.msra.mxu0 0.0
    %855 = vmatprep.subr.mxu0 0.0
    %856 = vmatpush1.msra.mxu0 0.0
    %857 = vmatprep.subr.mxu0 0.0
    %858 = vmatpush1.msra.mxu0 0.0
    %859 = vmatprep.subr.mxu0 0.0
    %860 = vmatpush1.msra.mxu0 0.0
    %861 = vmatprep.subr.mxu0 0.0
    %862 = vmatpush1.msra.mxu0 0.0
    %863 = vmatprep.subr.mxu0 0.0
    %864 = vmatpush1.msra.mxu0 0.0
    %865 = vmatprep.subr.mxu0 0.0
    %866 = vmatpush1.msra.mxu0 0.0
    %867 = vmatprep.subr.mxu0 0.0
    %868 = vmatpush1.msra.mxu0 0.0
    %869 = vmatprep.subr.mxu0 0.0
    %870 = vmatpush1.msra.mxu0 0.0
    %871 = vmatprep.subr.mxu0 0.0
    %872 = vmatpush1.msra.mxu0 0.0
    %873 = vmatprep.subr.mxu0 0.0
    %874 = vmatpush1.msra.mxu0 0.0
    %875 = vmatprep.subr.mxu0 0.0
    %876 = vmatpush1.msra.mxu0 0.0
    %877 = vmatprep.subr.mxu0 0.0
    %878 = vmatpush1.msra.mxu0 0.0
    %879 = vmatprep.subr.mxu0 0.0
    %880 = vmatpush1.msra.mxu0 0.0
    %881 = vmatprep.subr.mxu0 0.0
    %882 = vmatpush1.msra.mxu0 0.0
    %883 = vmatprep.subr.mxu0 0.0
    %884 = vmatpush1.msra.mxu0 0.0
    %885 = vmatprep.subr.mxu0 0.0
    %886 = vmatpush1.msra.mxu0 0.0
    %887 = vmatprep.subr.mxu0 0.0
    %888 = vmatpush1.msra.mxu0 0.0
    %889 = vmatprep.subr.mxu0 0.0
    %890 = vmatpush1.msra.mxu0 0.0
    %891 = vmatprep.subr.mxu0 0.0
    %892 = vmatpush1.msra.mxu0 0.0
    %893 = vmatprep.subr.mxu0 0.0
    %894 = vmatpush1.msra.mxu0 0.0
    %895 = vmatprep.mubr.f32.mxu0 0.0
    %896 = vmatmul.mubr.f32.gmra.mrb[0].mxu0 %v829
    %v897 = vpop.f32.mrb[0].mxu0
    %v898 = vadd.f32 %v825, %v897
    %v899 = vpop.f32.mrb[0].mxu0
    %900 = vdwg.mxu0
    %901 = vrot.lane.b32.xlu0 %v418, 112
    %v902 = vpop.permute.xlu0 %901
    %903 = vrot.lane.b32.xlu0 %v405, 80
    %v904 = vpop.permute.xlu0 %903
    %v905 = vsel %vm424, %v902, 0
    %v907 = vsel %vm424, %v904, 0
    %909 = vmatprep.subr.mxu0 0.0
    %910 = vmatpush1.xpose.msra.mxu0 %v907
    %911 = vmatprep.subr.mxu0 0.0
    %912 = vmatpush1.xpose.msra.mxu0 0.0
    %913 = vmatprep.subr.mxu0 0.0
    %914 = vmatpush1.xpose.msra.mxu0 0.0
    %915 = vmatprep.subr.mxu0 0.0
    %916 = vmatpush1.xpose.msra.mxu0 0.0
    %917 = vmatprep.subr.mxu0 0.0
    %918 = vmatpush1.xpose.msra.mxu0 0.0
    %919 = vmatprep.subr.mxu0 0.0
    %920 = vmatpush1.xpose.msra.mxu0 0.0
    %921 = vmatprep.subr.mxu0 0.0
    %922 = vmatpush1.xpose.msra.mxu0 0.0
    %923 = vmatprep.subr.mxu0 0.0
    %924 = vmatpush1.xpose.msra.mxu0 0.0
    %925 = vmatprep.subr.mxu0 0.0
    %926 = vmatpush1.xpose.msra.mxu0 0.0
    %927 = vmatprep.subr.mxu0 0.0
    %928 = vmatpush1.xpose.msra.mxu0 0.0
    %929 = vmatprep.subr.mxu0 0.0
    %930 = vmatpush1.xpose.msra.mxu0 0.0
    %931 = vmatprep.subr.mxu0 0.0
    %932 = vmatpush1.xpose.msra.mxu0 0.0
    %933 = vmatprep.subr.mxu0 0.0
    %934 = vmatpush1.xpose.msra.mxu0 0.0
    %935 = vmatprep.subr.mxu0 0.0
    %936 = vmatpush1.xpose.msra.mxu0 0.0
    %937 = vmatprep.subr.mxu0 0.0
    %938 = vmatpush1.xpose.msra.mxu0 0.0
    %939 = vmatprep.subr.mxu0 0.0
    %940 = vmatpush1.xpose.msra.mxu0 0.0
    %941 = vmatprep.subr.mxu0 0.0
    %942 = vmatpush1.xpose.msra.mxu0 0.0
    %943 = vmatprep.subr.mxu0 0.0
    %944 = vmatpush1.xpose.msra.mxu0 0.0
    %945 = vmatprep.subr.mxu0 0.0
    %946 = vmatpush1.xpose.msra.mxu0 0.0
    %947 = vmatprep.subr.mxu0 0.0
    %948 = vmatpush1.xpose.msra.mxu0 0.0
    %949 = vmatprep.subr.mxu0 0.0
    %950 = vmatpush1.xpose.msra.mxu0 0.0
    %951 = vmatprep.subr.mxu0 0.0
    %952 = vmatpush1.xpose.msra.mxu0 0.0
    %953 = vmatprep.subr.mxu0 0.0
    %954 = vmatpush1.xpose.msra.mxu0 0.0
    %955 = vmatprep.subr.mxu0 0.0
    %956 = vmatpush1.xpose.msra.mxu0 0.0
    %957 = vmatprep.subr.mxu0 0.0
    %958 = vmatpush1.xpose.msra.mxu0 0.0
    %959 = vmatprep.subr.mxu0 0.0
    %960 = vmatpush1.xpose.msra.mxu0 0.0
    %961 = vmatprep.subr.mxu0 0.0
    %962 = vmatpush1.xpose.msra.mxu0 0.0
    %963 = vmatprep.subr.mxu0 0.0
    %964 = vmatpush1.xpose.msra.mxu0 0.0
    %965 = vmatprep.subr.mxu0 0.0
    %966 = vmatpush1.xpose.msra.mxu0 0.0
    %967 = vmatprep.subr.mxu0 0.0
    %968 = vmatpush1.xpose.msra.mxu0 0.0
    %969 = vmatprep.subr.mxu0 0.0
    %970 = vmatpush1.xpose.msra.mxu0 0.0
    %971 = vmatprep.subr.mxu0 0.0
    %972 = vmatpush1.xpose.msra.mxu0 0.0
    %973 = vmatprep.mubr.f32.mxu0 0.0
    %974 = vmatmul.mubr.f32.gmra.mrb[0].mxu0 %v905
    %v975 = vpop.f32.mrb[0].mxu0
    %v976 = vadd.f32 0.0, %v975
    %v977 = vpop.f32.mrb[0].mxu0
    %978 = vdwg.mxu0
    %v979 = vsel %vm500, -1e+09, %v976
    %v980 = vsel %vm424, %v979, -inf
    %981 = vmax.xlane.f32.xlu0 %v980
    %v982 = vpop.xlane.xlu0 %981
    %v983 = vsub.f32 %v979, %v982
    %v984 = vmul.f32 %v983, 1.442695
    %v985 = vpow.pop %v984
    %v986 = vsel %vm424, %v985, 0.0
    %987 = vadd.xlane.f32.xlu0 %v986
    %v988 = vpop.xlane.xlu0 %987
    %v989 = vrcp.pop %v988
    %v990 = vmul.f32 %v985, %v989
    %991 = vrot.lane.b32.xlu0 %v405, 48
    %v992 = vpop.permute.xlu0 %991
    %v995 = vsel %vm424, %v990, 0
    %997 = vmatprep.subr.mxu0 0.0
    %998 = vmatpush1.msra.mxu0 %v992
    %999 = vmatprep.subr.mxu0 0.0
    %1000 = vmatpush1.msra.mxu0 0.0
    %1001 = vmatprep.subr.mxu0 0.0
    %1002 = vmatpush1.msra.mxu0 0.0
    %1003 = vmatprep.subr.mxu0 0.0
    %1004 = vmatpush1.msra.mxu0 0.0
    %1005 = vmatprep.subr.mxu0 0.0
    %1006 = vmatpush1.msra.mxu0 0.0
    %1007 = vmatprep.subr.mxu0 0.0
    %1008 = vmatpush1.msra.mxu0 0.0
    %1009 = vmatprep.subr.mxu0 0.0
    %1010 = vmatpush1.msra.mxu0 0.0
    %1011 = vmatprep.subr.mxu0 0.0
    %1012 = vmatpush1.msra.mxu0 0.0
    %1013 = vmatprep.subr.mxu0 0.0
    %1014 = vmatpush1.msra.mxu0 0.0
    %1015 = vmatprep.subr.mxu0 0.0
    %1016 = vmatpush1.msra.mxu0 0.0
    %1017 = vmatprep.subr.mxu0 0.0
    %1018 = vmatpush1.msra.mxu0 0.0
    %1019 = vmatprep.subr.mxu0 0.0
    %1020 = vmatpush1.msra.mxu0 0.0
    %1021 = vmatprep.subr.mxu0 0.0
    %1022 = vmatpush1.msra.mxu0 0.0
    %1023 = vmatprep.subr.mxu0 0.0
    %1024 = vmatpush1.msra.mxu0 0.0
    %1025 = vmatprep.subr.mxu0 0.0
    %1026 = vmatpush1.msra.mxu0 0.0
    %1027 = vmatprep.subr.mxu0 0.0
    %1028 = vmatpush1.msra.mxu0 0.0
    %1029 = vmatprep.subr.mxu0 0.0
    %1030 = vmatpush1.msra.mxu0 0.0
    %1031 = vmatprep.subr.mxu0 0.0
    %1032 = vmatpush1.msra.mxu0 0.0
    %1033 = vmatprep.subr.mxu0 0.0
    %1034 = vmatpush1.msra.mxu0 0.0
    %1035 = vmatprep.subr.mxu0 0.0
    %1036 = vmatpush1.msra.mxu0 0.0
    %1037 = vmatprep.subr.mxu0 0.0
    %1038 = vmatpush1.msra.mxu0 0.0
    %1039 = vmatprep.subr.mxu0 0.0
    %1040 = vmatpush1.msra.mxu0 0.0
    %1041 = vmatprep.subr.mxu0 0.0
    %1042 = vmatpush1.msra.mxu0 0.0
    %1043 = vmatprep.subr.mxu0 0.0
    %1044 = vmatpush1.msra.mxu0 0.0
    %1045 = vmatprep.subr.mxu0 0.0
    %1046 = vmatpush1.msra.mxu0 0.0
    %1047 = vmatprep.subr.mxu0 0.0
    %1048 = vmatpush1.msra.mxu0 0.0
    %1049 = vmatprep.subr.mxu0 0.0
    %1050 = vmatpush1.msra.mxu0 0.0
    %1051 = vmatprep.subr.mxu0 0.0
    %1052 = vmatpush1.msra.mxu0 0.0
    %1053 = vmatprep.subr.mxu0 0.0
    %1054 = vmatpush1.msra.mxu0 0.0
    %1055 = vmatprep.subr.mxu0 0.0
    %1056 = vmatpush1.msra.mxu0 0.0
    %1057 = vmatprep.subr.mxu0 0.0
    %1058 = vmatpush1.msra.mxu0 0.0
    %1059 = vmatprep.subr.mxu0 0.0
    %1060 = vmatpush1.msra.mxu0 0.0
    %1061 = vmatprep.mubr.f32.mxu0 0.0
    %1062 = vmatmul.mubr.f32.gmra.mrb[0].mxu0 %v995
    %v1063 = vpop.f32.mrb[0].mxu0
    %v1064 = vadd.f32 0.0, %v1063
    %v1065 = vpop.f32.mrb[0].mxu0
    %1066 = vdwg.mxu0
    %v1068 = vsel %vm424, %v1064, 0
    %1070 = vmatprep.subr.mxu0 0.0
    %1071 = vmatpush1.msra.mxu0 %v415
    %1072 = vmatprep.subr.mxu0 0.0
    %1073 = vmatpush1.msra.mxu0 0.0
    %1074 = vmatprep.subr.mxu0 0.0
    %1075 = vmatpush1.msra.mxu0 0.0
    %1076 = vmatprep.subr.mxu0 0.0
    %1077 = vmatpush1.msra.mxu0 0.0
    %1078 = vmatprep.subr.mxu0 0.0
    %1079 = vmatpush1.msra.mxu0 0.0
    %1080 = vmatprep.subr.mxu0 0.0
    %1081 = vmatpush1.msra.mxu0 0.0
    %1082 = vmatprep.subr.mxu0 0.0
    %1083 = vmatpush1.msra.mxu0 0.0
    %1084 = vmatprep.subr.mxu0 0.0
    %1085 = vmatpush1.msra.mxu0 0.0
    %1086 = vmatprep.subr.mxu0 0.0
    %1087 = vmatpush1.msra.mxu0 0.0
    %1088 = vmatprep.subr.mxu0 0.0
    %1089 = vmatpush1.msra.mxu0 0.0
    %1090 = vmatprep.subr.mxu0 0.0
    %1091 = vmatpush1.msra.mxu0 0.0
    %1092 = vmatprep.subr.mxu0 0.0
    %1093 = vmatpush1.msra.mxu0 0.0
    %1094 = vmatprep.subr.mxu0 0.0
    %1095 = vmatpush1.msra.mxu0 0.0
    %1096 = vmatprep.subr.mxu0 0.0
    %1097 = vmatpush1.msra.mxu0 0.0
    %1098 = vmatprep.subr.mxu0 0.0
    %1099 = vmatpush1.msra.mxu0 0.0
    %1100 = vmatprep.subr.mxu0 0.0
    %1101 = vmatpush1.msra.mxu0 0.0
    %1102 = vmatprep.subr.mxu0 0.0
    %1103 = vmatpush1.msra.mxu0 0.0
    %1104 = vmatprep.subr.mxu0 0.0
    %1105 = vmatpush1.msra.mxu0 0.0
    %1106 = vmatprep.subr.mxu0 0.0
    %1107 = vmatpush1.msra.mxu0 0.0
    %1108 = vmatprep.subr.mxu0 0.0
    %1109 = vmatpush1.msra.mxu0 0.0
    %1110 = vmatprep.subr.mxu0 0.0
    %1111 = vmatpush1.msra.mxu0 0.0
    %1112 = vmatprep.subr.mxu0 0.0
    %1113 = vmatpush1.msra.mxu0 0.0
    %1114 = vmatprep.subr.mxu0 0.0
    %1115 = vmatpush1.msra.mxu0 0.0
    %1116 = vmatprep.subr.mxu0 0.0
    %1117 = vmatpush1.msra.mxu0 0.0
    %1118 = vmatprep.subr.mxu0 0.0
    %1119 = vmatpush1.msra.mxu0 0.0
    %1120 = vmatprep.subr.mxu0 0.0
    %1121 = vmatpush1.msra.mxu0 0.0
    %1122 = vmatprep.subr.mxu0 0.0
    %1123 = vmatpush1.msra.mxu0 0.0
    %1124 = vmatprep.subr.mxu0 0.0
    %1125 = vmatpush1.msra.mxu0 0.0
    %1126 = vmatprep.subr.mxu0 0.0
    %1127 = vmatpush1.msra.mxu0 0.0
    %1128 = vmatprep.subr.mxu0 0.0
    %1129 = vmatpush1.msra.mxu0 0.0
    %1130 = vmatprep.subr.mxu0 0.0
    %1131 = vmatpush1.msra.mxu0 0.0
    %1132 = vmatprep.subr.mxu0 0.0
    %1133 = vmatpush1.msra.mxu0 0.0
    %1134 = vmatprep.mubr.f32.mxu0 0.0
    %1135 = vmatmul.mubr.f32.gmra.mrb[0].mxu0 %v1068
    %v1136 = vpop.f32.mrb[0].mxu0
    %v1137 = vadd.f32 0.0, %v1136
    %v1138 = vpop.f32.mrb[0].mxu0
    %1139 = vdwg.mxu0
    %v1140 = vadd.f32 %v898, %v1137
    %1141 = vrot.lane.b32.xlu0 %v418, 104
    %v1142 = vpop.permute.xlu0 %1141
    %1143 = vrot.lane.b32.xlu0 %v405, 72
    %v1144 = vpop.permute.xlu0 %1143
    %v1145 = vsel %vm424, %v1142, 0
    %v1147 = vsel %vm424, %v1144, 0
    %1149 = vmatprep.subr.mxu0 0.0
    %1150 = vmatpush1.xpose.msra.mxu0 %v1147
    %1151 = vmatprep.subr.mxu0 0.0
    %1152 = vmatpush1.xpose.msra.mxu0 0.0
    %1153 = vmatprep.subr.mxu0 0.0
    %1154 = vmatpush1.xpose.msra.mxu0 0.0
    %1155 = vmatprep.subr.mxu0 0.0
    %1156 = vmatpush1.xpose.msra.mxu0 0.0
    %1157 = vmatprep.subr.mxu0 0.0
    %1158 = vmatpush1.xpose.msra.mxu0 0.0
    %1159 = vmatprep.subr.mxu0 0.0
    %1160 = vmatpush1.xpose.msra.mxu0 0.0
    %1161 = vmatprep.subr.mxu0 0.0
    %1162 = vmatpush1.xpose.msra.mxu0 0.0
    %1163 = vmatprep.subr.mxu0 0.0
    %1164 = vmatpush1.xpose.msra.mxu0 0.0
    %1165 = vmatprep.subr.mxu0 0.0
    %1166 = vmatpush1.xpose.msra.mxu0 0.0
    %1167 = vmatprep.subr.mxu0 0.0
    %1168 = vmatpush1.xpose.msra.mxu0 0.0
    %1169 = vmatprep.subr.mxu0 0.0
    %1170 = vmatpush1.xpose.msra.mxu0 0.0
    %1171 = vmatprep.subr.mxu0 0.0
    %1172 = vmatpush1.xpose.msra.mxu0 0.0
    %1173 = vmatprep.subr.mxu0 0.0
    %1174 = vmatpush1.xpose.msra.mxu0 0.0
    %1175 = vmatprep.subr.mxu0 0.0
    %1176 = vmatpush1.xpose.msra.mxu0 0.0
    %1177 = vmatprep.subr.mxu0 0.0
    %1178 = vmatpush1.xpose.msra.mxu0 0.0
    %1179 = vmatprep.subr.mxu0 0.0
    %1180 = vmatpush1.xpose.msra.mxu0 0.0
    %1181 = vmatprep.subr.mxu0 0.0
    %1182 = vmatpush1.xpose.msra.mxu0 0.0
    %1183 = vmatprep.subr.mxu0 0.0
    %1184 = vmatpush1.xpose.msra.mxu0 0.0
    %1185 = vmatprep.subr.mxu0 0.0
    %1186 = vmatpush1.xpose.msra.mxu0 0.0
    %1187 = vmatprep.subr.mxu0 0.0
    %1188 = vmatpush1.xpose.msra.mxu0 0.0
    %1189 = vmatprep.subr.mxu0 0.0
    %1190 = vmatpush1.xpose.msra.mxu0 0.0
    %1191 = vmatprep.subr.mxu0 0.0
    %1192 = vmatpush1.xpose.msra.mxu0 0.0
    %1193 = vmatprep.subr.mxu0 0.0
    %1194 = vmatpush1.xpose.msra.mxu0 0.0
    %1195 = vmatprep.subr.mxu0 0.0
    %1196 = vmatpush1.xpose.msra.mxu0 0.0
    %1197 = vmatprep.subr.mxu0 0.0
    %1198 = vmatpush1.xpose.msra.mxu0 0.0
    %1199 = vmatprep.subr.mxu0 0.0
    %1200 = vmatpush1.xpose.msra.mxu0 0.0
    %1201 = vmatprep.subr.mxu0 0.0
    %1202 = vmatpush1.xpose.msra.mxu0 0.0
    %1203 = vmatprep.subr.mxu0 0.0
    %1204 = vmatpush1.xpose.msra.mxu0 0.0
    %1205 = vmatprep.subr.mxu0 0.0
    %1206 = vmatpush1.xpose.msra.mxu0 0.0
    %1207 = vmatprep.subr.mxu0 0.0
    %1208 = vmatpush1.xpose.msra.mxu0 0.0
    %1209 = vmatprep.subr.mxu0 0.0
    %1210 = vmatpush1.xpose.msra.mxu0 0.0
    %1211 = vmatprep.subr.mxu0 0.0
    %1212 = vmatpush1.xpose.msra.mxu0 0.0
    %1213 = vmatprep.mubr.f32.mxu0 0.0
    %1214 = vmatmul.mubr.f32.gmra.mrb[0].mxu0 %v1145
    %v1215 = vpop.f32.mrb[0].mxu0
    %v1216 = vadd.f32 0.0, %v1215
    %v1217 = vpop.f32.mrb[0].mxu0
    %1218 = vdwg.mxu0
    %v1219 = vsel %vm500, -1e+09, %v1216
    %v1220 = vsel %vm424, %v1219, -inf
    %1221 = vmax.xlane.f32.xlu0 %v1220
    %v1222 = vpop.xlane.xlu0 %1221
    %v1223 = vsub.f32 %v1219, %v1222
    %v1224 = vmul.f32 %v1223, 1.442695
    %v1225 = vpow.pop %v1224
    %v1226 = vsel %vm424, %v1225, 0.0
    %1227 = vadd.xlane.f32.xlu0 %v1226
    %v1228 = vpop.xlane.xlu0 %1227
    %v1229 = vrcp.pop %v1228
    %v1230 = vmul.f32 %v1225, %v1229
    %1231 = vrot.lane.b32.xlu0 %v405, 40
    %v1232 = vpop.permute.xlu0 %1231
    %v1235 = vsel %vm424, %v1230, 0
    %1237 = vmatprep.subr.mxu0 0.0
    %1238 = vmatpush1.msra.mxu0 %v1232
    %1239 = vmatprep.subr.mxu0 0.0
    %1240 = vmatpush1.msra.mxu0 0.0
    %1241 = vmatprep.subr.mxu0 0.0
    %1242 = vmatpush1.msra.mxu0 0.0
    %1243 = vmatprep.subr.mxu0 0.0
    %1244 = vmatpush1.msra.mxu0 0.0
    %1245 = vmatprep.subr.mxu0 0.0
    %1246 = vmatpush1.msra.mxu0 0.0
    %1247 = vmatprep.subr.mxu0 0.0
    %1248 = vmatpush1.msra.mxu0 0.0
    %1249 = vmatprep.subr.mxu0 0.0
    %1250 = vmatpush1.msra.mxu0 0.0
    %1251 = vmatprep.subr.mxu0 0.0
    %1252 = vmatpush1.msra.mxu0 0.0
    %1253 = vmatprep.subr.mxu0 0.0
    %1254 = vmatpush1.msra.mxu0 0.0
    %1255 = vmatprep.subr.mxu0 0.0
    %1256 = vmatpush1.msra.mxu0 0.0
    %1257 = vmatprep.subr.mxu0 0.0
    %1258 = vmatpush1.msra.mxu0 0.0
    %1259 = vmatprep.subr.mxu0 0.0
    %1260 = vmatpush1.msra.mxu0 0.0
    %1261 = vmatprep.subr.mxu0 0.0
    %1262 = vmatpush1.msra.mxu0 0.0
    %1263 = vmatprep.subr.mxu0 0.0
    %1264 = vmatpush1.msra.mxu0 0.0
    %1265 = vmatprep.subr.mxu0 0.0
    %1266 = vmatpush1.msra.mxu0 0.0
    %1267 = vmatprep.subr.mxu0 0.0
    %1268 = vmatpush1.msra.mxu0 0.0
    %1269 = vmatprep.subr.mxu0 0.0
    %1270 = vmatpush1.msra.mxu0 0.0
    %1271 = vmatprep.subr.mxu0 0.0
    %1272 = vmatpush1.msra.mxu0 0.0
    %1273 = vmatprep.subr.mxu0 0.0
    %1274 = vmatpush1.msra.mxu0 0.0
    %1275 = vmatprep.subr.mxu0 0.0
    %1276 = vmatpush1.msra.mxu0 0.0
    %1277 = vmatprep.subr.mxu0 0.0
    %1278 = vmatpush1.msra.mxu0 0.0
    %1279 = vmatprep.subr.mxu0 0.0
    %1280 = vmatpush1.msra.mxu0 0.0
    %1281 = vmatprep.subr.mxu0 0.0
    %1282 = vmatpush1.msra.mxu0 0.0
    %1283 = vmatprep.subr.mxu0 0.0
    %1284 = vmatpush1.msra.mxu0 0.0
    %1285 = vmatprep.subr.mxu0 0.0
    %1286 = vmatpush1.msra.mxu0 0.0
    %1287 = vmatprep.subr.mxu0 0.0
    %1288 = vmatpush1.msra.mxu0 0.0
    %1289 = vmatprep.subr.mxu0 0.0
    %1290 = vmatpush1.msra.mxu0 0.0
    %1291 = vmatprep.subr.mxu0 0.0
    %1292 = vmatpush1.msra.mxu0 0.0
    %1293 = vmatprep.subr.mxu0 0.0
    %1294 = vmatpush1.msra.mxu0 0.0
    %1295 = vmatprep.subr.mxu0 0.0
    %1296 = vmatpush1.msra.mxu0 0.0
    %1297 = vmatprep.subr.mxu0 0.0
    %1298 = vmatpush1.msra.mxu0 0.0
    %1299 = vmatprep.subr.mxu0 0.0
    %1300 = vmatpush1.msra.mxu0 0.0
    %1301 = vmatprep.mubr.f32.mxu0 0.0
    %1302 = vmatmul.mubr.f32.gmra.mrb[0].mxu0 %v1235
    %v1303 = vpop.f32.mrb[0].mxu0
    %v1304 = vadd.f32 0.0, %v1303
    %v1305 = vpop.f32.mrb[0].mxu0
    %1306 = vdwg.mxu0
    %v1308 = vsel %vm424, %v1304, 0
    %1310 = vmatprep.subr.mxu0 0.0
    %1311 = vmatpush1.msra.mxu0 %v416
    %1312 = vmatprep.subr.mxu0 0.0
    %1313 = vmatpush1.msra.mxu0 0.0
    %1314 = vmatprep.subr.mxu0 0.0
    %1315 = vmatpush1.msra.mxu0 0.0
    %1316 = vmatprep.subr.mxu0 0.0
    %1317 = vmatpush1.msra.mxu0 0.0
    %1318 = vmatprep.subr.mxu0 0.0
    %1319 = vmatpush1.msra.mxu0 0.0
    %1320 = vmatprep.subr.mxu0 0.0
    %1321 = vmatpush1.msra.mxu0 0.0
    %1322 = vmatprep.subr.mxu0 0.0
    %1323 = vmatpush1.msra.mxu0 0.0
    %1324 = vmatprep.subr.mxu0 0.0
    %1325 = vmatpush1.msra.mxu0 0.0
    %1326 = vmatprep.subr.mxu0 0.0
    %1327 = vmatpush1.msra.mxu0 0.0
    %1328 = vmatprep.subr.mxu0 0.0
    %1329 = vmatpush1.msra.mxu0 0.0
    %1330 = vmatprep.subr.mxu0 0.0
    %1331 = vmatpush1.msra.mxu0 0.0
    %1332 = vmatprep.subr.mxu0 0.0
    %1333 = vmatpush1.msra.mxu0 0.0
    %1334 = vmatprep.subr.mxu0 0.0
    %1335 = vmatpush1.msra.mxu0 0.0
    %1336 = vmatprep.subr.mxu0 0.0
    %1337 = vmatpush1.msra.mxu0 0.0
    %1338 = vmatprep.subr.mxu0 0.0
    %1339 = vmatpush1.msra.mxu0 0.0
    %1340 = vmatprep.subr.mxu0 0.0
    %1341 = vmatpush1.msra.mxu0 0.0
    %1342 = vmatprep.subr.mxu0 0.0
    %1343 = vmatpush1.msra.mxu0 0.0
    %1344 = vmatprep.subr.mxu0 0.0
    %1345 = vmatpush1.msra.mxu0 0.0
    %1346 = vmatprep.subr.mxu0 0.0
    %1347 = vmatpush1.msra.mxu0 0.0
    %1348 = vmatprep.subr.mxu0 0.0
    %1349 = vmatpush1.msra.mxu0 0.0
    %1350 = vmatprep.subr.mxu0 0.0
    %1351 = vmatpush1.msra.mxu0 0.0
    %1352 = vmatprep.subr.mxu0 0.0
    %1353 = vmatpush1.msra.mxu0 0.0
    %1354 = vmatprep.subr.mxu0 0.0
    %1355 = vmatpush1.msra.mxu0 0.0
    %1356 = vmatprep.subr.mxu0 0.0
    %1357 = vmatpush1.msra.mxu0 0.0
    %1358 = vmatprep.subr.mxu0 0.0
    %1359 = vmatpush1.msra.mxu0 0.0
    %1360 = vmatprep.subr.mxu0 0.0
    %1361 = vmatpush1.msra.mxu0 0.0
    %1362 = vmatprep.subr.mxu0 0.0
    %1363 = vmatpush1.msra.mxu0 0.0
    %1364 = vmatprep.subr.mxu0 0.0
    %1365 = vmatpush1.msra.mxu0 0.0
    %1366 = vmatprep.subr.mxu0 0.0
    %1367 = vmatpush1.msra.mxu0 0.0
    %1368 = vmatprep.subr.mxu0 0.0
    %1369 = vmatpush1.msra.mxu0 0.0
    %1370 = vmatprep.subr.mxu0 0.0
    %1371 = vmatpush1.msra.mxu0 0.0
    %1372 = vmatprep.subr.mxu0 0.0
    %1373 = vmatpush1.msra.mxu0 0.0
    %1374 = vmatprep.mubr.f32.mxu0 0.0
    %1375 = vmatmul.mubr.f32.gmra.mrb[0].mxu0 %v1308
    %v1376 = vpop.f32.mrb[0].mxu0
    %v1377 = vadd.f32 0.0, %v1376
    %v1378 = vpop.f32.mrb[0].mxu0
    %1379 = vdwg.mxu0
    %v1380 = vadd.f32 %v1140, %v1377
    %v1382 = vlaneseq
    %v1383 = vshrl.u32 %v1382, 7
    %v1384 = vsub.s32 0, %v1383
    %v1385 = vrot.slane %v417, %v1384
    %v1387 = vadd.f32 %v1380, %v1385
    %s1388 = scalar_lea.vmem [#allocation5], 8
    %v1389 = vld [vmem:[%s1388] sm:$0xff]
    %1391 = vrot.lane.b32.xlu0 %v410, 96
    %v1392 = vpop.permute.xlu0 %1391
    %v1394 = vsel %vm424, %v419, 0
    %v1396 = vsel %vm424, %v1392, 0
    %1398 = vmatprep.subr.mxu0 0.0
    %1399 = vmatpush1.xpose.msra.mxu0 %v1396
    %1400 = vmatprep.subr.mxu0 0.0
    %1401 = vmatpush1.xpose.msra.mxu0 0.0
    %1402 = vmatprep.subr.mxu0 0.0
    %1403 = vmatpush1.xpose.msra.mxu0 0.0
    %1404 = vmatprep.subr.mxu0 0.0
    %1405 = vmatpush1.xpose.msra.mxu0 0.0
    %1406 = vmatprep.subr.mxu0 0.0
    %1407 = vmatpush1.xpose.msra.mxu0 0.0
    %1408 = vmatprep.subr.mxu0 0.0
    %1409 = vmatpush1.xpose.msra.mxu0 0.0
    %1410 = vmatprep.subr.mxu0 0.0
    %1411 = vmatpush1.xpose.msra.mxu0 0.0
    %1412 = vmatprep.subr.mxu0 0.0
    %1413 = vmatpush1.xpose.msra.mxu0 0.0
    %1414 = vmatprep.subr.mxu0 0.0
    %1415 = vmatpush1.xpose.msra.mxu0 0.0
    %1416 = vmatprep.subr.mxu0 0.0
    %1417 = vmatpush1.xpose.msra.mxu0 0.0
    %1418 = vmatprep.subr.mxu0 0.0
    %1419 = vmatpush1.xpose.msra.mxu0 0.0
    %1420 = vmatprep.subr.mxu0 0.0
    %1421 = vmatpush1.xpose.msra.mxu0 0.0
    %1422 = vmatprep.subr.mxu0 0.0
    %1423 = vmatpush1.xpose.msra.mxu0 0.0
    %1424 = vmatprep.subr.mxu0 0.0
    %1425 = vmatpush1.xpose.msra.mxu0 0.0
    %1426 = vmatprep.subr.mxu0 0.0
    %1427 = vmatpush1.xpose.msra.mxu0 0.0
    %1428 = vmatprep.subr.mxu0 0.0
    %1429 = vmatpush1.xpose.msra.mxu0 0.0
    %1430 = vmatprep.subr.mxu0 0.0
    %1431 = vmatpush1.xpose.msra.mxu0 0.0
    %1432 = vmatprep.subr.mxu0 0.0
    %1433 = vmatpush1.xpose.msra.mxu0 0.0
    %1434 = vmatprep.subr.mxu0 0.0
    %1435 = vmatpush1.xpose.msra.mxu0 0.0
    %1436 = vmatprep.subr.mxu0 0.0
    %1437 = vmatpush1.xpose.msra.mxu0 0.0
    %1438 = vmatprep.subr.mxu0 0.0
    %1439 = vmatpush1.xpose.msra.mxu0 0.0
    %1440 = vmatprep.subr.mxu0 0.0
    %1441 = vmatpush1.xpose.msra.mxu0 0.0
    %1442 = vmatprep.subr.mxu0 0.0
    %1443 = vmatpush1.xpose.msra.mxu0 0.0
    %1444 = vmatprep.subr.mxu0 0.0
    %1445 = vmatpush1.xpose.msra.mxu0 0.0
    %1446 = vmatprep.subr.mxu0 0.0
    %1447 = vmatpush1.xpose.msra.mxu0 0.0
    %1448 = vmatprep.subr.mxu0 0.0
    %1449 = vmatpush1.xpose.msra.mxu0 0.0
    %1450 = vmatprep.subr.mxu0 0.0
    %1451 = vmatpush1.xpose.msra.mxu0 0.0
    %1452 = vmatprep.subr.mxu0 0.0
    %1453 = vmatpush1.xpose.msra.mxu0 0.0
    %1454 = vmatprep.subr.mxu0 0.0
    %1455 = vmatpush1.xpose.msra.mxu0 0.0
    %1456 = vmatprep.subr.mxu0 0.0
    %1457 = vmatpush1.xpose.msra.mxu0 0.0
    %1458 = vmatprep.subr.mxu0 0.0
    %1459 = vmatpush1.xpose.msra.mxu0 0.0
    %1460 = vmatprep.subr.mxu0 0.0
    %1461 = vmatpush1.xpose.msra.mxu0 0.0
    %1462 = vmatprep.mubr.f32.mxu0 0.0
    %1463 = vmatmul.mubr.f32.gmra.mrb[0].mxu0 %v1394
    %v1464 = vpop.f32.mrb[0].mxu0
    %v1465 = vadd.f32 0.0, %v1464
    %v1466 = vpop.f32.mrb[0].mxu0
    %1467 = vdwg.mxu0
    %vm1468 = vcmp.eq.f32.partialorder %v1389, 0.0
    %v1469 = vsel %vm1468, -1e+09, %v1465
    %v1470 = vsel %vm424, %v1469, -inf
    %1471 = vmax.xlane.f32.xlu0 %v1470
    %v1472 = vpop.xlane.xlu0 %1471
    %v1473 = vsub.f32 %v1469, %v1472
    %v1474 = vmul.f32 %v1473, 1.442695
    %v1475 = vpow.pop %v1474
    %v1476 = vsel %vm424, %v1475, 0.0
    %1477 = vadd.xlane.f32.xlu0 %v1476
    %v1478 = vpop.xlane.xlu0 %1477
    %v1479 = vrcp.pop %v1478
    %v1480 = vmul.f32 %v1475, %v1479
    %1481 = vrot.lane.b32.xlu0 %v410, 64
    %v1482 = vpop.permute.xlu0 %1481
    %v1485 = vsel %vm424, %v1480, 0
    %1487 = vmatprep.subr.mxu0 0.0
    %1488 = vmatpush1.msra.mxu0 %v1482
    %1489 = vmatprep.subr.mxu0 0.0
    %1490 = vmatpush1.msra.mxu0 0.0
    %1491 = vmatprep.subr.mxu0 0.0
    %1492 = vmatpush1.msra.mxu0 0.0
    %1493 = vmatprep.subr.mxu0 0.0
    %1494 = vmatpush1.msra.mxu0 0.0
    %1495 = vmatprep.subr.mxu0 0.0
    %1496 = vmatpush1.msra.mxu0 0.0
    %1497 = vmatprep.subr.mxu0 0.0
    %1498 = vmatpush1.msra.mxu0 0.0
    %1499 = vmatprep.subr.mxu0 0.0
    %1500 = vmatpush1.msra.mxu0 0.0
    %1501 = vmatprep.subr.mxu0 0.0
    %1502 = vmatpush1.msra.mxu0 0.0
    %1503 = vmatprep.subr.mxu0 0.0
    %1504 = vmatpush1.msra.mxu0 0.0
    %1505 = vmatprep.subr.mxu0 0.0
    %1506 = vmatpush1.msra.mxu0 0.0
    %1507 = vmatprep.subr.mxu0 0.0
    %1508 = vmatpush1.msra.mxu0 0.0
    %1509 = vmatprep.subr.mxu0 0.0
    %1510 = vmatpush1.msra.mxu0 0.0
    %1511 = vmatprep.subr.mxu0 0.0
    %1512 = vmatpush1.msra.mxu0 0.0
    %1513 = vmatprep.subr.mxu0 0.0
    %1514 = vmatpush1.msra.mxu0 0.0
    %1515 = vmatprep.subr.mxu0 0.0
    %1516 = vmatpush1.msra.mxu0 0.0
    %1517 = vmatprep.subr.mxu0 0.0
    %1518 = vmatpush1.msra.mxu0 0.0
    %1519 = vmatprep.subr.mxu0 0.0
    %1520 = vmatpush1.msra.mxu0 0.0
    %1521 = vmatprep.subr.mxu0 0.0
    %1522 = vmatpush1.msra.mxu0 0.0
    %1523 = vmatprep.subr.mxu0 0.0
    %1524 = vmatpush1.msra.mxu0 0.0
    %1525 = vmatprep.subr.mxu0 0.0
    %1526 = vmatpush1.msra.mxu0 0.0
    %1527 = vmatprep.subr.mxu0 0.0
    %1528 = vmatpush1.msra.mxu0 0.0
    %1529 = vmatprep.subr.mxu0 0.0
    %1530 = vmatpush1.msra.mxu0 0.0
    %1531 = vmatprep.subr.mxu0 0.0
    %1532 = vmatpush1.msra.mxu0 0.0
    %1533 = vmatprep.subr.mxu0 0.0
    %1534 = vmatpush1.msra.mxu0 0.0
    %1535 = vmatprep.subr.mxu0 0.0
    %1536 = vmatpush1.msra.mxu0 0.0
    %1537 = vmatprep.subr.mxu0 0.0
    %1538 = vmatpush1.msra.mxu0 0.0
    %1539 = vmatprep.subr.mxu0 0.0
    %1540 = vmatpush1.msra.mxu0 0.0
    %1541 = vmatprep.subr.mxu0 0.0
    %1542 = vmatpush1.msra.mxu0 0.0
    %1543 = vmatprep.subr.mxu0 0.0
    %1544 = vmatpush1.msra.mxu0 0.0
    %1545 = vmatprep.subr.mxu0 0.0
    %1546 = vmatpush1.msra.mxu0 0.0
    %1547 = vmatprep.subr.mxu0 0.0
    %1548 = vmatpush1.msra.mxu0 0.0
    %1549 = vmatprep.subr.mxu0 0.0
    %1550 = vmatpush1.msra.mxu0 0.0
    %1551 = vmatprep.mubr.f32.mxu0 0.0
    %1552 = vmatmul.mubr.f32.gmra.mrb[0].mxu0 %v1485
    %v1553 = vpop.f32.mrb[0].mxu0
    %v1554 = vadd.f32 0.0, %v1553
    %v1555 = vpop.f32.mrb[0].mxu0
    %1556 = vdwg.mxu0
    %1557 = vrot.lane.b32.xlu0 %v419, 120
    %v1558 = vpop.permute.xlu0 %1557
    %1559 = vrot.lane.b32.xlu0 %v410, 88
    %v1560 = vpop.permute.xlu0 %1559
    %v1561 = vsel %vm424, %v1558, 0
    %v1563 = vsel %vm424, %v1560, 0
    %1565 = vmatprep.subr.mxu0 0.0
    %1566 = vmatpush1.xpose.msra.mxu0 %v1563
    %1567 = vmatprep.subr.mxu0 0.0
    %1568 = vmatpush1.xpose.msra.mxu0 0.0
    %1569 = vmatprep.subr.mxu0 0.0
    %1570 = vmatpush1.xpose.msra.mxu0 0.0
    %1571 = vmatprep.subr.mxu0 0.0
    %1572 = vmatpush1.xpose.msra.mxu0 0.0
    %1573 = vmatprep.subr.mxu0 0.0
    %1574 = vmatpush1.xpose.msra.mxu0 0.0
    %1575 = vmatprep.subr.mxu0 0.0
    %1576 = vmatpush1.xpose.msra.mxu0 0.0
    %1577 = vmatprep.subr.mxu0 0.0
    %1578 = vmatpush1.xpose.msra.mxu0 0.0
    %1579 = vmatprep.subr.mxu0 0.0
    %1580 = vmatpush1.xpose.msra.mxu0 0.0
    %1581 = vmatprep.subr.mxu0 0.0
    %1582 = vmatpush1.xpose.msra.mxu0 0.0
    %1583 = vmatprep.subr.mxu0 0.0
    %1584 = vmatpush1.xpose.msra.mxu0 0.0
    %1585 = vmatprep.subr.mxu0 0.0
    %1586 = vmatpush1.xpose.msra.mxu0 0.0
    %1587 = vmatprep.subr.mxu0 0.0
    %1588 = vmatpush1.xpose.msra.mxu0 0.0
    %1589 = vmatprep.subr.mxu0 0.0
    %1590 = vmatpush1.xpose.msra.mxu0 0.0
    %1591 = vmatprep.subr.mxu0 0.0
    %1592 = vmatpush1.xpose.msra.mxu0 0.0
    %1593 = vmatprep.subr.mxu0 0.0
    %1594 = vmatpush1.xpose.msra.mxu0 0.0
    %1595 = vmatprep.subr.mxu0 0.0
    %1596 = vmatpush1.xpose.msra.mxu0 0.0
    %1597 = vmatprep.subr.mxu0 0.0
    %1598 = vmatpush1.xpose.msra.mxu0 0.0
    %1599 = vmatprep.subr.mxu0 0.0
    %1600 = vmatpush1.xpose.msra.mxu0 0.0
    %1601 = vmatprep.subr.mxu0 0.0
    %1602 = vmatpush1.xpose.msra.mxu0 0.0
    %1603 = vmatprep.subr.mxu0 0.0
    %1604 = vmatpush1.xpose.msra.mxu0 0.0
    %1605 = vmatprep.subr.mxu0 0.0
    %1606 = vmatpush1.xpose.msra.mxu0 0.0
    %1607 = vmatprep.subr.mxu0 0.0
    %1608 = vmatpush1.xpose.msra.mxu0 0.0
    %1609 = vmatprep.subr.mxu0 0.0
    %1610 = vmatpush1.xpose.msra.mxu0 0.0
    %1611 = vmatprep.subr.mxu0 0.0
    %1612 = vmatpush1.xpose.msra.mxu0 0.0
    %1613 = vmatprep.subr.mxu0 0.0
    %1614 = vmatpush1.xpose.msra.mxu0 0.0
    %1615 = vmatprep.subr.mxu0 0.0
    %1616 = vmatpush1.xpose.msra.mxu0 0.0
    %1617 = vmatprep.subr.mxu0 0.0
    %1618 = vmatpush1.xpose.msra.mxu0 0.0
    %1619 = vmatprep.subr.mxu0 0.0
    %1620 = vmatpush1.xpose.msra.mxu0 0.0
    %1621 = vmatprep.subr.mxu0 0.0
    %1622 = vmatpush1.xpose.msra.mxu0 0.0
    %1623 = vmatprep.subr.mxu0 0.0
    %1624 = vmatpush1.xpose.msra.mxu0 0.0
    %1625 = vmatprep.subr.mxu0 0.0
    %1626 = vmatpush1.xpose.msra.mxu0 0.0
    %1627 = vmatprep.subr.mxu0 0.0
    %1628 = vmatpush1.xpose.msra.mxu0 0.0
    %1629 = vmatprep.mubr.f32.mxu0 0.0
    %1630 = vmatmul.mubr.f32.gmra.mrb[0].mxu0 %v1561
    %v1631 = vpop.f32.mrb[0].mxu0
    %v1632 = vadd.f32 0.0, %v1631
    %v1633 = vpop.f32.mrb[0].mxu0
    %1634 = vdwg.mxu0
    %v1635 = vsel %vm1468, -1e+09, %v1632
    %v1636 = vsel %vm424, %v1635, -inf
    %1637 = vmax.xlane.f32.xlu0 %v1636
    %v1638 = vpop.xlane.xlu0 %1637
    %v1639 = vsub.f32 %v1635, %v1638
    %v1640 = vmul.f32 %v1639, 1.442695
    %v1641 = vpow.pop %v1640
    %v1642 = vsel %vm424, %v1641, 0.0
    %1643 = vadd.xlane.f32.xlu0 %v1642
    %v1644 = vpop.xlane.xlu0 %1643
    %v1645 = vrcp.pop %v1644
    %v1646 = vmul.f32 %v1641, %v1645
    %1647 = vrot.lane.b32.xlu0 %v410, 56
    %v1648 = vpop.permute.xlu0 %1647
    %v1651 = vsel %vm424, %v1646, 0
    %1653 = vmatprep.subr.mxu0 0.0
    %1654 = vmatpush1.msra.mxu0 %v1648
    %1655 = vmatprep.subr.mxu0 0.0
    %1656 = vmatpush1.msra.mxu0 0.0
    %1657 = vmatprep.subr.mxu0 0.0
    %1658 = vmatpush1.msra.mxu0 0.0
    %1659 = vmatprep.subr.mxu0 0.0
    %1660 = vmatpush1.msra.mxu0 0.0
    %1661 = vmatprep.subr.mxu0 0.0
    %1662 = vmatpush1.msra.mxu0 0.0
    %1663 = vmatprep.subr.mxu0 0.0
    %1664 = vmatpush1.msra.mxu0 0.0
    %1665 = vmatprep.subr.mxu0 0.0
    %1666 = vmatpush1.msra.mxu0 0.0
    %1667 = vmatprep.subr.mxu0 0.0
    %1668 = vmatpush1.msra.mxu0 0.0
    %1669 = vmatprep.subr.mxu0 0.0
    %1670 = vmatpush1.msra.mxu0 0.0
    %1671 = vmatprep.subr.mxu0 0.0
    %1672 = vmatpush1.msra.mxu0 0.0
    %1673 = vmatprep.subr.mxu0 0.0
    %1674 = vmatpush1.msra.mxu0 0.0
    %1675 = vmatprep.subr.mxu0 0.0
    %1676 = vmatpush1.msra.mxu0 0.0
    %1677 = vmatprep.subr.mxu0 0.0
    %1678 = vmatpush1.msra.mxu0 0.0
    %1679 = vmatprep.subr.mxu0 0.0
    %1680 = vmatpush1.msra.mxu0 0.0
    %1681 = vmatprep.subr.mxu0 0.0
    %1682 = vmatpush1.msra.mxu0 0.0
    %1683 = vmatprep.subr.mxu0 0.0
    %1684 = vmatpush1.msra.mxu0 0.0
    %1685 = vmatprep.subr.mxu0 0.0
    %1686 = vmatpush1.msra.mxu0 0.0
    %1687 = vmatprep.subr.mxu0 0.0
    %1688 = vmatpush1.msra.mxu0 0.0
    %1689 = vmatprep.subr.mxu0 0.0
    %1690 = vmatpush1.msra.mxu0 0.0
    %1691 = vmatprep.subr.mxu0 0.0
    %1692 = vmatpush1.msra.mxu0 0.0
    %1693 = vmatprep.subr.mxu0 0.0
    %1694 = vmatpush1.msra.mxu0 0.0
    %1695 = vmatprep.subr.mxu0 0.0
    %1696 = vmatpush1.msra.mxu0 0.0
    %1697 = vmatprep.subr.mxu0 0.0
    %1698 = vmatpush1.msra.mxu0 0.0
    %1699 = vmatprep.subr.mxu0 0.0
    %1700 = vmatpush1.msra.mxu0 0.0
    %1701 = vmatprep.subr.mxu0 0.0
    %1702 = vmatpush1.msra.mxu0 0.0
    %1703 = vmatprep.subr.mxu0 0.0
    %1704 = vmatpush1.msra.mxu0 0.0
    %1705 = vmatprep.subr.mxu0 0.0
    %1706 = vmatpush1.msra.mxu0 0.0
    %1707 = vmatprep.subr.mxu0 0.0
    %1708 = vmatpush1.msra.mxu0 0.0
    %1709 = vmatprep.subr.mxu0 0.0
    %1710 = vmatpush1.msra.mxu0 0.0
    %1711 = vmatprep.subr.mxu0 0.0
    %1712 = vmatpush1.msra.mxu0 0.0
    %1713 = vmatprep.subr.mxu0 0.0
    %1714 = vmatpush1.msra.mxu0 0.0
    %1715 = vmatprep.subr.mxu0 0.0
    %1716 = vmatpush1.msra.mxu0 0.0
    %1717 = vmatprep.mubr.f32.mxu0 0.0
    %1718 = vmatmul.mubr.f32.gmra.mrb[0].mxu0 %v1651
    %v1719 = vpop.f32.mrb[0].mxu0
    %v1720 = vadd.f32 0.0, %v1719
    %v1721 = vpop.f32.mrb[0].mxu0
    %1722 = vdwg.mxu0
    %v1724 = vsel %vm424, %v1720, 0
    %1726 = vmatprep.subr.mxu0 0.0
    %1727 = vmatpush1.msra.mxu0 %v414
    %1728 = vmatprep.subr.mxu0 0.0
    %1729 = vmatpush1.msra.mxu0 0.0
    %1730 = vmatprep.subr.mxu0 0.0
    %1731 = vmatpush1.msra.mxu0 0.0
    %1732 = vmatprep.subr.mxu0 0.0
    %1733 = vmatpush1.msra.mxu0 0.0
    %1734 = vmatprep.subr.mxu0 0.0
    %1735 = vmatpush1.msra.mxu0 0.0
    %1736 = vmatprep.subr.mxu0 0.0
    %1737 = vmatpush1.msra.mxu0 0.0
    %1738 = vmatprep.subr.mxu0 0.0
    %1739 = vmatpush1.msra.mxu0 0.0
    %1740 = vmatprep.subr.mxu0 0.0
    %1741 = vmatpush1.msra.mxu0 0.0
    %1742 = vmatprep.subr.mxu0 0.0
    %1743 = vmatpush1.msra.mxu0 0.0
    %1744 = vmatprep.subr.mxu0 0.0
    %1745 = vmatpush1.msra.mxu0 0.0
    %1746 = vmatprep.subr.mxu0 0.0
    %1747 = vmatpush1.msra.mxu0 0.0
    %1748 = vmatprep.subr.mxu0 0.0
    %1749 = vmatpush1.msra.mxu0 0.0
    %1750 = vmatprep.subr.mxu0 0.0
    %1751 = vmatpush1.msra.mxu0 0.0
    %1752 = vmatprep.subr.mxu0 0.0
    %1753 = vmatpush1.msra.mxu0 0.0
    %1754 = vmatprep.subr.mxu0 0.0
    %1755 = vmatpush1.msra.mxu0 0.0
    %1756 = vmatprep.subr.mxu0 0.0
    %1757 = vmatpush1.msra.mxu0 0.0
    %1758 = vmatprep.subr.mxu0 0.0
    %1759 = vmatpush1.msra.mxu0 0.0
    %1760 = vmatprep.subr.mxu0 0.0
    %1761 = vmatpush1.msra.mxu0 0.0
    %1762 = vmatprep.subr.mxu0 0.0
    %1763 = vmatpush1.msra.mxu0 0.0
    %1764 = vmatprep.subr.mxu0 0.0
    %1765 = vmatpush1.msra.mxu0 0.0
    %1766 = vmatprep.subr.mxu0 0.0
    %1767 = vmatpush1.msra.mxu0 0.0
    %1768 = vmatprep.subr.mxu0 0.0
    %1769 = vmatpush1.msra.mxu0 0.0
    %1770 = vmatprep.subr.mxu0 0.0
    %1771 = vmatpush1.msra.mxu0 0.0
    %1772 = vmatprep.subr.mxu0 0.0
    %1773 = vmatpush1.msra.mxu0 0.0
    %1774 = vmatprep.subr.mxu0 0.0
    %1775 = vmatpush1.msra.mxu0 0.0
    %1776 = vmatprep.subr.mxu0 0.0
    %1777 = vmatpush1.msra.mxu0 0.0
    %1778 = vmatprep.subr.mxu0 0.0
    %1779 = vmatpush1.msra.mxu0 0.0
    %1780 = vmatprep.subr.mxu0 0.0
    %1781 = vmatpush1.msra.mxu0 0.0
    %1782 = vmatprep.subr.mxu0 0.0
    %1783 = vmatpush1.msra.mxu0 0.0
    %1784 = vmatprep.subr.mxu0 0.0
    %1785 = vmatpush1.msra.mxu0 0.0
    %1786 = vmatprep.subr.mxu0 0.0
    %1787 = vmatpush1.msra.mxu0 0.0
    %1788 = vmatprep.subr.mxu0 0.0
    %1789 = vmatpush1.msra.mxu0 0.0
    %1790 = vmatprep.mubr.f32.mxu0 0.0
    %1791 = vmatmul.mubr.f32.gmra.mrb[0].mxu0 %v1724
    %v1792 = vpop.f32.mrb[0].mxu0
    %v1793 = vadd.f32 0.0, %v1792
    %v1794 = vpop.f32.mrb[0].mxu0
    %1795 = vdwg.mxu0
    %v1797 = vsel %vm424, %v1554, 0
    %1799 = vmatprep.subr.mxu0 0.0
    %1800 = vmatpush1.msra.mxu0 %v413
    %1801 = vmatprep.subr.mxu0 0.0
    %1802 = vmatpush1.msra.mxu0 0.0
    %1803 = vmatprep.subr.mxu0 0.0
    %1804 = vmatpush1.msra.mxu0 0.0
    %1805 = vmatprep.subr.mxu0 0.0
    %1806 = vmatpush1.msra.mxu0 0.0
    %1807 = vmatprep.subr.mxu0 0.0
    %1808 = vmatpush1.msra.mxu0 0.0
    %1809 = vmatprep.subr.mxu0 0.0
    %1810 = vmatpush1.msra.mxu0 0.0
    %1811 = vmatprep.subr.mxu0 0.0
    %1812 = vmatpush1.msra.mxu0 0.0
    %1813 = vmatprep.subr.mxu0 0.0
    %1814 = vmatpush1.msra.mxu0 0.0
    %1815 = vmatprep.subr.mxu0 0.0
    %1816 = vmatpush1.msra.mxu0 0.0
    %1817 = vmatprep.subr.mxu0 0.0
    %1818 = vmatpush1.msra.mxu0 0.0
    %1819 = vmatprep.subr.mxu0 0.0
    %1820 = vmatpush1.msra.mxu0 0.0
    %1821 = vmatprep.subr.mxu0 0.0
    %1822 = vmatpush1.msra.mxu0 0.0
    %1823 = vmatprep.subr.mxu0 0.0
    %1824 = vmatpush1.msra.mxu0 0.0
    %1825 = vmatprep.subr.mxu0 0.0
    %1826 = vmatpush1.msra.mxu0 0.0
    %1827 = vmatprep.subr.mxu0 0.0
    %1828 = vmatpush1.msra.mxu0 0.0
    %1829 = vmatprep.subr.mxu0 0.0
    %1830 = vmatpush1.msra.mxu0 0.0
    %1831 = vmatprep.subr.mxu0 0.0
    %1832 = vmatpush1.msra.mxu0 0.0
    %1833 = vmatprep.subr.mxu0 0.0
    %1834 = vmatpush1.msra.mxu0 0.0
    %1835 = vmatprep.subr.mxu0 0.0
    %1836 = vmatpush1.msra.mxu0 0.0
    %1837 = vmatprep.subr.mxu0 0.0
    %1838 = vmatpush1.msra.mxu0 0.0
    %1839 = vmatprep.subr.mxu0 0.0
    %1840 = vmatpush1.msra.mxu0 0.0
    %1841 = vmatprep.subr.mxu0 0.0
    %1842 = vmatpush1.msra.mxu0 0.0
    %1843 = vmatprep.subr.mxu0 0.0
    %1844 = vmatpush1.msra.mxu0 0.0
    %1845 = vmatprep.subr.mxu0 0.0
    %1846 = vmatpush1.msra.mxu0 0.0
    %1847 = vmatprep.subr.mxu0 0.0
    %1848 = vmatpush1.msra.mxu0 0.0
    %1849 = vmatprep.subr.mxu0 0.0
    %1850 = vmatpush1.msra.mxu0 0.0
    %1851 = vmatprep.subr.mxu0 0.0
    %1852 = vmatpush1.msra.mxu0 0.0
    %1853 = vmatprep.subr.mxu0 0.0
    %1854 = vmatpush1.msra.mxu0 0.0
    %1855 = vmatprep.subr.mxu0 0.0
    %1856 = vmatpush1.msra.mxu0 0.0
    %1857 = vmatprep.subr.mxu0 0.0
    %1858 = vmatpush1.msra.mxu0 0.0
    %1859 = vmatprep.subr.mxu0 0.0
    %1860 = vmatpush1.msra.mxu0 0.0
    %1861 = vmatprep.subr.mxu0 0.0
    %1862 = vmatpush1.msra.mxu0 0.0
    %1863 = vmatprep.mubr.f32.mxu0 0.0
    %1864 = vmatmul.mubr.f32.gmra.mrb[0].mxu0 %v1797
    %v1865 = vpop.f32.mrb[0].mxu0
    %v1866 = vadd.f32 %v1793, %v1865
    %v1867 = vpop.f32.mrb[0].mxu0
    %1868 = vdwg.mxu0
    %1869 = vrot.lane.b32.xlu0 %v419, 112
    %v1870 = vpop.permute.xlu0 %1869
    %1871 = vrot.lane.b32.xlu0 %v410, 80
    %v1872 = vpop.permute.xlu0 %1871
    %v1873 = vsel %vm424, %v1870, 0
    %v1875 = vsel %vm424, %v1872, 0
    %1877 = vmatprep.subr.mxu0 0.0
    %1878 = vmatpush1.xpose.msra.mxu0 %v1875
    %1879 = vmatprep.subr.mxu0 0.0
    %1880 = vmatpush1.xpose.msra.mxu0 0.0
    %1881 = vmatprep.subr.mxu0 0.0
    %1882 = vmatpush1.xpose.msra.mxu0 0.0
    %1883 = vmatprep.subr.mxu0 0.0
    %1884 = vmatpush1.xpose.msra.mxu0 0.0
    %1885 = vmatprep.subr.mxu0 0.0
    %1886 = vmatpush1.xpose.msra.mxu0 0.0
    %1887 = vmatprep.subr.mxu0 0.0
    %1888 = vmatpush1.xpose.msra.mxu0 0.0
    %1889 = vmatprep.subr.mxu0 0.0
    %1890 = vmatpush1.xpose.msra.mxu0 0.0
    %1891 = vmatprep.subr.mxu0 0.0
    %1892 = vmatpush1.xpose.msra.mxu0 0.0
    %1893 = vmatprep.subr.mxu0 0.0
    %1894 = vmatpush1.xpose.msra.mxu0 0.0
    %1895 = vmatprep.subr.mxu0 0.0
    %1896 = vmatpush1.xpose.msra.mxu0 0.0
    %1897 = vmatprep.subr.mxu0 0.0
    %1898 = vmatpush1.xpose.msra.mxu0 0.0
    %1899 = vmatprep.subr.mxu0 0.0
    %1900 = vmatpush1.xpose.msra.mxu0 0.0
    %1901 = vmatprep.subr.mxu0 0.0
    %1902 = vmatpush1.xpose.msra.mxu0 0.0
    %1903 = vmatprep.subr.mxu0 0.0
    %1904 = vmatpush1.xpose.msra.mxu0 0.0
    %1905 = vmatprep.subr.mxu0 0.0
    %1906 = vmatpush1.xpose.msra.mxu0 0.0
    %1907 = vmatprep.subr.mxu0 0.0
    %1908 = vmatpush1.xpose.msra.mxu0 0.0
    %1909 = vmatprep.subr.mxu0 0.0
    %1910 = vmatpush1.xpose.msra.mxu0 0.0
    %1911 = vmatprep.subr.mxu0 0.0
    %1912 = vmatpush1.xpose.msra.mxu0 0.0
    %1913 = vmatprep.subr.mxu0 0.0
    %1914 = vmatpush1.xpose.msra.mxu0 0.0
    %1915 = vmatprep.subr.mxu0 0.0
    %1916 = vmatpush1.xpose.msra.mxu0 0.0
    %1917 = vmatprep.subr.mxu0 0.0
    %1918 = vmatpush1.xpose.msra.mxu0 0.0
    %1919 = vmatprep.subr.mxu0 0.0
    %1920 = vmatpush1.xpose.msra.mxu0 0.0
    %1921 = vmatprep.subr.mxu0 0.0
    %1922 = vmatpush1.xpose.msra.mxu0 0.0
    %1923 = vmatprep.subr.mxu0 0.0
    %1924 = vmatpush1.xpose.msra.mxu0 0.0
    %1925 = vmatprep.subr.mxu0 0.0
    %1926 = vmatpush1.xpose.msra.mxu0 0.0
    %1927 = vmatprep.subr.mxu0 0.0
    %1928 = vmatpush1.xpose.msra.mxu0 0.0
    %1929 = vmatprep.subr.mxu0 0.0
    %1930 = vmatpush1.xpose.msra.mxu0 0.0
    %1931 = vmatprep.subr.mxu0 0.0
    %1932 = vmatpush1.xpose.msra.mxu0 0.0
    %1933 = vmatprep.subr.mxu0 0.0
    %1934 = vmatpush1.xpose.msra.mxu0 0.0
    %1935 = vmatprep.subr.mxu0 0.0
    %1936 = vmatpush1.xpose.msra.mxu0 0.0
    %1937 = vmatprep.subr.mxu0 0.0
    %1938 = vmatpush1.xpose.msra.mxu0 0.0
    %1939 = vmatprep.subr.mxu0 0.0
    %1940 = vmatpush1.xpose.msra.mxu0 0.0
    %1941 = vmatprep.mubr.f32.mxu0 0.0
    %1942 = vmatmul.mubr.f32.gmra.mrb[0].mxu0 %v1873
    %v1943 = vpop.f32.mrb[0].mxu0
    %v1944 = vadd.f32 0.0, %v1943
    %v1945 = vpop.f32.mrb[0].mxu0
    %1946 = vdwg.mxu0
    %v1947 = vsel %vm1468, -1e+09, %v1944
    %v1948 = vsel %vm424, %v1947, -inf
    %1949 = vmax.xlane.f32.xlu0 %v1948
    %v1950 = vpop.xlane.xlu0 %1949
    %v1951 = vsub.f32 %v1947, %v1950
    %v1952 = vmul.f32 %v1951, 1.442695
    %v1953 = vpow.pop %v1952
    %v1954 = vsel %vm424, %v1953, 0.0
    %1955 = vadd.xlane.f32.xlu0 %v1954
    %v1956 = vpop.xlane.xlu0 %1955
    %v1957 = vrcp.pop %v1956
    %v1958 = vmul.f32 %v1953, %v1957
    %1959 = vrot.lane.b32.xlu0 %v410, 48
    %v1960 = vpop.permute.xlu0 %1959
    %v1963 = vsel %vm424, %v1958, 0
    %1965 = vmatprep.subr.mxu0 0.0
    %1966 = vmatpush1.msra.mxu0 %v1960
    %1967 = vmatprep.subr.mxu0 0.0
    %1968 = vmatpush1.msra.mxu0 0.0
    %1969 = vmatprep.subr.mxu0 0.0
    %1970 = vmatpush1.msra.mxu0 0.0
    %1971 = vmatprep.subr.mxu0 0.0
    %1972 = vmatpush1.msra.mxu0 0.0
    %1973 = vmatprep.subr.mxu0 0.0
    %1974 = vmatpush1.msra.mxu0 0.0
    %1975 = vmatprep.subr.mxu0 0.0
    %1976 = vmatpush1.msra.mxu0 0.0
    %1977 = vmatprep.subr.mxu0 0.0
    %1978 = vmatpush1.msra.mxu0 0.0
    %1979 = vmatprep.subr.mxu0 0.0
    %1980 = vmatpush1.msra.mxu0 0.0
    %1981 = vmatprep.subr.mxu0 0.0
    %1982 = vmatpush1.msra.mxu0 0.0
    %1983 = vmatprep.subr.mxu0 0.0
    %1984 = vmatpush1.msra.mxu0 0.0
    %1985 = vmatprep.subr.mxu0 0.0
    %1986 = vmatpush1.msra.mxu0 0.0
    %1987 = vmatprep.subr.mxu0 0.0
    %1988 = vmatpush1.msra.mxu0 0.0
    %1989 = vmatprep.subr.mxu0 0.0
    %1990 = vmatpush1.msra.mxu0 0.0
    %1991 = vmatprep.subr.mxu0 0.0
    %1992 = vmatpush1.msra.mxu0 0.0
    %1993 = vmatprep.subr.mxu0 0.0
    %1994 = vmatpush1.msra.mxu0 0.0
    %1995 = vmatprep.subr.mxu0 0.0
    %1996 = vmatpush1.msra.mxu0 0.0
    %1997 = vmatprep.subr.mxu0 0.0
    %1998 = vmatpush1.msra.mxu0 0.0
    %1999 = vmatprep.subr.mxu0 0.0
    %2000 = vmatpush1.msra.mxu0 0.0
    %2001 = vmatprep.subr.mxu0 0.0
    %2002 = vmatpush1.msra.mxu0 0.0
    %2003 = vmatprep.subr.mxu0 0.0
    %2004 = vmatpush1.msra.mxu0 0.0
    %2005 = vmatprep.subr.mxu0 0.0
    %2006 = vmatpush1.msra.mxu0 0.0
    %2007 = vmatprep.subr.mxu0 0.0
    %2008 = vmatpush1.msra.mxu0 0.0
    %2009 = vmatprep.subr.mxu0 0.0
    %2010 = vmatpush1.msra.mxu0 0.0
    %2011 = vmatprep.subr.mxu0 0.0
    %2012 = vmatpush1.msra.mxu0 0.0
    %2013 = vmatprep.subr.mxu0 0.0
    %2014 = vmatpush1.msra.mxu0 0.0
    %2015 = vmatprep.subr.mxu0 0.0
    %2016 = vmatpush1.msra.mxu0 0.0
    %2017 = vmatprep.subr.mxu0 0.0
    %2018 = vmatpush1.msra.mxu0 0.0
    %2019 = vmatprep.subr.mxu0 0.0
    %2020 = vmatpush1.msra.mxu0 0.0
    %2021 = vmatprep.subr.mxu0 0.0
    %2022 = vmatpush1.msra.mxu0 0.0
    %2023 = vmatprep.subr.mxu0 0.0
    %2024 = vmatpush1.msra.mxu0 0.0
    %2025 = vmatprep.subr.mxu0 0.0
    %2026 = vmatpush1.msra.mxu0 0.0
    %2027 = vmatprep.subr.mxu0 0.0
    %2028 = vmatpush1.msra.mxu0 0.0
    %2029 = vmatprep.mubr.f32.mxu0 0.0
    %2030 = vmatmul.mubr.f32.gmra.mrb[0].mxu0 %v1963
    %v2031 = vpop.f32.mrb[0].mxu0
    %v2032 = vadd.f32 0.0, %v2031
    %v2033 = vpop.f32.mrb[0].mxu0
    %2034 = vdwg.mxu0
    %v2036 = vsel %vm424, %v2032, 0
    %2038 = vmatprep.subr.mxu0 0.0
    %2039 = vmatpush1.msra.mxu0 %v415
    %2040 = vmatprep.subr.mxu0 0.0
    %2041 = vmatpush1.msra.mxu0 0.0
    %2042 = vmatprep.subr.mxu0 0.0
    %2043 = vmatpush1.msra.mxu0 0.0
    %2044 = vmatprep.subr.mxu0 0.0
    %2045 = vmatpush1.msra.mxu0 0.0
    %2046 = vmatprep.subr.mxu0 0.0
    %2047 = vmatpush1.msra.mxu0 0.0
    %2048 = vmatprep.subr.mxu0 0.0
    %2049 = vmatpush1.msra.mxu0 0.0
    %2050 = vmatprep.subr.mxu0 0.0
    %2051 = vmatpush1.msra.mxu0 0.0
    %2052 = vmatprep.subr.mxu0 0.0
    %2053 = vmatpush1.msra.mxu0 0.0
    %2054 = vmatprep.subr.mxu0 0.0
    %2055 = vmatpush1.msra.mxu0 0.0
    %2056 = vmatprep.subr.mxu0 0.0
    %2057 = vmatpush1.msra.mxu0 0.0
    %2058 = vmatprep.subr.mxu0 0.0
    %2059 = vmatpush1.msra.mxu0 0.0
    %2060 = vmatprep.subr.mxu0 0.0
    %2061 = vmatpush1.msra.mxu0 0.0
    %2062 = vmatprep.subr.mxu0 0.0
    %2063 = vmatpush1.msra.mxu0 0.0
    %2064 = vmatprep.subr.mxu0 0.0
    %2065 = vmatpush1.msra.mxu0 0.0
    %2066 = vmatprep.subr.mxu0 0.0
    %2067 = vmatpush1.msra.mxu0 0.0
    %2068 = vmatprep.subr.mxu0 0.0
    %2069 = vmatpush1.msra.mxu0 0.0
    %2070 = vmatprep.subr.mxu0 0.0
    %2071 = vmatpush1.msra.mxu0 0.0
    %2072 = vmatprep.subr.mxu0 0.0
    %2073 = vmatpush1.msra.mxu0 0.0
    %2074 = vmatprep.subr.mxu0 0.0
    %2075 = vmatpush1.msra.mxu0 0.0
    %2076 = vmatprep.subr.mxu0 0.0
    %2077 = vmatpush1.msra.mxu0 0.0
    %2078 = vmatprep.subr.mxu0 0.0
    %2079 = vmatpush1.msra.mxu0 0.0
    %2080 = vmatprep.subr.mxu0 0.0
    %2081 = vmatpush1.msra.mxu0 0.0
    %2082 = vmatprep.subr.mxu0 0.0
    %2083 = vmatpush1.msra.mxu0 0.0
    %2084 = vmatprep.subr.mxu0 0.0
    %2085 = vmatpush1.msra.mxu0 0.0
    %2086 = vmatprep.subr.mxu0 0.0
    %2087 = vmatpush1.msra.mxu0 0.0
    %2088 = vmatprep.subr.mxu0 0.0
    %2089 = vmatpush1.msra.mxu0 0.0
    %2090 = vmatprep.subr.mxu0 0.0
    %2091 = vmatpush1.msra.mxu0 0.0
    %2092 = vmatprep.subr.mxu0 0.0
    %2093 = vmatpush1.msra.mxu0 0.0
    %2094 = vmatprep.subr.mxu0 0.0
    %2095 = vmatpush1.msra.mxu0 0.0
    %2096 = vmatprep.subr.mxu0 0.0
    %2097 = vmatpush1.msra.mxu0 0.0
    %2098 = vmatprep.subr.mxu0 0.0
    %2099 = vmatpush1.msra.mxu0 0.0
    %2100 = vmatprep.subr.mxu0 0.0
    %2101 = vmatpush1.msra.mxu0 0.0
    %2102 = vmatprep.mubr.f32.mxu0 0.0
    %2103 = vmatmul.mubr.f32.gmra.mrb[0].mxu0 %v2036
    %v2104 = vpop.f32.mrb[0].mxu0
    %v2105 = vadd.f32 0.0, %v2104
    %v2106 = vpop.f32.mrb[0].mxu0
    %2107 = vdwg.mxu0
    %v2108 = vadd.f32 %v1866, %v2105
    %2109 = vrot.lane.b32.xlu0 %v419, 104
    %v2110 = vpop.permute.xlu0 %2109
    %2111 = vrot.lane.b32.xlu0 %v410, 72
    %v2112 = vpop.permute.xlu0 %2111
    %v2113 = vsel %vm424, %v2110, 0
    %v2115 = vsel %vm424, %v2112, 0
    %2117 = vmatprep.subr.mxu0 0.0
    %2118 = vmatpush1.xpose.msra.mxu0 %v2115
    %2119 = vmatprep.subr.mxu0 0.0
    %2120 = vmatpush1.xpose.msra.mxu0 0.0
    %2121 = vmatprep.subr.mxu0 0.0
    %2122 = vmatpush1.xpose.msra.mxu0 0.0
    %2123 = vmatprep.subr.mxu0 0.0
    %2124 = vmatpush1.xpose.msra.mxu0 0.0
    %2125 = vmatprep.subr.mxu0 0.0
    %2126 = vmatpush1.xpose.msra.mxu0 0.0
    %2127 = vmatprep.subr.mxu0 0.0
    %2128 = vmatpush1.xpose.msra.mxu0 0.0
    %2129 = vmatprep.subr.mxu0 0.0
    %2130 = vmatpush1.xpose.msra.mxu0 0.0
    %2131 = vmatprep.subr.mxu0 0.0
    %2132 = vmatpush1.xpose.msra.mxu0 0.0
    %2133 = vmatprep.subr.mxu0 0.0
    %2134 = vmatpush1.xpose.msra.mxu0 0.0
    %2135 = vmatprep.subr.mxu0 0.0
    %2136 = vmatpush1.xpose.msra.mxu0 0.0
    %2137 = vmatprep.subr.mxu0 0.0
    %2138 = vmatpush1.xpose.msra.mxu0 0.0
    %2139 = vmatprep.subr.mxu0 0.0
    %2140 = vmatpush1.xpose.msra.mxu0 0.0
    %2141 = vmatprep.subr.mxu0 0.0
    %2142 = vmatpush1.xpose.msra.mxu0 0.0
    %2143 = vmatprep.subr.mxu0 0.0
    %2144 = vmatpush1.xpose.msra.mxu0 0.0
    %2145 = vmatprep.subr.mxu0 0.0
    %2146 = vmatpush1.xpose.msra.mxu0 0.0
    %2147 = vmatprep.subr.mxu0 0.0
    %2148 = vmatpush1.xpose.msra.mxu0 0.0
    %2149 = vmatprep.subr.mxu0 0.0
    %2150 = vmatpush1.xpose.msra.mxu0 0.0
    %2151 = vmatprep.subr.mxu0 0.0
    %2152 = vmatpush1.xpose.msra.mxu0 0.0
    %2153 = vmatprep.subr.mxu0 0.0
    %2154 = vmatpush1.xpose.msra.mxu0 0.0
    %2155 = vmatprep.subr.mxu0 0.0
    %2156 = vmatpush1.xpose.msra.mxu0 0.0
    %2157 = vmatprep.subr.mxu0 0.0
    %2158 = vmatpush1.xpose.msra.mxu0 0.0
    %2159 = vmatprep.subr.mxu0 0.0
    %2160 = vmatpush1.xpose.msra.mxu0 0.0
    %2161 = vmatprep.subr.mxu0 0.0
    %2162 = vmatpush1.xpose.msra.mxu0 0.0
    %2163 = vmatprep.subr.mxu0 0.0
    %2164 = vmatpush1.xpose.msra.mxu0 0.0
    %2165 = vmatprep.subr.mxu0 0.0
    %2166 = vmatpush1.xpose.msra.mxu0 0.0
    %2167 = vmatprep.subr.mxu0 0.0
    %2168 = vmatpush1.xpose.msra.mxu0 0.0
    %2169 = vmatprep.subr.mxu0 0.0
    %2170 = vmatpush1.xpose.msra.mxu0 0.0
    %2171 = vmatprep.subr.mxu0 0.0
    %2172 = vmatpush1.xpose.msra.mxu0 0.0
    %2173 = vmatprep.subr.mxu0 0.0
    %2174 = vmatpush1.xpose.msra.mxu0 0.0
    %2175 = vmatprep.subr.mxu0 0.0
    %2176 = vmatpush1.xpose.msra.mxu0 0.0
    %2177 = vmatprep.subr.mxu0 0.0
    %2178 = vmatpush1.xpose.msra.mxu0 0.0
    %2179 = vmatprep.subr.mxu0 0.0
    %2180 = vmatpush1.xpose.msra.mxu0 0.0
    %2181 = vmatprep.mubr.f32.mxu0 0.0
    %2182 = vmatmul.mubr.f32.gmra.mrb[0].mxu0 %v2113
    %v2183 = vpop.f32.mrb[0].mxu0
    %v2184 = vadd.f32 0.0, %v2183
    %v2185 = vpop.f32.mrb[0].mxu0
    %2186 = vdwg.mxu0
    %v2187 = vsel %vm1468, -1e+09, %v2184
    %v2188 = vsel %vm424, %v2187, -inf
    %2189 = vmax.xlane.f32.xlu0 %v2188
    %v2190 = vpop.xlane.xlu0 %2189
    %v2191 = vsub.f32 %v2187, %v2190
    %v2192 = vmul.f32 %v2191, 1.442695
    %v2193 = vpow.pop %v2192
    %v2194 = vsel %vm424, %v2193, 0.0
    %2195 = vadd.xlane.f32.xlu0 %v2194
    %v2196 = vpop.xlane.xlu0 %2195
    %v2197 = vrcp.pop %v2196
    %v2198 = vmul.f32 %v2193, %v2197
    %2199 = vrot.lane.b32.xlu0 %v410, 40
    %v2200 = vpop.permute.xlu0 %2199
    %v2203 = vsel %vm424, %v2198, 0
    %2205 = vmatprep.subr.mxu0 0.0
    %2206 = vmatpush1.msra.mxu0 %v2200
    %2207 = vmatprep.subr.mxu0 0.0
    %2208 = vmatpush1.msra.mxu0 0.0
    %2209 = vmatprep.subr.mxu0 0.0
    %2210 = vmatpush1.msra.mxu0 0.0
    %2211 = vmatprep.subr.mxu0 0.0
    %2212 = vmatpush1.msra.mxu0 0.0
    %2213 = vmatprep.subr.mxu0 0.0
    %2214 = vmatpush1.msra.mxu0 0.0
    %2215 = vmatprep.subr.mxu0 0.0
    %2216 = vmatpush1.msra.mxu0 0.0
    %2217 = vmatprep.subr.mxu0 0.0
    %2218 = vmatpush1.msra.mxu0 0.0
    %2219 = vmatprep.subr.mxu0 0.0
    %2220 = vmatpush1.msra.mxu0 0.0
    %2221 = vmatprep.subr.mxu0 0.0
    %2222 = vmatpush1.msra.mxu0 0.0
    %2223 = vmatprep.subr.mxu0 0.0
    %2224 = vmatpush1.msra.mxu0 0.0
    %2225 = vmatprep.subr.mxu0 0.0
    %2226 = vmatpush1.msra.mxu0 0.0
    %2227 = vmatprep.subr.mxu0 0.0
    %2228 = vmatpush1.msra.mxu0 0.0
    %2229 = vmatprep.subr.mxu0 0.0
    %2230 = vmatpush1.msra.mxu0 0.0
    %2231 = vmatprep.subr.mxu0 0.0
    %2232 = vmatpush1.msra.mxu0 0.0
    %2233 = vmatprep.subr.mxu0 0.0
    %2234 = vmatpush1.msra.mxu0 0.0
    %2235 = vmatprep.subr.mxu0 0.0
    %2236 = vmatpush1.msra.mxu0 0.0
    %2237 = vmatprep.subr.mxu0 0.0
    %2238 = vmatpush1.msra.mxu0 0.0
    %2239 = vmatprep.subr.mxu0 0.0
    %2240 = vmatpush1.msra.mxu0 0.0
    %2241 = vmatprep.subr.mxu0 0.0
    %2242 = vmatpush1.msra.mxu0 0.0
    %2243 = vmatprep.subr.mxu0 0.0
    %2244 = vmatpush1.msra.mxu0 0.0
    %2245 = vmatprep.subr.mxu0 0.0
    %2246 = vmatpush1.msra.mxu0 0.0
    %2247 = vmatprep.subr.mxu0 0.0
    %2248 = vmatpush1.msra.mxu0 0.0
    %2249 = vmatprep.subr.mxu0 0.0
    %2250 = vmatpush1.msra.mxu0 0.0
    %2251 = vmatprep.subr.mxu0 0.0
    %2252 = vmatpush1.msra.mxu0 0.0
    %2253 = vmatprep.subr.mxu0 0.0
    %2254 = vmatpush1.msra.mxu0 0.0
    %2255 = vmatprep.subr.mxu0 0.0
    %2256 = vmatpush1.msra.mxu0 0.0
    %2257 = vmatprep.subr.mxu0 0.0
    %2258 = vmatpush1.msra.mxu0 0.0
    %2259 = vmatprep.subr.mxu0 0.0
    %2260 = vmatpush1.msra.mxu0 0.0
    %2261 = vmatprep.subr.mxu0 0.0
    %2262 = vmatpush1.msra.mxu0 0.0
    %2263 = vmatprep.subr.mxu0 0.0
    %2264 = vmatpush1.msra.mxu0 0.0
    %2265 = vmatprep.subr.mxu0 0.0
    %2266 = vmatpush1.msra.mxu0 0.0
    %2267 = vmatprep.subr.mxu0 0.0
    %2268 = vmatpush1.msra.mxu0 0.0
    %2269 = vmatprep.mubr.f32.mxu0 0.0
    %2270 = vmatmul.mubr.f32.gmra.mrb[0].mxu0 %v2203
    %v2271 = vpop.f32.mrb[0].mxu0
    %v2272 = vadd.f32 0.0, %v2271
    %v2273 = vpop.f32.mrb[0].mxu0
    %2274 = vdwg.mxu0
    %v2276 = vsel %vm424, %v2272, 0
    %2278 = vmatprep.subr.mxu0 0.0
    %2279 = vmatpush1.msra.mxu0 %v416
    %2280 = vmatprep.subr.mxu0 0.0
    %2281 = vmatpush1.msra.mxu0 0.0
    %2282 = vmatprep.subr.mxu0 0.0
    %2283 = vmatpush1.msra.mxu0 0.0
    %2284 = vmatprep.subr.mxu0 0.0
    %2285 = vmatpush1.msra.mxu0 0.0
    %2286 = vmatprep.subr.mxu0 0.0
    %2287 = vmatpush1.msra.mxu0 0.0
    %2288 = vmatprep.subr.mxu0 0.0
    %2289 = vmatpush1.msra.mxu0 0.0
    %2290 = vmatprep.subr.mxu0 0.0
    %2291 = vmatpush1.msra.mxu0 0.0
    %2292 = vmatprep.subr.mxu0 0.0
    %2293 = vmatpush1.msra.mxu0 0.0
    %2294 = vmatprep.subr.mxu0 0.0
    %2295 = vmatpush1.msra.mxu0 0.0
    %2296 = vmatprep.subr.mxu0 0.0
    %2297 = vmatpush1.msra.mxu0 0.0
    %2298 = vmatprep.subr.mxu0 0.0
    %2299 = vmatpush1.msra.mxu0 0.0
    %2300 = vmatprep.subr.mxu0 0.0
    %2301 = vmatpush1.msra.mxu0 0.0
    %2302 = vmatprep.subr.mxu0 0.0
    %2303 = vmatpush1.msra.mxu0 0.0
    %2304 = vmatprep.subr.mxu0 0.0
    %2305 = vmatpush1.msra.mxu0 0.0
    %2306 = vmatprep.subr.mxu0 0.0
    %2307 = vmatpush1.msra.mxu0 0.0
    %2308 = vmatprep.subr.mxu0 0.0
    %2309 = vmatpush1.msra.mxu0 0.0
    %2310 = vmatprep.subr.mxu0 0.0
    %2311 = vmatpush1.msra.mxu0 0.0
    %2312 = vmatprep.subr.mxu0 0.0
    %2313 = vmatpush1.msra.mxu0 0.0
    %2314 = vmatprep.subr.mxu0 0.0
    %2315 = vmatpush1.msra.mxu0 0.0
    %2316 = vmatprep.subr.mxu0 0.0
    %2317 = vmatpush1.msra.mxu0 0.0
    %2318 = vmatprep.subr.mxu0 0.0
    %2319 = vmatpush1.msra.mxu0 0.0
    %2320 = vmatprep.subr.mxu0 0.0
    %2321 = vmatpush1.msra.mxu0 0.0
    %2322 = vmatprep.subr.mxu0 0.0
    %2323 = vmatpush1.msra.mxu0 0.0
    %2324 = vmatprep.subr.mxu0 0.0
    %2325 = vmatpush1.msra.mxu0 0.0
    %2326 = vmatprep.subr.mxu0 0.0
    %2327 = vmatpush1.msra.mxu0 0.0
    %2328 = vmatprep.subr.mxu0 0.0
    %2329 = vmatpush1.msra.mxu0 0.0
    %2330 = vmatprep.subr.mxu0 0.0
    %2331 = vmatpush1.msra.mxu0 0.0
    %2332 = vmatprep.subr.mxu0 0.0
    %2333 = vmatpush1.msra.mxu0 0.0
    %2334 = vmatprep.subr.mxu0 0.0
    %2335 = vmatpush1.msra.mxu0 0.0
    %2336 = vmatprep.subr.mxu0 0.0
    %2337 = vmatpush1.msra.mxu0 0.0
    %2338 = vmatprep.subr.mxu0 0.0
    %2339 = vmatpush1.msra.mxu0 0.0
    %2340 = vmatprep.subr.mxu0 0.0
    %2341 = vmatpush1.msra.mxu0 0.0
    %2342 = vmatprep.mubr.f32.mxu0 0.0
    %2343 = vmatmul.mubr.f32.gmra.mrb[0].mxu0 %v2276
    %v2344 = vpop.f32.mrb[0].mxu0
    %v2345 = vadd.f32 0.0, %v2344
    %v2346 = vpop.f32.mrb[0].mxu0
    %2347 = vdwg.mxu0
    %v2348 = vadd.f32 %v2108, %v2345
    %v2349 = vadd.f32 %v2348, %v1385
    %v2350 = vadd.f32 %v256, %v1387
    %v2351 = vadd.f32 %v257, %v2349
    %s2352 = scalar_lea.vmem %s18, 1
    %v2353 = vld [vmem:[%s2352] sm:$0x1]
    %s2354 = scalar_lea.vmem %s19, 1
    %v2355 = vld [vmem:[%s2354] sm:$0x1]
    %v2356 = vsel %vm262, %v2350, 0.0
    %2357 = vadd.xlane.f32.xlu0 %v2356
    %v2358 = vpop.xlane.xlu0 %2357
    %v2359 = vsel %vm262, %v2351, 0.0
    %2360 = vadd.xlane.f32.xlu0 %v2359
    %v2361 = vpop.xlane.xlu0 %2360
    %v2362 = vmul.f32 %v2358, %v269
    %v2363 = vmul.f32 %v2361, %v269
    %v2364 = vsub.f32 %v2350, %v2362
    %v2365 = vsub.f32 %v2351, %v2363
    %v2366 = vmul.f32 %v2364, %v2364
    %v2367 = vmul.f32 %v2365, %v2365
    %v2368 = vsel %vm262, %v2366, 0.0
    %2369 = vadd.xlane.f32.xlu0 %v2368
    %v2370 = vpop.xlane.xlu0 %2369
    %v2371 = vsel %vm262, %v2367, 0.0
    %2372 = vadd.xlane.f32.xlu0 %v2371
    %v2373 = vpop.xlane.xlu0 %2372
    %v2374 = vmul.f32 %v2370, %v282
    %v2375 = vmul.f32 %v2373, %v282
    %v2376 = vrsqrt.pop %v2374
    %v2377 = vmul.f32 %v2374, %v2376
    %vm2378 = vcmp.eq.f32.partialorder %v2374, inf
    %v2379 = vsel %vm2378, %v2374, %v2377
    %vm2380 = vcmp.eq.f32.partialorder %v2374, 0.0
    %v2381 = vand.u32 %v2374, 2147483648
    %v2382 = vsel %vm2380, %v2381, %v2379
    %v2383 = vrsqrt.pop %v2375
    %v2384 = vmul.f32 %v2375, %v2383
    %vm2385 = vcmp.eq.f32.partialorder %v2375, inf
    %v2386 = vsel %vm2385, %v2375, %v2384
    %vm2387 = vcmp.eq.f32.partialorder %v2375, 0.0
    %v2388 = vand.u32 %v2375, 2147483648
    %v2389 = vsel %vm2387, %v2388, %v2386
    %v2391 = vlaneseq
    %v2392 = vshrl.u32 %v2391, 7
    %v2393 = vsub.s32 0, %v2392
    %v2394 = vrot.slane %v2353, %v2393
    %v2396 = vmul.f32 %v2394, %v2364
    %v2397 = vmul.f32 %v2394, %v2365
    %v2398 = vadd.f32 %v2382, 1e-06
    %v2399 = vadd.f32 %v2389, 1e-06
    %v2400 = vrcp.pop %v2398
    %v2401 = vmul.f32 %v2396, %v2400
    %v2402 = vrcp.pop %v2399
    %v2403 = vmul.f32 %v2397, %v2402
    %v2405 = vlaneseq
    %v2406 = vshrl.u32 %v2405, 7
    %v2407 = vsub.s32 0, %v2406
    %v2408 = vrot.slane %v2355, %v2407
    %v2410 = vadd.f32 %v2401, %v2408
    %v2411 = vadd.f32 %v2403, %v2408
    %v2412 = vld [vmem:[#allocation14] sm:$0xff]
    %v2413 = vld [vmem:[#allocation14 + $0x8] sm:$0xff]
    %v2414 = vld [vmem:[#allocation14 + $0x10] sm:$0xff]
    %v2415 = vld [vmem:[#allocation14 + $0x18] sm:$0xff]
    %v2416 = vld [vmem:[#allocation16] sm:$0x1]
    %v2418 = vlaneseq
    %v2419 = vshrl.u32 %v2418, 7
    %v2420 = vsub.s32 0, %v2419
    %v2421 = vrot.slane %v2416, %v2420
    %v2424 = vsel %vm262, %v2410, 0
    %v2427 = vsel %vm262, %v2411, 0
    %2429 = vmatprep.subr.mxu0 0.0
    %2430 = vmatpush1.msra.mxu0 %v2412
    %2431 = vmatprep.subr.mxu0 0.0
    %2432 = vmatpush1.msra.mxu0 %v2413
    %2433 = vmatprep.subr.mxu0 0.0
    %2434 = vmatpush1.msra.mxu0 %v2414
    %2435 = vmatprep.subr.mxu0 0.0
    %2436 = vmatpush1.msra.mxu0 %v2415
    %2437 = vmatprep.subr.mxu0 0.0
    %2438 = vmatpush1.msra.mxu0 0.0
    %2439 = vmatprep.subr.mxu0 0.0
    %2440 = vmatpush1.msra.mxu0 0.0
    %2441 = vmatprep.subr.mxu0 0.0
    %2442 = vmatpush1.msra.mxu0 0.0
    %2443 = vmatprep.subr.mxu0 0.0
    %2444 = vmatpush1.msra.mxu0 0.0
    %2445 = vmatprep.subr.mxu0 0.0
    %2446 = vmatpush1.msra.mxu0 0.0
    %2447 = vmatprep.subr.mxu0 0.0
    %2448 = vmatpush1.msra.mxu0 0.0
    %2449 = vmatprep.subr.mxu0 0.0
    %2450 = vmatpush1.msra.mxu0 0.0
    %2451 = vmatprep.subr.mxu0 0.0
    %2452 = vmatpush1.msra.mxu0 0.0
    %2453 = vmatprep.subr.mxu0 0.0
    %2454 = vmatpush1.msra.mxu0 0.0
    %2455 = vmatprep.subr.mxu0 0.0
    %2456 = vmatpush1.msra.mxu0 0.0
    %2457 = vmatprep.subr.mxu0 0.0
    %2458 = vmatpush1.msra.mxu0 0.0
    %2459 = vmatprep.subr.mxu0 0.0
    %2460 = vmatpush1.msra.mxu0 0.0
    %2461 = vmatprep.subr.mxu0 0.0
    %2462 = vmatpush1.msra.mxu0 0.0
    %2463 = vmatprep.subr.mxu0 0.0
    %2464 = vmatpush1.msra.mxu0 0.0
    %2465 = vmatprep.subr.mxu0 0.0
    %2466 = vmatpush1.msra.mxu0 0.0
    %2467 = vmatprep.subr.mxu0 0.0
    %2468 = vmatpush1.msra.mxu0 0.0
    %2469 = vmatprep.subr.mxu0 0.0
    %2470 = vmatpush1.msra.mxu0 0.0
    %2471 = vmatprep.subr.mxu0 0.0
    %2472 = vmatpush1.msra.mxu0 0.0
    %2473 = vmatprep.subr.mxu0 0.0
    %2474 = vmatpush1.msra.mxu0 0.0
    %2475 = vmatprep.subr.mxu0 0.0
    %2476 = vmatpush1.msra.mxu0 0.0
    %2477 = vmatprep.subr.mxu0 0.0
    %2478 = vmatpush1.msra.mxu0 0.0
    %2479 = vmatprep.subr.mxu0 0.0
    %2480 = vmatpush1.msra.mxu0 0.0
    %2481 = vmatprep.subr.mxu0 0.0
    %2482 = vmatpush1.msra.mxu0 0.0
    %2483 = vmatprep.subr.mxu0 0.0
    %2484 = vmatpush1.msra.mxu0 0.0
    %2485 = vmatprep.subr.mxu0 0.0
    %2486 = vmatpush1.msra.mxu0 0.0
    %2487 = vmatprep.subr.mxu0 0.0
    %2488 = vmatpush1.msra.mxu0 0.0
    %2489 = vmatprep.subr.mxu0 0.0
    %2490 = vmatpush1.msra.mxu0 0.0
    %2491 = vmatprep.subr.mxu0 0.0
    %2492 = vmatpush1.msra.mxu0 0.0
    %2493 = vmatprep.mubr.f32.mxu0 0.0
    %2494 = vmatmul.mubr.f32.gmra.mrb[0].mxu0 %v2424
    %v2495 = vpop.f32.mrb[0].mxu0
    %v2496 = vadd.f32 %v2421, %v2495
    %v2497 = vpop.f32.mrb[0].mxu0
    %2498 = vmatprep.mubr.f32.mxu0 0.0
    %2499 = vmatmul.mubr.f32.gmra.mrb[0].mxu0 %v2427
    %v2500 = vpop.f32.mrb[0].mxu0
    %v2501 = vadd.f32 %v2421, %v2500
    %v2502 = vpop.f32.mrb[0].mxu0
    %2503 = vdwg.mxu0
    %v2504 = vld [vmem:[#allocation17] sm:$0xff]
    %v2505 = vld [vmem:[#allocation17 + $0x8] sm:$0xff]
    %v2506 = vld [vmem:[#allocation17 + $0x10] sm:$0xff]
    %v2507 = vld [vmem:[#allocation17 + $0x18] sm:$0xff]
    %v2508 = vld [vmem:[#allocation19] sm:$0x1]
    %v2510 = vlaneseq
    %v2511 = vshrl.u32 %v2510, 7
    %v2512 = vsub.s32 0, %v2511
    %v2513 = vrot.slane %v2508, %v2512
    %v2516 = vsel %vm262, %v258, 0
    %v2519 = vsel %vm262, %v259, 0
    %2521 = vmatprep.subr.mxu0 0.0
    %2522 = vmatpush1.msra.mxu0 %v2504
    %2523 = vmatprep.subr.mxu0 0.0
    %2524 = vmatpush1.msra.mxu0 %v2505
    %2525 = vmatprep.subr.mxu0 0.0
    %2526 = vmatpush1.msra.mxu0 %v2506
    %2527 = vmatprep.subr.mxu0 0.0
    %2528 = vmatpush1.msra.mxu0 %v2507
    %2529 = vmatprep.subr.mxu0 0.0
    %2530 = vmatpush1.msra.mxu0 0.0
    %2531 = vmatprep.subr.mxu0 0.0
    %2532 = vmatpush1.msra.mxu0 0.0
    %2533 = vmatprep.subr.mxu0 0.0
    %2534 = vmatpush1.msra.mxu0 0.0
    %2535 = vmatprep.subr.mxu0 0.0
    %2536 = vmatpush1.msra.mxu0 0.0
    %2537 = vmatprep.subr.mxu0 0.0
    %2538 = vmatpush1.msra.mxu0 0.0
    %2539 = vmatprep.subr.mxu0 0.0
    %2540 = vmatpush1.msra.mxu0 0.0
    %2541 = vmatprep.subr.mxu0 0.0
    %2542 = vmatpush1.msra.mxu0 0.0
    %2543 = vmatprep.subr.mxu0 0.0
    %2544 = vmatpush1.msra.mxu0 0.0
    %2545 = vmatprep.subr.mxu0 0.0
    %2546 = vmatpush1.msra.mxu0 0.0
    %2547 = vmatprep.subr.mxu0 0.0
    %2548 = vmatpush1.msra.mxu0 0.0
    %2549 = vmatprep.subr.mxu0 0.0
    %2550 = vmatpush1.msra.mxu0 0.0
    %2551 = vmatprep.subr.mxu0 0.0
    %2552 = vmatpush1.msra.mxu0 0.0
    %2553 = vmatprep.subr.mxu0 0.0
    %2554 = vmatpush1.msra.mxu0 0.0
    %2555 = vmatprep.subr.mxu0 0.0
    %2556 = vmatpush1.msra.mxu0 0.0
    %2557 = vmatprep.subr.mxu0 0.0
    %2558 = vmatpush1.msra.mxu0 0.0
    %2559 = vmatprep.subr.mxu0 0.0
    %2560 = vmatpush1.msra.mxu0 0.0
    %2561 = vmatprep.subr.mxu0 0.0
    %2562 = vmatpush1.msra.mxu0 0.0
    %2563 = vmatprep.subr.mxu0 0.0
    %2564 = vmatpush1.msra.mxu0 0.0
    %2565 = vmatprep.subr.mxu0 0.0
    %2566 = vmatpush1.msra.mxu0 0.0
    %2567 = vmatprep.subr.mxu0 0.0
    %2568 = vmatpush1.msra.mxu0 0.0
    %2569 = vmatprep.subr.mxu0 0.0
    %2570 = vmatpush1.msra.mxu0 0.0
    %2571 = vmatprep.subr.mxu0 0.0
    %2572 = vmatpush1.msra.mxu0 0.0
    %2573 = vmatprep.subr.mxu0 0.0
    %2574 = vmatpush1.msra.mxu0 0.0
    %2575 = vmatprep.subr.mxu0 0.0
    %2576 = vmatpush1.msra.mxu0 0.0
    %2577 = vmatprep.subr.mxu0 0.0
    %2578 = vmatpush1.msra.mxu0 0.0
    %2579 = vmatprep.subr.mxu0 0.0
    %2580 = vmatpush1.msra.mxu0 0.0
    %2581 = vmatprep.subr.mxu0 0.0
    %2582 = vmatpush1.msra.mxu0 0.0
    %2583 = vmatprep.subr.mxu0 0.0
    %2584 = vmatpush1.msra.mxu0 0.0
    %2585 = vmatprep.mubr.f32.mxu0 0.0
    %2586 = vmatmul.mubr.f32.gmra.mrb[0].mxu0 %v2516
    %v2587 = vpop.f32.mrb[0].mxu0
    %v2588 = vadd.f32 %v2513, %v2587
    %v2589 = vpop.f32.mrb[0].mxu0
    %2590 = vmatprep.mubr.f32.mxu0 0.0
    %2591 = vmatmul.mubr.f32.gmra.mrb[0].mxu0 %v2519
    %v2592 = vpop.f32.mrb[0].mxu0
    %v2593 = vadd.f32 %v2513, %v2592
    %v2594 = vpop.f32.mrb[0].mxu0
    %2595 = vdwg.mxu0
    %v2596 = vld [vmem:[#allocation20] sm:$0xff]
    %v2597 = vld [vmem:[#allocation20 + $0x8] sm:$0xff]
    %v2598 = vld [vmem:[#allocation20 + $0x10] sm:$0xff]
    %v2599 = vld [vmem:[#allocation20 + $0x18] sm:$0xff]
    %v2600 = vld [vmem:[#allocation22] sm:$0x1]
    %v2601 = vmul.f32 %v2496, 0.35355338
    %v2602 = vmul.f32 %v2501, 0.35355338
    %v2603 = vld [vmem:[#allocation7] sm:$0xff]
    %v2605 = vsel %vm424, %v2601, 0
    %v2608 = vsel %vm424, %v2588, 0
    %2610 = vmatprep.subr.mxu0 0.0
    %2611 = vmatpush1.xpose.msra.mxu0 %v2608
    %2612 = vmatprep.subr.mxu0 0.0
    %2613 = vmatpush1.xpose.msra.mxu0 0.0
    %2614 = vmatprep.subr.mxu0 0.0
    %2615 = vmatpush1.xpose.msra.mxu0 0.0
    %2616 = vmatprep.subr.mxu0 0.0
    %2617 = vmatpush1.xpose.msra.mxu0 0.0
    %2618 = vmatprep.subr.mxu0 0.0
    %2619 = vmatpush1.xpose.msra.mxu0 0.0
    %2620 = vmatprep.subr.mxu0 0.0
    %2621 = vmatpush1.xpose.msra.mxu0 0.0
    %2622 = vmatprep.subr.mxu0 0.0
    %2623 = vmatpush1.xpose.msra.mxu0 0.0
    %2624 = vmatprep.subr.mxu0 0.0
    %2625 = vmatpush1.xpose.msra.mxu0 0.0
    %2626 = vmatprep.subr.mxu0 0.0
    %2627 = vmatpush1.xpose.msra.mxu0 0.0
    %2628 = vmatprep.subr.mxu0 0.0
    %2629 = vmatpush1.xpose.msra.mxu0 0.0
    %2630 = vmatprep.subr.mxu0 0.0
    %2631 = vmatpush1.xpose.msra.mxu0 0.0
    %2632 = vmatprep.subr.mxu0 0.0
    %2633 = vmatpush1.xpose.msra.mxu0 0.0
    %2634 = vmatprep.subr.mxu0 0.0
    %2635 = vmatpush1.xpose.msra.mxu0 0.0
    %2636 = vmatprep.subr.mxu0 0.0
    %2637 = vmatpush1.xpose.msra.mxu0 0.0
    %2638 = vmatprep.subr.mxu0 0.0
    %2639 = vmatpush1.xpose.msra.mxu0 0.0
    %2640 = vmatprep.subr.mxu0 0.0
    %2641 = vmatpush1.xpose.msra.mxu0 0.0
    %2642 = vmatprep.subr.mxu0 0.0
    %2643 = vmatpush1.xpose.msra.mxu0 0.0
    %2644 = vmatprep.subr.mxu0 0.0
    %2645 = vmatpush1.xpose.msra.mxu0 0.0
    %2646 = vmatprep.subr.mxu0 0.0
    %2647 = vmatpush1.xpose.msra.mxu0 0.0
    %2648 = vmatprep.subr.mxu0 0.0
    %2649 = vmatpush1.xpose.msra.mxu0 0.0
    %2650 = vmatprep.subr.mxu0 0.0
    %2651 = vmatpush1.xpose.msra.mxu0 0.0
    %2652 = vmatprep.subr.mxu0 0.0
    %2653 = vmatpush1.xpose.msra.mxu0 0.0
    %2654 = vmatprep.subr.mxu0 0.0
    %2655 = vmatpush1.xpose.msra.mxu0 0.0
    %2656 = vmatprep.subr.mxu0 0.0
    %2657 = vmatpush1.xpose.msra.mxu0 0.0
    %2658 = vmatprep.subr.mxu0 0.0
    %2659 = vmatpush1.xpose.msra.mxu0 0.0
    %2660 = vmatprep.subr.mxu0 0.0
    %2661 = vmatpush1.xpose.msra.mxu0 0.0
    %2662 = vmatprep.subr.mxu0 0.0
    %2663 = vmatpush1.xpose.msra.mxu0 0.0
    %2664 = vmatprep.subr.mxu0 0.0
    %2665 = vmatpush1.xpose.msra.mxu0 0.0
    %2666 = vmatprep.subr.mxu0 0.0
    %2667 = vmatpush1.xpose.msra.mxu0 0.0
    %2668 = vmatprep.subr.mxu0 0.0
    %2669 = vmatpush1.xpose.msra.mxu0 0.0
    %2670 = vmatprep.subr.mxu0 0.0
    %2671 = vmatpush1.xpose.msra.mxu0 0.0
    %2672 = vmatprep.subr.mxu0 0.0
    %2673 = vmatpush1.xpose.msra.mxu0 0.0
    %2674 = vmatprep.mubr.f32.mxu0 0.0
    %2675 = vmatmul.mubr.f32.gmra.mrb[0].mxu0 %v2605
    %v2676 = vpop.f32.mrb[0].mxu0
    %v2677 = vadd.f32 0.0, %v2676
    %v2678 = vpop.f32.mrb[0].mxu0
    %2679 = vdwg.mxu0
    %vm2680 = vcmp.eq.f32.partialorder %v2603, 0.0
    %v2681 = vsel %vm2680, -1e+09, %v2677
    %v2682 = vsel %vm424, %v2681, -inf
    %2683 = vmax.xlane.f32.xlu0 %v2682
    %v2684 = vpop.xlane.xlu0 %2683
    %v2685 = vsub.f32 %v2681, %v2684
    %v2686 = vmul.f32 %v2685, 1.442695
    %v2687 = vpow.pop %v2686
    %v2688 = vsel %vm424, %v2687, 0.0
    %2689 = vadd.xlane.f32.xlu0 %v2688
    %v2690 = vpop.xlane.xlu0 %2689
    %v2691 = vrcp.pop %v2690
    %v2692 = vmul.f32 %v2687, %v2691
    %2693 = vrot.lane.b32.xlu0 %v2588, 96
    %v2694 = vpop.permute.xlu0 %2693
    %v2697 = vsel %vm424, %v2692, 0
    %2699 = vmatprep.subr.mxu0 0.0
    %2700 = vmatpush1.msra.mxu0 %v2694
    %2701 = vmatprep.subr.mxu0 0.0
    %2702 = vmatpush1.msra.mxu0 0.0
    %2703 = vmatprep.subr.mxu0 0.0
    %2704 = vmatpush1.msra.mxu0 0.0
    %2705 = vmatprep.subr.mxu0 0.0
    %2706 = vmatpush1.msra.mxu0 0.0
    %2707 = vmatprep.subr.mxu0 0.0
    %2708 = vmatpush1.msra.mxu0 0.0
    %2709 = vmatprep.subr.mxu0 0.0
    %2710 = vmatpush1.msra.mxu0 0.0
    %2711 = vmatprep.subr.mxu0 0.0
    %2712 = vmatpush1.msra.mxu0 0.0
    %2713 = vmatprep.subr.mxu0 0.0
    %2714 = vmatpush1.msra.mxu0 0.0
    %2715 = vmatprep.subr.mxu0 0.0
    %2716 = vmatpush1.msra.mxu0 0.0
    %2717 = vmatprep.subr.mxu0 0.0
    %2718 = vmatpush1.msra.mxu0 0.0
    %2719 = vmatprep.subr.mxu0 0.0
    %2720 = vmatpush1.msra.mxu0 0.0
    %2721 = vmatprep.subr.mxu0 0.0
    %2722 = vmatpush1.msra.mxu0 0.0
    %2723 = vmatprep.subr.mxu0 0.0
    %2724 = vmatpush1.msra.mxu0 0.0
    %2725 = vmatprep.subr.mxu0 0.0
    %2726 = vmatpush1.msra.mxu0 0.0
    %2727 = vmatprep.subr.mxu0 0.0
    %2728 = vmatpush1.msra.mxu0 0.0
    %2729 = vmatprep.subr.mxu0 0.0
    %2730 = vmatpush1.msra.mxu0 0.0
    %2731 = vmatprep.subr.mxu0 0.0
    %2732 = vmatpush1.msra.mxu0 0.0
    %2733 = vmatprep.subr.mxu0 0.0
    %2734 = vmatpush1.msra.mxu0 0.0
    %2735 = vmatprep.subr.mxu0 0.0
    %2736 = vmatpush1.msra.mxu0 0.0
    %2737 = vmatprep.subr.mxu0 0.0
    %2738 = vmatpush1.msra.mxu0 0.0
    %2739 = vmatprep.subr.mxu0 0.0
    %2740 = vmatpush1.msra.mxu0 0.0
    %2741 = vmatprep.subr.mxu0 0.0
    %2742 = vmatpush1.msra.mxu0 0.0
    %2743 = vmatprep.subr.mxu0 0.0
    %2744 = vmatpush1.msra.mxu0 0.0
    %2745 = vmatprep.subr.mxu0 0.0
    %2746 = vmatpush1.msra.mxu0 0.0
    %2747 = vmatprep.subr.mxu0 0.0
    %2748 = vmatpush1.msra.mxu0 0.0
    %2749 = vmatprep.subr.mxu0 0.0
    %2750 = vmatpush1.msra.mxu0 0.0
    %2751 = vmatprep.subr.mxu0 0.0
    %2752 = vmatpush1.msra.mxu0 0.0
    %2753 = vmatprep.subr.mxu0 0.0
    %2754 = vmatpush1.msra.mxu0 0.0
    %2755 = vmatprep.subr.mxu0 0.0
    %2756 = vmatpush1.msra.mxu0 0.0
    %2757 = vmatprep.subr.mxu0 0.0
    %2758 = vmatpush1.msra.mxu0 0.0
    %2759 = vmatprep.subr.mxu0 0.0
    %2760 = vmatpush1.msra.mxu0 0.0
    %2761 = vmatprep.subr.mxu0 0.0
    %2762 = vmatpush1.msra.mxu0 0.0
    %2763 = vmatprep.mubr.f32.mxu0 0.0
    %2764 = vmatmul.mubr.f32.gmra.mrb[0].mxu0 %v2697
    %v2765 = vpop.f32.mrb[0].mxu0
    %v2766 = vadd.f32 0.0, %v2765
    %v2767 = vpop.f32.mrb[0].mxu0
    %2768 = vdwg.mxu0
    %2769 = vrot.lane.b32.xlu0 %v2601, 120
    %v2770 = vpop.permute.xlu0 %2769
    %2771 = vrot.lane.b32.xlu0 %v2588, 120
    %v2772 = vpop.permute.xlu0 %2771
    %v2773 = vsel %vm424, %v2770, 0
    %v2775 = vsel %vm424, %v2772, 0
    %2777 = vmatprep.subr.mxu0 0.0
    %2778 = vmatpush1.xpose.msra.mxu0 %v2775
    %2779 = vmatprep.subr.mxu0 0.0
    %2780 = vmatpush1.xpose.msra.mxu0 0.0
    %2781 = vmatprep.subr.mxu0 0.0
    %2782 = vmatpush1.xpose.msra.mxu0 0.0
    %2783 = vmatprep.subr.mxu0 0.0
    %2784 = vmatpush1.xpose.msra.mxu0 0.0
    %2785 = vmatprep.subr.mxu0 0.0
    %2786 = vmatpush1.xpose.msra.mxu0 0.0
    %2787 = vmatprep.subr.mxu0 0.0
    %2788 = vmatpush1.xpose.msra.mxu0 0.0
    %2789 = vmatprep.subr.mxu0 0.0
    %2790 = vmatpush1.xpose.msra.mxu0 0.0
    %2791 = vmatprep.subr.mxu0 0.0
    %2792 = vmatpush1.xpose.msra.mxu0 0.0
    %2793 = vmatprep.subr.mxu0 0.0
    %2794 = vmatpush1.xpose.msra.mxu0 0.0
    %2795 = vmatprep.subr.mxu0 0.0
    %2796 = vmatpush1.xpose.msra.mxu0 0.0
    %2797 = vmatprep.subr.mxu0 0.0
    %2798 = vmatpush1.xpose.msra.mxu0 0.0
    %2799 = vmatprep.subr.mxu0 0.0
    %2800 = vmatpush1.xpose.msra.mxu0 0.0
    %2801 = vmatprep.subr.mxu0 0.0
    %2802 = vmatpush1.xpose.msra.mxu0 0.0
    %2803 = vmatprep.subr.mxu0 0.0
    %2804 = vmatpush1.xpose.msra.mxu0 0.0
    %2805 = vmatprep.subr.mxu0 0.0
    %2806 = vmatpush1.xpose.msra.mxu0 0.0
    %2807 = vmatprep.subr.mxu0 0.0
    %2808 = vmatpush1.xpose.msra.mxu0 0.0
    %2809 = vmatprep.subr.mxu0 0.0
    %2810 = vmatpush1.xpose.msra.mxu0 0.0
    %2811 = vmatprep.subr.mxu0 0.0
    %2812 = vmatpush1.xpose.msra.mxu0 0.0
    %2813 = vmatprep.subr.mxu0 0.0
    %2814 = vmatpush1.xpose.msra.mxu0 0.0
    %2815 = vmatprep.subr.mxu0 0.0
    %2816 = vmatpush1.xpose.msra.mxu0 0.0
    %2817 = vmatprep.subr.mxu0 0.0
    %2818 = vmatpush1.xpose.msra.mxu0 0.0
    %2819 = vmatprep.subr.mxu0 0.0
    %2820 = vmatpush1.xpose.msra.mxu0 0.0
    %2821 = vmatprep.subr.mxu0 0.0
    %2822 = vmatpush1.xpose.msra.mxu0 0.0
    %2823 = vmatprep.subr.mxu0 0.0
    %2824 = vmatpush1.xpose.msra.mxu0 0.0
    %2825 = vmatprep.subr.mxu0 0.0
    %2826 = vmatpush1.xpose.msra.mxu0 0.0
    %2827 = vmatprep.subr.mxu0 0.0
    %2828 = vmatpush1.xpose.msra.mxu0 0.0
    %2829 = vmatprep.subr.mxu0 0.0
    %2830 = vmatpush1.xpose.msra.mxu0 0.0
    %2831 = vmatprep.subr.mxu0 0.0
    %2832 = vmatpush1.xpose.msra.mxu0 0.0
    %2833 = vmatprep.subr.mxu0 0.0
    %2834 = vmatpush1.xpose.msra.mxu0 0.0
    %2835 = vmatprep.subr.mxu0 0.0
    %2836 = vmatpush1.xpose.msra.mxu0 0.0
    %2837 = vmatprep.subr.mxu0 0.0
    %2838 = vmatpush1.xpose.msra.mxu0 0.0
    %2839 = vmatprep.subr.mxu0 0.0
    %2840 = vmatpush1.xpose.msra.mxu0 0.0
    %2841 = vmatprep.mubr.f32.mxu0 0.0
    %2842 = vmatmul.mubr.f32.gmra.mrb[0].mxu0 %v2773
    %v2843 = vpop.f32.mrb[0].mxu0
    %v2844 = vadd.f32 0.0, %v2843
    %v2845 = vpop.f32.mrb[0].mxu0
    %2846 = vdwg.mxu0
    %v2847 = vsel %vm2680, -1e+09, %v2844
    %v2848 = vsel %vm424, %v2847, -inf
    %2849 = vmax.xlane.f32.xlu0 %v2848
    %v2850 = vpop.xlane.xlu0 %2849
    %v2851 = vsub.f32 %v2847, %v2850
    %v2852 = vmul.f32 %v2851, 1.442695
    %v2853 = vpow.pop %v2852
    %v2854 = vsel %vm424, %v2853, 0.0
    %2855 = vadd.xlane.f32.xlu0 %v2854
    %v2856 = vpop.xlane.xlu0 %2855
    %v2857 = vrcp.pop %v2856
    %v2858 = vmul.f32 %v2853, %v2857
    %2859 = vrot.lane.b32.xlu0 %v2588, 88
    %v2860 = vpop.permute.xlu0 %2859
    %v2863 = vsel %vm424, %v2858, 0
    %2865 = vmatprep.subr.mxu0 0.0
    %2866 = vmatpush1.msra.mxu0 %v2860
    %2867 = vmatprep.subr.mxu0 0.0
    %2868 = vmatpush1.msra.mxu0 0.0
    %2869 = vmatprep.subr.mxu0 0.0
    %2870 = vmatpush1.msra.mxu0 0.0
    %2871 = vmatprep.subr.mxu0 0.0
    %2872 = vmatpush1.msra.mxu0 0.0
    %2873 = vmatprep.subr.mxu0 0.0
    %2874 = vmatpush1.msra.mxu0 0.0
    %2875 = vmatprep.subr.mxu0 0.0
    %2876 = vmatpush1.msra.mxu0 0.0
    %2877 = vmatprep.subr.mxu0 0.0
    %2878 = vmatpush1.msra.mxu0 0.0
    %2879 = vmatprep.subr.mxu0 0.0
    %2880 = vmatpush1.msra.mxu0 0.0
    %2881 = vmatprep.subr.mxu0 0.0
    %2882 = vmatpush1.msra.mxu0 0.0
    %2883 = vmatprep.subr.mxu0 0.0
    %2884 = vmatpush1.msra.mxu0 0.0
    %2885 = vmatprep.subr.mxu0 0.0
    %2886 = vmatpush1.msra.mxu0 0.0
    %2887 = vmatprep.subr.mxu0 0.0
    %2888 = vmatpush1.msra.mxu0 0.0
    %2889 = vmatprep.subr.mxu0 0.0
    %2890 = vmatpush1.msra.mxu0 0.0
    %2891 = vmatprep.subr.mxu0 0.0
    %2892 = vmatpush1.msra.mxu0 0.0
    %2893 = vmatprep.subr.mxu0 0.0
    %2894 = vmatpush1.msra.mxu0 0.0
    %2895 = vmatprep.subr.mxu0 0.0
    %2896 = vmatpush1.msra.mxu0 0.0
    %2897 = vmatprep.subr.mxu0 0.0
    %2898 = vmatpush1.msra.mxu0 0.0
    %2899 = vmatprep.subr.mxu0 0.0
    %2900 = vmatpush1.msra.mxu0 0.0
    %2901 = vmatprep.subr.mxu0 0.0
    %2902 = vmatpush1.msra.mxu0 0.0
    %2903 = vmatprep.subr.mxu0 0.0
    %2904 = vmatpush1.msra.mxu0 0.0
    %2905 = vmatprep.subr.mxu0 0.0
    %2906 = vmatpush1.msra.mxu0 0.0
    %2907 = vmatprep.subr.mxu0 0.0
    %2908 = vmatpush1.msra.mxu0 0.0
    %2909 = vmatprep.subr.mxu0 0.0
    %2910 = vmatpush1.msra.mxu0 0.0
    %2911 = vmatprep.subr.mxu0 0.0
    %2912 = vmatpush1.msra.mxu0 0.0
    %2913 = vmatprep.subr.mxu0 0.0
    %2914 = vmatpush1.msra.mxu0 0.0
    %2915 = vmatprep.subr.mxu0 0.0
    %2916 = vmatpush1.msra.mxu0 0.0
    %2917 = vmatprep.subr.mxu0 0.0
    %2918 = vmatpush1.msra.mxu0 0.0
    %2919 = vmatprep.subr.mxu0 0.0
    %2920 = vmatpush1.msra.mxu0 0.0
    %2921 = vmatprep.subr.mxu0 0.0
    %2922 = vmatpush1.msra.mxu0 0.0
    %2923 = vmatprep.subr.mxu0 0.0
    %2924 = vmatpush1.msra.mxu0 0.0
    %2925 = vmatprep.subr.mxu0 0.0
    %2926 = vmatpush1.msra.mxu0 0.0
    %2927 = vmatprep.subr.mxu0 0.0
    %2928 = vmatpush1.msra.mxu0 0.0
    %2929 = vmatprep.mubr.f32.mxu0 0.0
    %2930 = vmatmul.mubr.f32.gmra.mrb[0].mxu0 %v2863
    %v2931 = vpop.f32.mrb[0].mxu0
    %v2932 = vadd.f32 0.0, %v2931
    %v2933 = vpop.f32.mrb[0].mxu0
    %2934 = vdwg.mxu0
    %v2936 = vsel %vm424, %v2932, 0
    %2938 = vmatprep.subr.mxu0 0.0
    %2939 = vmatpush1.msra.mxu0 %v2597
    %2940 = vmatprep.subr.mxu0 0.0
    %2941 = vmatpush1.msra.mxu0 0.0
    %2942 = vmatprep.subr.mxu0 0.0
    %2943 = vmatpush1.msra.mxu0 0.0
    %2944 = vmatprep.subr.mxu0 0.0
    %2945 = vmatpush1.msra.mxu0 0.0
    %2946 = vmatprep.subr.mxu0 0.0
    %2947 = vmatpush1.msra.mxu0 0.0
    %2948 = vmatprep.subr.mxu0 0.0
    %2949 = vmatpush1.msra.mxu0 0.0
    %2950 = vmatprep.subr.mxu0 0.0
    %2951 = vmatpush1.msra.mxu0 0.0
    %2952 = vmatprep.subr.mxu0 0.0
    %2953 = vmatpush1.msra.mxu0 0.0
    %2954 = vmatprep.subr.mxu0 0.0
    %2955 = vmatpush1.msra.mxu0 0.0
    %2956 = vmatprep.subr.mxu0 0.0
    %2957 = vmatpush1.msra.mxu0 0.0
    %2958 = vmatprep.subr.mxu0 0.0
    %2959 = vmatpush1.msra.mxu0 0.0
    %2960 = vmatprep.subr.mxu0 0.0
    %2961 = vmatpush1.msra.mxu0 0.0
    %2962 = vmatprep.subr.mxu0 0.0
    %2963 = vmatpush1.msra.mxu0 0.0
    %2964 = vmatprep.subr.mxu0 0.0
    %2965 = vmatpush1.msra.mxu0 0.0
    %2966 = vmatprep.subr.mxu0 0.0
    %2967 = vmatpush1.msra.mxu0 0.0
    %2968 = vmatprep.subr.mxu0 0.0
    %2969 = vmatpush1.msra.mxu0 0.0
    %2970 = vmatprep.subr.mxu0 0.0
    %2971 = vmatpush1.msra.mxu0 0.0
    %2972 = vmatprep.subr.mxu0 0.0
    %2973 = vmatpush1.msra.mxu0 0.0
    %2974 = vmatprep.subr.mxu0 0.0
    %2975 = vmatpush1.msra.mxu0 0.0
    %2976 = vmatprep.subr.mxu0 0.0
    %2977 = vmatpush1.msra.mxu0 0.0
    %2978 = vmatprep.subr.mxu0 0.0
    %2979 = vmatpush1.msra.mxu0 0.0
    %2980 = vmatprep.subr.mxu0 0.0
    %2981 = vmatpush1.msra.mxu0 0.0
    %2982 = vmatprep.subr.mxu0 0.0
    %2983 = vmatpush1.msra.mxu0 0.0
    %2984 = vmatprep.subr.mxu0 0.0
    %2985 = vmatpush1.msra.mxu0 0.0
    %2986 = vmatprep.subr.mxu0 0.0
    %2987 = vmatpush1.msra.mxu0 0.0
    %2988 = vmatprep.subr.mxu0 0.0
    %2989 = vmatpush1.msra.mxu0 0.0
    %2990 = vmatprep.subr.mxu0 0.0
    %2991 = vmatpush1.msra.mxu0 0.0
    %2992 = vmatprep.subr.mxu0 0.0
    %2993 = vmatpush1.msra.mxu0 0.0
    %2994 = vmatprep.subr.mxu0 0.0
    %2995 = vmatpush1.msra.mxu0 0.0
    %2996 = vmatprep.subr.mxu0 0.0
    %2997 = vmatpush1.msra.mxu0 0.0
    %2998 = vmatprep.subr.mxu0 0.0
    %2999 = vmatpush1.msra.mxu0 0.0
    %3000 = vmatprep.subr.mxu0 0.0
    %3001 = vmatpush1.msra.mxu0 0.0
    %3002 = vmatprep.mubr.f32.mxu0 0.0
    %3003 = vmatmul.mubr.f32.gmra.mrb[0].mxu0 %v2936
    %v3004 = vpop.f32.mrb[0].mxu0
    %v3005 = vadd.f32 0.0, %v3004
    %v3006 = vpop.f32.mrb[0].mxu0
    %3007 = vdwg.mxu0
    %v3009 = vsel %vm424, %v2766, 0
    %3011 = vmatprep.subr.mxu0 0.0
    %3012 = vmatpush1.msra.mxu0 %v2596
    %3013 = vmatprep.subr.mxu0 0.0
    %3014 = vmatpush1.msra.mxu0 0.0
    %3015 = vmatprep.subr.mxu0 0.0
    %3016 = vmatpush1.msra.mxu0 0.0
    %3017 = vmatprep.subr.mxu0 0.0
    %3018 = vmatpush1.msra.mxu0 0.0
    %3019 = vmatprep.subr.mxu0 0.0
    %3020 = vmatpush1.msra.mxu0 0.0
    %3021 = vmatprep.subr.mxu0 0.0
    %3022 = vmatpush1.msra.mxu0 0.0
    %3023 = vmatprep.subr.mxu0 0.0
    %3024 = vmatpush1.msra.mxu0 0.0
    %3025 = vmatprep.subr.mxu0 0.0
    %3026 = vmatpush1.msra.mxu0 0.0
    %3027 = vmatprep.subr.mxu0 0.0
    %3028 = vmatpush1.msra.mxu0 0.0
    %3029 = vmatprep.subr.mxu0 0.0
    %3030 = vmatpush1.msra.mxu0 0.0
    %3031 = vmatprep.subr.mxu0 0.0
    %3032 = vmatpush1.msra.mxu0 0.0
    %3033 = vmatprep.subr.mxu0 0.0
    %3034 = vmatpush1.msra.mxu0 0.0
    %3035 = vmatprep.subr.mxu0 0.0
    %3036 = vmatpush1.msra.mxu0 0.0
    %3037 = vmatprep.subr.mxu0 0.0
    %3038 = vmatpush1.msra.mxu0 0.0
    %3039 = vmatprep.subr.mxu0 0.0
    %3040 = vmatpush1.msra.mxu0 0.0
    %3041 = vmatprep.subr.mxu0 0.0
    %3042 = vmatpush1.msra.mxu0 0.0
    %3043 = vmatprep.subr.mxu0 0.0
    %3044 = vmatpush1.msra.mxu0 0.0
    %3045 = vmatprep.subr.mxu0 0.0
    %3046 = vmatpush1.msra.mxu0 0.0
    %3047 = vmatprep.subr.mxu0 0.0
    %3048 = vmatpush1.msra.mxu0 0.0
    %3049 = vmatprep.subr.mxu0 0.0
    %3050 = vmatpush1.msra.mxu0 0.0
    %3051 = vmatprep.subr.mxu0 0.0
    %3052 = vmatpush1.msra.mxu0 0.0
    %3053 = vmatprep.subr.mxu0 0.0
    %3054 = vmatpush1.msra.mxu0 0.0
    %3055 = vmatprep.subr.mxu0 0.0
    %3056 = vmatpush1.msra.mxu0 0.0
    %3057 = vmatprep.subr.mxu0 0.0
    %3058 = vmatpush1.msra.mxu0 0.0
    %3059 = vmatprep.subr.mxu0 0.0
    %3060 = vmatpush1.msra.mxu0 0.0
    %3061 = vmatprep.subr.mxu0 0.0
    %3062 = vmatpush1.msra.mxu0 0.0
    %3063 = vmatprep.subr.mxu0 0.0
    %3064 = vmatpush1.msra.mxu0 0.0
    %3065 = vmatprep.subr.mxu0 0.0
    %3066 = vmatpush1.msra.mxu0 0.0
    %3067 = vmatprep.subr.mxu0 0.0
    %3068 = vmatpush1.msra.mxu0 0.0
    %3069 = vmatprep.subr.mxu0 0.0
    %3070 = vmatpush1.msra.mxu0 0.0
    %3071 = vmatprep.subr.mxu0 0.0
    %3072 = vmatpush1.msra.mxu0 0.0
    %3073 = vmatprep.subr.mxu0 0.0
    %3074 = vmatpush1.msra.mxu0 0.0
    %3075 = vmatprep.mubr.f32.mxu0 0.0
    %3076 = vmatmul.mubr.f32.gmra.mrb[0].mxu0 %v3009
    %v3077 = vpop.f32.mrb[0].mxu0
    %v3078 = vadd.f32 %v3005, %v3077
    %v3079 = vpop.f32.mrb[0].mxu0
    %3080 = vdwg.mxu0
    %3081 = vrot.lane.b32.xlu0 %v2601, 112
    %v3082 = vpop.permute.xlu0 %3081
    %3083 = vrot.lane.b32.xlu0 %v2588, 112
    %v3084 = vpop.permute.xlu0 %3083
    %v3085 = vsel %vm424, %v3082, 0
    %v3087 = vsel %vm424, %v3084, 0
    %3089 = vmatprep.subr.mxu0 0.0
    %3090 = vmatpush1.xpose.msra.mxu0 %v3087
    %3091 = vmatprep.subr.mxu0 0.0
    %3092 = vmatpush1.xpose.msra.mxu0 0.0
    %3093 = vmatprep.subr.mxu0 0.0
    %3094 = vmatpush1.xpose.msra.mxu0 0.0
    %3095 = vmatprep.subr.mxu0 0.0
    %3096 = vmatpush1.xpose.msra.mxu0 0.0
    %3097 = vmatprep.subr.mxu0 0.0
    %3098 = vmatpush1.xpose.msra.mxu0 0.0
    %3099 = vmatprep.subr.mxu0 0.0
    %3100 = vmatpush1.xpose.msra.mxu0 0.0
    %3101 = vmatprep.subr.mxu0 0.0
    %3102 = vmatpush1.xpose.msra.mxu0 0.0
    %3103 = vmatprep.subr.mxu0 0.0
    %3104 = vmatpush1.xpose.msra.mxu0 0.0
    %3105 = vmatprep.subr.mxu0 0.0
    %3106 = vmatpush1.xpose.msra.mxu0 0.0
    %3107 = vmatprep.subr.mxu0 0.0
    %3108 = vmatpush1.xpose.msra.mxu0 0.0
    %3109 = vmatprep.subr.mxu0 0.0
    %3110 = vmatpush1.xpose.msra.mxu0 0.0
    %3111 = vmatprep.subr.mxu0 0.0
    %3112 = vmatpush1.xpose.msra.mxu0 0.0
    %3113 = vmatprep.subr.mxu0 0.0
    %3114 = vmatpush1.xpose.msra.mxu0 0.0
    %3115 = vmatprep.subr.mxu0 0.0
    %3116 = vmatpush1.xpose.msra.mxu0 0.0
    %3117 = vmatprep.subr.mxu0 0.0
    %3118 = vmatpush1.xpose.msra.mxu0 0.0
    %3119 = vmatprep.subr.mxu0 0.0
    %3120 = vmatpush1.xpose.msra.mxu0 0.0
    %3121 = vmatprep.subr.mxu0 0.0
    %3122 = vmatpush1.xpose.msra.mxu0 0.0
    %3123 = vmatprep.subr.mxu0 0.0
    %3124 = vmatpush1.xpose.msra.mxu0 0.0
    %3125 = vmatprep.subr.mxu0 0.0
    %3126 = vmatpush1.xpose.msra.mxu0 0.0
    %3127 = vmatprep.subr.mxu0 0.0
    %3128 = vmatpush1.xpose.msra.mxu0 0.0
    %3129 = vmatprep.subr.mxu0 0.0
    %3130 = vmatpush1.xpose.msra.mxu0 0.0
    %3131 = vmatprep.subr.mxu0 0.0
    %3132 = vmatpush1.xpose.msra.mxu0 0.0
    %3133 = vmatprep.subr.mxu0 0.0
    %3134 = vmatpush1.xpose.msra.mxu0 0.0
    %3135 = vmatprep.subr.mxu0 0.0
    %3136 = vmatpush1.xpose.msra.mxu0 0.0
    %3137 = vmatprep.subr.mxu0 0.0
    %3138 = vmatpush1.xpose.msra.mxu0 0.0
    %3139 = vmatprep.subr.mxu0 0.0
    %3140 = vmatpush1.xpose.msra.mxu0 0.0
    %3141 = vmatprep.subr.mxu0 0.0
    %3142 = vmatpush1.xpose.msra.mxu0 0.0
    %3143 = vmatprep.subr.mxu0 0.0
    %3144 = vmatpush1.xpose.msra.mxu0 0.0
    %3145 = vmatprep.subr.mxu0 0.0
    %3146 = vmatpush1.xpose.msra.mxu0 0.0
    %3147 = vmatprep.subr.mxu0 0.0
    %3148 = vmatpush1.xpose.msra.mxu0 0.0
    %3149 = vmatprep.subr.mxu0 0.0
    %3150 = vmatpush1.xpose.msra.mxu0 0.0
    %3151 = vmatprep.subr.mxu0 0.0
    %3152 = vmatpush1.xpose.msra.mxu0 0.0
    %3153 = vmatprep.mubr.f32.mxu0 0.0
    %3154 = vmatmul.mubr.f32.gmra.mrb[0].mxu0 %v3085
    %v3155 = vpop.f32.mrb[0].mxu0
    %v3156 = vadd.f32 0.0, %v3155
    %v3157 = vpop.f32.mrb[0].mxu0
    %3158 = vdwg.mxu0
    %v3159 = vsel %vm2680, -1e+09, %v3156
    %v3160 = vsel %vm424, %v3159, -inf
    %3161 = vmax.xlane.f32.xlu0 %v3160
    %v3162 = vpop.xlane.xlu0 %3161
    %v3163 = vsub.f32 %v3159, %v3162
    %v3164 = vmul.f32 %v3163, 1.442695
    %v3165 = vpow.pop %v3164
    %v3166 = vsel %vm424, %v3165, 0.0
    %3167 = vadd.xlane.f32.xlu0 %v3166
    %v3168 = vpop.xlane.xlu0 %3167
    %v3169 = vrcp.pop %v3168
    %v3170 = vmul.f32 %v3165, %v3169
    %3171 = vrot.lane.b32.xlu0 %v2588, 80
    %v3172 = vpop.permute.xlu0 %3171
    %v3175 = vsel %vm424, %v3170, 0
    %3177 = vmatprep.subr.mxu0 0.0
    %3178 = vmatpush1.msra.mxu0 %v3172
    %3179 = vmatprep.subr.mxu0 0.0
    %3180 = vmatpush1.msra.mxu0 0.0
    %3181 = vmatprep.subr.mxu0 0.0
    %3182 = vmatpush1.msra.mxu0 0.0
    %3183 = vmatprep.subr.mxu0 0.0
    %3184 = vmatpush1.msra.mxu0 0.0
    %3185 = vmatprep.subr.mxu0 0.0
    %3186 = vmatpush1.msra.mxu0 0.0
    %3187 = vmatprep.subr.mxu0 0.0
    %3188 = vmatpush1.msra.mxu0 0.0
    %3189 = vmatprep.subr.mxu0 0.0
    %3190 = vmatpush1.msra.mxu0 0.0
    %3191 = vmatprep.subr.mxu0 0.0
    %3192 = vmatpush1.msra.mxu0 0.0
    %3193 = vmatprep.subr.mxu0 0.0
    %3194 = vmatpush1.msra.mxu0 0.0
    %3195 = vmatprep.subr.mxu0 0.0
    %3196 = vmatpush1.msra.mxu0 0.0
    %3197 = vmatprep.subr.mxu0 0.0
    %3198 = vmatpush1.msra.mxu0 0.0
    %3199 = vmatprep.subr.mxu0 0.0
    %3200 = vmatpush1.msra.mxu0 0.0
    %3201 = vmatprep.subr.mxu0 0.0
    %3202 = vmatpush1.msra.mxu0 0.0
    %3203 = vmatprep.subr.mxu0 0.0
    %3204 = vmatpush1.msra.mxu0 0.0
    %3205 = vmatprep.subr.mxu0 0.0
    %3206 = vmatpush1.msra.mxu0 0.0
    %3207 = vmatprep.subr.mxu0 0.0
    %3208 = vmatpush1.msra.mxu0 0.0
    %3209 = vmatprep.subr.mxu0 0.0
    %3210 = vmatpush1.msra.mxu0 0.0
    %3211 = vmatprep.subr.mxu0 0.0
    %3212 = vmatpush1.msra.mxu0 0.0
    %3213 = vmatprep.subr.mxu0 0.0
    %3214 = vmatpush1.msra.mxu0 0.0
    %3215 = vmatprep.subr.mxu0 0.0
    %3216 = vmatpush1.msra.mxu0 0.0
    %3217 = vmatprep.subr.mxu0 0.0
    %3218 = vmatpush1.msra.mxu0 0.0
    %3219 = vmatprep.subr.mxu0 0.0
    %3220 = vmatpush1.msra.mxu0 0.0
    %3221 = vmatprep.subr.mxu0 0.0
    %3222 = vmatpush1.msra.mxu0 0.0
    %3223 = vmatprep.subr.mxu0 0.0
    %3224 = vmatpush1.msra.mxu0 0.0
    %3225 = vmatprep.subr.mxu0 0.0
    %3226 = vmatpush1.msra.mxu0 0.0
    %3227 = vmatprep.subr.mxu0 0.0
    %3228 = vmatpush1.msra.mxu0 0.0
    %3229 = vmatprep.subr.mxu0 0.0
    %3230 = vmatpush1.msra.mxu0 0.0
    %3231 = vmatprep.subr.mxu0 0.0
    %3232 = vmatpush1.msra.mxu0 0.0
    %3233 = vmatprep.subr.mxu0 0.0
    %3234 = vmatpush1.msra.mxu0 0.0
    %3235 = vmatprep.subr.mxu0 0.0
    %3236 = vmatpush1.msra.mxu0 0.0
    %3237 = vmatprep.subr.mxu0 0.0
    %3238 = vmatpush1.msra.mxu0 0.0
    %3239 = vmatprep.subr.mxu0 0.0
    %3240 = vmatpush1.msra.mxu0 0.0
    %3241 = vmatprep.mubr.f32.mxu0 0.0
    %3242 = vmatmul.mubr.f32.gmra.mrb[0].mxu0 %v3175
    %v3243 = vpop.f32.mrb[0].mxu0
    %v3244 = vadd.f32 0.0, %v3243
    %v3245 = vpop.f32.mrb[0].mxu0
    %3246 = vdwg.mxu0
    %v3248 = vsel %vm424, %v3244, 0
    %3250 = vmatprep.subr.mxu0 0.0
    %3251 = vmatpush1.msra.mxu0 %v2598
    %3252 = vmatprep.subr.mxu0 0.0
    %3253 = vmatpush1.msra.mxu0 0.0
    %3254 = vmatprep.subr.mxu0 0.0
    %3255 = vmatpush1.msra.mxu0 0.0
    %3256 = vmatprep.subr.mxu0 0.0
    %3257 = vmatpush1.msra.mxu0 0.0
    %3258 = vmatprep.subr.mxu0 0.0
    %3259 = vmatpush1.msra.mxu0 0.0
    %3260 = vmatprep.subr.mxu0 0.0
    %3261 = vmatpush1.msra.mxu0 0.0
    %3262 = vmatprep.subr.mxu0 0.0
    %3263 = vmatpush1.msra.mxu0 0.0
    %3264 = vmatprep.subr.mxu0 0.0
    %3265 = vmatpush1.msra.mxu0 0.0
    %3266 = vmatprep.subr.mxu0 0.0
    %3267 = vmatpush1.msra.mxu0 0.0
    %3268 = vmatprep.subr.mxu0 0.0
    %3269 = vmatpush1.msra.mxu0 0.0
    %3270 = vmatprep.subr.mxu0 0.0
    %3271 = vmatpush1.msra.mxu0 0.0
    %3272 = vmatprep.subr.mxu0 0.0
    %3273 = vmatpush1.msra.mxu0 0.0
    %3274 = vmatprep.subr.mxu0 0.0
    %3275 = vmatpush1.msra.mxu0 0.0
    %3276 = vmatprep.subr.mxu0 0.0
    %3277 = vmatpush1.msra.mxu0 0.0
    %3278 = vmatprep.subr.mxu0 0.0
    %3279 = vmatpush1.msra.mxu0 0.0
    %3280 = vmatprep.subr.mxu0 0.0
    %3281 = vmatpush1.msra.mxu0 0.0
    %3282 = vmatprep.subr.mxu0 0.0
    %3283 = vmatpush1.msra.mxu0 0.0
    %3284 = vmatprep.subr.mxu0 0.0
    %3285 = vmatpush1.msra.mxu0 0.0
    %3286 = vmatprep.subr.mxu0 0.0
    %3287 = vmatpush1.msra.mxu0 0.0
    %3288 = vmatprep.subr.mxu0 0.0
    %3289 = vmatpush1.msra.mxu0 0.0
    %3290 = vmatprep.subr.mxu0 0.0
    %3291 = vmatpush1.msra.mxu0 0.0
    %3292 = vmatprep.subr.mxu0 0.0
    %3293 = vmatpush1.msra.mxu0 0.0
    %3294 = vmatprep.subr.mxu0 0.0
    %3295 = vmatpush1.msra.mxu0 0.0
    %3296 = vmatprep.subr.mxu0 0.0
    %3297 = vmatpush1.msra.mxu0 0.0
    %3298 = vmatprep.subr.mxu0 0.0
    %3299 = vmatpush1.msra.mxu0 0.0
    %3300 = vmatprep.subr.mxu0 0.0
    %3301 = vmatpush1.msra.mxu0 0.0
    %3302 = vmatprep.subr.mxu0 0.0
    %3303 = vmatpush1.msra.mxu0 0.0
    %3304 = vmatprep.subr.mxu0 0.0
    %3305 = vmatpush1.msra.mxu0 0.0
    %3306 = vmatprep.subr.mxu0 0.0
    %3307 = vmatpush1.msra.mxu0 0.0
    %3308 = vmatprep.subr.mxu0 0.0
    %3309 = vmatpush1.msra.mxu0 0.0
    %3310 = vmatprep.subr.mxu0 0.0
    %3311 = vmatpush1.msra.mxu0 0.0
    %3312 = vmatprep.subr.mxu0 0.0
    %3313 = vmatpush1.msra.mxu0 0.0
    %3314 = vmatprep.mubr.f32.mxu0 0.0
    %3315 = vmatmul.mubr.f32.gmra.mrb[0].mxu0 %v3248
    %v3316 = vpop.f32.mrb[0].mxu0
    %v3317 = vadd.f32 0.0, %v3316
    %v3318 = vpop.f32.mrb[0].mxu0
    %3319 = vdwg.mxu0
    %v3320 = vadd.f32 %v3078, %v3317
    %3321 = vrot.lane.b32.xlu0 %v2601, 104
    %v3322 = vpop.permute.xlu0 %3321
    %3323 = vrot.lane.b32.xlu0 %v2588, 104
    %v3324 = vpop.permute.xlu0 %3323
    %v3325 = vsel %vm424, %v3322, 0
    %v3327 = vsel %vm424, %v3324, 0
    %3329 = vmatprep.subr.mxu0 0.0
    %3330 = vmatpush1.xpose.msra.mxu0 %v3327
    %3331 = vmatprep.subr.mxu0 0.0
    %3332 = vmatpush1.xpose.msra.mxu0 0.0
    %3333 = vmatprep.subr.mxu0 0.0
    %3334 = vmatpush1.xpose.msra.mxu0 0.0
    %3335 = vmatprep.subr.mxu0 0.0
    %3336 = vmatpush1.xpose.msra.mxu0 0.0
    %3337 = vmatprep.subr.mxu0 0.0
    %3338 = vmatpush1.xpose.msra.mxu0 0.0
    %3339 = vmatprep.subr.mxu0 0.0
    %3340 = vmatpush1.xpose.msra.mxu0 0.0
    %3341 = vmatprep.subr.mxu0 0.0
    %3342 = vmatpush1.xpose.msra.mxu0 0.0
    %3343 = vmatprep.subr.mxu0 0.0
    %3344 = vmatpush1.xpose.msra.mxu0 0.0
    %3345 = vmatprep.subr.mxu0 0.0
    %3346 = vmatpush1.xpose.msra.mxu0 0.0
    %3347 = vmatprep.subr.mxu0 0.0
    %3348 = vmatpush1.xpose.msra.mxu0 0.0
    %3349 = vmatprep.subr.mxu0 0.0
    %3350 = vmatpush1.xpose.msra.mxu0 0.0
    %3351 = vmatprep.subr.mxu0 0.0
    %3352 = vmatpush1.xpose.msra.mxu0 0.0
    %3353 = vmatprep.subr.mxu0 0.0
    %3354 = vmatpush1.xpose.msra.mxu0 0.0
    %3355 = vmatprep.subr.mxu0 0.0
    %3356 = vmatpush1.xpose.msra.mxu0 0.0
    %3357 = vmatprep.subr.mxu0 0.0
    %3358 = vmatpush1.xpose.msra.mxu0 0.0
    %3359 = vmatprep.subr.mxu0 0.0
    %3360 = vmatpush1.xpose.msra.mxu0 0.0
    %3361 = vmatprep.subr.mxu0 0.0
    %3362 = vmatpush1.xpose.msra.mxu0 0.0
    %3363 = vmatprep.subr.mxu0 0.0
    %3364 = vmatpush1.xpose.msra.mxu0 0.0
    %3365 = vmatprep.subr.mxu0 0.0
    %3366 = vmatpush1.xpose.msra.mxu0 0.0
    %3367 = vmatprep.subr.mxu0 0.0
    %3368 = vmatpush1.xpose.msra.mxu0 0.0
    %3369 = vmatprep.subr.mxu0 0.0
    %3370 = vmatpush1.xpose.msra.mxu0 0.0
    %3371 = vmatprep.subr.mxu0 0.0
    %3372 = vmatpush1.xpose.msra.mxu0 0.0
    %3373 = vmatprep.subr.mxu0 0.0
    %3374 = vmatpush1.xpose.msra.mxu0 0.0
    %3375 = vmatprep.subr.mxu0 0.0
    %3376 = vmatpush1.xpose.msra.mxu0 0.0
    %3377 = vmatprep.subr.mxu0 0.0
    %3378 = vmatpush1.xpose.msra.mxu0 0.0
    %3379 = vmatprep.subr.mxu0 0.0
    %3380 = vmatpush1.xpose.msra.mxu0 0.0
    %3381 = vmatprep.subr.mxu0 0.0
    %3382 = vmatpush1.xpose.msra.mxu0 0.0
    %3383 = vmatprep.subr.mxu0 0.0
    %3384 = vmatpush1.xpose.msra.mxu0 0.0
    %3385 = vmatprep.subr.mxu0 0.0
    %3386 = vmatpush1.xpose.msra.mxu0 0.0
    %3387 = vmatprep.subr.mxu0 0.0
    %3388 = vmatpush1.xpose.msra.mxu0 0.0
    %3389 = vmatprep.subr.mxu0 0.0
    %3390 = vmatpush1.xpose.msra.mxu0 0.0
    %3391 = vmatprep.subr.mxu0 0.0
    %3392 = vmatpush1.xpose.msra.mxu0 0.0
    %3393 = vmatprep.mubr.f32.mxu0 0.0
    %3394 = vmatmul.mubr.f32.gmra.mrb[0].mxu0 %v3325
    %v3395 = vpop.f32.mrb[0].mxu0
    %v3396 = vadd.f32 0.0, %v3395
    %v3397 = vpop.f32.mrb[0].mxu0
    %3398 = vdwg.mxu0
    %v3399 = vsel %vm2680, -1e+09, %v3396
    %v3400 = vsel %vm424, %v3399, -inf
    %3401 = vmax.xlane.f32.xlu0 %v3400
    %v3402 = vpop.xlane.xlu0 %3401
    %v3403 = vsub.f32 %v3399, %v3402
    %v3404 = vmul.f32 %v3403, 1.442695
    %v3405 = vpow.pop %v3404
    %v3406 = vsel %vm424, %v3405, 0.0
    %3407 = vadd.xlane.f32.xlu0 %v3406
    %v3408 = vpop.xlane.xlu0 %3407
    %v3409 = vrcp.pop %v3408
    %v3410 = vmul.f32 %v3405, %v3409
    %3411 = vrot.lane.b32.xlu0 %v2588, 72
    %v3412 = vpop.permute.xlu0 %3411
    %v3415 = vsel %vm424, %v3410, 0
    %3417 = vmatprep.subr.mxu0 0.0
    %3418 = vmatpush1.msra.mxu0 %v3412
    %3419 = vmatprep.subr.mxu0 0.0
    %3420 = vmatpush1.msra.mxu0 0.0
    %3421 = vmatprep.subr.mxu0 0.0
    %3422 = vmatpush1.msra.mxu0 0.0
    %3423 = vmatprep.subr.mxu0 0.0
    %3424 = vmatpush1.msra.mxu0 0.0
    %3425 = vmatprep.subr.mxu0 0.0
    %3426 = vmatpush1.msra.mxu0 0.0
    %3427 = vmatprep.subr.mxu0 0.0
    %3428 = vmatpush1.msra.mxu0 0.0
    %3429 = vmatprep.subr.mxu0 0.0
    %3430 = vmatpush1.msra.mxu0 0.0
    %3431 = vmatprep.subr.mxu0 0.0
    %3432 = vmatpush1.msra.mxu0 0.0
    %3433 = vmatprep.subr.mxu0 0.0
    %3434 = vmatpush1.msra.mxu0 0.0
    %3435 = vmatprep.subr.mxu0 0.0
    %3436 = vmatpush1.msra.mxu0 0.0
    %3437 = vmatprep.subr.mxu0 0.0
    %3438 = vmatpush1.msra.mxu0 0.0
    %3439 = vmatprep.subr.mxu0 0.0
    %3440 = vmatpush1.msra.mxu0 0.0
    %3441 = vmatprep.subr.mxu0 0.0
    %3442 = vmatpush1.msra.mxu0 0.0
    %3443 = vmatprep.subr.mxu0 0.0
    %3444 = vmatpush1.msra.mxu0 0.0
    %3445 = vmatprep.subr.mxu0 0.0
    %3446 = vmatpush1.msra.mxu0 0.0
    %3447 = vmatprep.subr.mxu0 0.0
    %3448 = vmatpush1.msra.mxu0 0.0
    %3449 = vmatprep.subr.mxu0 0.0
    %3450 = vmatpush1.msra.mxu0 0.0
    %3451 = vmatprep.subr.mxu0 0.0
    %3452 = vmatpush1.msra.mxu0 0.0
    %3453 = vmatprep.subr.mxu0 0.0
    %3454 = vmatpush1.msra.mxu0 0.0
    %3455 = vmatprep.subr.mxu0 0.0
    %3456 = vmatpush1.msra.mxu0 0.0
    %3457 = vmatprep.subr.mxu0 0.0
    %3458 = vmatpush1.msra.mxu0 0.0
    %3459 = vmatprep.subr.mxu0 0.0
    %3460 = vmatpush1.msra.mxu0 0.0
    %3461 = vmatprep.subr.mxu0 0.0
    %3462 = vmatpush1.msra.mxu0 0.0
    %3463 = vmatprep.subr.mxu0 0.0
    %3464 = vmatpush1.msra.mxu0 0.0
    %3465 = vmatprep.subr.mxu0 0.0
    %3466 = vmatpush1.msra.mxu0 0.0
    %3467 = vmatprep.subr.mxu0 0.0
    %3468 = vmatpush1.msra.mxu0 0.0
    %3469 = vmatprep.subr.mxu0 0.0
    %3470 = vmatpush1.msra.mxu0 0.0
    %3471 = vmatprep.subr.mxu0 0.0
    %3472 = vmatpush1.msra.mxu0 0.0
    %3473 = vmatprep.subr.mxu0 0.0
    %3474 = vmatpush1.msra.mxu0 0.0
    %3475 = vmatprep.subr.mxu0 0.0
    %3476 = vmatpush1.msra.mxu0 0.0
    %3477 = vmatprep.subr.mxu0 0.0
    %3478 = vmatpush1.msra.mxu0 0.0
    %3479 = vmatprep.subr.mxu0 0.0
    %3480 = vmatpush1.msra.mxu0 0.0
    %3481 = vmatprep.mubr.f32.mxu0 0.0
    %3482 = vmatmul.mubr.f32.gmra.mrb[0].mxu0 %v3415
    %v3483 = vpop.f32.mrb[0].mxu0
    %v3484 = vadd.f32 0.0, %v3483
    %v3485 = vpop.f32.mrb[0].mxu0
    %3486 = vdwg.mxu0
    %v3488 = vsel %vm424, %v3484, 0
    %3490 = vmatprep.subr.mxu0 0.0
    %3491 = vmatpush1.msra.mxu0 %v2599
    %3492 = vmatprep.subr.mxu0 0.0
    %3493 = vmatpush1.msra.mxu0 0.0
    %3494 = vmatprep.subr.mxu0 0.0
    %3495 = vmatpush1.msra.mxu0 0.0
    %3496 = vmatprep.subr.mxu0 0.0
    %3497 = vmatpush1.msra.mxu0 0.0
    %3498 = vmatprep.subr.mxu0 0.0
    %3499 = vmatpush1.msra.mxu0 0.0
    %3500 = vmatprep.subr.mxu0 0.0
    %3501 = vmatpush1.msra.mxu0 0.0
    %3502 = vmatprep.subr.mxu0 0.0
    %3503 = vmatpush1.msra.mxu0 0.0
    %3504 = vmatprep.subr.mxu0 0.0
    %3505 = vmatpush1.msra.mxu0 0.0
    %3506 = vmatprep.subr.mxu0 0.0
    %3507 = vmatpush1.msra.mxu0 0.0
    %3508 = vmatprep.subr.mxu0 0.0
    %3509 = vmatpush1.msra.mxu0 0.0
    %3510 = vmatprep.subr.mxu0 0.0
    %3511 = vmatpush1.msra.mxu0 0.0
    %3512 = vmatprep.subr.mxu0 0.0
    %3513 = vmatpush1.msra.mxu0 0.0
    %3514 = vmatprep.subr.mxu0 0.0
    %3515 = vmatpush1.msra.mxu0 0.0
    %3516 = vmatprep.subr.mxu0 0.0
    %3517 = vmatpush1.msra.mxu0 0.0
    %3518 = vmatprep.subr.mxu0 0.0
    %3519 = vmatpush1.msra.mxu0 0.0
    %3520 = vmatprep.subr.mxu0 0.0
    %3521 = vmatpush1.msra.mxu0 0.0
    %3522 = vmatprep.subr.mxu0 0.0
    %3523 = vmatpush1.msra.mxu0 0.0
    %3524 = vmatprep.subr.mxu0 0.0
    %3525 = vmatpush1.msra.mxu0 0.0
    %3526 = vmatprep.subr.mxu0 0.0
    %3527 = vmatpush1.msra.mxu0 0.0
    %3528 = vmatprep.subr.mxu0 0.0
    %3529 = vmatpush1.msra.mxu0 0.0
    %3530 = vmatprep.subr.mxu0 0.0
    %3531 = vmatpush1.msra.mxu0 0.0
    %3532 = vmatprep.subr.mxu0 0.0
    %3533 = vmatpush1.msra.mxu0 0.0
    %3534 = vmatprep.subr.mxu0 0.0
    %3535 = vmatpush1.msra.mxu0 0.0
    %3536 = vmatprep.subr.mxu0 0.0
    %3537 = vmatpush1.msra.mxu0 0.0
    %3538 = vmatprep.subr.mxu0 0.0
    %3539 = vmatpush1.msra.mxu0 0.0
    %3540 = vmatprep.subr.mxu0 0.0
    %3541 = vmatpush1.msra.mxu0 0.0
    %3542 = vmatprep.subr.mxu0 0.0
    %3543 = vmatpush1.msra.mxu0 0.0
    %3544 = vmatprep.subr.mxu0 0.0
    %3545 = vmatpush1.msra.mxu0 0.0
    %3546 = vmatprep.subr.mxu0 0.0
    %3547 = vmatpush1.msra.mxu0 0.0
    %3548 = vmatprep.subr.mxu0 0.0
    %3549 = vmatpush1.msra.mxu0 0.0
    %3550 = vmatprep.subr.mxu0 0.0
    %3551 = vmatpush1.msra.mxu0 0.0
    %3552 = vmatprep.subr.mxu0 0.0
    %3553 = vmatpush1.msra.mxu0 0.0
    %3554 = vmatprep.mubr.f32.mxu0 0.0
    %3555 = vmatmul.mubr.f32.gmra.mrb[0].mxu0 %v3488
    %v3556 = vpop.f32.mrb[0].mxu0
    %v3557 = vadd.f32 0.0, %v3556
    %v3558 = vpop.f32.mrb[0].mxu0
    %3559 = vdwg.mxu0
    %v3560 = vadd.f32 %v3320, %v3557
    %v3562 = vlaneseq
    %v3563 = vshrl.u32 %v3562, 7
    %v3564 = vsub.s32 0, %v3563
    %v3565 = vrot.slane %v2600, %v3564
    %v3567 = vadd.f32 %v3560, %v3565
    %s3568 = scalar_lea.vmem [#allocation7], 8
    %v3569 = vld [vmem:[%s3568] sm:$0xff]
    %v3571 = vsel %vm424, %v2602, 0
    %v3574 = vsel %vm424, %v2593, 0
    %3576 = vmatprep.subr.mxu0 0.0
    %3577 = vmatpush1.xpose.msra.mxu0 %v3574
    %3578 = vmatprep.subr.mxu0 0.0
    %3579 = vmatpush1.xpose.msra.mxu0 0.0
    %3580 = vmatprep.subr.mxu0 0.0
    %3581 = vmatpush1.xpose.msra.mxu0 0.0
    %3582 = vmatprep.subr.mxu0 0.0
    %3583 = vmatpush1.xpose.msra.mxu0 0.0
    %3584 = vmatprep.subr.mxu0 0.0
    %3585 = vmatpush1.xpose.msra.mxu0 0.0
    %3586 = vmatprep.subr.mxu0 0.0
    %3587 = vmatpush1.xpose.msra.mxu0 0.0
    %3588 = vmatprep.subr.mxu0 0.0
    %3589 = vmatpush1.xpose.msra.mxu0 0.0
    %3590 = vmatprep.subr.mxu0 0.0
    %3591 = vmatpush1.xpose.msra.mxu0 0.0
    %3592 = vmatprep.subr.mxu0 0.0
    %3593 = vmatpush1.xpose.msra.mxu0 0.0
    %3594 = vmatprep.subr.mxu0 0.0
    %3595 = vmatpush1.xpose.msra.mxu0 0.0
    %3596 = vmatprep.subr.mxu0 0.0
    %3597 = vmatpush1.xpose.msra.mxu0 0.0
    %3598 = vmatprep.subr.mxu0 0.0
    %3599 = vmatpush1.xpose.msra.mxu0 0.0
    %3600 = vmatprep.subr.mxu0 0.0
    %3601 = vmatpush1.xpose.msra.mxu0 0.0
    %3602 = vmatprep.subr.mxu0 0.0
    %3603 = vmatpush1.xpose.msra.mxu0 0.0
    %3604 = vmatprep.subr.mxu0 0.0
    %3605 = vmatpush1.xpose.msra.mxu0 0.0
    %3606 = vmatprep.subr.mxu0 0.0
    %3607 = vmatpush1.xpose.msra.mxu0 0.0
    %3608 = vmatprep.subr.mxu0 0.0
    %3609 = vmatpush1.xpose.msra.mxu0 0.0
    %3610 = vmatprep.subr.mxu0 0.0
    %3611 = vmatpush1.xpose.msra.mxu0 0.0
    %3612 = vmatprep.subr.mxu0 0.0
    %3613 = vmatpush1.xpose.msra.mxu0 0.0
    %3614 = vmatprep.subr.mxu0 0.0
    %3615 = vmatpush1.xpose.msra.mxu0 0.0
    %3616 = vmatprep.subr.mxu0 0.0
    %3617 = vmatpush1.xpose.msra.mxu0 0.0
    %3618 = vmatprep.subr.mxu0 0.0
    %3619 = vmatpush1.xpose.msra.mxu0 0.0
    %3620 = vmatprep.subr.mxu0 0.0
    %3621 = vmatpush1.xpose.msra.mxu0 0.0
    %3622 = vmatprep.subr.mxu0 0.0
    %3623 = vmatpush1.xpose.msra.mxu0 0.0
    %3624 = vmatprep.subr.mxu0 0.0
    %3625 = vmatpush1.xpose.msra.mxu0 0.0
    %3626 = vmatprep.subr.mxu0 0.0
    %3627 = vmatpush1.xpose.msra.mxu0 0.0
    %3628 = vmatprep.subr.mxu0 0.0
    %3629 = vmatpush1.xpose.msra.mxu0 0.0
    %3630 = vmatprep.subr.mxu0 0.0
    %3631 = vmatpush1.xpose.msra.mxu0 0.0
    %3632 = vmatprep.subr.mxu0 0.0
    %3633 = vmatpush1.xpose.msra.mxu0 0.0
    %3634 = vmatprep.subr.mxu0 0.0
    %3635 = vmatpush1.xpose.msra.mxu0 0.0
    %3636 = vmatprep.subr.mxu0 0.0
    %3637 = vmatpush1.xpose.msra.mxu0 0.0
    %3638 = vmatprep.subr.mxu0 0.0
    %3639 = vmatpush1.xpose.msra.mxu0 0.0
    %3640 = vmatprep.mubr.f32.mxu0 0.0
    %3641 = vmatmul.mubr.f32.gmra.mrb[0].mxu0 %v3571
    %v3642 = vpop.f32.mrb[0].mxu0
    %v3643 = vadd.f32 0.0, %v3642
    %v3644 = vpop.f32.mrb[0].mxu0
    %3645 = vdwg.mxu0
    %vm3646 = vcmp.eq.f32.partialorder %v3569, 0.0
    %v3647 = vsel %vm3646, -1e+09, %v3643
    %v3648 = vsel %vm424, %v3647, -inf
    %3649 = vmax.xlane.f32.xlu0 %v3648
    %v3650 = vpop.xlane.xlu0 %3649
    %v3651 = vsub.f32 %v3647, %v3650
    %v3652 = vmul.f32 %v3651, 1.442695
    %v3653 = vpow.pop %v3652
    %v3654 = vsel %vm424, %v3653, 0.0
    %3655 = vadd.xlane.f32.xlu0 %v3654
    %v3656 = vpop.xlane.xlu0 %3655
    %v3657 = vrcp.pop %v3656
    %v3658 = vmul.f32 %v3653, %v3657
    %3659 = vrot.lane.b32.xlu0 %v2593, 96
    %v3660 = vpop.permute.xlu0 %3659
    %v3663 = vsel %vm424, %v3658, 0
    %3665 = vmatprep.subr.mxu0 0.0
    %3666 = vmatpush1.msra.mxu0 %v3660
    %3667 = vmatprep.subr.mxu0 0.0
    %3668 = vmatpush1.msra.mxu0 0.0
    %3669 = vmatprep.subr.mxu0 0.0
    %3670 = vmatpush1.msra.mxu0 0.0
    %3671 = vmatprep.subr.mxu0 0.0
    %3672 = vmatpush1.msra.mxu0 0.0
    %3673 = vmatprep.subr.mxu0 0.0
    %3674 = vmatpush1.msra.mxu0 0.0
    %3675 = vmatprep.subr.mxu0 0.0
    %3676 = vmatpush1.msra.mxu0 0.0
    %3677 = vmatprep.subr.mxu0 0.0
    %3678 = vmatpush1.msra.mxu0 0.0
    %3679 = vmatprep.subr.mxu0 0.0
    %3680 = vmatpush1.msra.mxu0 0.0
    %3681 = vmatprep.subr.mxu0 0.0
    %3682 = vmatpush1.msra.mxu0 0.0
    %3683 = vmatprep.subr.mxu0 0.0
    %3684 = vmatpush1.msra.mxu0 0.0
    %3685 = vmatprep.subr.mxu0 0.0
    %3686 = vmatpush1.msra.mxu0 0.0
    %3687 = vmatprep.subr.mxu0 0.0
    %3688 = vmatpush1.msra.mxu0 0.0
    %3689 = vmatprep.subr.mxu0 0.0
    %3690 = vmatpush1.msra.mxu0 0.0
    %3691 = vmatprep.subr.mxu0 0.0
    %3692 = vmatpush1.msra.mxu0 0.0
    %3693 = vmatprep.subr.mxu0 0.0
    %3694 = vmatpush1.msra.mxu0 0.0
    %3695 = vmatprep.subr.mxu0 0.0
    %3696 = vmatpush1.msra.mxu0 0.0
    %3697 = vmatprep.subr.mxu0 0.0
    %3698 = vmatpush1.msra.mxu0 0.0
    %3699 = vmatprep.subr.mxu0 0.0
    %3700 = vmatpush1.msra.mxu0 0.0
    %3701 = vmatprep.subr.mxu0 0.0
    %3702 = vmatpush1.msra.mxu0 0.0
    %3703 = vmatprep.subr.mxu0 0.0
    %3704 = vmatpush1.msra.mxu0 0.0
    %3705 = vmatprep.subr.mxu0 0.0
    %3706 = vmatpush1.msra.mxu0 0.0
    %3707 = vmatprep.subr.mxu0 0.0
    %3708 = vmatpush1.msra.mxu0 0.0
    %3709 = vmatprep.subr.mxu0 0.0
    %3710 = vmatpush1.msra.mxu0 0.0
    %3711 = vmatprep.subr.mxu0 0.0
    %3712 = vmatpush1.msra.mxu0 0.0
    %3713 = vmatprep.subr.mxu0 0.0
    %3714 = vmatpush1.msra.mxu0 0.0
    %3715 = vmatprep.subr.mxu0 0.0
    %3716 = vmatpush1.msra.mxu0 0.0
    %3717 = vmatprep.subr.mxu0 0.0
    %3718 = vmatpush1.msra.mxu0 0.0
    %3719 = vmatprep.subr.mxu0 0.0
    %3720 = vmatpush1.msra.mxu0 0.0
    %3721 = vmatprep.subr.mxu0 0.0
    %3722 = vmatpush1.msra.mxu0 0.0
    %3723 = vmatprep.subr.mxu0 0.0
    %3724 = vmatpush1.msra.mxu0 0.0
    %3725 = vmatprep.subr.mxu0 0.0
    %3726 = vmatpush1.msra.mxu0 0.0
    %3727 = vmatprep.subr.mxu0 0.0
    %3728 = vmatpush1.msra.mxu0 0.0
    %3729 = vmatprep.mubr.f32.mxu0 0.0
    %3730 = vmatmul.mubr.f32.gmra.mrb[0].mxu0 %v3663
    %v3731 = vpop.f32.mrb[0].mxu0
    %v3732 = vadd.f32 0.0, %v3731
    %v3733 = vpop.f32.mrb[0].mxu0
    %3734 = vdwg.mxu0
    %3735 = vrot.lane.b32.xlu0 %v2602, 120
    %v3736 = vpop.permute.xlu0 %3735
    %3737 = vrot.lane.b32.xlu0 %v2593, 120
    %v3738 = vpop.permute.xlu0 %3737
    %v3739 = vsel %vm424, %v3736, 0
    %v3741 = vsel %vm424, %v3738, 0
    %3743 = vmatprep.subr.mxu0 0.0
    %3744 = vmatpush1.xpose.msra.mxu0 %v3741
    %3745 = vmatprep.subr.mxu0 0.0
    %3746 = vmatpush1.xpose.msra.mxu0 0.0
    %3747 = vmatprep.subr.mxu0 0.0
    %3748 = vmatpush1.xpose.msra.mxu0 0.0
    %3749 = vmatprep.subr.mxu0 0.0
    %3750 = vmatpush1.xpose.msra.mxu0 0.0
    %3751 = vmatprep.subr.mxu0 0.0
    %3752 = vmatpush1.xpose.msra.mxu0 0.0
    %3753 = vmatprep.subr.mxu0 0.0
    %3754 = vmatpush1.xpose.msra.mxu0 0.0
    %3755 = vmatprep.subr.mxu0 0.0
    %3756 = vmatpush1.xpose.msra.mxu0 0.0
    %3757 = vmatprep.subr.mxu0 0.0
    %3758 = vmatpush1.xpose.msra.mxu0 0.0
    %3759 = vmatprep.subr.mxu0 0.0
    %3760 = vmatpush1.xpose.msra.mxu0 0.0
    %3761 = vmatprep.subr.mxu0 0.0
    %3762 = vmatpush1.xpose.msra.mxu0 0.0
    %3763 = vmatprep.subr.mxu0 0.0
    %3764 = vmatpush1.xpose.msra.mxu0 0.0
    %3765 = vmatprep.subr.mxu0 0.0
    %3766 = vmatpush1.xpose.msra.mxu0 0.0
    %3767 = vmatprep.subr.mxu0 0.0
    %3768 = vmatpush1.xpose.msra.mxu0 0.0
    %3769 = vmatprep.subr.mxu0 0.0
    %3770 = vmatpush1.xpose.msra.mxu0 0.0
    %3771 = vmatprep.subr.mxu0 0.0
    %3772 = vmatpush1.xpose.msra.mxu0 0.0
    %3773 = vmatprep.subr.mxu0 0.0
    %3774 = vmatpush1.xpose.msra.mxu0 0.0
    %3775 = vmatprep.subr.mxu0 0.0
    %3776 = vmatpush1.xpose.msra.mxu0 0.0
    %3777 = vmatprep.subr.mxu0 0.0
    %3778 = vmatpush1.xpose.msra.mxu0 0.0
    %3779 = vmatprep.subr.mxu0 0.0
    %3780 = vmatpush1.xpose.msra.mxu0 0.0
    %3781 = vmatprep.subr.mxu0 0.0
    %3782 = vmatpush1.xpose.msra.mxu0 0.0
    %3783 = vmatprep.subr.mxu0 0.0
    %3784 = vmatpush1.xpose.msra.mxu0 0.0
    %3785 = vmatprep.subr.mxu0 0.0
    %3786 = vmatpush1.xpose.msra.mxu0 0.0
    %3787 = vmatprep.subr.mxu0 0.0
    %3788 = vmatpush1.xpose.msra.mxu0 0.0
    %3789 = vmatprep.subr.mxu0 0.0
    %3790 = vmatpush1.xpose.msra.mxu0 0.0
    %3791 = vmatprep.subr.mxu0 0.0
    %3792 = vmatpush1.xpose.msra.mxu0 0.0
    %3793 = vmatprep.subr.mxu0 0.0
    %3794 = vmatpush1.xpose.msra.mxu0 0.0
    %3795 = vmatprep.subr.mxu0 0.0
    %3796 = vmatpush1.xpose.msra.mxu0 0.0
    %3797 = vmatprep.subr.mxu0 0.0
    %3798 = vmatpush1.xpose.msra.mxu0 0.0
    %3799 = vmatprep.subr.mxu0 0.0
    %3800 = vmatpush1.xpose.msra.mxu0 0.0
    %3801 = vmatprep.subr.mxu0 0.0
    %3802 = vmatpush1.xpose.msra.mxu0 0.0
    %3803 = vmatprep.subr.mxu0 0.0
    %3804 = vmatpush1.xpose.msra.mxu0 0.0
    %3805 = vmatprep.subr.mxu0 0.0
    %3806 = vmatpush1.xpose.msra.mxu0 0.0
    %3807 = vmatprep.mubr.f32.mxu0 0.0
    %3808 = vmatmul.mubr.f32.gmra.mrb[0].mxu0 %v3739
    %v3809 = vpop.f32.mrb[0].mxu0
    %v3810 = vadd.f32 0.0, %v3809
    %v3811 = vpop.f32.mrb[0].mxu0
    %3812 = vdwg.mxu0
    %v3813 = vsel %vm3646, -1e+09, %v3810
    %v3814 = vsel %vm424, %v3813, -inf
    %3815 = vmax.xlane.f32.xlu0 %v3814
    %v3816 = vpop.xlane.xlu0 %3815
    %v3817 = vsub.f32 %v3813, %v3816
    %v3818 = vmul.f32 %v3817, 1.442695
    %v3819 = vpow.pop %v3818
    %v3820 = vsel %vm424, %v3819, 0.0
    %3821 = vadd.xlane.f32.xlu0 %v3820
    %v3822 = vpop.xlane.xlu0 %3821
    %v3823 = vrcp.pop %v3822
    %v3824 = vmul.f32 %v3819, %v3823
    %3825 = vrot.lane.b32.xlu0 %v2593, 88
    %v3826 = vpop.permute.xlu0 %3825
    %v3829 = vsel %vm424, %v3824, 0
    %3831 = vmatprep.subr.mxu0 0.0
    %3832 = vmatpush1.msra.mxu0 %v3826
    %3833 = vmatprep.subr.mxu0 0.0
    %3834 = vmatpush1.msra.mxu0 0.0
    %3835 = vmatprep.subr.mxu0 0.0
    %3836 = vmatpush1.msra.mxu0 0.0
    %3837 = vmatprep.subr.mxu0 0.0
    %3838 = vmatpush1.msra.mxu0 0.0
    %3839 = vmatprep.subr.mxu0 0.0
    %3840 = vmatpush1.msra.mxu0 0.0
    %3841 = vmatprep.subr.mxu0 0.0
    %3842 = vmatpush1.msra.mxu0 0.0
    %3843 = vmatprep.subr.mxu0 0.0
    %3844 = vmatpush1.msra.mxu0 0.0
    %3845 = vmatprep.subr.mxu0 0.0
    %3846 = vmatpush1.msra.mxu0 0.0
    %3847 = vmatprep.subr.mxu0 0.0
    %3848 = vmatpush1.msra.mxu0 0.0
    %3849 = vmatprep.subr.mxu0 0.0
    %3850 = vmatpush1.msra.mxu0 0.0
    %3851 = vmatprep.subr.mxu0 0.0
    %3852 = vmatpush1.msra.mxu0 0.0
    %3853 = vmatprep.subr.mxu0 0.0
    %3854 = vmatpush1.msra.mxu0 0.0
    %3855 = vmatprep.subr.mxu0 0.0
    %3856 = vmatpush1.msra.mxu0 0.0
    %3857 = vmatprep.subr.mxu0 0.0
    %3858 = vmatpush1.msra.mxu0 0.0
    %3859 = vmatprep.subr.mxu0 0.0
    %3860 = vmatpush1.msra.mxu0 0.0
    %3861 = vmatprep.subr.mxu0 0.0
    %3862 = vmatpush1.msra.mxu0 0.0
    %3863 = vmatprep.subr.mxu0 0.0
    %3864 = vmatpush1.msra.mxu0 0.0
    %3865 = vmatprep.subr.mxu0 0.0
    %3866 = vmatpush1.msra.mxu0 0.0
    %3867 = vmatprep.subr.mxu0 0.0
    %3868 = vmatpush1.msra.mxu0 0.0
    %3869 = vmatprep.subr.mxu0 0.0
    %3870 = vmatpush1.msra.mxu0 0.0
    %3871 = vmatprep.subr.mxu0 0.0
    %3872 = vmatpush1.msra.mxu0 0.0
    %3873 = vmatprep.subr.mxu0 0.0
    %3874 = vmatpush1.msra.mxu0 0.0
    %3875 = vmatprep.subr.mxu0 0.0
    %3876 = vmatpush1.msra.mxu0 0.0
    %3877 = vmatprep.subr.mxu0 0.0
    %3878 = vmatpush1.msra.mxu0 0.0
    %3879 = vmatprep.subr.mxu0 0.0
    %3880 = vmatpush1.msra.mxu0 0.0
    %3881 = vmatprep.subr.mxu0 0.0
    %3882 = vmatpush1.msra.mxu0 0.0
    %3883 = vmatprep.subr.mxu0 0.0
    %3884 = vmatpush1.msra.mxu0 0.0
    %3885 = vmatprep.subr.mxu0 0.0
    %3886 = vmatpush1.msra.mxu0 0.0
    %3887 = vmatprep.subr.mxu0 0.0
    %3888 = vmatpush1.msra.mxu0 0.0
    %3889 = vmatprep.subr.mxu0 0.0
    %3890 = vmatpush1.msra.mxu0 0.0
    %3891 = vmatprep.subr.mxu0 0.0
    %3892 = vmatpush1.msra.mxu0 0.0
    %3893 = vmatprep.subr.mxu0 0.0
    %3894 = vmatpush1.msra.mxu0 0.0
    %3895 = vmatprep.mubr.f32.mxu0 0.0
    %3896 = vmatmul.mubr.f32.gmra.mrb[0].mxu0 %v3829
    %v3897 = vpop.f32.mrb[0].mxu0
    %v3898 = vadd.f32 0.0, %v3897
    %v3899 = vpop.f32.mrb[0].mxu0
    %3900 = vdwg.mxu0
    %v3902 = vsel %vm424, %v3898, 0
    %3904 = vmatprep.subr.mxu0 0.0
    %3905 = vmatpush1.msra.mxu0 %v2597
    %3906 = vmatprep.subr.mxu0 0.0
    %3907 = vmatpush1.msra.mxu0 0.0
    %3908 = vmatprep.subr.mxu0 0.0
    %3909 = vmatpush1.msra.mxu0 0.0
    %3910 = vmatprep.subr.mxu0 0.0
    %3911 = vmatpush1.msra.mxu0 0.0
    %3912 = vmatprep.subr.mxu0 0.0
    %3913 = vmatpush1.msra.mxu0 0.0
    %3914 = vmatprep.subr.mxu0 0.0
    %3915 = vmatpush1.msra.mxu0 0.0
    %3916 = vmatprep.subr.mxu0 0.0
    %3917 = vmatpush1.msra.mxu0 0.0
    %3918 = vmatprep.subr.mxu0 0.0
    %3919 = vmatpush1.msra.mxu0 0.0
    %3920 = vmatprep.subr.mxu0 0.0
    %3921 = vmatpush1.msra.mxu0 0.0
    %3922 = vmatprep.subr.mxu0 0.0
    %3923 = vmatpush1.msra.mxu0 0.0
    %3924 = vmatprep.subr.mxu0 0.0
    %3925 = vmatpush1.msra.mxu0 0.0
    %3926 = vmatprep.subr.mxu0 0.0
    %3927 = vmatpush1.msra.mxu0 0.0
    %3928 = vmatprep.subr.mxu0 0.0
    %3929 = vmatpush1.msra.mxu0 0.0
    %3930 = vmatprep.subr.mxu0 0.0
    %3931 = vmatpush1.msra.mxu0 0.0
    %3932 = vmatprep.subr.mxu0 0.0
    %3933 = vmatpush1.msra.mxu0 0.0
    %3934 = vmatprep.subr.mxu0 0.0
    %3935 = vmatpush1.msra.mxu0 0.0
    %3936 = vmatprep.subr.mxu0 0.0
    %3937 = vmatpush1.msra.mxu0 0.0
    %3938 = vmatprep.subr.mxu0 0.0
    %3939 = vmatpush1.msra.mxu0 0.0
    %3940 = vmatprep.subr.mxu0 0.0
    %3941 = vmatpush1.msra.mxu0 0.0
    %3942 = vmatprep.subr.mxu0 0.0
    %3943 = vmatpush1.msra.mxu0 0.0
    %3944 = vmatprep.subr.mxu0 0.0
    %3945 = vmatpush1.msra.mxu0 0.0
    %3946 = vmatprep.subr.mxu0 0.0
    %3947 = vmatpush1.msra.mxu0 0.0
    %3948 = vmatprep.subr.mxu0 0.0
    %3949 = vmatpush1.msra.mxu0 0.0
    %3950 = vmatprep.subr.mxu0 0.0
    %3951 = vmatpush1.msra.mxu0 0.0
    %3952 = vmatprep.subr.mxu0 0.0
    %3953 = vmatpush1.msra.mxu0 0.0
    %3954 = vmatprep.subr.mxu0 0.0
    %3955 = vmatpush1.msra.mxu0 0.0
    %3956 = vmatprep.subr.mxu0 0.0
    %3957 = vmatpush1.msra.mxu0 0.0
    %3958 = vmatprep.subr.mxu0 0.0
    %3959 = vmatpush1.msra.mxu0 0.0
    %3960 = vmatprep.subr.mxu0 0.0
    %3961 = vmatpush1.msra.mxu0 0.0
    %3962 = vmatprep.subr.mxu0 0.0
    %3963 = vmatpush1.msra.mxu0 0.0
    %3964 = vmatprep.subr.mxu0 0.0
    %3965 = vmatpush1.msra.mxu0 0.0
    %3966 = vmatprep.subr.mxu0 0.0
    %3967 = vmatpush1.msra.mxu0 0.0
    %3968 = vmatprep.mubr.f32.mxu0 0.0
    %3969 = vmatmul.mubr.f32.gmra.mrb[0].mxu0 %v3902
    %v3970 = vpop.f32.mrb[0].mxu0
    %v3971 = vadd.f32 0.0, %v3970
    %v3972 = vpop.f32.mrb[0].mxu0
    %3973 = vdwg.mxu0
    %v3975 = vsel %vm424, %v3732, 0
    %3977 = vmatprep.subr.mxu0 0.0
    %3978 = vmatpush1.msra.mxu0 %v2596
    %3979 = vmatprep.subr.mxu0 0.0
    %3980 = vmatpush1.msra.mxu0 0.0
    %3981 = vmatprep.subr.mxu0 0.0
    %3982 = vmatpush1.msra.mxu0 0.0
    %3983 = vmatprep.subr.mxu0 0.0
    %3984 = vmatpush1.msra.mxu0 0.0
    %3985 = vmatprep.subr.mxu0 0.0
    %3986 = vmatpush1.msra.mxu0 0.0
    %3987 = vmatprep.subr.mxu0 0.0
    %3988 = vmatpush1.msra.mxu0 0.0
    %3989 = vmatprep.subr.mxu0 0.0
    %3990 = vmatpush1.msra.mxu0 0.0
    %3991 = vmatprep.subr.mxu0 0.0
    %3992 = vmatpush1.msra.mxu0 0.0
    %3993 = vmatprep.subr.mxu0 0.0
    %3994 = vmatpush1.msra.mxu0 0.0
    %3995 = vmatprep.subr.mxu0 0.0
    %3996 = vmatpush1.msra.mxu0 0.0
    %3997 = vmatprep.subr.mxu0 0.0
    %3998 = vmatpush1.msra.mxu0 0.0
    %3999 = vmatprep.subr.mxu0 0.0
    %4000 = vmatpush1.msra.mxu0 0.0
    %4001 = vmatprep.subr.mxu0 0.0
    %4002 = vmatpush1.msra.mxu0 0.0
    %4003 = vmatprep.subr.mxu0 0.0
    %4004 = vmatpush1.msra.mxu0 0.0
    %4005 = vmatprep.subr.mxu0 0.0
    %4006 = vmatpush1.msra.mxu0 0.0
    %4007 = vmatprep.subr.mxu0 0.0
    %4008 = vmatpush1.msra.mxu0 0.0
    %4009 = vmatprep.subr.mxu0 0.0
    %4010 = vmatpush1.msra.mxu0 0.0
    %4011 = vmatprep.subr.mxu0 0.0
    %4012 = vmatpush1.msra.mxu0 0.0
    %4013 = vmatprep.subr.mxu0 0.0
    %4014 = vmatpush1.msra.mxu0 0.0
    %4015 = vmatprep.subr.mxu0 0.0
    %4016 = vmatpush1.msra.mxu0 0.0
    %4017 = vmatprep.subr.mxu0 0.0
    %4018 = vmatpush1.msra.mxu0 0.0
    %4019 = vmatprep.subr.mxu0 0.0
    %4020 = vmatpush1.msra.mxu0 0.0
    %4021 = vmatprep.subr.mxu0 0.0
    %4022 = vmatpush1.msra.mxu0 0.0
    %4023 = vmatprep.subr.mxu0 0.0
    %4024 = vmatpush1.msra.mxu0 0.0
    %4025 = vmatprep.subr.mxu0 0.0
    %4026 = vmatpush1.msra.mxu0 0.0
    %4027 = vmatprep.subr.mxu0 0.0
    %4028 = vmatpush1.msra.mxu0 0.0
    %4029 = vmatprep.subr.mxu0 0.0
    %4030 = vmatpush1.msra.mxu0 0.0
    %4031 = vmatprep.subr.mxu0 0.0
    %4032 = vmatpush1.msra.mxu0 0.0
    %4033 = vmatprep.subr.mxu0 0.0
    %4034 = vmatpush1.msra.mxu0 0.0
    %4035 = vmatprep.subr.mxu0 0.0
    %4036 = vmatpush1.msra.mxu0 0.0
    %4037 = vmatprep.subr.mxu0 0.0
    %4038 = vmatpush1.msra.mxu0 0.0
    %4039 = vmatprep.subr.mxu0 0.0
    %4040 = vmatpush1.msra.mxu0 0.0
    %4041 = vmatprep.mubr.f32.mxu0 0.0
    %4042 = vmatmul.mubr.f32.gmra.mrb[0].mxu0 %v3975
    %v4043 = vpop.f32.mrb[0].mxu0
    %v4044 = vadd.f32 %v3971, %v4043
    %v4045 = vpop.f32.mrb[0].mxu0
    %4046 = vdwg.mxu0
    %4047 = vrot.lane.b32.xlu0 %v2602, 112
    %v4048 = vpop.permute.xlu0 %4047
    %4049 = vrot.lane.b32.xlu0 %v2593, 112
    %v4050 = vpop.permute.xlu0 %4049
    %v4051 = vsel %vm424, %v4048, 0
    %v4053 = vsel %vm424, %v4050, 0
    %4055 = vmatprep.subr.mxu0 0.0
    %4056 = vmatpush1.xpose.msra.mxu0 %v4053
    %4057 = vmatprep.subr.mxu0 0.0
    %4058 = vmatpush1.xpose.msra.mxu0 0.0
    %4059 = vmatprep.subr.mxu0 0.0
    %4060 = vmatpush1.xpose.msra.mxu0 0.0
    %4061 = vmatprep.subr.mxu0 0.0
    %4062 = vmatpush1.xpose.msra.mxu0 0.0
    %4063 = vmatprep.subr.mxu0 0.0
    %4064 = vmatpush1.xpose.msra.mxu0 0.0
    %4065 = vmatprep.subr.mxu0 0.0
    %4066 = vmatpush1.xpose.msra.mxu0 0.0
    %4067 = vmatprep.subr.mxu0 0.0
    %4068 = vmatpush1.xpose.msra.mxu0 0.0
    %4069 = vmatprep.subr.mxu0 0.0
    %4070 = vmatpush1.xpose.msra.mxu0 0.0
    %4071 = vmatprep.subr.mxu0 0.0
    %4072 = vmatpush1.xpose.msra.mxu0 0.0
    %4073 = vmatprep.subr.mxu0 0.0
    %4074 = vmatpush1.xpose.msra.mxu0 0.0
    %4075 = vmatprep.subr.mxu0 0.0
    %4076 = vmatpush1.xpose.msra.mxu0 0.0
    %4077 = vmatprep.subr.mxu0 0.0
    %4078 = vmatpush1.xpose.msra.mxu0 0.0
    %4079 = vmatprep.subr.mxu0 0.0
    %4080 = vmatpush1.xpose.msra.mxu0 0.0
    %4081 = vmatprep.subr.mxu0 0.0
    %4082 = vmatpush1.xpose.msra.mxu0 0.0
    %4083 = vmatprep.subr.mxu0 0.0
    %4084 = vmatpush1.xpose.msra.mxu0 0.0
    %4085 = vmatprep.subr.mxu0 0.0
    %4086 = vmatpush1.xpose.msra.mxu0 0.0
    %4087 = vmatprep.subr.mxu0 0.0
    %4088 = vmatpush1.xpose.msra.mxu0 0.0
    %4089 = vmatprep.subr.mxu0 0.0
    %4090 = vmatpush1.xpose.msra.mxu0 0.0
    %4091 = vmatprep.subr.mxu0 0.0
    %4092 = vmatpush1.xpose.msra.mxu0 0.0
    %4093 = vmatprep.subr.mxu0 0.0
    %4094 = vmatpush1.xpose.msra.mxu0 0.0
    %4095 = vmatprep.subr.mxu0 0.0
    %4096 = vmatpush1.xpose.msra.mxu0 0.0
    %4097 = vmatprep.subr.mxu0 0.0
    %4098 = vmatpush1.xpose.msra.mxu0 0.0
    %4099 = vmatprep.subr.mxu0 0.0
    %4100 = vmatpush1.xpose.msra.mxu0 0.0
    %4101 = vmatprep.subr.mxu0 0.0
    %4102 = vmatpush1.xpose.msra.mxu0 0.0
    %4103 = vmatprep.subr.mxu0 0.0
    %4104 = vmatpush1.xpose.msra.mxu0 0.0
    %4105 = vmatprep.subr.mxu0 0.0
    %4106 = vmatpush1.xpose.msra.mxu0 0.0
    %4107 = vmatprep.subr.mxu0 0.0
    %4108 = vmatpush1.xpose.msra.mxu0 0.0
    %4109 = vmatprep.subr.mxu0 0.0
    %4110 = vmatpush1.xpose.msra.mxu0 0.0
    %4111 = vmatprep.subr.mxu0 0.0
    %4112 = vmatpush1.xpose.msra.mxu0 0.0
    %4113 = vmatprep.subr.mxu0 0.0
    %4114 = vmatpush1.xpose.msra.mxu0 0.0
    %4115 = vmatprep.subr.mxu0 0.0
    %4116 = vmatpush1.xpose.msra.mxu0 0.0
    %4117 = vmatprep.subr.mxu0 0.0
    %4118 = vmatpush1.xpose.msra.mxu0 0.0
    %4119 = vmatprep.mubr.f32.mxu0 0.0
    %4120 = vmatmul.mubr.f32.gmra.mrb[0].mxu0 %v4051
    %v4121 = vpop.f32.mrb[0].mxu0
    %v4122 = vadd.f32 0.0, %v4121
    %v4123 = vpop.f32.mrb[0].mxu0
    %4124 = vdwg.mxu0
    %v4125 = vsel %vm3646, -1e+09, %v4122
    %v4126 = vsel %vm424, %v4125, -inf
    %4127 = vmax.xlane.f32.xlu0 %v4126
    %v4128 = vpop.xlane.xlu0 %4127
    %v4129 = vsub.f32 %v4125, %v4128
    %v4130 = vmul.f32 %v4129, 1.442695
    %v4131 = vpow.pop %v4130
    %v4132 = vsel %vm424, %v4131, 0.0
    %4133 = vadd.xlane.f32.xlu0 %v4132
    %v4134 = vpop.xlane.xlu0 %4133
    %v4135 = vrcp.pop %v4134
    %v4136 = vmul.f32 %v4131, %v4135
    %4137 = vrot.lane.b32.xlu0 %v2593, 80
    %v4138 = vpop.permute.xlu0 %4137
    %v4141 = vsel %vm424, %v4136, 0
    %4143 = vmatprep.subr.mxu0 0.0
    %4144 = vmatpush1.msra.mxu0 %v4138
    %4145 = vmatprep.subr.mxu0 0.0
    %4146 = vmatpush1.msra.mxu0 0.0
    %4147 = vmatprep.subr.mxu0 0.0
    %4148 = vmatpush1.msra.mxu0 0.0
    %4149 = vmatprep.subr.mxu0 0.0
    %4150 = vmatpush1.msra.mxu0 0.0
    %4151 = vmatprep.subr.mxu0 0.0
    %4152 = vmatpush1.msra.mxu0 0.0
    %4153 = vmatprep.subr.mxu0 0.0
    %4154 = vmatpush1.msra.mxu0 0.0
    %4155 = vmatprep.subr.mxu0 0.0
    %4156 = vmatpush1.msra.mxu0 0.0
    %4157 = vmatprep.subr.mxu0 0.0
    %4158 = vmatpush1.msra.mxu0 0.0
    %4159 = vmatprep.subr.mxu0 0.0
    %4160 = vmatpush1.msra.mxu0 0.0
    %4161 = vmatprep.subr.mxu0 0.0
    %4162 = vmatpush1.msra.mxu0 0.0
    %4163 = vmatprep.subr.mxu0 0.0
    %4164 = vmatpush1.msra.mxu0 0.0
    %4165 = vmatprep.subr.mxu0 0.0
    %4166 = vmatpush1.msra.mxu0 0.0
    %4167 = vmatprep.subr.mxu0 0.0
    %4168 = vmatpush1.msra.mxu0 0.0
    %4169 = vmatprep.subr.mxu0 0.0
    %4170 = vmatpush1.msra.mxu0 0.0
    %4171 = vmatprep.subr.mxu0 0.0
    %4172 = vmatpush1.msra.mxu0 0.0
    %4173 = vmatprep.subr.mxu0 0.0
    %4174 = vmatpush1.msra.mxu0 0.0
    %4175 = vmatprep.subr.mxu0 0.0
    %4176 = vmatpush1.msra.mxu0 0.0
    %4177 = vmatprep.subr.mxu0 0.0
    %4178 = vmatpush1.msra.mxu0 0.0
    %4179 = vmatprep.subr.mxu0 0.0
    %4180 = vmatpush1.msra.mxu0 0.0
    %4181 = vmatprep.subr.mxu0 0.0
    %4182 = vmatpush1.msra.mxu0 0.0
    %4183 = vmatprep.subr.mxu0 0.0
    %4184 = vmatpush1.msra.mxu0 0.0
    %4185 = vmatprep.subr.mxu0 0.0
    %4186 = vmatpush1.msra.mxu0 0.0
    %4187 = vmatprep.subr.mxu0 0.0
    %4188 = vmatpush1.msra.mxu0 0.0
    %4189 = vmatprep.subr.mxu0 0.0
    %4190 = vmatpush1.msra.mxu0 0.0
    %4191 = vmatprep.subr.mxu0 0.0
    %4192 = vmatpush1.msra.mxu0 0.0
    %4193 = vmatprep.subr.mxu0 0.0
    %4194 = vmatpush1.msra.mxu0 0.0
    %4195 = vmatprep.subr.mxu0 0.0
    %4196 = vmatpush1.msra.mxu0 0.0
    %4197 = vmatprep.subr.mxu0 0.0
    %4198 = vmatpush1.msra.mxu0 0.0
    %4199 = vmatprep.subr.mxu0 0.0
    %4200 = vmatpush1.msra.mxu0 0.0
    %4201 = vmatprep.subr.mxu0 0.0
    %4202 = vmatpush1.msra.mxu0 0.0
    %4203 = vmatprep.subr.mxu0 0.0
    %4204 = vmatpush1.msra.mxu0 0.0
    %4205 = vmatprep.subr.mxu0 0.0
    %4206 = vmatpush1.msra.mxu0 0.0
    %4207 = vmatprep.mubr.f32.mxu0 0.0
    %4208 = vmatmul.mubr.f32.gmra.mrb[0].mxu0 %v4141
    %v4209 = vpop.f32.mrb[0].mxu0
    %v4210 = vadd.f32 0.0, %v4209
    %v4211 = vpop.f32.mrb[0].mxu0
    %4212 = vdwg.mxu0
    %v4214 = vsel %vm424, %v4210, 0
    %4216 = vmatprep.subr.mxu0 0.0
    %4217 = vmatpush1.msra.mxu0 %v2598
    %4218 = vmatprep.subr.mxu0 0.0
    %4219 = vmatpush1.msra.mxu0 0.0
    %4220 = vmatprep.subr.mxu0 0.0
    %4221 = vmatpush1.msra.mxu0 0.0
    %4222 = vmatprep.subr.mxu0 0.0
    %4223 = vmatpush1.msra.mxu0 0.0
    %4224 = vmatprep.subr.mxu0 0.0
    %4225 = vmatpush1.msra.mxu0 0.0
    %4226 = vmatprep.subr.mxu0 0.0
    %4227 = vmatpush1.msra.mxu0 0.0
    %4228 = vmatprep.subr.mxu0 0.0
    %4229 = vmatpush1.msra.mxu0 0.0
    %4230 = vmatprep.subr.mxu0 0.0
    %4231 = vmatpush1.msra.mxu0 0.0
    %4232 = vmatprep.subr.mxu0 0.0
    %4233 = vmatpush1.msra.mxu0 0.0
    %4234 = vmatprep.subr.mxu0 0.0
    %4235 = vmatpush1.msra.mxu0 0.0
    %4236 = vmatprep.subr.mxu0 0.0
    %4237 = vmatpush1.msra.mxu0 0.0
    %4238 = vmatprep.subr.mxu0 0.0
    %4239 = vmatpush1.msra.mxu0 0.0
    %4240 = vmatprep.subr.mxu0 0.0
    %4241 = vmatpush1.msra.mxu0 0.0
    %4242 = vmatprep.subr.mxu0 0.0
    %4243 = vmatpush1.msra.mxu0 0.0
    %4244 = vmatprep.subr.mxu0 0.0
    %4245 = vmatpush1.msra.mxu0 0.0
    %4246 = vmatprep.subr.mxu0 0.0
    %4247 = vmatpush1.msra.mxu0 0.0
    %4248 = vmatprep.subr.mxu0 0.0
    %4249 = vmatpush1.msra.mxu0 0.0
    %4250 = vmatprep.subr.mxu0 0.0
    %4251 = vmatpush1.msra.mxu0 0.0
    %4252 = vmatprep.subr.mxu0 0.0
    %4253 = vmatpush1.msra.mxu0 0.0
    %4254 = vmatprep.subr.mxu0 0.0
    %4255 = vmatpush1.msra.mxu0 0.0
    %4256 = vmatprep.subr.mxu0 0.0
    %4257 = vmatpush1.msra.mxu0 0.0
    %4258 = vmatprep.subr.mxu0 0.0
    %4259 = vmatpush1.msra.mxu0 0.0
    %4260 = vmatprep.subr.mxu0 0.0
    %4261 = vmatpush1.msra.mxu0 0.0
    %4262 = vmatprep.subr.mxu0 0.0
    %4263 = vmatpush1.msra.mxu0 0.0
    %4264 = vmatprep.subr.mxu0 0.0
    %4265 = vmatpush1.msra.mxu0 0.0
    %4266 = vmatprep.subr.mxu0 0.0
    %4267 = vmatpush1.msra.mxu0 0.0
    %4268 = vmatprep.subr.mxu0 0.0
    %4269 = vmatpush1.msra.mxu0 0.0
    %4270 = vmatprep.subr.mxu0 0.0
    %4271 = vmatpush1.msra.mxu0 0.0
    %4272 = vmatprep.subr.mxu0 0.0
    %4273 = vmatpush1.msra.mxu0 0.0
    %4274 = vmatprep.subr.mxu0 0.0
    %4275 = vmatpush1.msra.mxu0 0.0
    %4276 = vmatprep.subr.mxu0 0.0
    %4277 = vmatpush1.msra.mxu0 0.0
    %4278 = vmatprep.subr.mxu0 0.0
    %4279 = vmatpush1.msra.mxu0 0.0
    %4280 = vmatprep.mubr.f32.mxu0 0.0
    %4281 = vmatmul.mubr.f32.gmra.mrb[0].mxu0 %v4214
    %v4282 = vpop.f32.mrb[0].mxu0
    %v4283 = vadd.f32 0.0, %v4282
    %v4284 = vpop.f32.mrb[0].mxu0
    %4285 = vdwg.mxu0
    %v4286 = vadd.f32 %v4044, %v4283
    %4287 = vrot.lane.b32.xlu0 %v2602, 104
    %v4288 = vpop.permute.xlu0 %4287
    %4289 = vrot.lane.b32.xlu0 %v2593, 104
    %v4290 = vpop.permute.xlu0 %4289
    %v4291 = vsel %vm424, %v4288, 0
    %v4293 = vsel %vm424, %v4290, 0
    %4295 = vmatprep.subr.mxu0 0.0
    %4296 = vmatpush1.xpose.msra.mxu0 %v4293
    %4297 = vmatprep.subr.mxu0 0.0
    %4298 = vmatpush1.xpose.msra.mxu0 0.0
    %4299 = vmatprep.subr.mxu0 0.0
    %4300 = vmatpush1.xpose.msra.mxu0 0.0
    %4301 = vmatprep.subr.mxu0 0.0
    %4302 = vmatpush1.xpose.msra.mxu0 0.0
    %4303 = vmatprep.subr.mxu0 0.0
    %4304 = vmatpush1.xpose.msra.mxu0 0.0
    %4305 = vmatprep.subr.mxu0 0.0
    %4306 = vmatpush1.xpose.msra.mxu0 0.0
    %4307 = vmatprep.subr.mxu0 0.0
    %4308 = vmatpush1.xpose.msra.mxu0 0.0
    %4309 = vmatprep.subr.mxu0 0.0
    %4310 = vmatpush1.xpose.msra.mxu0 0.0
    %4311 = vmatprep.subr.mxu0 0.0
    %4312 = vmatpush1.xpose.msra.mxu0 0.0
    %4313 = vmatprep.subr.mxu0 0.0
    %4314 = vmatpush1.xpose.msra.mxu0 0.0
    %4315 = vmatprep.subr.mxu0 0.0
    %4316 = vmatpush1.xpose.msra.mxu0 0.0
    %4317 = vmatprep.subr.mxu0 0.0
    %4318 = vmatpush1.xpose.msra.mxu0 0.0
    %4319 = vmatprep.subr.mxu0 0.0
    %4320 = vmatpush1.xpose.msra.mxu0 0.0
    %4321 = vmatprep.subr.mxu0 0.0
    %4322 = vmatpush1.xpose.msra.mxu0 0.0
    %4323 = vmatprep.subr.mxu0 0.0
    %4324 = vmatpush1.xpose.msra.mxu0 0.0
    %4325 = vmatprep.subr.mxu0 0.0
    %4326 = vmatpush1.xpose.msra.mxu0 0.0
    %4327 = vmatprep.subr.mxu0 0.0
    %4328 = vmatpush1.xpose.msra.mxu0 0.0
    %4329 = vmatprep.subr.mxu0 0.0
    %4330 = vmatpush1.xpose.msra.mxu0 0.0
    %4331 = vmatprep.subr.mxu0 0.0
    %4332 = vmatpush1.xpose.msra.mxu0 0.0
    %4333 = vmatprep.subr.mxu0 0.0
    %4334 = vmatpush1.xpose.msra.mxu0 0.0
    %4335 = vmatprep.subr.mxu0 0.0
    %4336 = vmatpush1.xpose.msra.mxu0 0.0
    %4337 = vmatprep.subr.mxu0 0.0
    %4338 = vmatpush1.xpose.msra.mxu0 0.0
    %4339 = vmatprep.subr.mxu0 0.0
    %4340 = vmatpush1.xpose.msra.mxu0 0.0
    %4341 = vmatprep.subr.mxu0 0.0
    %4342 = vmatpush1.xpose.msra.mxu0 0.0
    %4343 = vmatprep.subr.mxu0 0.0
    %4344 = vmatpush1.xpose.msra.mxu0 0.0
    %4345 = vmatprep.subr.mxu0 0.0
    %4346 = vmatpush1.xpose.msra.mxu0 0.0
    %4347 = vmatprep.subr.mxu0 0.0
    %4348 = vmatpush1.xpose.msra.mxu0 0.0
    %4349 = vmatprep.subr.mxu0 0.0
    %4350 = vmatpush1.xpose.msra.mxu0 0.0
    %4351 = vmatprep.subr.mxu0 0.0
    %4352 = vmatpush1.xpose.msra.mxu0 0.0
    %4353 = vmatprep.subr.mxu0 0.0
    %4354 = vmatpush1.xpose.msra.mxu0 0.0
    %4355 = vmatprep.subr.mxu0 0.0
    %4356 = vmatpush1.xpose.msra.mxu0 0.0
    %4357 = vmatprep.subr.mxu0 0.0
    %4358 = vmatpush1.xpose.msra.mxu0 0.0
    %4359 = vmatprep.mubr.f32.mxu0 0.0
    %4360 = vmatmul.mubr.f32.gmra.mrb[0].mxu0 %v4291
    %v4361 = vpop.f32.mrb[0].mxu0
    %v4362 = vadd.f32 0.0, %v4361
    %v4363 = vpop.f32.mrb[0].mxu0
    %4364 = vdwg.mxu0
    %v4365 = vsel %vm3646, -1e+09, %v4362
    %v4366 = vsel %vm424, %v4365, -inf
    %4367 = vmax.xlane.f32.xlu0 %v4366
    %v4368 = vpop.xlane.xlu0 %4367
    %v4369 = vsub.f32 %v4365, %v4368
    %v4370 = vmul.f32 %v4369, 1.442695
    %v4371 = vpow.pop %v4370
    %v4372 = vsel %vm424, %v4371, 0.0
    %4373 = vadd.xlane.f32.xlu0 %v4372
    %v4374 = vpop.xlane.xlu0 %4373
    %v4375 = vrcp.pop %v4374
    %v4376 = vmul.f32 %v4371, %v4375
    %4377 = vrot.lane.b32.xlu0 %v2593, 72
    %v4378 = vpop.permute.xlu0 %4377
    %v4381 = vsel %vm424, %v4376, 0
    %4383 = vmatprep.subr.mxu0 0.0
    %4384 = vmatpush1.msra.mxu0 %v4378
    %4385 = vmatprep.subr.mxu0 0.0
    %4386 = vmatpush1.msra.mxu0 0.0
    %4387 = vmatprep.subr.mxu0 0.0
    %4388 = vmatpush1.msra.mxu0 0.0
    %4389 = vmatprep.subr.mxu0 0.0
    %4390 = vmatpush1.msra.mxu0 0.0
    %4391 = vmatprep.subr.mxu0 0.0
    %4392 = vmatpush1.msra.mxu0 0.0
    %4393 = vmatprep.subr.mxu0 0.0
    %4394 = vmatpush1.msra.mxu0 0.0
    %4395 = vmatprep.subr.mxu0 0.0
    %4396 = vmatpush1.msra.mxu0 0.0
    %4397 = vmatprep.subr.mxu0 0.0
    %4398 = vmatpush1.msra.mxu0 0.0
    %4399 = vmatprep.subr.mxu0 0.0
    %4400 = vmatpush1.msra.mxu0 0.0
    %4401 = vmatprep.subr.mxu0 0.0
    %4402 = vmatpush1.msra.mxu0 0.0
    %4403 = vmatprep.subr.mxu0 0.0
    %4404 = vmatpush1.msra.mxu0 0.0
    %4405 = vmatprep.subr.mxu0 0.0
    %4406 = vmatpush1.msra.mxu0 0.0
    %4407 = vmatprep.subr.mxu0 0.0
    %4408 = vmatpush1.msra.mxu0 0.0
    %4409 = vmatprep.subr.mxu0 0.0
    %4410 = vmatpush1.msra.mxu0 0.0
    %4411 = vmatprep.subr.mxu0 0.0
    %4412 = vmatpush1.msra.mxu0 0.0
    %4413 = vmatprep.subr.mxu0 0.0
    %4414 = vmatpush1.msra.mxu0 0.0
    %4415 = vmatprep.subr.mxu0 0.0
    %4416 = vmatpush1.msra.mxu0 0.0
    %4417 = vmatprep.subr.mxu0 0.0
    %4418 = vmatpush1.msra.mxu0 0.0
    %4419 = vmatprep.subr.mxu0 0.0
    %4420 = vmatpush1.msra.mxu0 0.0
    %4421 = vmatprep.subr.mxu0 0.0
    %4422 = vmatpush1.msra.mxu0 0.0
    %4423 = vmatprep.subr.mxu0 0.0
    %4424 = vmatpush1.msra.mxu0 0.0
    %4425 = vmatprep.subr.mxu0 0.0
    %4426 = vmatpush1.msra.mxu0 0.0
    %4427 = vmatprep.subr.mxu0 0.0
    %4428 = vmatpush1.msra.mxu0 0.0
    %4429 = vmatprep.subr.mxu0 0.0
    %4430 = vmatpush1.msra.mxu0 0.0
    %4431 = vmatprep.subr.mxu0 0.0
    %4432 = vmatpush1.msra.mxu0 0.0
    %4433 = vmatprep.subr.mxu0 0.0
    %4434 = vmatpush1.msra.mxu0 0.0
    %4435 = vmatprep.subr.mxu0 0.0
    %4436 = vmatpush1.msra.mxu0 0.0
    %4437 = vmatprep.subr.mxu0 0.0
    %4438 = vmatpush1.msra.mxu0 0.0
    %4439 = vmatprep.subr.mxu0 0.0
    %4440 = vmatpush1.msra.mxu0 0.0
    %4441 = vmatprep.subr.mxu0 0.0
    %4442 = vmatpush1.msra.mxu0 0.0
    %4443 = vmatprep.subr.mxu0 0.0
    %4444 = vmatpush1.msra.mxu0 0.0
    %4445 = vmatprep.subr.mxu0 0.0
    %4446 = vmatpush1.msra.mxu0 0.0
    %4447 = vmatprep.mubr.f32.mxu0 0.0
    %4448 = vmatmul.mubr.f32.gmra.mrb[0].mxu0 %v4381
    %v4449 = vpop.f32.mrb[0].mxu0
    %v4450 = vadd.f32 0.0, %v4449
    %v4451 = vpop.f32.mrb[0].mxu0
    %4452 = vdwg.mxu0
    %v4454 = vsel %vm424, %v4450, 0
    %4456 = vmatprep.subr.mxu0 0.0
    %4457 = vmatpush1.msra.mxu0 %v2599
    %4458 = vmatprep.subr.mxu0 0.0
    %4459 = vmatpush1.msra.mxu0 0.0
    %4460 = vmatprep.subr.mxu0 0.0
    %4461 = vmatpush1.msra.mxu0 0.0
    %4462 = vmatprep.subr.mxu0 0.0
    %4463 = vmatpush1.msra.mxu0 0.0
    %4464 = vmatprep.subr.mxu0 0.0
    %4465 = vmatpush1.msra.mxu0 0.0
    %4466 = vmatprep.subr.mxu0 0.0
    %4467 = vmatpush1.msra.mxu0 0.0
    %4468 = vmatprep.subr.mxu0 0.0
    %4469 = vmatpush1.msra.mxu0 0.0
    %4470 = vmatprep.subr.mxu0 0.0
    %4471 = vmatpush1.msra.mxu0 0.0
    %4472 = vmatprep.subr.mxu0 0.0
    %4473 = vmatpush1.msra.mxu0 0.0
    %4474 = vmatprep.subr.mxu0 0.0
    %4475 = vmatpush1.msra.mxu0 0.0
    %4476 = vmatprep.subr.mxu0 0.0
    %4477 = vmatpush1.msra.mxu0 0.0
    %4478 = vmatprep.subr.mxu0 0.0
    %4479 = vmatpush1.msra.mxu0 0.0
    %4480 = vmatprep.subr.mxu0 0.0
    %4481 = vmatpush1.msra.mxu0 0.0
    %4482 = vmatprep.subr.mxu0 0.0
    %4483 = vmatpush1.msra.mxu0 0.0
    %4484 = vmatprep.subr.mxu0 0.0
    %4485 = vmatpush1.msra.mxu0 0.0
    %4486 = vmatprep.subr.mxu0 0.0
    %4487 = vmatpush1.msra.mxu0 0.0
    %4488 = vmatprep.subr.mxu0 0.0
    %4489 = vmatpush1.msra.mxu0 0.0
    %4490 = vmatprep.subr.mxu0 0.0
    %4491 = vmatpush1.msra.mxu0 0.0
    %4492 = vmatprep.subr.mxu0 0.0
    %4493 = vmatpush1.msra.mxu0 0.0
    %4494 = vmatprep.subr.mxu0 0.0
    %4495 = vmatpush1.msra.mxu0 0.0
    %4496 = vmatprep.subr.mxu0 0.0
    %4497 = vmatpush1.msra.mxu0 0.0
    %4498 = vmatprep.subr.mxu0 0.0
    %4499 = vmatpush1.msra.mxu0 0.0
    %4500 = vmatprep.subr.mxu0 0.0
    %4501 = vmatpush1.msra.mxu0 0.0
    %4502 = vmatprep.subr.mxu0 0.0
    %4503 = vmatpush1.msra.mxu0 0.0
    %4504 = vmatprep.subr.mxu0 0.0
    %4505 = vmatpush1.msra.mxu0 0.0
    %4506 = vmatprep.subr.mxu0 0.0
    %4507 = vmatpush1.msra.mxu0 0.0
    %4508 = vmatprep.subr.mxu0 0.0
    %4509 = vmatpush1.msra.mxu0 0.0
    %4510 = vmatprep.subr.mxu0 0.0
    %4511 = vmatpush1.msra.mxu0 0.0
    %4512 = vmatprep.subr.mxu0 0.0
    %4513 = vmatpush1.msra.mxu0 0.0
    %4514 = vmatprep.subr.mxu0 0.0
    %4515 = vmatpush1.msra.mxu0 0.0
    %4516 = vmatprep.subr.mxu0 0.0
    %4517 = vmatpush1.msra.mxu0 0.0
    %4518 = vmatprep.subr.mxu0 0.0
    %4519 = vmatpush1.msra.mxu0 0.0
    %4520 = vmatprep.mubr.f32.mxu0 0.0
    %4521 = vmatmul.mubr.f32.gmra.mrb[0].mxu0 %v4454
    %v4522 = vpop.f32.mrb[0].mxu0
    %v4523 = vadd.f32 0.0, %v4522
    %v4524 = vpop.f32.mrb[0].mxu0
    %4525 = vdwg.mxu0
    %v4526 = vadd.f32 %v4286, %v4523
    %v4527 = vadd.f32 %v4526, %v3565
    %v4528 = vadd.f32 %v2350, %v3567
    %v4529 = vadd.f32 %v2351, %v4527
    %s4530 = scalar_lea.vmem %s18, 2
    %v4531 = vld [vmem:[%s4530] sm:$0x1]
    %s4532 = scalar_lea.vmem %s19, 2
    %v4533 = vld [vmem:[%s4532] sm:$0x1]
    %v4534 = vsel %vm262, %v4528, 0.0
    %4535 = vadd.xlane.f32.xlu0 %v4534
    %v4536 = vpop.xlane.xlu0 %4535
    %v4537 = vsel %vm262, %v4529, 0.0
    %4538 = vadd.xlane.f32.xlu0 %v4537
    %v4539 = vpop.xlane.xlu0 %4538
    %v4540 = vmul.f32 %v4536, %v269
    %v4541 = vmul.f32 %v4539, %v269
    %v4542 = vsub.f32 %v4528, %v4540
    %v4543 = vsub.f32 %v4529, %v4541
    %v4544 = vmul.f32 %v4542, %v4542
    %v4545 = vmul.f32 %v4543, %v4543
    %v4546 = vsel %vm262, %v4544, 0.0
    %4547 = vadd.xlane.f32.xlu0 %v4546
    %v4548 = vpop.xlane.xlu0 %4547
    %v4549 = vsel %vm262, %v4545, 0.0
    %4550 = vadd.xlane.f32.xlu0 %v4549
    %v4551 = vpop.xlane.xlu0 %4550
    %v4552 = vmul.f32 %v4548, %v282
    %v4553 = vmul.f32 %v4551, %v282
    %v4554 = vrsqrt.pop %v4552
    %v4555 = vmul.f32 %v4552, %v4554
    %vm4556 = vcmp.eq.f32.partialorder %v4552, inf
    %v4557 = vsel %vm4556, %v4552, %v4555
    %vm4558 = vcmp.eq.f32.partialorder %v4552, 0.0
    %v4559 = vand.u32 %v4552, 2147483648
    %v4560 = vsel %vm4558, %v4559, %v4557
    %v4561 = vrsqrt.pop %v4553
    %v4562 = vmul.f32 %v4553, %v4561
    %vm4563 = vcmp.eq.f32.partialorder %v4553, inf
    %v4564 = vsel %vm4563, %v4553, %v4562
    %vm4565 = vcmp.eq.f32.partialorder %v4553, 0.0
    %v4566 = vand.u32 %v4553, 2147483648
    %v4567 = vsel %vm4565, %v4566, %v4564
    %v4569 = vlaneseq
    %v4570 = vshrl.u32 %v4569, 7
    %v4571 = vsub.s32 0, %v4570
    %v4572 = vrot.slane %v4531, %v4571
    %v4574 = vmul.f32 %v4572, %v4542
    %v4575 = vmul.f32 %v4572, %v4543
    %v4576 = vadd.f32 %v4560, 1e-06
    %v4577 = vadd.f32 %v4567, 1e-06
    %v4578 = vrcp.pop %v4576
    %v4579 = vmul.f32 %v4574, %v4578
    %v4580 = vrcp.pop %v4577
    %v4581 = vmul.f32 %v4575, %v4580
    %v4583 = vlaneseq
    %v4584 = vshrl.u32 %v4583, 7
    %v4585 = vsub.s32 0, %v4584
    %v4586 = vrot.slane %v4533, %v4585
    %v4588 = vadd.f32 %v4579, %v4586
    %v4589 = vadd.f32 %v4581, %v4586
    %v4590 = vld [vmem:[%s14] sm:$0xff]
    %v4591 = vld [vmem:[%s14 + $0x8] sm:$0xff]
    %v4592 = vld [vmem:[%s14 + $0x10] sm:$0xff]
    %v4593 = vld [vmem:[%s14 + $0x18] sm:$0xff]
    %v4594 = vld [vmem:[%s15] sm:$0x1]
    %v4596 = vlaneseq
    %v4597 = vshrl.u32 %v4596, 7
    %v4598 = vsub.s32 0, %v4597
    %v4599 = vrot.slane %v4594, %v4598
    %v4602 = vsel %vm262, %v4588, 0
    %v4605 = vsel %vm262, %v4589, 0
    %4607 = vmatprep.subr.mxu0 0.0
    %4608 = vmatpush1.msra.mxu0 %v4590
    %4609 = vmatprep.subr.mxu0 0.0
    %4610 = vmatpush1.msra.mxu0 %v4591
    %4611 = vmatprep.subr.mxu0 0.0
    %4612 = vmatpush1.msra.mxu0 %v4592
    %4613 = vmatprep.subr.mxu0 0.0
    %4614 = vmatpush1.msra.mxu0 %v4593
    %4615 = vmatprep.subr.mxu0 0.0
    %4616 = vmatpush1.msra.mxu0 0.0
    %4617 = vmatprep.subr.mxu0 0.0
    %4618 = vmatpush1.msra.mxu0 0.0
    %4619 = vmatprep.subr.mxu0 0.0
    %4620 = vmatpush1.msra.mxu0 0.0
    %4621 = vmatprep.subr.mxu0 0.0
    %4622 = vmatpush1.msra.mxu0 0.0
    %4623 = vmatprep.subr.mxu0 0.0
    %4624 = vmatpush1.msra.mxu0 0.0
    %4625 = vmatprep.subr.mxu0 0.0
    %4626 = vmatpush1.msra.mxu0 0.0
    %4627 = vmatprep.subr.mxu0 0.0
    %4628 = vmatpush1.msra.mxu0 0.0
    %4629 = vmatprep.subr.mxu0 0.0
    %4630 = vmatpush1.msra.mxu0 0.0
    %4631 = vmatprep.subr.mxu0 0.0
    %4632 = vmatpush1.msra.mxu0 0.0
    %4633 = vmatprep.subr.mxu0 0.0
    %4634 = vmatpush1.msra.mxu0 0.0
    %4635 = vmatprep.subr.mxu0 0.0
    %4636 = vmatpush1.msra.mxu0 0.0
    %4637 = vmatprep.subr.mxu0 0.0
    %4638 = vmatpush1.msra.mxu0 0.0
    %4639 = vmatprep.subr.mxu0 0.0
    %4640 = vmatpush1.msra.mxu0 0.0
    %4641 = vmatprep.subr.mxu0 0.0
    %4642 = vmatpush1.msra.mxu0 0.0
    %4643 = vmatprep.subr.mxu0 0.0
    %4644 = vmatpush1.msra.mxu0 0.0
    %4645 = vmatprep.subr.mxu0 0.0
    %4646 = vmatpush1.msra.mxu0 0.0
    %4647 = vmatprep.subr.mxu0 0.0
    %4648 = vmatpush1.msra.mxu0 0.0
    %4649 = vmatprep.subr.mxu0 0.0
    %4650 = vmatpush1.msra.mxu0 0.0
    %4651 = vmatprep.subr.mxu0 0.0
    %4652 = vmatpush1.msra.mxu0 0.0
    %4653 = vmatprep.subr.mxu0 0.0
    %4654 = vmatpush1.msra.mxu0 0.0
    %4655 = vmatprep.subr.mxu0 0.0
    %4656 = vmatpush1.msra.mxu0 0.0
    %4657 = vmatprep.subr.mxu0 0.0
    %4658 = vmatpush1.msra.mxu0 0.0
    %4659 = vmatprep.subr.mxu0 0.0
    %4660 = vmatpush1.msra.mxu0 0.0
    %4661 = vmatprep.subr.mxu0 0.0
    %4662 = vmatpush1.msra.mxu0 0.0
    %4663 = vmatprep.subr.mxu0 0.0
    %4664 = vmatpush1.msra.mxu0 0.0
    %4665 = vmatprep.subr.mxu0 0.0
    %4666 = vmatpush1.msra.mxu0 0.0
    %4667 = vmatprep.subr.mxu0 0.0
    %4668 = vmatpush1.msra.mxu0 0.0
    %4669 = vmatprep.subr.mxu0 0.0
    %4670 = vmatpush1.msra.mxu0 0.0
    %4671 = vmatprep.mubr.f32.mxu0 0.0
    %4672 = vmatmul.mubr.f32.gmra.mrb[0].mxu0 %v4602
    %v4673 = vpop.f32.mrb[0].mxu0
    %v4674 = vadd.f32 %v4599, %v4673
    %v4675 = vpop.f32.mrb[0].mxu0
    %4676 = vmatprep.mubr.f32.mxu0 0.0
    %4677 = vmatmul.mubr.f32.gmra.mrb[0].mxu0 %v4605
    %v4678 = vpop.f32.mrb[0].mxu0
    %v4679 = vadd.f32 %v4599, %v4678
    %v4680 = vpop.f32.mrb[0].mxu0
    %4681 = vdwg.mxu0
    %v4682 = vmax.f32 %v4674, 0.0
    %v4683 = vmax.f32 %v4679, 0.0
    %v4684 = vld [vmem:[#allocation23] sm:$0xff]
    %v4685 = vld [vmem:[#allocation23 + $0x8] sm:$0xff]
    %v4686 = vld [vmem:[#allocation23 + $0x10] sm:$0xff]
    %v4687 = vld [vmem:[#allocation23 + $0x18] sm:$0xff]
    %v4688 = vld [vmem:[#allocation23 + $0x20] sm:$0xff]
    %v4689 = vld [vmem:[#allocation23 + $0x28] sm:$0xff]
    %v4690 = vld [vmem:[#allocation23 + $0x30] sm:$0xff]
    %v4691 = vld [vmem:[#allocation23 + $0x38] sm:$0xff]
    %vm4692 = vcmask 523264
    %v4694 = vsel %vm4692, %v4682, 0
    %v4697 = vsel %vm4692, %v4683, 0
    %4699 = vmatprep.subr.mxu0 0.0
    %4700 = vmatpush1.msra.mxu0 %v4684
    %4701 = vmatprep.subr.mxu0 0.0
    %4702 = vmatpush1.msra.mxu0 %v4685
    %4703 = vmatprep.subr.mxu0 0.0
    %4704 = vmatpush1.msra.mxu0 %v4686
    %4705 = vmatprep.subr.mxu0 0.0
    %4706 = vmatpush1.msra.mxu0 %v4687
    %4707 = vmatprep.subr.mxu0 0.0
    %4708 = vmatpush1.msra.mxu0 %v4688
    %4709 = vmatprep.subr.mxu0 0.0
    %4710 = vmatpush1.msra.mxu0 %v4689
    %4711 = vmatprep.subr.mxu0 0.0
    %4712 = vmatpush1.msra.mxu0 %v4690
    %4713 = vmatprep.subr.mxu0 0.0
    %4714 = vmatpush1.msra.mxu0 %v4691
    %4715 = vmatprep.subr.mxu0 0.0
    %4716 = vmatpush1.msra.mxu0 0.0
    %4717 = vmatprep.subr.mxu0 0.0
    %4718 = vmatpush1.msra.mxu0 0.0
    %4719 = vmatprep.subr.mxu0 0.0
    %4720 = vmatpush1.msra.mxu0 0.0
    %4721 = vmatprep.subr.mxu0 0.0
    %4722 = vmatpush1.msra.mxu0 0.0
    %4723 = vmatprep.subr.mxu0 0.0
    %4724 = vmatpush1.msra.mxu0 0.0
    %4725 = vmatprep.subr.mxu0 0.0
    %4726 = vmatpush1.msra.mxu0 0.0
    %4727 = vmatprep.subr.mxu0 0.0
    %4728 = vmatpush1.msra.mxu0 0.0
    %4729 = vmatprep.subr.mxu0 0.0
    %4730 = vmatpush1.msra.mxu0 0.0
    %4731 = vmatprep.subr.mxu0 0.0
    %4732 = vmatpush1.msra.mxu0 0.0
    %4733 = vmatprep.subr.mxu0 0.0
    %4734 = vmatpush1.msra.mxu0 0.0
    %4735 = vmatprep.subr.mxu0 0.0
    %4736 = vmatpush1.msra.mxu0 0.0
    %4737 = vmatprep.subr.mxu0 0.0
    %4738 = vmatpush1.msra.mxu0 0.0
    %4739 = vmatprep.subr.mxu0 0.0
    %4740 = vmatpush1.msra.mxu0 0.0
    %4741 = vmatprep.subr.mxu0 0.0
    %4742 = vmatpush1.msra.mxu0 0.0
    %4743 = vmatprep.subr.mxu0 0.0
    %4744 = vmatpush1.msra.mxu0 0.0
    %4745 = vmatprep.subr.mxu0 0.0
    %4746 = vmatpush1.msra.mxu0 0.0
    %4747 = vmatprep.subr.mxu0 0.0
    %4748 = vmatpush1.msra.mxu0 0.0
    %4749 = vmatprep.subr.mxu0 0.0
    %4750 = vmatpush1.msra.mxu0 0.0
    %4751 = vmatprep.subr.mxu0 0.0
    %4752 = vmatpush1.msra.mxu0 0.0
    %4753 = vmatprep.subr.mxu0 0.0
    %4754 = vmatpush1.msra.mxu0 0.0
    %4755 = vmatprep.subr.mxu0 0.0
    %4756 = vmatpush1.msra.mxu0 0.0
    %4757 = vmatprep.subr.mxu0 0.0
    %4758 = vmatpush1.msra.mxu0 0.0
    %4759 = vmatprep.subr.mxu0 0.0
    %4760 = vmatpush1.msra.mxu0 0.0
    %4761 = vmatprep.subr.mxu0 0.0
    %4762 = vmatpush1.msra.mxu0 0.0
    %4763 = vmatprep.mubr.f32.mxu0 0.0
    %4764 = vmatmul.mubr.f32.gmra.mrb[0].mxu0 %v4694
    %v4765 = vpop.f32.mrb[0].mxu0
    %v4766 = vadd.f32 0.0, %v4765
    %v4767 = vpop.f32.mrb[0].mxu0
    %4768 = vmatprep.mubr.f32.mxu0 0.0
    %4769 = vmatmul.mubr.f32.gmra.mrb[0].mxu0 %v4697
    %v4770 = vpop.f32.mrb[0].mxu0
    %v4771 = vadd.f32 0.0, %v4770
    %v4772 = vpop.f32.mrb[0].mxu0
    %4773 = vdwg.mxu0
    %v4774 = vadd.f32 %v4528, %v4766
    %v4775 = vadd.f32 %v4529, %v4771
    %v4776 = vld [vmem:[%s17] sm:$0x1]
    %v4778 = vlaneseq
    %v4779 = vshrl.u32 %v4778, 7
    %v4780 = vsub.s32 0, %v4779
    %v4781 = vrot.slane %v4776, %v4780
    %v4783 = vadd.f32 %v4774, %v4781
    %v4784 = vadd.f32 %v4775, %v4781
    %s4785 = scalar_lea.vmem %s18, 3
    %v4786 = vld [vmem:[%s4785] sm:$0x1]
    %s4787 = scalar_lea.vmem %s19, 3
    %v4788 = vld [vmem:[%s4787] sm:$0x1]
    %v4789 = vsel %vm262, %v4783, 0.0
    %4790 = vadd.xlane.f32.xlu0 %v4789
    %v4791 = vpop.xlane.xlu0 %4790
    %v4792 = vsel %vm262, %v4784, 0.0
    %4793 = vadd.xlane.f32.xlu0 %v4792
    %v4794 = vpop.xlane.xlu0 %4793
    %v4795 = vmul.f32 %v4791, %v269
    %v4796 = vmul.f32 %v4794, %v269
    %v4797 = vsub.f32 %v4783, %v4795
    %v4798 = vsub.f32 %v4784, %v4796
    %v4799 = vmul.f32 %v4797, %v4797
    %v4800 = vmul.f32 %v4798, %v4798
    %v4801 = vsel %vm262, %v4799, 0.0
    %4802 = vadd.xlane.f32.xlu0 %v4801
    %v4803 = vpop.xlane.xlu0 %4802
    %v4804 = vsel %vm262, %v4800, 0.0
    %4805 = vadd.xlane.f32.xlu0 %v4804
    %v4806 = vpop.xlane.xlu0 %4805
    %v4807 = vmul.f32 %v4803, %v282
    %v4808 = vmul.f32 %v4806, %v282
    %v4809 = vrsqrt.pop %v4807
    %v4810 = vmul.f32 %v4807, %v4809
    %vm4811 = vcmp.eq.f32.partialorder %v4807, inf
    %v4812 = vsel %vm4811, %v4807, %v4810
    %vm4813 = vcmp.eq.f32.partialorder %v4807, 0.0
    %v4814 = vand.u32 %v4807, 2147483648
    %v4815 = vsel %vm4813, %v4814, %v4812
    %v4816 = vrsqrt.pop %v4808
    %v4817 = vmul.f32 %v4808, %v4816
    %vm4818 = vcmp.eq.f32.partialorder %v4808, inf
    %v4819 = vsel %vm4818, %v4808, %v4817
    %vm4820 = vcmp.eq.f32.partialorder %v4808, 0.0
    %v4821 = vand.u32 %v4808, 2147483648
    %v4822 = vsel %vm4820, %v4821, %v4819
    %v4824 = vlaneseq
    %v4825 = vshrl.u32 %v4824, 7
    %v4826 = vsub.s32 0, %v4825
    %v4827 = vrot.slane %v4786, %v4826
    %v4829 = vmul.f32 %v4827, %v4797
    %v4830 = vmul.f32 %v4827, %v4798
    %v4831 = vadd.f32 %v4815, 1e-06
    %v4832 = vadd.f32 %v4822, 1e-06
    %v4833 = vrcp.pop %v4831
    %v4834 = vmul.f32 %v4829, %v4833
    %v4835 = vrcp.pop %v4832
    %v4836 = vmul.f32 %v4830, %v4835
    %v4838 = vlaneseq
    %v4839 = vshrl.u32 %v4838, 7
    %v4840 = vsub.s32 0, %v4839
    %v4841 = vrot.slane %v4788, %v4840
    %v4843 = vadd.f32 %v4834, %v4841
    %v4844 = vadd.f32 %v4836, %v4841
    %s4845 = scalar_lea.vmem [#allocation8], 32
    %v4846 = vld [vmem:[%s4845] sm:$0xff]
    %v4847 = vld [vmem:[%s4845 + $0x8] sm:$0xff]
    %v4848 = vld [vmem:[%s4845 + $0x10] sm:$0xff]
    %v4849 = vld [vmem:[%s4845 + $0x18] sm:$0xff]
    %s4850 = scalar_lea.vmem [#allocation10], 1
    %v4851 = vld [vmem:[%s4850] sm:$0x1]
    %v4853 = vlaneseq
    %v4854 = vshrl.u32 %v4853, 7
    %v4855 = vsub.s32 0, %v4854
    %v4856 = vrot.slane %v4851, %v4855
    %v4859 = vsel %vm262, %v4843, 0
    %v4862 = vsel %vm262, %v4844, 0
    %4864 = vmatprep.subr.mxu0 0.0
    %4865 = vmatpush1.msra.mxu0 %v4846
    %4866 = vmatprep.subr.mxu0 0.0
    %4867 = vmatpush1.msra.mxu0 %v4847
    %4868 = vmatprep.subr.mxu0 0.0
    %4869 = vmatpush1.msra.mxu0 %v4848
    %4870 = vmatprep.subr.mxu0 0.0
    %4871 = vmatpush1.msra.mxu0 %v4849
    %4872 = vmatprep.subr.mxu0 0.0
    %4873 = vmatpush1.msra.mxu0 0.0
    %4874 = vmatprep.subr.mxu0 0.0
    %4875 = vmatpush1.msra.mxu0 0.0
    %4876 = vmatprep.subr.mxu0 0.0
    %4877 = vmatpush1.msra.mxu0 0.0
    %4878 = vmatprep.subr.mxu0 0.0
    %4879 = vmatpush1.msra.mxu0 0.0
    %4880 = vmatprep.subr.mxu0 0.0
    %4881 = vmatpush1.msra.mxu0 0.0
    %4882 = vmatprep.subr.mxu0 0.0
    %4883 = vmatpush1.msra.mxu0 0.0
    %4884 = vmatprep.subr.mxu0 0.0
    %4885 = vmatpush1.msra.mxu0 0.0
    %4886 = vmatprep.subr.mxu0 0.0
    %4887 = vmatpush1.msra.mxu0 0.0
    %4888 = vmatprep.subr.mxu0 0.0
    %4889 = vmatpush1.msra.mxu0 0.0
    %4890 = vmatprep.subr.mxu0 0.0
    %4891 = vmatpush1.msra.mxu0 0.0
    %4892 = vmatprep.subr.mxu0 0.0
    %4893 = vmatpush1.msra.mxu0 0.0
    %4894 = vmatprep.subr.mxu0 0.0
    %4895 = vmatpush1.msra.mxu0 0.0
    %4896 = vmatprep.subr.mxu0 0.0
    %4897 = vmatpush1.msra.mxu0 0.0
    %4898 = vmatprep.subr.mxu0 0.0
    %4899 = vmatpush1.msra.mxu0 0.0
    %4900 = vmatprep.subr.mxu0 0.0
    %4901 = vmatpush1.msra.mxu0 0.0
    %4902 = vmatprep.subr.mxu0 0.0
    %4903 = vmatpush1.msra.mxu0 0.0
    %4904 = vmatprep.subr.mxu0 0.0
    %4905 = vmatpush1.msra.mxu0 0.0
    %4906 = vmatprep.subr.mxu0 0.0
    %4907 = vmatpush1.msra.mxu0 0.0
    %4908 = vmatprep.subr.mxu0 0.0
    %4909 = vmatpush1.msra.mxu0 0.0
    %4910 = vmatprep.subr.mxu0 0.0
    %4911 = vmatpush1.msra.mxu0 0.0
    %4912 = vmatprep.subr.mxu0 0.0
    %4913 = vmatpush1.msra.mxu0 0.0
    %4914 = vmatprep.subr.mxu0 0.0
    %4915 = vmatpush1.msra.mxu0 0.0
    %4916 = vmatprep.subr.mxu0 0.0
    %4917 = vmatpush1.msra.mxu0 0.0
    %4918 = vmatprep.subr.mxu0 0.0
    %4919 = vmatpush1.msra.mxu0 0.0
    %4920 = vmatprep.subr.mxu0 0.0
    %4921 = vmatpush1.msra.mxu0 0.0
    %4922 = vmatprep.subr.mxu0 0.0
    %4923 = vmatpush1.msra.mxu0 0.0
    %4924 = vmatprep.subr.mxu0 0.0
    %4925 = vmatpush1.msra.mxu0 0.0
    %4926 = vmatprep.subr.mxu0 0.0
    %4927 = vmatpush1.msra.mxu0 0.0
    %4928 = vmatprep.mubr.f32.mxu0 0.0
    %4929 = vmatmul.mubr.f32.gmra.mrb[0].mxu0 %v4859
    %v4930 = vpop.f32.mrb[0].mxu0
    %v4931 = vadd.f32 %v4856, %v4930
    %v4932 = vpop.f32.mrb[0].mxu0
    %4933 = vmatprep.mubr.f32.mxu0 0.0
    %4934 = vmatmul.mubr.f32.gmra.mrb[0].mxu0 %v4862
    %v4935 = vpop.f32.mrb[0].mxu0
    %v4936 = vadd.f32 %v4856, %v4935
    %v4937 = vpop.f32.mrb[0].mxu0
    %4938 = vdwg.mxu0
    %s4939 = scalar_lea.vmem [#allocation11], 32
    %v4940 = vld [vmem:[%s4939] sm:$0xff]
    %v4941 = vld [vmem:[%s4939 + $0x8] sm:$0xff]
    %v4942 = vld [vmem:[%s4939 + $0x10] sm:$0xff]
    %v4943 = vld [vmem:[%s4939 + $0x18] sm:$0xff]
    %s4944 = scalar_lea.vmem [#allocation13], 1
    %v4945 = vld [vmem:[%s4944] sm:$0x1]
    %v4946 = vmul.f32 %v4931, 0.35355338
    %v4947 = vmul.f32 %v4936, 0.35355338
    %4949 = vrot.lane.b32.xlu0 %v4931, 96
    %v4950 = vpop.permute.xlu0 %4949
    %v4952 = vsel %vm424, %v4946, 0
    %v4954 = vsel %vm424, %v4950, 0
    %4956 = vmatprep.subr.mxu0 0.0
    %4957 = vmatpush1.xpose.msra.mxu0 %v4954
    %4958 = vmatprep.subr.mxu0 0.0
    %4959 = vmatpush1.xpose.msra.mxu0 0.0
    %4960 = vmatprep.subr.mxu0 0.0
    %4961 = vmatpush1.xpose.msra.mxu0 0.0
    %4962 = vmatprep.subr.mxu0 0.0
    %4963 = vmatpush1.xpose.msra.mxu0 0.0
    %4964 = vmatprep.subr.mxu0 0.0
    %4965 = vmatpush1.xpose.msra.mxu0 0.0
    %4966 = vmatprep.subr.mxu0 0.0
    %4967 = vmatpush1.xpose.msra.mxu0 0.0
    %4968 = vmatprep.subr.mxu0 0.0
    %4969 = vmatpush1.xpose.msra.mxu0 0.0
    %4970 = vmatprep.subr.mxu0 0.0
    %4971 = vmatpush1.xpose.msra.mxu0 0.0
    %4972 = vmatprep.subr.mxu0 0.0
    %4973 = vmatpush1.xpose.msra.mxu0 0.0
    %4974 = vmatprep.subr.mxu0 0.0
    %4975 = vmatpush1.xpose.msra.mxu0 0.0
    %4976 = vmatprep.subr.mxu0 0.0
    %4977 = vmatpush1.xpose.msra.mxu0 0.0
    %4978 = vmatprep.subr.mxu0 0.0
    %4979 = vmatpush1.xpose.msra.mxu0 0.0
    %4980 = vmatprep.subr.mxu0 0.0
    %4981 = vmatpush1.xpose.msra.mxu0 0.0
    %4982 = vmatprep.subr.mxu0 0.0
    %4983 = vmatpush1.xpose.msra.mxu0 0.0
    %4984 = vmatprep.subr.mxu0 0.0
    %4985 = vmatpush1.xpose.msra.mxu0 0.0
    %4986 = vmatprep.subr.mxu0 0.0
    %4987 = vmatpush1.xpose.msra.mxu0 0.0
    %4988 = vmatprep.subr.mxu0 0.0
    %4989 = vmatpush1.xpose.msra.mxu0 0.0
    %4990 = vmatprep.subr.mxu0 0.0
    %4991 = vmatpush1.xpose.msra.mxu0 0.0
    %4992 = vmatprep.subr.mxu0 0.0
    %4993 = vmatpush1.xpose.msra.mxu0 0.0
    %4994 = vmatprep.subr.mxu0 0.0
    %4995 = vmatpush1.xpose.msra.mxu0 0.0
    %4996 = vmatprep.subr.mxu0 0.0
    %4997 = vmatpush1.xpose.msra.mxu0 0.0
    %4998 = vmatprep.subr.mxu0 0.0
    %4999 = vmatpush1.xpose.msra.mxu0 0.0
    %5000 = vmatprep.subr.mxu0 0.0
    %5001 = vmatpush1.xpose.msra.mxu0 0.0
    %5002 = vmatprep.subr.mxu0 0.0
    %5003 = vmatpush1.xpose.msra.mxu0 0.0
    %5004 = vmatprep.subr.mxu0 0.0
    %5005 = vmatpush1.xpose.msra.mxu0 0.0
    %5006 = vmatprep.subr.mxu0 0.0
    %5007 = vmatpush1.xpose.msra.mxu0 0.0
    %5008 = vmatprep.subr.mxu0 0.0
    %5009 = vmatpush1.xpose.msra.mxu0 0.0
    %5010 = vmatprep.subr.mxu0 0.0
    %5011 = vmatpush1.xpose.msra.mxu0 0.0
    %5012 = vmatprep.subr.mxu0 0.0
    %5013 = vmatpush1.xpose.msra.mxu0 0.0
    %5014 = vmatprep.subr.mxu0 0.0
    %5015 = vmatpush1.xpose.msra.mxu0 0.0
    %5016 = vmatprep.subr.mxu0 0.0
    %5017 = vmatpush1.xpose.msra.mxu0 0.0
    %5018 = vmatprep.subr.mxu0 0.0
    %5019 = vmatpush1.xpose.msra.mxu0 0.0
    %5020 = vmatprep.mubr.f32.mxu0 0.0
    %5021 = vmatmul.mubr.f32.gmra.mrb[0].mxu0 %v4952
    %v5022 = vpop.f32.mrb[0].mxu0
    %v5023 = vadd.f32 0.0, %v5022
    %v5024 = vpop.f32.mrb[0].mxu0
    %5025 = vdwg.mxu0
    %v5026 = vsel %vm500, -1e+09, %v5023
    %v5027 = vsel %vm424, %v5026, -inf
    %5028 = vmax.xlane.f32.xlu0 %v5027
    %v5029 = vpop.xlane.xlu0 %5028
    %v5030 = vsub.f32 %v5026, %v5029
    %v5031 = vmul.f32 %v5030, 1.442695
    %v5032 = vpow.pop %v5031
    %v5033 = vsel %vm424, %v5032, 0.0
    %5034 = vadd.xlane.f32.xlu0 %v5033
    %v5035 = vpop.xlane.xlu0 %5034
    %v5036 = vrcp.pop %v5035
    %v5037 = vmul.f32 %v5032, %v5036
    %5038 = vrot.lane.b32.xlu0 %v4931, 64
    %v5039 = vpop.permute.xlu0 %5038
    %v5042 = vsel %vm424, %v5037, 0
    %5044 = vmatprep.subr.mxu0 0.0
    %5045 = vmatpush1.msra.mxu0 %v5039
    %5046 = vmatprep.subr.mxu0 0.0
    %5047 = vmatpush1.msra.mxu0 0.0
    %5048 = vmatprep.subr.mxu0 0.0
    %5049 = vmatpush1.msra.mxu0 0.0
    %5050 = vmatprep.subr.mxu0 0.0
    %5051 = vmatpush1.msra.mxu0 0.0
    %5052 = vmatprep.subr.mxu0 0.0
    %5053 = vmatpush1.msra.mxu0 0.0
    %5054 = vmatprep.subr.mxu0 0.0
    %5055 = vmatpush1.msra.mxu0 0.0
    %5056 = vmatprep.subr.mxu0 0.0
    %5057 = vmatpush1.msra.mxu0 0.0
    %5058 = vmatprep.subr.mxu0 0.0
    %5059 = vmatpush1.msra.mxu0 0.0
    %5060 = vmatprep.subr.mxu0 0.0
    %5061 = vmatpush1.msra.mxu0 0.0
    %5062 = vmatprep.subr.mxu0 0.0
    %5063 = vmatpush1.msra.mxu0 0.0
    %5064 = vmatprep.subr.mxu0 0.0
    %5065 = vmatpush1.msra.mxu0 0.0
    %5066 = vmatprep.subr.mxu0 0.0
    %5067 = vmatpush1.msra.mxu0 0.0
    %5068 = vmatprep.subr.mxu0 0.0
    %5069 = vmatpush1.msra.mxu0 0.0
    %5070 = vmatprep.subr.mxu0 0.0
    %5071 = vmatpush1.msra.mxu0 0.0
    %5072 = vmatprep.subr.mxu0 0.0
    %5073 = vmatpush1.msra.mxu0 0.0
    %5074 = vmatprep.subr.mxu0 0.0
    %5075 = vmatpush1.msra.mxu0 0.0
    %5076 = vmatprep.subr.mxu0 0.0
    %5077 = vmatpush1.msra.mxu0 0.0
    %5078 = vmatprep.subr.mxu0 0.0
    %5079 = vmatpush1.msra.mxu0 0.0
    %5080 = vmatprep.subr.mxu0 0.0
    %5081 = vmatpush1.msra.mxu0 0.0
    %5082 = vmatprep.subr.mxu0 0.0
    %5083 = vmatpush1.msra.mxu0 0.0
    %5084 = vmatprep.subr.mxu0 0.0
    %5085 = vmatpush1.msra.mxu0 0.0
    %5086 = vmatprep.subr.mxu0 0.0
    %5087 = vmatpush1.msra.mxu0 0.0
    %5088 = vmatprep.subr.mxu0 0.0
    %5089 = vmatpush1.msra.mxu0 0.0
    %5090 = vmatprep.subr.mxu0 0.0
    %5091 = vmatpush1.msra.mxu0 0.0
    %5092 = vmatprep.subr.mxu0 0.0
    %5093 = vmatpush1.msra.mxu0 0.0
    %5094 = vmatprep.subr.mxu0 0.0
    %5095 = vmatpush1.msra.mxu0 0.0
    %5096 = vmatprep.subr.mxu0 0.0
    %5097 = vmatpush1.msra.mxu0 0.0
    %5098 = vmatprep.subr.mxu0 0.0
    %5099 = vmatpush1.msra.mxu0 0.0
    %5100 = vmatprep.subr.mxu0 0.0
    %5101 = vmatpush1.msra.mxu0 0.0
    %5102 = vmatprep.subr.mxu0 0.0
    %5103 = vmatpush1.msra.mxu0 0.0
    %5104 = vmatprep.subr.mxu0 0.0
    %5105 = vmatpush1.msra.mxu0 0.0
    %5106 = vmatprep.subr.mxu0 0.0
    %5107 = vmatpush1.msra.mxu0 0.0
    %5108 = vmatprep.mubr.f32.mxu0 0.0
    %5109 = vmatmul.mubr.f32.gmra.mrb[0].mxu0 %v5042
    %v5110 = vpop.f32.mrb[0].mxu0
    %v5111 = vadd.f32 0.0, %v5110
    %v5112 = vpop.f32.mrb[0].mxu0
    %5113 = vdwg.mxu0
    %5114 = vrot.lane.b32.xlu0 %v4946, 120
    %v5115 = vpop.permute.xlu0 %5114
    %5116 = vrot.lane.b32.xlu0 %v4931, 88
    %v5117 = vpop.permute.xlu0 %5116
    %v5118 = vsel %vm424, %v5115, 0
    %v5120 = vsel %vm424, %v5117, 0
    %5122 = vmatprep.subr.mxu0 0.0
    %5123 = vmatpush1.xpose.msra.mxu0 %v5120
    %5124 = vmatprep.subr.mxu0 0.0
    %5125 = vmatpush1.xpose.msra.mxu0 0.0
    %5126 = vmatprep.subr.mxu0 0.0
    %5127 = vmatpush1.xpose.msra.mxu0 0.0
    %5128 = vmatprep.subr.mxu0 0.0
    %5129 = vmatpush1.xpose.msra.mxu0 0.0
    %5130 = vmatprep.subr.mxu0 0.0
    %5131 = vmatpush1.xpose.msra.mxu0 0.0
    %5132 = vmatprep.subr.mxu0 0.0
    %5133 = vmatpush1.xpose.msra.mxu0 0.0
    %5134 = vmatprep.subr.mxu0 0.0
    %5135 = vmatpush1.xpose.msra.mxu0 0.0
    %5136 = vmatprep.subr.mxu0 0.0
    %5137 = vmatpush1.xpose.msra.mxu0 0.0
    %5138 = vmatprep.subr.mxu0 0.0
    %5139 = vmatpush1.xpose.msra.mxu0 0.0
    %5140 = vmatprep.subr.mxu0 0.0
    %5141 = vmatpush1.xpose.msra.mxu0 0.0
    %5142 = vmatprep.subr.mxu0 0.0
    %5143 = vmatpush1.xpose.msra.mxu0 0.0
    %5144 = vmatprep.subr.mxu0 0.0
    %5145 = vmatpush1.xpose.msra.mxu0 0.0
    %5146 = vmatprep.subr.mxu0 0.0
    %5147 = vmatpush1.xpose.msra.mxu0 0.0
    %5148 = vmatprep.subr.mxu0 0.0
    %5149 = vmatpush1.xpose.msra.mxu0 0.0
    %5150 = vmatprep.subr.mxu0 0.0
    %5151 = vmatpush1.xpose.msra.mxu0 0.0
    %5152 = vmatprep.subr.mxu0 0.0
    %5153 = vmatpush1.xpose.msra.mxu0 0.0
    %5154 = vmatprep.subr.mxu0 0.0
    %5155 = vmatpush1.xpose.msra.mxu0 0.0
    %5156 = vmatprep.subr.mxu0 0.0
    %5157 = vmatpush1.xpose.msra.mxu0 0.0
    %5158 = vmatprep.subr.mxu0 0.0
    %5159 = vmatpush1.xpose.msra.mxu0 0.0
    %5160 = vmatprep.subr.mxu0 0.0
    %5161 = vmatpush1.xpose.msra.mxu0 0.0
    %5162 = vmatprep.subr.mxu0 0.0
    %5163 = vmatpush1.xpose.msra.mxu0 0.0
    %5164 = vmatprep.subr.mxu0 0.0
    %5165 = vmatpush1.xpose.msra.mxu0 0.0
    %5166 = vmatprep.subr.mxu0 0.0
    %5167 = vmatpush1.xpose.msra.mxu0 0.0
    %5168 = vmatprep.subr.mxu0 0.0
    %5169 = vmatpush1.xpose.msra.mxu0 0.0
    %5170 = vmatprep.subr.mxu0 0.0
    %5171 = vmatpush1.xpose.msra.mxu0 0.0
    %5172 = vmatprep.subr.mxu0 0.0
    %5173 = vmatpush1.xpose.msra.mxu0 0.0
    %5174 = vmatprep.subr.mxu0 0.0
    %5175 = vmatpush1.xpose.msra.mxu0 0.0
    %5176 = vmatprep.subr.mxu0 0.0
    %5177 = vmatpush1.xpose.msra.mxu0 0.0
    %5178 = vmatprep.subr.mxu0 0.0
    %5179 = vmatpush1.xpose.msra.mxu0 0.0
    %5180 = vmatprep.subr.mxu0 0.0
    %5181 = vmatpush1.xpose.msra.mxu0 0.0
    %5182 = vmatprep.subr.mxu0 0.0
    %5183 = vmatpush1.xpose.msra.mxu0 0.0
    %5184 = vmatprep.subr.mxu0 0.0
    %5185 = vmatpush1.xpose.msra.mxu0 0.0
    %5186 = vmatprep.mubr.f32.mxu0 0.0
    %5187 = vmatmul.mubr.f32.gmra.mrb[0].mxu0 %v5118
    %v5188 = vpop.f32.mrb[0].mxu0
    %v5189 = vadd.f32 0.0, %v5188
    %v5190 = vpop.f32.mrb[0].mxu0
    %5191 = vdwg.mxu0
    %v5192 = vsel %vm500, -1e+09, %v5189
    %v5193 = vsel %vm424, %v5192, -inf
    %5194 = vmax.xlane.f32.xlu0 %v5193
    %v5195 = vpop.xlane.xlu0 %5194
    %v5196 = vsub.f32 %v5192, %v5195
    %v5197 = vmul.f32 %v5196, 1.442695
    %v5198 = vpow.pop %v5197
    %v5199 = vsel %vm424, %v5198, 0.0
    %5200 = vadd.xlane.f32.xlu0 %v5199
    %v5201 = vpop.xlane.xlu0 %5200
    %v5202 = vrcp.pop %v5201
    %v5203 = vmul.f32 %v5198, %v5202
    %5204 = vrot.lane.b32.xlu0 %v4931, 56
    %v5205 = vpop.permute.xlu0 %5204
    %v5208 = vsel %vm424, %v5203, 0
    %5210 = vmatprep.subr.mxu0 0.0
    %5211 = vmatpush1.msra.mxu0 %v5205
    %5212 = vmatprep.subr.mxu0 0.0
    %5213 = vmatpush1.msra.mxu0 0.0
    %5214 = vmatprep.subr.mxu0 0.0
    %5215 = vmatpush1.msra.mxu0 0.0
    %5216 = vmatprep.subr.mxu0 0.0
    %5217 = vmatpush1.msra.mxu0 0.0
    %5218 = vmatprep.subr.mxu0 0.0
    %5219 = vmatpush1.msra.mxu0 0.0
    %5220 = vmatprep.subr.mxu0 0.0
    %5221 = vmatpush1.msra.mxu0 0.0
    %5222 = vmatprep.subr.mxu0 0.0
    %5223 = vmatpush1.msra.mxu0 0.0
    %5224 = vmatprep.subr.mxu0 0.0
    %5225 = vmatpush1.msra.mxu0 0.0
    %5226 = vmatprep.subr.mxu0 0.0
    %5227 = vmatpush1.msra.mxu0 0.0
    %5228 = vmatprep.subr.mxu0 0.0
    %5229 = vmatpush1.msra.mxu0 0.0
    %5230 = vmatprep.subr.mxu0 0.0
    %5231 = vmatpush1.msra.mxu0 0.0
    %5232 = vmatprep.subr.mxu0 0.0
    %5233 = vmatpush1.msra.mxu0 0.0
    %5234 = vmatprep.subr.mxu0 0.0
    %5235 = vmatpush1.msra.mxu0 0.0
    %5236 = vmatprep.subr.mxu0 0.0
    %5237 = vmatpush1.msra.mxu0 0.0
    %5238 = vmatprep.subr.mxu0 0.0
    %5239 = vmatpush1.msra.mxu0 0.0
    %5240 = vmatprep.subr.mxu0 0.0
    %5241 = vmatpush1.msra.mxu0 0.0
    %5242 = vmatprep.subr.mxu0 0.0
    %5243 = vmatpush1.msra.mxu0 0.0
    %5244 = vmatprep.subr.mxu0 0.0
    %5245 = vmatpush1.msra.mxu0 0.0
    %5246 = vmatprep.subr.mxu0 0.0
    %5247 = vmatpush1.msra.mxu0 0.0
    %5248 = vmatprep.subr.mxu0 0.0
    %5249 = vmatpush1.msra.mxu0 0.0
    %5250 = vmatprep.subr.mxu0 0.0
    %5251 = vmatpush1.msra.mxu0 0.0
    %5252 = vmatprep.subr.mxu0 0.0
    %5253 = vmatpush1.msra.mxu0 0.0
    %5254 = vmatprep.subr.mxu0 0.0
    %5255 = vmatpush1.msra.mxu0 0.0
    %5256 = vmatprep.subr.mxu0 0.0
    %5257 = vmatpush1.msra.mxu0 0.0
    %5258 = vmatprep.subr.mxu0 0.0
    %5259 = vmatpush1.msra.mxu0 0.0
    %5260 = vmatprep.subr.mxu0 0.0
    %5261 = vmatpush1.msra.mxu0 0.0
    %5262 = vmatprep.subr.mxu0 0.0
    %5263 = vmatpush1.msra.mxu0 0.0
    %5264 = vmatprep.subr.mxu0 0.0
    %5265 = vmatpush1.msra.mxu0 0.0
    %5266 = vmatprep.subr.mxu0 0.0
    %5267 = vmatpush1.msra.mxu0 0.0
    %5268 = vmatprep.subr.mxu0 0.0
    %5269 = vmatpush1.msra.mxu0 0.0
    %5270 = vmatprep.subr.mxu0 0.0
    %5271 = vmatpush1.msra.mxu0 0.0
    %5272 = vmatprep.subr.mxu0 0.0
    %5273 = vmatpush1.msra.mxu0 0.0
    %5274 = vmatprep.mubr.f32.mxu0 0.0
    %5275 = vmatmul.mubr.f32.gmra.mrb[0].mxu0 %v5208
    %v5276 = vpop.f32.mrb[0].mxu0
    %v5277 = vadd.f32 0.0, %v5276
    %v5278 = vpop.f32.mrb[0].mxu0
    %5279 = vdwg.mxu0
    %v5281 = vsel %vm424, %v5277, 0
    %5283 = vmatprep.subr.mxu0 0.0
    %5284 = vmatpush1.msra.mxu0 %v4941
    %5285 = vmatprep.subr.mxu0 0.0
    %5286 = vmatpush1.msra.mxu0 0.0
    %5287 = vmatprep.subr.mxu0 0.0
    %5288 = vmatpush1.msra.mxu0 0.0
    %5289 = vmatprep.subr.mxu0 0.0
    %5290 = vmatpush1.msra.mxu0 0.0
    %5291 = vmatprep.subr.mxu0 0.0
    %5292 = vmatpush1.msra.mxu0 0.0
    %5293 = vmatprep.subr.mxu0 0.0
    %5294 = vmatpush1.msra.mxu0 0.0
    %5295 = vmatprep.subr.mxu0 0.0
    %5296 = vmatpush1.msra.mxu0 0.0
    %5297 = vmatprep.subr.mxu0 0.0
    %5298 = vmatpush1.msra.mxu0 0.0
    %5299 = vmatprep.subr.mxu0 0.0
    %5300 = vmatpush1.msra.mxu0 0.0
    %5301 = vmatprep.subr.mxu0 0.0
    %5302 = vmatpush1.msra.mxu0 0.0
    %5303 = vmatprep.subr.mxu0 0.0
    %5304 = vmatpush1.msra.mxu0 0.0
    %5305 = vmatprep.subr.mxu0 0.0
    %5306 = vmatpush1.msra.mxu0 0.0
    %5307 = vmatprep.subr.mxu0 0.0
    %5308 = vmatpush1.msra.mxu0 0.0
    %5309 = vmatprep.subr.mxu0 0.0
    %5310 = vmatpush1.msra.mxu0 0.0
    %5311 = vmatprep.subr.mxu0 0.0
    %5312 = vmatpush1.msra.mxu0 0.0
    %5313 = vmatprep.subr.mxu0 0.0
    %5314 = vmatpush1.msra.mxu0 0.0
    %5315 = vmatprep.subr.mxu0 0.0
    %5316 = vmatpush1.msra.mxu0 0.0
    %5317 = vmatprep.subr.mxu0 0.0
    %5318 = vmatpush1.msra.mxu0 0.0
    %5319 = vmatprep.subr.mxu0 0.0
    %5320 = vmatpush1.msra.mxu0 0.0
    %5321 = vmatprep.subr.mxu0 0.0
    %5322 = vmatpush1.msra.mxu0 0.0
    %5323 = vmatprep.subr.mxu0 0.0
    %5324 = vmatpush1.msra.mxu0 0.0
    %5325 = vmatprep.subr.mxu0 0.0
    %5326 = vmatpush1.msra.mxu0 0.0
    %5327 = vmatprep.subr.mxu0 0.0
    %5328 = vmatpush1.msra.mxu0 0.0
    %5329 = vmatprep.subr.mxu0 0.0
    %5330 = vmatpush1.msra.mxu0 0.0
    %5331 = vmatprep.subr.mxu0 0.0
    %5332 = vmatpush1.msra.mxu0 0.0
    %5333 = vmatprep.subr.mxu0 0.0
    %5334 = vmatpush1.msra.mxu0 0.0
    %5335 = vmatprep.subr.mxu0 0.0
    %5336 = vmatpush1.msra.mxu0 0.0
    %5337 = vmatprep.subr.mxu0 0.0
    %5338 = vmatpush1.msra.mxu0 0.0
    %5339 = vmatprep.subr.mxu0 0.0
    %5340 = vmatpush1.msra.mxu0 0.0
    %5341 = vmatprep.subr.mxu0 0.0
    %5342 = vmatpush1.msra.mxu0 0.0
    %5343 = vmatprep.subr.mxu0 0.0
    %5344 = vmatpush1.msra.mxu0 0.0
    %5345 = vmatprep.subr.mxu0 0.0
    %5346 = vmatpush1.msra.mxu0 0.0
    %5347 = vmatprep.mubr.f32.mxu0 0.0
    %5348 = vmatmul.mubr.f32.gmra.mrb[0].mxu0 %v5281
    %v5349 = vpop.f32.mrb[0].mxu0
    %v5350 = vadd.f32 0.0, %v5349
    %v5351 = vpop.f32.mrb[0].mxu0
    %5352 = vdwg.mxu0
    %v5354 = vsel %vm424, %v5111, 0
    %5356 = vmatprep.subr.mxu0 0.0
    %5357 = vmatpush1.msra.mxu0 %v4940
    %5358 = vmatprep.subr.mxu0 0.0
    %5359 = vmatpush1.msra.mxu0 0.0
    %5360 = vmatprep.subr.mxu0 0.0
    %5361 = vmatpush1.msra.mxu0 0.0
    %5362 = vmatprep.subr.mxu0 0.0
    %5363 = vmatpush1.msra.mxu0 0.0
    %5364 = vmatprep.subr.mxu0 0.0
    %5365 = vmatpush1.msra.mxu0 0.0
    %5366 = vmatprep.subr.mxu0 0.0
    %5367 = vmatpush1.msra.mxu0 0.0
    %5368 = vmatprep.subr.mxu0 0.0
    %5369 = vmatpush1.msra.mxu0 0.0
    %5370 = vmatprep.subr.mxu0 0.0
    %5371 = vmatpush1.msra.mxu0 0.0
    %5372 = vmatprep.subr.mxu0 0.0
    %5373 = vmatpush1.msra.mxu0 0.0
    %5374 = vmatprep.subr.mxu0 0.0
    %5375 = vmatpush1.msra.mxu0 0.0
    %5376 = vmatprep.subr.mxu0 0.0
    %5377 = vmatpush1.msra.mxu0 0.0
    %5378 = vmatprep.subr.mxu0 0.0
    %5379 = vmatpush1.msra.mxu0 0.0
    %5380 = vmatprep.subr.mxu0 0.0
    %5381 = vmatpush1.msra.mxu0 0.0
    %5382 = vmatprep.subr.mxu0 0.0
    %5383 = vmatpush1.msra.mxu0 0.0
    %5384 = vmatprep.subr.mxu0 0.0
    %5385 = vmatpush1.msra.mxu0 0.0
    %5386 = vmatprep.subr.mxu0 0.0
    %5387 = vmatpush1.msra.mxu0 0.0
    %5388 = vmatprep.subr.mxu0 0.0
    %5389 = vmatpush1.msra.mxu0 0.0
    %5390 = vmatprep.subr.mxu0 0.0
    %5391 = vmatpush1.msra.mxu0 0.0
    %5392 = vmatprep.subr.mxu0 0.0
    %5393 = vmatpush1.msra.mxu0 0.0
    %5394 = vmatprep.subr.mxu0 0.0
    %5395 = vmatpush1.msra.mxu0 0.0
    %5396 = vmatprep.subr.mxu0 0.0
    %5397 = vmatpush1.msra.mxu0 0.0
    %5398 = vmatprep.subr.mxu0 0.0
    %5399 = vmatpush1.msra.mxu0 0.0
    %5400 = vmatprep.subr.mxu0 0.0
    %5401 = vmatpush1.msra.mxu0 0.0
    %5402 = vmatprep.subr.mxu0 0.0
    %5403 = vmatpush1.msra.mxu0 0.0
    %5404 = vmatprep.subr.mxu0 0.0
    %5405 = vmatpush1.msra.mxu0 0.0
    %5406 = vmatprep.subr.mxu0 0.0
    %5407 = vmatpush1.msra.mxu0 0.0
    %5408 = vmatprep.subr.mxu0 0.0
    %5409 = vmatpush1.msra.mxu0 0.0
    %5410 = vmatprep.subr.mxu0 0.0
    %5411 = vmatpush1.msra.mxu0 0.0
    %5412 = vmatprep.subr.mxu0 0.0
    %5413 = vmatpush1.msra.mxu0 0.0
    %5414 = vmatprep.subr.mxu0 0.0
    %5415 = vmatpush1.msra.mxu0 0.0
    %5416 = vmatprep.subr.mxu0 0.0
    %5417 = vmatpush1.msra.mxu0 0.0
    %5418 = vmatprep.subr.mxu0 0.0
    %5419 = vmatpush1.msra.mxu0 0.0
    %5420 = vmatprep.mubr.f32.mxu0 0.0
    %5421 = vmatmul.mubr.f32.gmra.mrb[0].mxu0 %v5354
    %v5422 = vpop.f32.mrb[0].mxu0
    %v5423 = vadd.f32 %v5350, %v5422
    %v5424 = vpop.f32.mrb[0].mxu0
    %5425 = vdwg.mxu0
    %5426 = vrot.lane.b32.xlu0 %v4946, 112
    %v5427 = vpop.permute.xlu0 %5426
    %5428 = vrot.lane.b32.xlu0 %v4931, 80
    %v5429 = vpop.permute.xlu0 %5428
    %v5430 = vsel %vm424, %v5427, 0
    %v5432 = vsel %vm424, %v5429, 0
    %5434 = vmatprep.subr.mxu0 0.0
    %5435 = vmatpush1.xpose.msra.mxu0 %v5432
    %5436 = vmatprep.subr.mxu0 0.0
    %5437 = vmatpush1.xpose.msra.mxu0 0.0
    %5438 = vmatprep.subr.mxu0 0.0
    %5439 = vmatpush1.xpose.msra.mxu0 0.0
    %5440 = vmatprep.subr.mxu0 0.0
    %5441 = vmatpush1.xpose.msra.mxu0 0.0
    %5442 = vmatprep.subr.mxu0 0.0
    %5443 = vmatpush1.xpose.msra.mxu0 0.0
    %5444 = vmatprep.subr.mxu0 0.0
    %5445 = vmatpush1.xpose.msra.mxu0 0.0
    %5446 = vmatprep.subr.mxu0 0.0
    %5447 = vmatpush1.xpose.msra.mxu0 0.0
    %5448 = vmatprep.subr.mxu0 0.0
    %5449 = vmatpush1.xpose.msra.mxu0 0.0
    %5450 = vmatprep.subr.mxu0 0.0
    %5451 = vmatpush1.xpose.msra.mxu0 0.0
    %5452 = vmatprep.subr.mxu0 0.0
    %5453 = vmatpush1.xpose.msra.mxu0 0.0
    %5454 = vmatprep.subr.mxu0 0.0
    %5455 = vmatpush1.xpose.msra.mxu0 0.0
    %5456 = vmatprep.subr.mxu0 0.0
    %5457 = vmatpush1.xpose.msra.mxu0 0.0
    %5458 = vmatprep.subr.mxu0 0.0
    %5459 = vmatpush1.xpose.msra.mxu0 0.0
    %5460 = vmatprep.subr.mxu0 0.0
    %5461 = vmatpush1.xpose.msra.mxu0 0.0
    %5462 = vmatprep.subr.mxu0 0.0
    %5463 = vmatpush1.xpose.msra.mxu0 0.0
    %5464 = vmatprep.subr.mxu0 0.0
    %5465 = vmatpush1.xpose.msra.mxu0 0.0
    %5466 = vmatprep.subr.mxu0 0.0
    %5467 = vmatpush1.xpose.msra.mxu0 0.0
    %5468 = vmatprep.subr.mxu0 0.0
    %5469 = vmatpush1.xpose.msra.mxu0 0.0
    %5470 = vmatprep.subr.mxu0 0.0
    %5471 = vmatpush1.xpose.msra.mxu0 0.0
    %5472 = vmatprep.subr.mxu0 0.0
    %5473 = vmatpush1.xpose.msra.mxu0 0.0
    %5474 = vmatprep.subr.mxu0 0.0
    %5475 = vmatpush1.xpose.msra.mxu0 0.0
    %5476 = vmatprep.subr.mxu0 0.0
    %5477 = vmatpush1.xpose.msra.mxu0 0.0
    %5478 = vmatprep.subr.mxu0 0.0
    %5479 = vmatpush1.xpose.msra.mxu0 0.0
    %5480 = vmatprep.subr.mxu0 0.0
    %5481 = vmatpush1.xpose.msra.mxu0 0.0
    %5482 = vmatprep.subr.mxu0 0.0
    %5483 = vmatpush1.xpose.msra.mxu0 0.0
    %5484 = vmatprep.subr.mxu0 0.0
    %5485 = vmatpush1.xpose.msra.mxu0 0.0
    %5486 = vmatprep.subr.mxu0 0.0
    %5487 = vmatpush1.xpose.msra.mxu0 0.0
    %5488 = vmatprep.subr.mxu0 0.0
    %5489 = vmatpush1.xpose.msra.mxu0 0.0
    %5490 = vmatprep.subr.mxu0 0.0
    %5491 = vmatpush1.xpose.msra.mxu0 0.0
    %5492 = vmatprep.subr.mxu0 0.0
    %5493 = vmatpush1.xpose.msra.mxu0 0.0
    %5494 = vmatprep.subr.mxu0 0.0
    %5495 = vmatpush1.xpose.msra.mxu0 0.0
    %5496 = vmatprep.subr.mxu0 0.0
    %5497 = vmatpush1.xpose.msra.mxu0 0.0
    %5498 = vmatprep.mubr.f32.mxu0 0.0
    %5499 = vmatmul.mubr.f32.gmra.mrb[0].mxu0 %v5430
    %v5500 = vpop.f32.mrb[0].mxu0
    %v5501 = vadd.f32 0.0, %v5500
    %v5502 = vpop.f32.mrb[0].mxu0
    %5503 = vdwg.mxu0
    %v5504 = vsel %vm500, -1e+09, %v5501
    %v5505 = vsel %vm424, %v5504, -inf
    %5506 = vmax.xlane.f32.xlu0 %v5505
    %v5507 = vpop.xlane.xlu0 %5506
    %v5508 = vsub.f32 %v5504, %v5507
    %v5509 = vmul.f32 %v5508, 1.442695
    %v5510 = vpow.pop %v5509
    %v5511 = vsel %vm424, %v5510, 0.0
    %5512 = vadd.xlane.f32.xlu0 %v5511
    %v5513 = vpop.xlane.xlu0 %5512
    %v5514 = vrcp.pop %v5513
    %v5515 = vmul.f32 %v5510, %v5514
    %5516 = vrot.lane.b32.xlu0 %v4931, 48
    %v5517 = vpop.permute.xlu0 %5516
    %v5520 = vsel %vm424, %v5515, 0
    %5522 = vmatprep.subr.mxu0 0.0
    %5523 = vmatpush1.msra.mxu0 %v5517
    %5524 = vmatprep.subr.mxu0 0.0
    %5525 = vmatpush1.msra.mxu0 0.0
    %5526 = vmatprep.subr.mxu0 0.0
    %5527 = vmatpush1.msra.mxu0 0.0
    %5528 = vmatprep.subr.mxu0 0.0
    %5529 = vmatpush1.msra.mxu0 0.0
    %5530 = vmatprep.subr.mxu0 0.0
    %5531 = vmatpush1.msra.mxu0 0.0
    %5532 = vmatprep.subr.mxu0 0.0
    %5533 = vmatpush1.msra.mxu0 0.0
    %5534 = vmatprep.subr.mxu0 0.0
    %5535 = vmatpush1.msra.mxu0 0.0
    %5536 = vmatprep.subr.mxu0 0.0
    %5537 = vmatpush1.msra.mxu0 0.0
    %5538 = vmatprep.subr.mxu0 0.0
    %5539 = vmatpush1.msra.mxu0 0.0
    %5540 = vmatprep.subr.mxu0 0.0
    %5541 = vmatpush1.msra.mxu0 0.0
    %5542 = vmatprep.subr.mxu0 0.0
    %5543 = vmatpush1.msra.mxu0 0.0
    %5544 = vmatprep.subr.mxu0 0.0
    %5545 = vmatpush1.msra.mxu0 0.0
    %5546 = vmatprep.subr.mxu0 0.0
    %5547 = vmatpush1.msra.mxu0 0.0
    %5548 = vmatprep.subr.mxu0 0.0
    %5549 = vmatpush1.msra.mxu0 0.0
    %5550 = vmatprep.subr.mxu0 0.0
    %5551 = vmatpush1.msra.mxu0 0.0
    %5552 = vmatprep.subr.mxu0 0.0
    %5553 = vmatpush1.msra.mxu0 0.0
    %5554 = vmatprep.subr.mxu0 0.0
    %5555 = vmatpush1.msra.mxu0 0.0
    %5556 = vmatprep.subr.mxu0 0.0
    %5557 = vmatpush1.msra.mxu0 0.0
    %5558 = vmatprep.subr.mxu0 0.0
    %5559 = vmatpush1.msra.mxu0 0.0
    %5560 = vmatprep.subr.mxu0 0.0
    %5561 = vmatpush1.msra.mxu0 0.0
    %5562 = vmatprep.subr.mxu0 0.0
    %5563 = vmatpush1.msra.mxu0 0.0
    %5564 = vmatprep.subr.mxu0 0.0
    %5565 = vmatpush1.msra.mxu0 0.0
    %5566 = vmatprep.subr.mxu0 0.0
    %5567 = vmatpush1.msra.mxu0 0.0
    %5568 = vmatprep.subr.mxu0 0.0
    %5569 = vmatpush1.msra.mxu0 0.0
    %5570 = vmatprep.subr.mxu0 0.0
    %5571 = vmatpush1.msra.mxu0 0.0
    %5572 = vmatprep.subr.mxu0 0.0
    %5573 = vmatpush1.msra.mxu0 0.0
    %5574 = vmatprep.subr.mxu0 0.0
    %5575 = vmatpush1.msra.mxu0 0.0
    %5576 = vmatprep.subr.mxu0 0.0
    %5577 = vmatpush1.msra.mxu0 0.0
    %5578 = vmatprep.subr.mxu0 0.0
    %5579 = vmatpush1.msra.mxu0 0.0
    %5580 = vmatprep.subr.mxu0 0.0
    %5581 = vmatpush1.msra.mxu0 0.0
    %5582 = vmatprep.subr.mxu0 0.0
    %5583 = vmatpush1.msra.mxu0 0.0
    %5584 = vmatprep.subr.mxu0 0.0
    %5585 = vmatpush1.msra.mxu0 0.0
    %5586 = vmatprep.mubr.f32.mxu0 0.0
    %5587 = vmatmul.mubr.f32.gmra.mrb[0].mxu0 %v5520
    %v5588 = vpop.f32.mrb[0].mxu0
    %v5589 = vadd.f32 0.0, %v5588
    %v5590 = vpop.f32.mrb[0].mxu0
    %5591 = vdwg.mxu0
    %v5593 = vsel %vm424, %v5589, 0
    %5595 = vmatprep.subr.mxu0 0.0
    %5596 = vmatpush1.msra.mxu0 %v4942
    %5597 = vmatprep.subr.mxu0 0.0
    %5598 = vmatpush1.msra.mxu0 0.0
    %5599 = vmatprep.subr.mxu0 0.0
    %5600 = vmatpush1.msra.mxu0 0.0
    %5601 = vmatprep.subr.mxu0 0.0
    %5602 = vmatpush1.msra.mxu0 0.0
    %5603 = vmatprep.subr.mxu0 0.0
    %5604 = vmatpush1.msra.mxu0 0.0
    %5605 = vmatprep.subr.mxu0 0.0
    %5606 = vmatpush1.msra.mxu0 0.0
    %5607 = vmatprep.subr.mxu0 0.0
    %5608 = vmatpush1.msra.mxu0 0.0
    %5609 = vmatprep.subr.mxu0 0.0
    %5610 = vmatpush1.msra.mxu0 0.0
    %5611 = vmatprep.subr.mxu0 0.0
    %5612 = vmatpush1.msra.mxu0 0.0
    %5613 = vmatprep.subr.mxu0 0.0
    %5614 = vmatpush1.msra.mxu0 0.0
    %5615 = vmatprep.subr.mxu0 0.0
    %5616 = vmatpush1.msra.mxu0 0.0
    %5617 = vmatprep.subr.mxu0 0.0
    %5618 = vmatpush1.msra.mxu0 0.0
    %5619 = vmatprep.subr.mxu0 0.0
    %5620 = vmatpush1.msra.mxu0 0.0
    %5621 = vmatprep.subr.mxu0 0.0
    %5622 = vmatpush1.msra.mxu0 0.0
    %5623 = vmatprep.subr.mxu0 0.0
    %5624 = vmatpush1.msra.mxu0 0.0
    %5625 = vmatprep.subr.mxu0 0.0
    %5626 = vmatpush1.msra.mxu0 0.0
    %5627 = vmatprep.subr.mxu0 0.0
    %5628 = vmatpush1.msra.mxu0 0.0
    %5629 = vmatprep.subr.mxu0 0.0
    %5630 = vmatpush1.msra.mxu0 0.0
    %5631 = vmatprep.subr.mxu0 0.0
    %5632 = vmatpush1.msra.mxu0 0.0
    %5633 = vmatprep.subr.mxu0 0.0
    %5634 = vmatpush1.msra.mxu0 0.0
    %5635 = vmatprep.subr.mxu0 0.0
    %5636 = vmatpush1.msra.mxu0 0.0
    %5637 = vmatprep.subr.mxu0 0.0
    %5638 = vmatpush1.msra.mxu0 0.0
    %5639 = vmatprep.subr.mxu0 0.0
    %5640 = vmatpush1.msra.mxu0 0.0
    %5641 = vmatprep.subr.mxu0 0.0
    %5642 = vmatpush1.msra.mxu0 0.0
    %5643 = vmatprep.subr.mxu0 0.0
    %5644 = vmatpush1.msra.mxu0 0.0
    %5645 = vmatprep.subr.mxu0 0.0
    %5646 = vmatpush1.msra.mxu0 0.0
    %5647 = vmatprep.subr.mxu0 0.0
    %5648 = vmatpush1.msra.mxu0 0.0
    %5649 = vmatprep.subr.mxu0 0.0
    %5650 = vmatpush1.msra.mxu0 0.0
    %5651 = vmatprep.subr.mxu0 0.0
    %5652 = vmatpush1.msra.mxu0 0.0
    %5653 = vmatprep.subr.mxu0 0.0
    %5654 = vmatpush1.msra.mxu0 0.0
    %5655 = vmatprep.subr.mxu0 0.0
    %5656 = vmatpush1.msra.mxu0 0.0
    %5657 = vmatprep.subr.mxu0 0.0
    %5658 = vmatpush1.msra.mxu0 0.0
    %5659 = vmatprep.mubr.f32.mxu0 0.0
    %5660 = vmatmul.mubr.f32.gmra.mrb[0].mxu0 %v5593
    %v5661 = vpop.f32.mrb[0].mxu0
    %v5662 = vadd.f32 0.0, %v5661
    %v5663 = vpop.f32.mrb[0].mxu0
    %5664 = vdwg.mxu0
    %v5665 = vadd.f32 %v5423, %v5662
    %5666 = vrot.lane.b32.xlu0 %v4946, 104
    %v5667 = vpop.permute.xlu0 %5666
    %5668 = vrot.lane.b32.xlu0 %v4931, 72
    %v5669 = vpop.permute.xlu0 %5668
    %v5670 = vsel %vm424, %v5667, 0
    %v5672 = vsel %vm424, %v5669, 0
    %5674 = vmatprep.subr.mxu0 0.0
    %5675 = vmatpush1.xpose.msra.mxu0 %v5672
    %5676 = vmatprep.subr.mxu0 0.0
    %5677 = vmatpush1.xpose.msra.mxu0 0.0
    %5678 = vmatprep.subr.mxu0 0.0
    %5679 = vmatpush1.xpose.msra.mxu0 0.0
    %5680 = vmatprep.subr.mxu0 0.0
    %5681 = vmatpush1.xpose.msra.mxu0 0.0
    %5682 = vmatprep.subr.mxu0 0.0
    %5683 = vmatpush1.xpose.msra.mxu0 0.0
    %5684 = vmatprep.subr.mxu0 0.0
    %5685 = vmatpush1.xpose.msra.mxu0 0.0
    %5686 = vmatprep.subr.mxu0 0.0
    %5687 = vmatpush1.xpose.msra.mxu0 0.0
    %5688 = vmatprep.subr.mxu0 0.0
    %5689 = vmatpush1.xpose.msra.mxu0 0.0
    %5690 = vmatprep.subr.mxu0 0.0
    %5691 = vmatpush1.xpose.msra.mxu0 0.0
    %5692 = vmatprep.subr.mxu0 0.0
    %5693 = vmatpush1.xpose.msra.mxu0 0.0
    %5694 = vmatprep.subr.mxu0 0.0
    %5695 = vmatpush1.xpose.msra.mxu0 0.0
    %5696 = vmatprep.subr.mxu0 0.0
    %5697 = vmatpush1.xpose.msra.mxu0 0.0
    %5698 = vmatprep.subr.mxu0 0.0
    %5699 = vmatpush1.xpose.msra.mxu0 0.0
    %5700 = vmatprep.subr.mxu0 0.0
    %5701 = vmatpush1.xpose.msra.mxu0 0.0
    %5702 = vmatprep.subr.mxu0 0.0
    %5703 = vmatpush1.xpose.msra.mxu0 0.0
    %5704 = vmatprep.subr.mxu0 0.0
    %5705 = vmatpush1.xpose.msra.mxu0 0.0
    %5706 = vmatprep.subr.mxu0 0.0
    %5707 = vmatpush1.xpose.msra.mxu0 0.0
    %5708 = vmatprep.subr.mxu0 0.0
    %5709 = vmatpush1.xpose.msra.mxu0 0.0
    %5710 = vmatprep.subr.mxu0 0.0
    %5711 = vmatpush1.xpose.msra.mxu0 0.0
    %5712 = vmatprep.subr.mxu0 0.0
    %5713 = vmatpush1.xpose.msra.mxu0 0.0
    %5714 = vmatprep.subr.mxu0 0.0
    %5715 = vmatpush1.xpose.msra.mxu0 0.0
    %5716 = vmatprep.subr.mxu0 0.0
    %5717 = vmatpush1.xpose.msra.mxu0 0.0
    %5718 = vmatprep.subr.mxu0 0.0
    %5719 = vmatpush1.xpose.msra.mxu0 0.0
    %5720 = vmatprep.subr.mxu0 0.0
    %5721 = vmatpush1.xpose.msra.mxu0 0.0
    %5722 = vmatprep.subr.mxu0 0.0
    %5723 = vmatpush1.xpose.msra.mxu0 0.0
    %5724 = vmatprep.subr.mxu0 0.0
    %5725 = vmatpush1.xpose.msra.mxu0 0.0
    %5726 = vmatprep.subr.mxu0 0.0
    %5727 = vmatpush1.xpose.msra.mxu0 0.0
    %5728 = vmatprep.subr.mxu0 0.0
    %5729 = vmatpush1.xpose.msra.mxu0 0.0
    %5730 = vmatprep.subr.mxu0 0.0
    %5731 = vmatpush1.xpose.msra.mxu0 0.0
    %5732 = vmatprep.subr.mxu0 0.0
    %5733 = vmatpush1.xpose.msra.mxu0 0.0
    %5734 = vmatprep.subr.mxu0 0.0
    %5735 = vmatpush1.xpose.msra.mxu0 0.0
    %5736 = vmatprep.subr.mxu0 0.0
    %5737 = vmatpush1.xpose.msra.mxu0 0.0
    %5738 = vmatprep.mubr.f32.mxu0 0.0
    %5739 = vmatmul.mubr.f32.gmra.mrb[0].mxu0 %v5670
    %v5740 = vpop.f32.mrb[0].mxu0
    %v5741 = vadd.f32 0.0, %v5740
    %v5742 = vpop.f32.mrb[0].mxu0
    %5743 = vdwg.mxu0
    %v5744 = vsel %vm500, -1e+09, %v5741
    %v5745 = vsel %vm424, %v5744, -inf
    %5746 = vmax.xlane.f32.xlu0 %v5745
    %v5747 = vpop.xlane.xlu0 %5746
    %v5748 = vsub.f32 %v5744, %v5747
    %v5749 = vmul.f32 %v5748, 1.442695
    %v5750 = vpow.pop %v5749
    %v5751 = vsel %vm424, %v5750, 0.0
    %5752 = vadd.xlane.f32.xlu0 %v5751
    %v5753 = vpop.xlane.xlu0 %5752
    %v5754 = vrcp.pop %v5753
    %v5755 = vmul.f32 %v5750, %v5754
    %5756 = vrot.lane.b32.xlu0 %v4931, 40
    %v5757 = vpop.permute.xlu0 %5756
    %v5760 = vsel %vm424, %v5755, 0
    %5762 = vmatprep.subr.mxu0 0.0
    %5763 = vmatpush1.msra.mxu0 %v5757
    %5764 = vmatprep.subr.mxu0 0.0
    %5765 = vmatpush1.msra.mxu0 0.0
    %5766 = vmatprep.subr.mxu0 0.0
    %5767 = vmatpush1.msra.mxu0 0.0
    %5768 = vmatprep.subr.mxu0 0.0
    %5769 = vmatpush1.msra.mxu0 0.0
    %5770 = vmatprep.subr.mxu0 0.0
    %5771 = vmatpush1.msra.mxu0 0.0
    %5772 = vmatprep.subr.mxu0 0.0
    %5773 = vmatpush1.msra.mxu0 0.0
    %5774 = vmatprep.subr.mxu0 0.0
    %5775 = vmatpush1.msra.mxu0 0.0
    %5776 = vmatprep.subr.mxu0 0.0
    %5777 = vmatpush1.msra.mxu0 0.0
    %5778 = vmatprep.subr.mxu0 0.0
    %5779 = vmatpush1.msra.mxu0 0.0
    %5780 = vmatprep.subr.mxu0 0.0
    %5781 = vmatpush1.msra.mxu0 0.0
    %5782 = vmatprep.subr.mxu0 0.0
    %5783 = vmatpush1.msra.mxu0 0.0
    %5784 = vmatprep.subr.mxu0 0.0
    %5785 = vmatpush1.msra.mxu0 0.0
    %5786 = vmatprep.subr.mxu0 0.0
    %5787 = vmatpush1.msra.mxu0 0.0
    %5788 = vmatprep.subr.mxu0 0.0
    %5789 = vmatpush1.msra.mxu0 0.0
    %5790 = vmatprep.subr.mxu0 0.0
    %5791 = vmatpush1.msra.mxu0 0.0
    %5792 = vmatprep.subr.mxu0 0.0
    %5793 = vmatpush1.msra.mxu0 0.0
    %5794 = vmatprep.subr.mxu0 0.0
    %5795 = vmatpush1.msra.mxu0 0.0
    %5796 = vmatprep.subr.mxu0 0.0
    %5797 = vmatpush1.msra.mxu0 0.0
    %5798 = vmatprep.subr.mxu0 0.0
    %5799 = vmatpush1.msra.mxu0 0.0
    %5800 = vmatprep.subr.mxu0 0.0
    %5801 = vmatpush1.msra.mxu0 0.0
    %5802 = vmatprep.subr.mxu0 0.0
    %5803 = vmatpush1.msra.mxu0 0.0
    %5804 = vmatprep.subr.mxu0 0.0
    %5805 = vmatpush1.msra.mxu0 0.0
    %5806 = vmatprep.subr.mxu0 0.0
    %5807 = vmatpush1.msra.mxu0 0.0
    %5808 = vmatprep.subr.mxu0 0.0
    %5809 = vmatpush1.msra.mxu0 0.0
    %5810 = vmatprep.subr.mxu0 0.0
    %5811 = vmatpush1.msra.mxu0 0.0
    %5812 = vmatprep.subr.mxu0 0.0
    %5813 = vmatpush1.msra.mxu0 0.0
    %5814 = vmatprep.subr.mxu0 0.0
    %5815 = vmatpush1.msra.mxu0 0.0
    %5816 = vmatprep.subr.mxu0 0.0
    %5817 = vmatpush1.msra.mxu0 0.0
    %5818 = vmatprep.subr.mxu0 0.0
    %5819 = vmatpush1.msra.mxu0 0.0
    %5820 = vmatprep.subr.mxu0 0.0
    %5821 = vmatpush1.msra.mxu0 0.0
    %5822 = vmatprep.subr.mxu0 0.0
    %5823 = vmatpush1.msra.mxu0 0.0
    %5824 = vmatprep.subr.mxu0 0.0
    %5825 = vmatpush1.msra.mxu0 0.0
    %5826 = vmatprep.mubr.f32.mxu0 0.0
    %5827 = vmatmul.mubr.f32.gmra.mrb[0].mxu0 %v5760
    %v5828 = vpop.f32.mrb[0].mxu0
    %v5829 = vadd.f32 0.0, %v5828
    %v5830 = vpop.f32.mrb[0].mxu0
    %5831 = vdwg.mxu0
    %v5833 = vsel %vm424, %v5829, 0
    %5835 = vmatprep.subr.mxu0 0.0
    %5836 = vmatpush1.msra.mxu0 %v4943
    %5837 = vmatprep.subr.mxu0 0.0
    %5838 = vmatpush1.msra.mxu0 0.0
    %5839 = vmatprep.subr.mxu0 0.0
    %5840 = vmatpush1.msra.mxu0 0.0
    %5841 = vmatprep.subr.mxu0 0.0
    %5842 = vmatpush1.msra.mxu0 0.0
    %5843 = vmatprep.subr.mxu0 0.0
    %5844 = vmatpush1.msra.mxu0 0.0
    %5845 = vmatprep.subr.mxu0 0.0
    %5846 = vmatpush1.msra.mxu0 0.0
    %5847 = vmatprep.subr.mxu0 0.0
    %5848 = vmatpush1.msra.mxu0 0.0
    %5849 = vmatprep.subr.mxu0 0.0
    %5850 = vmatpush1.msra.mxu0 0.0
    %5851 = vmatprep.subr.mxu0 0.0
    %5852 = vmatpush1.msra.mxu0 0.0
    %5853 = vmatprep.subr.mxu0 0.0
    %5854 = vmatpush1.msra.mxu0 0.0
    %5855 = vmatprep.subr.mxu0 0.0
    %5856 = vmatpush1.msra.mxu0 0.0
    %5857 = vmatprep.subr.mxu0 0.0
    %5858 = vmatpush1.msra.mxu0 0.0
    %5859 = vmatprep.subr.mxu0 0.0
    %5860 = vmatpush1.msra.mxu0 0.0
    %5861 = vmatprep.subr.mxu0 0.0
    %5862 = vmatpush1.msra.mxu0 0.0
    %5863 = vmatprep.subr.mxu0 0.0
    %5864 = vmatpush1.msra.mxu0 0.0
    %5865 = vmatprep.subr.mxu0 0.0
    %5866 = vmatpush1.msra.mxu0 0.0
    %5867 = vmatprep.subr.mxu0 0.0
    %5868 = vmatpush1.msra.mxu0 0.0
    %5869 = vmatprep.subr.mxu0 0.0
    %5870 = vmatpush1.msra.mxu0 0.0
    %5871 = vmatprep.subr.mxu0 0.0
    %5872 = vmatpush1.msra.mxu0 0.0
    %5873 = vmatprep.subr.mxu0 0.0
    %5874 = vmatpush1.msra.mxu0 0.0
    %5875 = vmatprep.subr.mxu0 0.0
    %5876 = vmatpush1.msra.mxu0 0.0
    %5877 = vmatprep.subr.mxu0 0.0
    %5878 = vmatpush1.msra.mxu0 0.0
    %5879 = vmatprep.subr.mxu0 0.0
    %5880 = vmatpush1.msra.mxu0 0.0
    %5881 = vmatprep.subr.mxu0 0.0
    %5882 = vmatpush1.msra.mxu0 0.0
    %5883 = vmatprep.subr.mxu0 0.0
    %5884 = vmatpush1.msra.mxu0 0.0
    %5885 = vmatprep.subr.mxu0 0.0
    %5886 = vmatpush1.msra.mxu0 0.0
    %5887 = vmatprep.subr.mxu0 0.0
    %5888 = vmatpush1.msra.mxu0 0.0
    %5889 = vmatprep.subr.mxu0 0.0
    %5890 = vmatpush1.msra.mxu0 0.0
    %5891 = vmatprep.subr.mxu0 0.0
    %5892 = vmatpush1.msra.mxu0 0.0
    %5893 = vmatprep.subr.mxu0 0.0
    %5894 = vmatpush1.msra.mxu0 0.0
    %5895 = vmatprep.subr.mxu0 0.0
    %5896 = vmatpush1.msra.mxu0 0.0
    %5897 = vmatprep.subr.mxu0 0.0
    %5898 = vmatpush1.msra.mxu0 0.0
    %5899 = vmatprep.mubr.f32.mxu0 0.0
    %5900 = vmatmul.mubr.f32.gmra.mrb[0].mxu0 %v5833
    %v5901 = vpop.f32.mrb[0].mxu0
    %v5902 = vadd.f32 0.0, %v5901
    %v5903 = vpop.f32.mrb[0].mxu0
    %5904 = vdwg.mxu0
    %v5905 = vadd.f32 %v5665, %v5902
    %v5907 = vlaneseq
    %v5908 = vshrl.u32 %v5907, 7
    %v5909 = vsub.s32 0, %v5908
    %v5910 = vrot.slane %v4945, %v5909
    %v5912 = vadd.f32 %v5905, %v5910
    %5914 = vrot.lane.b32.xlu0 %v4936, 96
    %v5915 = vpop.permute.xlu0 %5914
    %v5917 = vsel %vm424, %v4947, 0
    %v5919 = vsel %vm424, %v5915, 0
    %5921 = vmatprep.subr.mxu0 0.0
    %5922 = vmatpush1.xpose.msra.mxu0 %v5919
    %5923 = vmatprep.subr.mxu0 0.0
    %5924 = vmatpush1.xpose.msra.mxu0 0.0
    %5925 = vmatprep.subr.mxu0 0.0
    %5926 = vmatpush1.xpose.msra.mxu0 0.0
    %5927 = vmatprep.subr.mxu0 0.0
    %5928 = vmatpush1.xpose.msra.mxu0 0.0
    %5929 = vmatprep.subr.mxu0 0.0
    %5930 = vmatpush1.xpose.msra.mxu0 0.0
    %5931 = vmatprep.subr.mxu0 0.0
    %5932 = vmatpush1.xpose.msra.mxu0 0.0
    %5933 = vmatprep.subr.mxu0 0.0
    %5934 = vmatpush1.xpose.msra.mxu0 0.0
    %5935 = vmatprep.subr.mxu0 0.0
    %5936 = vmatpush1.xpose.msra.mxu0 0.0
    %5937 = vmatprep.subr.mxu0 0.0
    %5938 = vmatpush1.xpose.msra.mxu0 0.0
    %5939 = vmatprep.subr.mxu0 0.0
    %5940 = vmatpush1.xpose.msra.mxu0 0.0
    %5941 = vmatprep.subr.mxu0 0.0
    %5942 = vmatpush1.xpose.msra.mxu0 0.0
    %5943 = vmatprep.subr.mxu0 0.0
    %5944 = vmatpush1.xpose.msra.mxu0 0.0
    %5945 = vmatprep.subr.mxu0 0.0
    %5946 = vmatpush1.xpose.msra.mxu0 0.0
    %5947 = vmatprep.subr.mxu0 0.0
    %5948 = vmatpush1.xpose.msra.mxu0 0.0
    %5949 = vmatprep.subr.mxu0 0.0
    %5950 = vmatpush1.xpose.msra.mxu0 0.0
    %5951 = vmatprep.subr.mxu0 0.0
    %5952 = vmatpush1.xpose.msra.mxu0 0.0
    %5953 = vmatprep.subr.mxu0 0.0
    %5954 = vmatpush1.xpose.msra.mxu0 0.0
    %5955 = vmatprep.subr.mxu0 0.0
    %5956 = vmatpush1.xpose.msra.mxu0 0.0
    %5957 = vmatprep.subr.mxu0 0.0
    %5958 = vmatpush1.xpose.msra.mxu0 0.0
    %5959 = vmatprep.subr.mxu0 0.0
    %5960 = vmatpush1.xpose.msra.mxu0 0.0
    %5961 = vmatprep.subr.mxu0 0.0
    %5962 = vmatpush1.xpose.msra.mxu0 0.0
    %5963 = vmatprep.subr.mxu0 0.0
    %5964 = vmatpush1.xpose.msra.mxu0 0.0
    %5965 = vmatprep.subr.mxu0 0.0
    %5966 = vmatpush1.xpose.msra.mxu0 0.0
    %5967 = vmatprep.subr.mxu0 0.0
    %5968 = vmatpush1.xpose.msra.mxu0 0.0
    %5969 = vmatprep.subr.mxu0 0.0
    %5970 = vmatpush1.xpose.msra.mxu0 0.0
    %5971 = vmatprep.subr.mxu0 0.0
    %5972 = vmatpush1.xpose.msra.mxu0 0.0
    %5973 = vmatprep.subr.mxu0 0.0
    %5974 = vmatpush1.xpose.msra.mxu0 0.0
    %5975 = vmatprep.subr.mxu0 0.0
    %5976 = vmatpush1.xpose.msra.mxu0 0.0
    %5977 = vmatprep.subr.mxu0 0.0
    %5978 = vmatpush1.xpose.msra.mxu0 0.0
    %5979 = vmatprep.subr.mxu0 0.0
    %5980 = vmatpush1.xpose.msra.mxu0 0.0
    %5981 = vmatprep.subr.mxu0 0.0
    %5982 = vmatpush1.xpose.msra.mxu0 0.0
    %5983 = vmatprep.subr.mxu0 0.0
    %5984 = vmatpush1.xpose.msra.mxu0 0.0
    %5985 = vmatprep.mubr.f32.mxu0 0.0
    %5986 = vmatmul.mubr.f32.gmra.mrb[0].mxu0 %v5917
    %v5987 = vpop.f32.mrb[0].mxu0
    %v5988 = vadd.f32 0.0, %v5987
    %v5989 = vpop.f32.mrb[0].mxu0
    %5990 = vdwg.mxu0
    %v5991 = vsel %vm1468, -1e+09, %v5988
    %v5992 = vsel %vm424, %v5991, -inf
    %5993 = vmax.xlane.f32.xlu0 %v5992
    %v5994 = vpop.xlane.xlu0 %5993
    %v5995 = vsub.f32 %v5991, %v5994
    %v5996 = vmul.f32 %v5995, 1.442695
    %v5997 = vpow.pop %v5996
    %v5998 = vsel %vm424, %v5997, 0.0
    %5999 = vadd.xlane.f32.xlu0 %v5998
    %v6000 = vpop.xlane.xlu0 %5999
    %v6001 = vrcp.pop %v6000
    %v6002 = vmul.f32 %v5997, %v6001
    %6003 = vrot.lane.b32.xlu0 %v4936, 64
    %v6004 = vpop.permute.xlu0 %6003
    %v6007 = vsel %vm424, %v6002, 0
    %6009 = vmatprep.subr.mxu0 0.0
    %6010 = vmatpush1.msra.mxu0 %v6004
    %6011 = vmatprep.subr.mxu0 0.0
    %6012 = vmatpush1.msra.mxu0 0.0
    %6013 = vmatprep.subr.mxu0 0.0
    %6014 = vmatpush1.msra.mxu0 0.0
    %6015 = vmatprep.subr.mxu0 0.0
    %6016 = vmatpush1.msra.mxu0 0.0
    %6017 = vmatprep.subr.mxu0 0.0
    %6018 = vmatpush1.msra.mxu0 0.0
    %6019 = vmatprep.subr.mxu0 0.0
    %6020 = vmatpush1.msra.mxu0 0.0
    %6021 = vmatprep.subr.mxu0 0.0
    %6022 = vmatpush1.msra.mxu0 0.0
    %6023 = vmatprep.subr.mxu0 0.0
    %6024 = vmatpush1.msra.mxu0 0.0
    %6025 = vmatprep.subr.mxu0 0.0
    %6026 = vmatpush1.msra.mxu0 0.0
    %6027 = vmatprep.subr.mxu0 0.0
    %6028 = vmatpush1.msra.mxu0 0.0
    %6029 = vmatprep.subr.mxu0 0.0
    %6030 = vmatpush1.msra.mxu0 0.0
    %6031 = vmatprep.subr.mxu0 0.0
    %6032 = vmatpush1.msra.mxu0 0.0
    %6033 = vmatprep.subr.mxu0 0.0
    %6034 = vmatpush1.msra.mxu0 0.0
    %6035 = vmatprep.subr.mxu0 0.0
    %6036 = vmatpush1.msra.mxu0 0.0
    %6037 = vmatprep.subr.mxu0 0.0
    %6038 = vmatpush1.msra.mxu0 0.0
    %6039 = vmatprep.subr.mxu0 0.0
    %6040 = vmatpush1.msra.mxu0 0.0
    %6041 = vmatprep.subr.mxu0 0.0
    %6042 = vmatpush1.msra.mxu0 0.0
    %6043 = vmatprep.subr.mxu0 0.0
    %6044 = vmatpush1.msra.mxu0 0.0
    %6045 = vmatprep.subr.mxu0 0.0
    %6046 = vmatpush1.msra.mxu0 0.0
    %6047 = vmatprep.subr.mxu0 0.0
    %6048 = vmatpush1.msra.mxu0 0.0
    %6049 = vmatprep.subr.mxu0 0.0
    %6050 = vmatpush1.msra.mxu0 0.0
    %6051 = vmatprep.subr.mxu0 0.0
    %6052 = vmatpush1.msra.mxu0 0.0
    %6053 = vmatprep.subr.mxu0 0.0
    %6054 = vmatpush1.msra.mxu0 0.0
    %6055 = vmatprep.subr.mxu0 0.0
    %6056 = vmatpush1.msra.mxu0 0.0
    %6057 = vmatprep.subr.mxu0 0.0
    %6058 = vmatpush1.msra.mxu0 0.0
    %6059 = vmatprep.subr.mxu0 0.0
    %6060 = vmatpush1.msra.mxu0 0.0
    %6061 = vmatprep.subr.mxu0 0.0
    %6062 = vmatpush1.msra.mxu0 0.0
    %6063 = vmatprep.subr.mxu0 0.0
    %6064 = vmatpush1.msra.mxu0 0.0
    %6065 = vmatprep.subr.mxu0 0.0
    %6066 = vmatpush1.msra.mxu0 0.0
    %6067 = vmatprep.subr.mxu0 0.0
    %6068 = vmatpush1.msra.mxu0 0.0
    %6069 = vmatprep.subr.mxu0 0.0
    %6070 = vmatpush1.msra.mxu0 0.0
    %6071 = vmatprep.subr.mxu0 0.0
    %6072 = vmatpush1.msra.mxu0 0.0
    %6073 = vmatprep.mubr.f32.mxu0 0.0
    %6074 = vmatmul.mubr.f32.gmra.mrb[0].mxu0 %v6007
    %v6075 = vpop.f32.mrb[0].mxu0
    %v6076 = vadd.f32 0.0, %v6075
    %v6077 = vpop.f32.mrb[0].mxu0
    %6078 = vdwg.mxu0
    %6079 = vrot.lane.b32.xlu0 %v4947, 120
    %v6080 = vpop.permute.xlu0 %6079
    %6081 = vrot.lane.b32.xlu0 %v4936, 88
    %v6082 = vpop.permute.xlu0 %6081
    %v6083 = vsel %vm424, %v6080, 0
    %v6085 = vsel %vm424, %v6082, 0
    %6087 = vmatprep.subr.mxu0 0.0
    %6088 = vmatpush1.xpose.msra.mxu0 %v6085
    %6089 = vmatprep.subr.mxu0 0.0
    %6090 = vmatpush1.xpose.msra.mxu0 0.0
    %6091 = vmatprep.subr.mxu0 0.0
    %6092 = vmatpush1.xpose.msra.mxu0 0.0
    %6093 = vmatprep.subr.mxu0 0.0
    %6094 = vmatpush1.xpose.msra.mxu0 0.0
    %6095 = vmatprep.subr.mxu0 0.0
    %6096 = vmatpush1.xpose.msra.mxu0 0.0
    %6097 = vmatprep.subr.mxu0 0.0
    %6098 = vmatpush1.xpose.msra.mxu0 0.0
    %6099 = vmatprep.subr.mxu0 0.0
    %6100 = vmatpush1.xpose.msra.mxu0 0.0
    %6101 = vmatprep.subr.mxu0 0.0
    %6102 = vmatpush1.xpose.msra.mxu0 0.0
    %6103 = vmatprep.subr.mxu0 0.0
    %6104 = vmatpush1.xpose.msra.mxu0 0.0
    %6105 = vmatprep.subr.mxu0 0.0
    %6106 = vmatpush1.xpose.msra.mxu0 0.0
    %6107 = vmatprep.subr.mxu0 0.0
    %6108 = vmatpush1.xpose.msra.mxu0 0.0
    %6109 = vmatprep.subr.mxu0 0.0
    %6110 = vmatpush1.xpose.msra.mxu0 0.0
    %6111 = vmatprep.subr.mxu0 0.0
    %6112 = vmatpush1.xpose.msra.mxu0 0.0
    %6113 = vmatprep.subr.mxu0 0.0
    %6114 = vmatpush1.xpose.msra.mxu0 0.0
    %6115 = vmatprep.subr.mxu0 0.0
    %6116 = vmatpush1.xpose.msra.mxu0 0.0
    %6117 = vmatprep.subr.mxu0 0.0
    %6118 = vmatpush1.xpose.msra.mxu0 0.0
    %6119 = vmatprep.subr.mxu0 0.0
    %6120 = vmatpush1.xpose.msra.mxu0 0.0
    %6121 = vmatprep.subr.mxu0 0.0
    %6122 = vmatpush1.xpose.msra.mxu0 0.0
    %6123 = vmatprep.subr.mxu0 0.0
    %6124 = vmatpush1.xpose.msra.mxu0 0.0
    %6125 = vmatprep.subr.mxu0 0.0
    %6126 = vmatpush1.xpose.msra.mxu0 0.0
    %6127 = vmatprep.subr.mxu0 0.0
    %6128 = vmatpush1.xpose.msra.mxu0 0.0
    %6129 = vmatprep.subr.mxu0 0.0
    %6130 = vmatpush1.xpose.msra.mxu0 0.0
    %6131 = vmatprep.subr.mxu0 0.0
    %6132 = vmatpush1.xpose.msra.mxu0 0.0
    %6133 = vmatprep.subr.mxu0 0.0
    %6134 = vmatpush1.xpose.msra.mxu0 0.0
    %6135 = vmatprep.subr.mxu0 0.0
    %6136 = vmatpush1.xpose.msra.mxu0 0.0
    %6137 = vmatprep.subr.mxu0 0.0
    %6138 = vmatpush1.xpose.msra.mxu0 0.0
    %6139 = vmatprep.subr.mxu0 0.0
    %6140 = vmatpush1.xpose.msra.mxu0 0.0
    %6141 = vmatprep.subr.mxu0 0.0
    %6142 = vmatpush1.xpose.msra.mxu0 0.0
    %6143 = vmatprep.subr.mxu0 0.0
    %6144 = vmatpush1.xpose.msra.mxu0 0.0
    %6145 = vmatprep.subr.mxu0 0.0
    %6146 = vmatpush1.xpose.msra.mxu0 0.0
    %6147 = vmatprep.subr.mxu0 0.0
    %6148 = vmatpush1.xpose.msra.mxu0 0.0
    %6149 = vmatprep.subr.mxu0 0.0
    %6150 = vmatpush1.xpose.msra.mxu0 0.0
    %6151 = vmatprep.mubr.f32.mxu0 0.0
    %6152 = vmatmul.mubr.f32.gmra.mrb[0].mxu0 %v6083
    %v6153 = vpop.f32.mrb[0].mxu0
    %v6154 = vadd.f32 0.0, %v6153
    %v6155 = vpop.f32.mrb[0].mxu0
    %6156 = vdwg.mxu0
    %v6157 = vsel %vm1468, -1e+09, %v6154
    %v6158 = vsel %vm424, %v6157, -inf
    %6159 = vmax.xlane.f32.xlu0 %v6158
    %v6160 = vpop.xlane.xlu0 %6159
    %v6161 = vsub.f32 %v6157, %v6160
    %v6162 = vmul.f32 %v6161, 1.442695
    %v6163 = vpow.pop %v6162
    %v6164 = vsel %vm424, %v6163, 0.0
    %6165 = vadd.xlane.f32.xlu0 %v6164
    %v6166 = vpop.xlane.xlu0 %6165
    %v6167 = vrcp.pop %v6166
    %v6168 = vmul.f32 %v6163, %v6167
    %6169 = vrot.lane.b32.xlu0 %v4936, 56
    %v6170 = vpop.permute.xlu0 %6169
    %v6173 = vsel %vm424, %v6168, 0
    %6175 = vmatprep.subr.mxu0 0.0
    %6176 = vmatpush1.msra.mxu0 %v6170
    %6177 = vmatprep.subr.mxu0 0.0
    %6178 = vmatpush1.msra.mxu0 0.0
    %6179 = vmatprep.subr.mxu0 0.0
    %6180 = vmatpush1.msra.mxu0 0.0
    %6181 = vmatprep.subr.mxu0 0.0
    %6182 = vmatpush1.msra.mxu0 0.0
    %6183 = vmatprep.subr.mxu0 0.0
    %6184 = vmatpush1.msra.mxu0 0.0
    %6185 = vmatprep.subr.mxu0 0.0
    %6186 = vmatpush1.msra.mxu0 0.0
    %6187 = vmatprep.subr.mxu0 0.0
    %6188 = vmatpush1.msra.mxu0 0.0
    %6189 = vmatprep.subr.mxu0 0.0
    %6190 = vmatpush1.msra.mxu0 0.0
    %6191 = vmatprep.subr.mxu0 0.0
    %6192 = vmatpush1.msra.mxu0 0.0
    %6193 = vmatprep.subr.mxu0 0.0
    %6194 = vmatpush1.msra.mxu0 0.0
    %6195 = vmatprep.subr.mxu0 0.0
    %6196 = vmatpush1.msra.mxu0 0.0
    %6197 = vmatprep.subr.mxu0 0.0
    %6198 = vmatpush1.msra.mxu0 0.0
    %6199 = vmatprep.subr.mxu0 0.0
    %6200 = vmatpush1.msra.mxu0 0.0
    %6201 = vmatprep.subr.mxu0 0.0
    %6202 = vmatpush1.msra.mxu0 0.0
    %6203 = vmatprep.subr.mxu0 0.0
    %6204 = vmatpush1.msra.mxu0 0.0
    %6205 = vmatprep.subr.mxu0 0.0
    %6206 = vmatpush1.msra.mxu0 0.0
    %6207 = vmatprep.subr.mxu0 0.0
    %6208 = vmatpush1.msra.mxu0 0.0
    %6209 = vmatprep.subr.mxu0 0.0
    %6210 = vmatpush1.msra.mxu0 0.0
    %6211 = vmatprep.subr.mxu0 0.0
    %6212 = vmatpush1.msra.mxu0 0.0
    %6213 = vmatprep.subr.mxu0 0.0
    %6214 = vmatpush1.msra.mxu0 0.0
    %6215 = vmatprep.subr.mxu0 0.0
    %6216 = vmatpush1.msra.mxu0 0.0
    %6217 = vmatprep.subr.mxu0 0.0
    %6218 = vmatpush1.msra.mxu0 0.0
    %6219 = vmatprep.subr.mxu0 0.0
    %6220 = vmatpush1.msra.mxu0 0.0
    %6221 = vmatprep.subr.mxu0 0.0
    %6222 = vmatpush1.msra.mxu0 0.0
    %6223 = vmatprep.subr.mxu0 0.0
    %6224 = vmatpush1.msra.mxu0 0.0
    %6225 = vmatprep.subr.mxu0 0.0
    %6226 = vmatpush1.msra.mxu0 0.0
    %6227 = vmatprep.subr.mxu0 0.0
    %6228 = vmatpush1.msra.mxu0 0.0
    %6229 = vmatprep.subr.mxu0 0.0
    %6230 = vmatpush1.msra.mxu0 0.0
    %6231 = vmatprep.subr.mxu0 0.0
    %6232 = vmatpush1.msra.mxu0 0.0
    %6233 = vmatprep.subr.mxu0 0.0
    %6234 = vmatpush1.msra.mxu0 0.0
    %6235 = vmatprep.subr.mxu0 0.0
    %6236 = vmatpush1.msra.mxu0 0.0
    %6237 = vmatprep.subr.mxu0 0.0
    %6238 = vmatpush1.msra.mxu0 0.0
    %6239 = vmatprep.mubr.f32.mxu0 0.0
    %6240 = vmatmul.mubr.f32.gmra.mrb[0].mxu0 %v6173
    %v6241 = vpop.f32.mrb[0].mxu0
    %v6242 = vadd.f32 0.0, %v6241
    %v6243 = vpop.f32.mrb[0].mxu0
    %6244 = vdwg.mxu0
    %v6246 = vsel %vm424, %v6242, 0
    %6248 = vmatprep.subr.mxu0 0.0
    %6249 = vmatpush1.msra.mxu0 %v4941
    %6250 = vmatprep.subr.mxu0 0.0
    %6251 = vmatpush1.msra.mxu0 0.0
    %6252 = vmatprep.subr.mxu0 0.0
    %6253 = vmatpush1.msra.mxu0 0.0
    %6254 = vmatprep.subr.mxu0 0.0
    %6255 = vmatpush1.msra.mxu0 0.0
    %6256 = vmatprep.subr.mxu0 0.0
    %6257 = vmatpush1.msra.mxu0 0.0
    %6258 = vmatprep.subr.mxu0 0.0
    %6259 = vmatpush1.msra.mxu0 0.0
    %6260 = vmatprep.subr.mxu0 0.0
    %6261 = vmatpush1.msra.mxu0 0.0
    %6262 = vmatprep.subr.mxu0 0.0
    %6263 = vmatpush1.msra.mxu0 0.0
    %6264 = vmatprep.subr.mxu0 0.0
    %6265 = vmatpush1.msra.mxu0 0.0
    %6266 = vmatprep.subr.mxu0 0.0
    %6267 = vmatpush1.msra.mxu0 0.0
    %6268 = vmatprep.subr.mxu0 0.0
    %6269 = vmatpush1.msra.mxu0 0.0
    %6270 = vmatprep.subr.mxu0 0.0
    %6271 = vmatpush1.msra.mxu0 0.0
    %6272 = vmatprep.subr.mxu0 0.0
    %6273 = vmatpush1.msra.mxu0 0.0
    %6274 = vmatprep.subr.mxu0 0.0
    %6275 = vmatpush1.msra.mxu0 0.0
    %6276 = vmatprep.subr.mxu0 0.0
    %6277 = vmatpush1.msra.mxu0 0.0
    %6278 = vmatprep.subr.mxu0 0.0
    %6279 = vmatpush1.msra.mxu0 0.0
    %6280 = vmatprep.subr.mxu0 0.0
    %6281 = vmatpush1.msra.mxu0 0.0
    %6282 = vmatprep.subr.mxu0 0.0
    %6283 = vmatpush1.msra.mxu0 0.0
    %6284 = vmatprep.subr.mxu0 0.0
    %6285 = vmatpush1.msra.mxu0 0.0
    %6286 = vmatprep.subr.mxu0 0.0
    %6287 = vmatpush1.msra.mxu0 0.0
    %6288 = vmatprep.subr.mxu0 0.0
    %6289 = vmatpush1.msra.mxu0 0.0
    %6290 = vmatprep.subr.mxu0 0.0
    %6291 = vmatpush1.msra.mxu0 0.0
    %6292 = vmatprep.subr.mxu0 0.0
    %6293 = vmatpush1.msra.mxu0 0.0
    %6294 = vmatprep.subr.mxu0 0.0
    %6295 = vmatpush1.msra.mxu0 0.0
    %6296 = vmatprep.subr.mxu0 0.0
    %6297 = vmatpush1.msra.mxu0 0.0
    %6298 = vmatprep.subr.mxu0 0.0
    %6299 = vmatpush1.msra.mxu0 0.0
    %6300 = vmatprep.subr.mxu0 0.0
    %6301 = vmatpush1.msra.mxu0 0.0
    %6302 = vmatprep.subr.mxu0 0.0
    %6303 = vmatpush1.msra.mxu0 0.0
    %6304 = vmatprep.subr.mxu0 0.0
    %6305 = vmatpush1.msra.mxu0 0.0
    %6306 = vmatprep.subr.mxu0 0.0
    %6307 = vmatpush1.msra.mxu0 0.0
    %6308 = vmatprep.subr.mxu0 0.0
    %6309 = vmatpush1.msra.mxu0 0.0
    %6310 = vmatprep.subr.mxu0 0.0
    %6311 = vmatpush1.msra.mxu0 0.0
    %6312 = vmatprep.mubr.f32.mxu0 0.0
    %6313 = vmatmul.mubr.f32.gmra.mrb[0].mxu0 %v6246
    %v6314 = vpop.f32.mrb[0].mxu0
    %v6315 = vadd.f32 0.0, %v6314
    %v6316 = vpop.f32.mrb[0].mxu0
    %6317 = vdwg.mxu0
    %v6319 = vsel %vm424, %v6076, 0
    %6321 = vmatprep.subr.mxu0 0.0
    %6322 = vmatpush1.msra.mxu0 %v4940
    %6323 = vmatprep.subr.mxu0 0.0
    %6324 = vmatpush1.msra.mxu0 0.0
    %6325 = vmatprep.subr.mxu0 0.0
    %6326 = vmatpush1.msra.mxu0 0.0
    %6327 = vmatprep.subr.mxu0 0.0
    %6328 = vmatpush1.msra.mxu0 0.0
    %6329 = vmatprep.subr.mxu0 0.0
    %6330 = vmatpush1.msra.mxu0 0.0
    %6331 = vmatprep.subr.mxu0 0.0
    %6332 = vmatpush1.msra.mxu0 0.0
    %6333 = vmatprep.subr.mxu0 0.0
    %6334 = vmatpush1.msra.mxu0 0.0
    %6335 = vmatprep.subr.mxu0 0.0
    %6336 = vmatpush1.msra.mxu0 0.0
    %6337 = vmatprep.subr.mxu0 0.0
    %6338 = vmatpush1.msra.mxu0 0.0
    %6339 = vmatprep.subr.mxu0 0.0
    %6340 = vmatpush1.msra.mxu0 0.0
    %6341 = vmatprep.subr.mxu0 0.0
    %6342 = vmatpush1.msra.mxu0 0.0
    %6343 = vmatprep.subr.mxu0 0.0
    %6344 = vmatpush1.msra.mxu0 0.0
    %6345 = vmatprep.subr.mxu0 0.0
    %6346 = vmatpush1.msra.mxu0 0.0
    %6347 = vmatprep.subr.mxu0 0.0
    %6348 = vmatpush1.msra.mxu0 0.0
    %6349 = vmatprep.subr.mxu0 0.0
    %6350 = vmatpush1.msra.mxu0 0.0
    %6351 = vmatprep.subr.mxu0 0.0
    %6352 = vmatpush1.msra.mxu0 0.0
    %6353 = vmatprep.subr.mxu0 0.0
    %6354 = vmatpush1.msra.mxu0 0.0
    %6355 = vmatprep.subr.mxu0 0.0
    %6356 = vmatpush1.msra.mxu0 0.0
    %6357 = vmatprep.subr.mxu0 0.0
    %6358 = vmatpush1.msra.mxu0 0.0
    %6359 = vmatprep.subr.mxu0 0.0
    %6360 = vmatpush1.msra.mxu0 0.0
    %6361 = vmatprep.subr.mxu0 0.0
    %6362 = vmatpush1.msra.mxu0 0.0
    %6363 = vmatprep.subr.mxu0 0.0
    %6364 = vmatpush1.msra.mxu0 0.0
    %6365 = vmatprep.subr.mxu0 0.0
    %6366 = vmatpush1.msra.mxu0 0.0
    %6367 = vmatprep.subr.mxu0 0.0
    %6368 = vmatpush1.msra.mxu0 0.0
    %6369 = vmatprep.subr.mxu0 0.0
    %6370 = vmatpush1.msra.mxu0 0.0
    %6371 = vmatprep.subr.mxu0 0.0
    %6372 = vmatpush1.msra.mxu0 0.0
    %6373 = vmatprep.subr.mxu0 0.0
    %6374 = vmatpush1.msra.mxu0 0.0
    %6375 = vmatprep.subr.mxu0 0.0
    %6376 = vmatpush1.msra.mxu0 0.0
    %6377 = vmatprep.subr.mxu0 0.0
    %6378 = vmatpush1.msra.mxu0 0.0
    %6379 = vmatprep.subr.mxu0 0.0
    %6380 = vmatpush1.msra.mxu0 0.0
    %6381 = vmatprep.subr.mxu0 0.0
    %6382 = vmatpush1.msra.mxu0 0.0
    %6383 = vmatprep.subr.mxu0 0.0
    %6384 = vmatpush1.msra.mxu0 0.0
    %6385 = vmatprep.mubr.f32.mxu0 0.0
    %6386 = vmatmul.mubr.f32.gmra.mrb[0].mxu0 %v6319
    %v6387 = vpop.f32.mrb[0].mxu0
    %v6388 = vadd.f32 %v6315, %v6387
    %v6389 = vpop.f32.mrb[0].mxu0
    %6390 = vdwg.mxu0
    %6391 = vrot.lane.b32.xlu0 %v4947, 112
    %v6392 = vpop.permute.xlu0 %6391
    %6393 = vrot.lane.b32.xlu0 %v4936, 80
    %v6394 = vpop.permute.xlu0 %6393
    %v6395 = vsel %vm424, %v6392, 0
    %v6397 = vsel %vm424, %v6394, 0
    %6399 = vmatprep.subr.mxu0 0.0
    %6400 = vmatpush1.xpose.msra.mxu0 %v6397
    %6401 = vmatprep.subr.mxu0 0.0
    %6402 = vmatpush1.xpose.msra.mxu0 0.0
    %6403 = vmatprep.subr.mxu0 0.0
    %6404 = vmatpush1.xpose.msra.mxu0 0.0
    %6405 = vmatprep.subr.mxu0 0.0
    %6406 = vmatpush1.xpose.msra.mxu0 0.0
    %6407 = vmatprep.subr.mxu0 0.0
    %6408 = vmatpush1.xpose.msra.mxu0 0.0
    %6409 = vmatprep.subr.mxu0 0.0
    %6410 = vmatpush1.xpose.msra.mxu0 0.0
    %6411 = vmatprep.subr.mxu0 0.0
    %6412 = vmatpush1.xpose.msra.mxu0 0.0
    %6413 = vmatprep.subr.mxu0 0.0
    %6414 = vmatpush1.xpose.msra.mxu0 0.0
    %6415 = vmatprep.subr.mxu0 0.0
    %6416 = vmatpush1.xpose.msra.mxu0 0.0
    %6417 = vmatprep.subr.mxu0 0.0
    %6418 = vmatpush1.xpose.msra.mxu0 0.0
    %6419 = vmatprep.subr.mxu0 0.0
    %6420 = vmatpush1.xpose.msra.mxu0 0.0
    %6421 = vmatprep.subr.mxu0 0.0
    %6422 = vmatpush1.xpose.msra.mxu0 0.0
    %6423 = vmatprep.subr.mxu0 0.0
    %6424 = vmatpush1.xpose.msra.mxu0 0.0
    %6425 = vmatprep.subr.mxu0 0.0
    %6426 = vmatpush1.xpose.msra.mxu0 0.0
    %6427 = vmatprep.subr.mxu0 0.0
    %6428 = vmatpush1.xpose.msra.mxu0 0.0
    %6429 = vmatprep.subr.mxu0 0.0
    %6430 = vmatpush1.xpose.msra.mxu0 0.0
    %6431 = vmatprep.subr.mxu0 0.0
    %6432 = vmatpush1.xpose.msra.mxu0 0.0
    %6433 = vmatprep.subr.mxu0 0.0
    %6434 = vmatpush1.xpose.msra.mxu0 0.0
    %6435 = vmatprep.subr.mxu0 0.0
    %6436 = vmatpush1.xpose.msra.mxu0 0.0
    %6437 = vmatprep.subr.mxu0 0.0
    %6438 = vmatpush1.xpose.msra.mxu0 0.0
    %6439 = vmatprep.subr.mxu0 0.0
    %6440 = vmatpush1.xpose.msra.mxu0 0.0
    %6441 = vmatprep.subr.mxu0 0.0
    %6442 = vmatpush1.xpose.msra.mxu0 0.0
    %6443 = vmatprep.subr.mxu0 0.0
    %6444 = vmatpush1.xpose.msra.mxu0 0.0
    %6445 = vmatprep.subr.mxu0 0.0
    %6446 = vmatpush1.xpose.msra.mxu0 0.0
    %6447 = vmatprep.subr.mxu0 0.0
    %6448 = vmatpush1.xpose.msra.mxu0 0.0
    %6449 = vmatprep.subr.mxu0 0.0
    %6450 = vmatpush1.xpose.msra.mxu0 0.0
    %6451 = vmatprep.subr.mxu0 0.0
    %6452 = vmatpush1.xpose.msra.mxu0 0.0
    %6453 = vmatprep.subr.mxu0 0.0
    %6454 = vmatpush1.xpose.msra.mxu0 0.0
    %6455 = vmatprep.subr.mxu0 0.0
    %6456 = vmatpush1.xpose.msra.mxu0 0.0
    %6457 = vmatprep.subr.mxu0 0.0
    %6458 = vmatpush1.xpose.msra.mxu0 0.0
    %6459 = vmatprep.subr.mxu0 0.0
    %6460 = vmatpush1.xpose.msra.mxu0 0.0
    %6461 = vmatprep.subr.mxu0 0.0
    %6462 = vmatpush1.xpose.msra.mxu0 0.0
    %6463 = vmatprep.mubr.f32.mxu0 0.0
    %6464 = vmatmul.mubr.f32.gmra.mrb[0].mxu0 %v6395
    %v6465 = vpop.f32.mrb[0].mxu0
    %v6466 = vadd.f32 0.0, %v6465
    %v6467 = vpop.f32.mrb[0].mxu0
    %6468 = vdwg.mxu0
    %v6469 = vsel %vm1468, -1e+09, %v6466
    %v6470 = vsel %vm424, %v6469, -inf
    %6471 = vmax.xlane.f32.xlu0 %v6470
    %v6472 = vpop.xlane.xlu0 %6471
    %v6473 = vsub.f32 %v6469, %v6472
    %v6474 = vmul.f32 %v6473, 1.442695
    %v6475 = vpow.pop %v6474
    %v6476 = vsel %vm424, %v6475, 0.0
    %6477 = vadd.xlane.f32.xlu0 %v6476
    %v6478 = vpop.xlane.xlu0 %6477
    %v6479 = vrcp.pop %v6478
    %v6480 = vmul.f32 %v6475, %v6479
    %6481 = vrot.lane.b32.xlu0 %v4936, 48
    %v6482 = vpop.permute.xlu0 %6481
    %v6485 = vsel %vm424, %v6480, 0
    %6487 = vmatprep.subr.mxu0 0.0
    %6488 = vmatpush1.msra.mxu0 %v6482
    %6489 = vmatprep.subr.mxu0 0.0
    %6490 = vmatpush1.msra.mxu0 0.0
    %6491 = vmatprep.subr.mxu0 0.0
    %6492 = vmatpush1.msra.mxu0 0.0
    %6493 = vmatprep.subr.mxu0 0.0
    %6494 = vmatpush1.msra.mxu0 0.0
    %6495 = vmatprep.subr.mxu0 0.0
    %6496 = vmatpush1.msra.mxu0 0.0
    %6497 = vmatprep.subr.mxu0 0.0
    %6498 = vmatpush1.msra.mxu0 0.0
    %6499 = vmatprep.subr.mxu0 0.0
    %6500 = vmatpush1.msra.mxu0 0.0
    %6501 = vmatprep.subr.mxu0 0.0
    %6502 = vmatpush1.msra.mxu0 0.0
    %6503 = vmatprep.subr.mxu0 0.0
    %6504 = vmatpush1.msra.mxu0 0.0
    %6505 = vmatprep.subr.mxu0 0.0
    %6506 = vmatpush1.msra.mxu0 0.0
    %6507 = vmatprep.subr.mxu0 0.0
    %6508 = vmatpush1.msra.mxu0 0.0
    %6509 = vmatprep.subr.mxu0 0.0
    %6510 = vmatpush1.msra.mxu0 0.0
    %6511 = vmatprep.subr.mxu0 0.0
    %6512 = vmatpush1.msra.mxu0 0.0
    %6513 = vmatprep.subr.mxu0 0.0
    %6514 = vmatpush1.msra.mxu0 0.0
    %6515 = vmatprep.subr.mxu0 0.0
    %6516 = vmatpush1.msra.mxu0 0.0
    %6517 = vmatprep.subr.mxu0 0.0
    %6518 = vmatpush1.msra.mxu0 0.0
    %6519 = vmatprep.subr.mxu0 0.0
    %6520 = vmatpush1.msra.mxu0 0.0
    %6521 = vmatprep.subr.mxu0 0.0
    %6522 = vmatpush1.msra.mxu0 0.0
    %6523 = vmatprep.subr.mxu0 0.0
    %6524 = vmatpush1.msra.mxu0 0.0
    %6525 = vmatprep.subr.mxu0 0.0
    %6526 = vmatpush1.msra.mxu0 0.0
    %6527 = vmatprep.subr.mxu0 0.0
    %6528 = vmatpush1.msra.mxu0 0.0
    %6529 = vmatprep.subr.mxu0 0.0
    %6530 = vmatpush1.msra.mxu0 0.0
    %6531 = vmatprep.subr.mxu0 0.0
    %6532 = vmatpush1.msra.mxu0 0.0
    %6533 = vmatprep.subr.mxu0 0.0
    %6534 = vmatpush1.msra.mxu0 0.0
    %6535 = vmatprep.subr.mxu0 0.0
    %6536 = vmatpush1.msra.mxu0 0.0
    %6537 = vmatprep.subr.mxu0 0.0
    %6538 = vmatpush1.msra.mxu0 0.0
    %6539 = vmatprep.subr.mxu0 0.0
    %6540 = vmatpush1.msra.mxu0 0.0
    %6541 = vmatprep.subr.mxu0 0.0
    %6542 = vmatpush1.msra.mxu0 0.0
    %6543 = vmatprep.subr.mxu0 0.0
    %6544 = vmatpush1.msra.mxu0 0.0
    %6545 = vmatprep.subr.mxu0 0.0
    %6546 = vmatpush1.msra.mxu0 0.0
    %6547 = vmatprep.subr.mxu0 0.0
    %6548 = vmatpush1.msra.mxu0 0.0
    %6549 = vmatprep.subr.mxu0 0.0
    %6550 = vmatpush1.msra.mxu0 0.0
    %6551 = vmatprep.mubr.f32.mxu0 0.0
    %6552 = vmatmul.mubr.f32.gmra.mrb[0].mxu0 %v6485
    %v6553 = vpop.f32.mrb[0].mxu0
    %v6554 = vadd.f32 0.0, %v6553
    %v6555 = vpop.f32.mrb[0].mxu0
    %6556 = vdwg.mxu0
    %v6558 = vsel %vm424, %v6554, 0
    %6560 = vmatprep.subr.mxu0 0.0
    %6561 = vmatpush1.msra.mxu0 %v4942
    %6562 = vmatprep.subr.mxu0 0.0
    %6563 = vmatpush1.msra.mxu0 0.0
    %6564 = vmatprep.subr.mxu0 0.0
    %6565 = vmatpush1.msra.mxu0 0.0
    %6566 = vmatprep.subr.mxu0 0.0
    %6567 = vmatpush1.msra.mxu0 0.0
    %6568 = vmatprep.subr.mxu0 0.0
    %6569 = vmatpush1.msra.mxu0 0.0
    %6570 = vmatprep.subr.mxu0 0.0
    %6571 = vmatpush1.msra.mxu0 0.0
    %6572 = vmatprep.subr.mxu0 0.0
    %6573 = vmatpush1.msra.mxu0 0.0
    %6574 = vmatprep.subr.mxu0 0.0
    %6575 = vmatpush1.msra.mxu0 0.0
    %6576 = vmatprep.subr.mxu0 0.0
    %6577 = vmatpush1.msra.mxu0 0.0
    %6578 = vmatprep.subr.mxu0 0.0
    %6579 = vmatpush1.msra.mxu0 0.0
    %6580 = vmatprep.subr.mxu0 0.0
    %6581 = vmatpush1.msra.mxu0 0.0
    %6582 = vmatprep.subr.mxu0 0.0
    %6583 = vmatpush1.msra.mxu0 0.0
    %6584 = vmatprep.subr.mxu0 0.0
    %6585 = vmatpush1.msra.mxu0 0.0
    %6586 = vmatprep.subr.mxu0 0.0
    %6587 = vmatpush1.msra.mxu0 0.0
    %6588 = vmatprep.subr.mxu0 0.0
    %6589 = vmatpush1.msra.mxu0 0.0
    %6590 = vmatprep.subr.mxu0 0.0
    %6591 = vmatpush1.msra.mxu0 0.0
    %6592 = vmatprep.subr.mxu0 0.0
    %6593 = vmatpush1.msra.mxu0 0.0
    %6594 = vmatprep.subr.mxu0 0.0
    %6595 = vmatpush1.msra.mxu0 0.0
    %6596 = vmatprep.subr.mxu0 0.0
    %6597 = vmatpush1.msra.mxu0 0.0
    %6598 = vmatprep.subr.mxu0 0.0
    %6599 = vmatpush1.msra.mxu0 0.0
    %6600 = vmatprep.subr.mxu0 0.0
    %6601 = vmatpush1.msra.mxu0 0.0
    %6602 = vmatprep.subr.mxu0 0.0
    %6603 = vmatpush1.msra.mxu0 0.0
    %6604 = vmatprep.subr.mxu0 0.0
    %6605 = vmatpush1.msra.mxu0 0.0
    %6606 = vmatprep.subr.mxu0 0.0
    %6607 = vmatpush1.msra.mxu0 0.0
    %6608 = vmatprep.subr.mxu0 0.0
    %6609 = vmatpush1.msra.mxu0 0.0
    %6610 = vmatprep.subr.mxu0 0.0
    %6611 = vmatpush1.msra.mxu0 0.0
    %6612 = vmatprep.subr.mxu0 0.0
    %6613 = vmatpush1.msra.mxu0 0.0
    %6614 = vmatprep.subr.mxu0 0.0
    %6615 = vmatpush1.msra.mxu0 0.0
    %6616 = vmatprep.subr.mxu0 0.0
    %6617 = vmatpush1.msra.mxu0 0.0
    %6618 = vmatprep.subr.mxu0 0.0
    %6619 = vmatpush1.msra.mxu0 0.0
    %6620 = vmatprep.subr.mxu0 0.0
    %6621 = vmatpush1.msra.mxu0 0.0
    %6622 = vmatprep.subr.mxu0 0.0
    %6623 = vmatpush1.msra.mxu0 0.0
    %6624 = vmatprep.mubr.f32.mxu0 0.0
    %6625 = vmatmul.mubr.f32.gmra.mrb[0].mxu0 %v6558
    %v6626 = vpop.f32.mrb[0].mxu0
    %v6627 = vadd.f32 0.0, %v6626
    %v6628 = vpop.f32.mrb[0].mxu0
    %6629 = vdwg.mxu0
    %v6630 = vadd.f32 %v6388, %v6627
    %6631 = vrot.lane.b32.xlu0 %v4947, 104
    %v6632 = vpop.permute.xlu0 %6631
    %6633 = vrot.lane.b32.xlu0 %v4936, 72
    %v6634 = vpop.permute.xlu0 %6633
    %v6635 = vsel %vm424, %v6632, 0
    %v6637 = vsel %vm424, %v6634, 0
    %6639 = vmatprep.subr.mxu0 0.0
    %6640 = vmatpush1.xpose.msra.mxu0 %v6637
    %6641 = vmatprep.subr.mxu0 0.0
    %6642 = vmatpush1.xpose.msra.mxu0 0.0
    %6643 = vmatprep.subr.mxu0 0.0
    %6644 = vmatpush1.xpose.msra.mxu0 0.0
    %6645 = vmatprep.subr.mxu0 0.0
    %6646 = vmatpush1.xpose.msra.mxu0 0.0
    %6647 = vmatprep.subr.mxu0 0.0
    %6648 = vmatpush1.xpose.msra.mxu0 0.0
    %6649 = vmatprep.subr.mxu0 0.0
    %6650 = vmatpush1.xpose.msra.mxu0 0.0
    %6651 = vmatprep.subr.mxu0 0.0
    %6652 = vmatpush1.xpose.msra.mxu0 0.0
    %6653 = vmatprep.subr.mxu0 0.0
    %6654 = vmatpush1.xpose.msra.mxu0 0.0
    %6655 = vmatprep.subr.mxu0 0.0
    %6656 = vmatpush1.xpose.msra.mxu0 0.0
    %6657 = vmatprep.subr.mxu0 0.0
    %6658 = vmatpush1.xpose.msra.mxu0 0.0
    %6659 = vmatprep.subr.mxu0 0.0
    %6660 = vmatpush1.xpose.msra.mxu0 0.0
    %6661 = vmatprep.subr.mxu0 0.0
    %6662 = vmatpush1.xpose.msra.mxu0 0.0
    %6663 = vmatprep.subr.mxu0 0.0
    %6664 = vmatpush1.xpose.msra.mxu0 0.0
    %6665 = vmatprep.subr.mxu0 0.0
    %6666 = vmatpush1.xpose.msra.mxu0 0.0
    %6667 = vmatprep.subr.mxu0 0.0
    %6668 = vmatpush1.xpose.msra.mxu0 0.0
    %6669 = vmatprep.subr.mxu0 0.0
    %6670 = vmatpush1.xpose.msra.mxu0 0.0
    %6671 = vmatprep.subr.mxu0 0.0
    %6672 = vmatpush1.xpose.msra.mxu0 0.0
    %6673 = vmatprep.subr.mxu0 0.0
    %6674 = vmatpush1.xpose.msra.mxu0 0.0
    %6675 = vmatprep.subr.mxu0 0.0
    %6676 = vmatpush1.xpose.msra.mxu0 0.0
    %6677 = vmatprep.subr.mxu0 0.0
    %6678 = vmatpush1.xpose.msra.mxu0 0.0
    %6679 = vmatprep.subr.mxu0 0.0
    %6680 = vmatpush1.xpose.msra.mxu0 0.0
    %6681 = vmatprep.subr.mxu0 0.0
    %6682 = vmatpush1.xpose.msra.mxu0 0.0
    %6683 = vmatprep.subr.mxu0 0.0
    %6684 = vmatpush1.xpose.msra.mxu0 0.0
    %6685 = vmatprep.subr.mxu0 0.0
    %6686 = vmatpush1.xpose.msra.mxu0 0.0
    %6687 = vmatprep.subr.mxu0 0.0
    %6688 = vmatpush1.xpose.msra.mxu0 0.0
    %6689 = vmatprep.subr.mxu0 0.0
    %6690 = vmatpush1.xpose.msra.mxu0 0.0
    %6691 = vmatprep.subr.mxu0 0.0
    %6692 = vmatpush1.xpose.msra.mxu0 0.0
    %6693 = vmatprep.subr.mxu0 0.0
    %6694 = vmatpush1.xpose.msra.mxu0 0.0
    %6695 = vmatprep.subr.mxu0 0.0
    %6696 = vmatpush1.xpose.msra.mxu0 0.0
    %6697 = vmatprep.subr.mxu0 0.0
    %6698 = vmatpush1.xpose.msra.mxu0 0.0
    %6699 = vmatprep.subr.mxu0 0.0
    %6700 = vmatpush1.xpose.msra.mxu0 0.0
    %6701 = vmatprep.subr.mxu0 0.0
    %6702 = vmatpush1.xpose.msra.mxu0 0.0
    %6703 = vmatprep.mubr.f32.mxu0 0.0
    %6704 = vmatmul.mubr.f32.gmra.mrb[0].mxu0 %v6635
    %v6705 = vpop.f32.mrb[0].mxu0
    %v6706 = vadd.f32 0.0, %v6705
    %v6707 = vpop.f32.mrb[0].mxu0
    %6708 = vdwg.mxu0
    %v6709 = vsel %vm1468, -1e+09, %v6706
    %v6710 = vsel %vm424, %v6709, -inf
    %6711 = vmax.xlane.f32.xlu0 %v6710
    %v6712 = vpop.xlane.xlu0 %6711
    %v6713 = vsub.f32 %v6709, %v6712
    %v6714 = vmul.f32 %v6713, 1.442695
    %v6715 = vpow.pop %v6714
    %v6716 = vsel %vm424, %v6715, 0.0
    %6717 = vadd.xlane.f32.xlu0 %v6716
    %v6718 = vpop.xlane.xlu0 %6717
    %v6719 = vrcp.pop %v6718
    %v6720 = vmul.f32 %v6715, %v6719
    %6721 = vrot.lane.b32.xlu0 %v4936, 40
    %v6722 = vpop.permute.xlu0 %6721
    %v6725 = vsel %vm424, %v6720, 0
    %6727 = vmatprep.subr.mxu0 0.0
    %6728 = vmatpush1.msra.mxu0 %v6722
    %6729 = vmatprep.subr.mxu0 0.0
    %6730 = vmatpush1.msra.mxu0 0.0
    %6731 = vmatprep.subr.mxu0 0.0
    %6732 = vmatpush1.msra.mxu0 0.0
    %6733 = vmatprep.subr.mxu0 0.0
    %6734 = vmatpush1.msra.mxu0 0.0
    %6735 = vmatprep.subr.mxu0 0.0
    %6736 = vmatpush1.msra.mxu0 0.0
    %6737 = vmatprep.subr.mxu0 0.0
    %6738 = vmatpush1.msra.mxu0 0.0
    %6739 = vmatprep.subr.mxu0 0.0
    %6740 = vmatpush1.msra.mxu0 0.0
    %6741 = vmatprep.subr.mxu0 0.0
    %6742 = vmatpush1.msra.mxu0 0.0
    %6743 = vmatprep.subr.mxu0 0.0
    %6744 = vmatpush1.msra.mxu0 0.0
    %6745 = vmatprep.subr.mxu0 0.0
    %6746 = vmatpush1.msra.mxu0 0.0
    %6747 = vmatprep.subr.mxu0 0.0
    %6748 = vmatpush1.msra.mxu0 0.0
    %6749 = vmatprep.subr.mxu0 0.0
    %6750 = vmatpush1.msra.mxu0 0.0
    %6751 = vmatprep.subr.mxu0 0.0
    %6752 = vmatpush1.msra.mxu0 0.0
    %6753 = vmatprep.subr.mxu0 0.0
    %6754 = vmatpush1.msra.mxu0 0.0
    %6755 = vmatprep.subr.mxu0 0.0
    %6756 = vmatpush1.msra.mxu0 0.0
    %6757 = vmatprep.subr.mxu0 0.0
    %6758 = vmatpush1.msra.mxu0 0.0
    %6759 = vmatprep.subr.mxu0 0.0
    %6760 = vmatpush1.msra.mxu0 0.0
    %6761 = vmatprep.subr.mxu0 0.0
    %6762 = vmatpush1.msra.mxu0 0.0
    %6763 = vmatprep.subr.mxu0 0.0
    %6764 = vmatpush1.msra.mxu0 0.0
    %6765 = vmatprep.subr.mxu0 0.0
    %6766 = vmatpush1.msra.mxu0 0.0
    %6767 = vmatprep.subr.mxu0 0.0
    %6768 = vmatpush1.msra.mxu0 0.0
    %6769 = vmatprep.subr.mxu0 0.0
    %6770 = vmatpush1.msra.mxu0 0.0
    %6771 = vmatprep.subr.mxu0 0.0
    %6772 = vmatpush1.msra.mxu0 0.0
    %6773 = vmatprep.subr.mxu0 0.0
    %6774 = vmatpush1.msra.mxu0 0.0
    %6775 = vmatprep.subr.mxu0 0.0
    %6776 = vmatpush1.msra.mxu0 0.0
    %6777 = vmatprep.subr.mxu0 0.0
    %6778 = vmatpush1.msra.mxu0 0.0
    %6779 = vmatprep.subr.mxu0 0.0
    %6780 = vmatpush1.msra.mxu0 0.0
    %6781 = vmatprep.subr.mxu0 0.0
    %6782 = vmatpush1.msra.mxu0 0.0
    %6783 = vmatprep.subr.mxu0 0.0
    %6784 = vmatpush1.msra.mxu0 0.0
    %6785 = vmatprep.subr.mxu0 0.0
    %6786 = vmatpush1.msra.mxu0 0.0
    %6787 = vmatprep.subr.mxu0 0.0
    %6788 = vmatpush1.msra.mxu0 0.0
    %6789 = vmatprep.subr.mxu0 0.0
    %6790 = vmatpush1.msra.mxu0 0.0
    %6791 = vmatprep.mubr.f32.mxu0 0.0
    %6792 = vmatmul.mubr.f32.gmra.mrb[0].mxu0 %v6725
    %v6793 = vpop.f32.mrb[0].mxu0
    %v6794 = vadd.f32 0.0, %v6793
    %v6795 = vpop.f32.mrb[0].mxu0
    %6796 = vdwg.mxu0
    %v6798 = vsel %vm424, %v6794, 0
    %6800 = vmatprep.subr.mxu0 0.0
    %6801 = vmatpush1.msra.mxu0 %v4943
    %6802 = vmatprep.subr.mxu0 0.0
    %6803 = vmatpush1.msra.mxu0 0.0
    %6804 = vmatprep.subr.mxu0 0.0
    %6805 = vmatpush1.msra.mxu0 0.0
    %6806 = vmatprep.subr.mxu0 0.0
    %6807 = vmatpush1.msra.mxu0 0.0
    %6808 = vmatprep.subr.mxu0 0.0
    %6809 = vmatpush1.msra.mxu0 0.0
    %6810 = vmatprep.subr.mxu0 0.0
    %6811 = vmatpush1.msra.mxu0 0.0
    %6812 = vmatprep.subr.mxu0 0.0
    %6813 = vmatpush1.msra.mxu0 0.0
    %6814 = vmatprep.subr.mxu0 0.0
    %6815 = vmatpush1.msra.mxu0 0.0
    %6816 = vmatprep.subr.mxu0 0.0
    %6817 = vmatpush1.msra.mxu0 0.0
    %6818 = vmatprep.subr.mxu0 0.0
    %6819 = vmatpush1.msra.mxu0 0.0
    %6820 = vmatprep.subr.mxu0 0.0
    %6821 = vmatpush1.msra.mxu0 0.0
    %6822 = vmatprep.subr.mxu0 0.0
    %6823 = vmatpush1.msra.mxu0 0.0
    %6824 = vmatprep.subr.mxu0 0.0
    %6825 = vmatpush1.msra.mxu0 0.0
    %6826 = vmatprep.subr.mxu0 0.0
    %6827 = vmatpush1.msra.mxu0 0.0
    %6828 = vmatprep.subr.mxu0 0.0
    %6829 = vmatpush1.msra.mxu0 0.0
    %6830 = vmatprep.subr.mxu0 0.0
    %6831 = vmatpush1.msra.mxu0 0.0
    %6832 = vmatprep.subr.mxu0 0.0
    %6833 = vmatpush1.msra.mxu0 0.0
    %6834 = vmatprep.subr.mxu0 0.0
    %6835 = vmatpush1.msra.mxu0 0.0
    %6836 = vmatprep.subr.mxu0 0.0
    %6837 = vmatpush1.msra.mxu0 0.0
    %6838 = vmatprep.subr.mxu0 0.0
    %6839 = vmatpush1.msra.mxu0 0.0
    %6840 = vmatprep.subr.mxu0 0.0
    %6841 = vmatpush1.msra.mxu0 0.0
    %6842 = vmatprep.subr.mxu0 0.0
    %6843 = vmatpush1.msra.mxu0 0.0
    %6844 = vmatprep.subr.mxu0 0.0
    %6845 = vmatpush1.msra.mxu0 0.0
    %6846 = vmatprep.subr.mxu0 0.0
    %6847 = vmatpush1.msra.mxu0 0.0
    %6848 = vmatprep.subr.mxu0 0.0
    %6849 = vmatpush1.msra.mxu0 0.0
    %6850 = vmatprep.subr.mxu0 0.0
    %6851 = vmatpush1.msra.mxu0 0.0
    %6852 = vmatprep.subr.mxu0 0.0
    %6853 = vmatpush1.msra.mxu0 0.0
    %6854 = vmatprep.subr.mxu0 0.0
    %6855 = vmatpush1.msra.mxu0 0.0
    %6856 = vmatprep.subr.mxu0 0.0
    %6857 = vmatpush1.msra.mxu0 0.0
    %6858 = vmatprep.subr.mxu0 0.0
    %6859 = vmatpush1.msra.mxu0 0.0
    %6860 = vmatprep.subr.mxu0 0.0
    %6861 = vmatpush1.msra.mxu0 0.0
    %6862 = vmatprep.subr.mxu0 0.0
    %6863 = vmatpush1.msra.mxu0 0.0
    %6864 = vmatprep.mubr.f32.mxu0 0.0
    %6865 = vmatmul.mubr.f32.gmra.mrb[0].mxu0 %v6798
    %v6866 = vpop.f32.mrb[0].mxu0
    %v6867 = vadd.f32 0.0, %v6866
    %v6868 = vpop.f32.mrb[0].mxu0
    %6869 = vdwg.mxu0
    %v6870 = vadd.f32 %v6630, %v6867
    %v6871 = vadd.f32 %v6870, %v5910
    %v6872 = vadd.f32 %v4783, %v5912
    %v6873 = vadd.f32 %v4784, %v6871
    %s6874 = scalar_lea.vmem %s18, 4
    %v6875 = vld [vmem:[%s6874] sm:$0x1]
    %s6876 = scalar_lea.vmem %s19, 4
    %v6877 = vld [vmem:[%s6876] sm:$0x1]
    %v6878 = vsel %vm262, %v6872, 0.0
    %6879 = vadd.xlane.f32.xlu0 %v6878
    %v6880 = vpop.xlane.xlu0 %6879
    %v6881 = vsel %vm262, %v6873, 0.0
    %6882 = vadd.xlane.f32.xlu0 %v6881
    %v6883 = vpop.xlane.xlu0 %6882
    %v6884 = vmul.f32 %v6880, %v269
    %v6885 = vmul.f32 %v6883, %v269
    %v6886 = vsub.f32 %v6872, %v6884
    %v6887 = vsub.f32 %v6873, %v6885
    %v6888 = vmul.f32 %v6886, %v6886
    %v6889 = vmul.f32 %v6887, %v6887
    %v6890 = vsel %vm262, %v6888, 0.0
    %6891 = vadd.xlane.f32.xlu0 %v6890
    %v6892 = vpop.xlane.xlu0 %6891
    %v6893 = vsel %vm262, %v6889, 0.0
    %6894 = vadd.xlane.f32.xlu0 %v6893
    %v6895 = vpop.xlane.xlu0 %6894
    %v6896 = vmul.f32 %v6892, %v282
    %v6897 = vmul.f32 %v6895, %v282
    %v6898 = vrsqrt.pop %v6896
    %v6899 = vmul.f32 %v6896, %v6898
    %vm6900 = vcmp.eq.f32.partialorder %v6896, inf
    %v6901 = vsel %vm6900, %v6896, %v6899
    %vm6902 = vcmp.eq.f32.partialorder %v6896, 0.0
    %v6903 = vand.u32 %v6896, 2147483648
    %v6904 = vsel %vm6902, %v6903, %v6901
    %v6905 = vrsqrt.pop %v6897
    %v6906 = vmul.f32 %v6897, %v6905
    %vm6907 = vcmp.eq.f32.partialorder %v6897, inf
    %v6908 = vsel %vm6907, %v6897, %v6906
    %vm6909 = vcmp.eq.f32.partialorder %v6897, 0.0
    %v6910 = vand.u32 %v6897, 2147483648
    %v6911 = vsel %vm6909, %v6910, %v6908
    %v6913 = vlaneseq
    %v6914 = vshrl.u32 %v6913, 7
    %v6915 = vsub.s32 0, %v6914
    %v6916 = vrot.slane %v6875, %v6915
    %v6918 = vmul.f32 %v6916, %v6886
    %v6919 = vmul.f32 %v6916, %v6887
    %v6920 = vadd.f32 %v6904, 1e-06
    %v6921 = vadd.f32 %v6911, 1e-06
    %v6922 = vrcp.pop %v6920
    %v6923 = vmul.f32 %v6918, %v6922
    %v6924 = vrcp.pop %v6921
    %v6925 = vmul.f32 %v6919, %v6924
    %v6927 = vlaneseq
    %v6928 = vshrl.u32 %v6927, 7
    %v6929 = vsub.s32 0, %v6928
    %v6930 = vrot.slane %v6877, %v6929
    %v6932 = vadd.f32 %v6923, %v6930
    %v6933 = vadd.f32 %v6925, %v6930
    %s6934 = scalar_lea.vmem [#allocation14], 32
    %v6935 = vld [vmem:[%s6934] sm:$0xff]
    %v6936 = vld [vmem:[%s6934 + $0x8] sm:$0xff]
    %v6937 = vld [vmem:[%s6934 + $0x10] sm:$0xff]
    %v6938 = vld [vmem:[%s6934 + $0x18] sm:$0xff]
    %s6939 = scalar_lea.vmem [#allocation16], 1
    %v6940 = vld [vmem:[%s6939] sm:$0x1]
    %v6942 = vlaneseq
    %v6943 = vshrl.u32 %v6942, 7
    %v6944 = vsub.s32 0, %v6943
    %v6945 = vrot.slane %v6940, %v6944
    %v6948 = vsel %vm262, %v6932, 0
    %v6951 = vsel %vm262, %v6933, 0
    %6953 = vmatprep.subr.mxu0 0.0
    %6954 = vmatpush1.msra.mxu0 %v6935
    %6955 = vmatprep.subr.mxu0 0.0
    %6956 = vmatpush1.msra.mxu0 %v6936
    %6957 = vmatprep.subr.mxu0 0.0
    %6958 = vmatpush1.msra.mxu0 %v6937
    %6959 = vmatprep.subr.mxu0 0.0
    %6960 = vmatpush1.msra.mxu0 %v6938
    %6961 = vmatprep.subr.mxu0 0.0
    %6962 = vmatpush1.msra.mxu0 0.0
    %6963 = vmatprep.subr.mxu0 0.0
    %6964 = vmatpush1.msra.mxu0 0.0
    %6965 = vmatprep.subr.mxu0 0.0
    %6966 = vmatpush1.msra.mxu0 0.0
    %6967 = vmatprep.subr.mxu0 0.0
    %6968 = vmatpush1.msra.mxu0 0.0
    %6969 = vmatprep.subr.mxu0 0.0
    %6970 = vmatpush1.msra.mxu0 0.0
    %6971 = vmatprep.subr.mxu0 0.0
    %6972 = vmatpush1.msra.mxu0 0.0
    %6973 = vmatprep.subr.mxu0 0.0
    %6974 = vmatpush1.msra.mxu0 0.0
    %6975 = vmatprep.subr.mxu0 0.0
    %6976 = vmatpush1.msra.mxu0 0.0
    %6977 = vmatprep.subr.mxu0 0.0
    %6978 = vmatpush1.msra.mxu0 0.0
    %6979 = vmatprep.subr.mxu0 0.0
    %6980 = vmatpush1.msra.mxu0 0.0
    %6981 = vmatprep.subr.mxu0 0.0
    %6982 = vmatpush1.msra.mxu0 0.0
    %6983 = vmatprep.subr.mxu0 0.0
    %6984 = vmatpush1.msra.mxu0 0.0
    %6985 = vmatprep.subr.mxu0 0.0
    %6986 = vmatpush1.msra.mxu0 0.0
    %6987 = vmatprep.subr.mxu0 0.0
    %6988 = vmatpush1.msra.mxu0 0.0
    %6989 = vmatprep.subr.mxu0 0.0
    %6990 = vmatpush1.msra.mxu0 0.0
    %6991 = vmatprep.subr.mxu0 0.0
    %6992 = vmatpush1.msra.mxu0 0.0
    %6993 = vmatprep.subr.mxu0 0.0
    %6994 = vmatpush1.msra.mxu0 0.0
    %6995 = vmatprep.subr.mxu0 0.0
    %6996 = vmatpush1.msra.mxu0 0.0
    %6997 = vmatprep.subr.mxu0 0.0
    %6998 = vmatpush1.msra.mxu0 0.0
    %6999 = vmatprep.subr.mxu0 0.0
    %7000 = vmatpush1.msra.mxu0 0.0
    %7001 = vmatprep.subr.mxu0 0.0
    %7002 = vmatpush1.msra.mxu0 0.0
    %7003 = vmatprep.subr.mxu0 0.0
    %7004 = vmatpush1.msra.mxu0 0.0
    %7005 = vmatprep.subr.mxu0 0.0
    %7006 = vmatpush1.msra.mxu0 0.0
    %7007 = vmatprep.subr.mxu0 0.0
    %7008 = vmatpush1.msra.mxu0 0.0
    %7009 = vmatprep.subr.mxu0 0.0
    %7010 = vmatpush1.msra.mxu0 0.0
    %7011 = vmatprep.subr.mxu0 0.0
    %7012 = vmatpush1.msra.mxu0 0.0
    %7013 = vmatprep.subr.mxu0 0.0
    %7014 = vmatpush1.msra.mxu0 0.0
    %7015 = vmatprep.subr.mxu0 0.0
    %7016 = vmatpush1.msra.mxu0 0.0
    %7017 = vmatprep.mubr.f32.mxu0 0.0
    %7018 = vmatmul.mubr.f32.gmra.mrb[0].mxu0 %v6948
    %v7019 = vpop.f32.mrb[0].mxu0
    %v7020 = vadd.f32 %v6945, %v7019
    %v7021 = vpop.f32.mrb[0].mxu0
    %7022 = vmatprep.mubr.f32.mxu0 0.0
    %7023 = vmatmul.mubr.f32.gmra.mrb[0].mxu0 %v6951
    %v7024 = vpop.f32.mrb[0].mxu0
    %v7025 = vadd.f32 %v6945, %v7024
    %v7026 = vpop.f32.mrb[0].mxu0
    %7027 = vdwg.mxu0
    %s7028 = scalar_lea.vmem [#allocation17], 32
    %v7029 = vld [vmem:[%s7028] sm:$0xff]
    %v7030 = vld [vmem:[%s7028 + $0x8] sm:$0xff]
    %v7031 = vld [vmem:[%s7028 + $0x10] sm:$0xff]
    %v7032 = vld [vmem:[%s7028 + $0x18] sm:$0xff]
    %s7033 = scalar_lea.vmem [#allocation19], 1
    %v7034 = vld [vmem:[%s7033] sm:$0x1]
    %v7036 = vlaneseq
    %v7037 = vshrl.u32 %v7036, 7
    %v7038 = vsub.s32 0, %v7037
    %v7039 = vrot.slane %v7034, %v7038
    %7041 = vmatprep.subr.mxu0 0.0
    %7042 = vmatpush1.msra.mxu0 %v7029
    %7043 = vmatprep.subr.mxu0 0.0
    %7044 = vmatpush1.msra.mxu0 %v7030
    %7045 = vmatprep.subr.mxu0 0.0
    %7046 = vmatpush1.msra.mxu0 %v7031
    %7047 = vmatprep.subr.mxu0 0.0
    %7048 = vmatpush1.msra.mxu0 %v7032
    %7049 = vmatprep.subr.mxu0 0.0
    %7050 = vmatpush1.msra.mxu0 0.0
    %7051 = vmatprep.subr.mxu0 0.0
    %7052 = vmatpush1.msra.mxu0 0.0
    %7053 = vmatprep.subr.mxu0 0.0
    %7054 = vmatpush1.msra.mxu0 0.0
    %7055 = vmatprep.subr.mxu0 0.0
    %7056 = vmatpush1.msra.mxu0 0.0
    %7057 = vmatprep.subr.mxu0 0.0
    %7058 = vmatpush1.msra.mxu0 0.0
    %7059 = vmatprep.subr.mxu0 0.0
    %7060 = vmatpush1.msra.mxu0 0.0
    %7061 = vmatprep.subr.mxu0 0.0
    %7062 = vmatpush1.msra.mxu0 0.0
    %7063 = vmatprep.subr.mxu0 0.0
    %7064 = vmatpush1.msra.mxu0 0.0
    %7065 = vmatprep.subr.mxu0 0.0
    %7066 = vmatpush1.msra.mxu0 0.0
    %7067 = vmatprep.subr.mxu0 0.0
    %7068 = vmatpush1.msra.mxu0 0.0
    %7069 = vmatprep.subr.mxu0 0.0
    %7070 = vmatpush1.msra.mxu0 0.0
    %7071 = vmatprep.subr.mxu0 0.0
    %7072 = vmatpush1.msra.mxu0 0.0
    %7073 = vmatprep.subr.mxu0 0.0
    %7074 = vmatpush1.msra.mxu0 0.0
    %7075 = vmatprep.subr.mxu0 0.0
    %7076 = vmatpush1.msra.mxu0 0.0
    %7077 = vmatprep.subr.mxu0 0.0
    %7078 = vmatpush1.msra.mxu0 0.0
    %7079 = vmatprep.subr.mxu0 0.0
    %7080 = vmatpush1.msra.mxu0 0.0
    %7081 = vmatprep.subr.mxu0 0.0
    %7082 = vmatpush1.msra.mxu0 0.0
    %7083 = vmatprep.subr.mxu0 0.0
    %7084 = vmatpush1.msra.mxu0 0.0
    %7085 = vmatprep.subr.mxu0 0.0
    %7086 = vmatpush1.msra.mxu0 0.0
    %7087 = vmatprep.subr.mxu0 0.0
    %7088 = vmatpush1.msra.mxu0 0.0
    %7089 = vmatprep.subr.mxu0 0.0
    %7090 = vmatpush1.msra.mxu0 0.0
    %7091 = vmatprep.subr.mxu0 0.0
    %7092 = vmatpush1.msra.mxu0 0.0
    %7093 = vmatprep.subr.mxu0 0.0
    %7094 = vmatpush1.msra.mxu0 0.0
    %7095 = vmatprep.subr.mxu0 0.0
    %7096 = vmatpush1.msra.mxu0 0.0
    %7097 = vmatprep.subr.mxu0 0.0
    %7098 = vmatpush1.msra.mxu0 0.0
    %7099 = vmatprep.subr.mxu0 0.0
    %7100 = vmatpush1.msra.mxu0 0.0
    %7101 = vmatprep.subr.mxu0 0.0
    %7102 = vmatpush1.msra.mxu0 0.0
    %7103 = vmatprep.subr.mxu0 0.0
    %7104 = vmatpush1.msra.mxu0 0.0
    %7105 = vmatprep.mubr.f32.mxu0 0.0
    %7106 = vmatmul.mubr.f32.gmra.mrb[0].mxu0 %v2516
    %v7107 = vpop.f32.mrb[0].mxu0
    %v7108 = vadd.f32 %v7039, %v7107
    %v7109 = vpop.f32.mrb[0].mxu0
    %7110 = vmatprep.mubr.f32.mxu0 0.0
    %7111 = vmatmul.mubr.f32.gmra.mrb[0].mxu0 %v2519
    %v7112 = vpop.f32.mrb[0].mxu0
    %v7113 = vadd.f32 %v7039, %v7112
    %v7114 = vpop.f32.mrb[0].mxu0
    %7115 = vdwg.mxu0
    %s7116 = scalar_lea.vmem [#allocation20], 32
    %v7117 = vld [vmem:[%s7116] sm:$0xff]
    %v7118 = vld [vmem:[%s7116 + $0x8] sm:$0xff]
    %v7119 = vld [vmem:[%s7116 + $0x10] sm:$0xff]
    %v7120 = vld [vmem:[%s7116 + $0x18] sm:$0xff]
    %s7121 = scalar_lea.vmem [#allocation22], 1
    %v7122 = vld [vmem:[%s7121] sm:$0x1]
    %v7123 = vmul.f32 %v7020, 0.35355338
    %v7124 = vmul.f32 %v7025, 0.35355338
    %v7126 = vsel %vm424, %v7123, 0
    %v7129 = vsel %vm424, %v7108, 0
    %7131 = vmatprep.subr.mxu0 0.0
    %7132 = vmatpush1.xpose.msra.mxu0 %v7129
    %7133 = vmatprep.subr.mxu0 0.0
    %7134 = vmatpush1.xpose.msra.mxu0 0.0
    %7135 = vmatprep.subr.mxu0 0.0
    %7136 = vmatpush1.xpose.msra.mxu0 0.0
    %7137 = vmatprep.subr.mxu0 0.0
    %7138 = vmatpush1.xpose.msra.mxu0 0.0
    %7139 = vmatprep.subr.mxu0 0.0
    %7140 = vmatpush1.xpose.msra.mxu0 0.0
    %7141 = vmatprep.subr.mxu0 0.0
    %7142 = vmatpush1.xpose.msra.mxu0 0.0
    %7143 = vmatprep.subr.mxu0 0.0
    %7144 = vmatpush1.xpose.msra.mxu0 0.0
    %7145 = vmatprep.subr.mxu0 0.0
    %7146 = vmatpush1.xpose.msra.mxu0 0.0
    %7147 = vmatprep.subr.mxu0 0.0
    %7148 = vmatpush1.xpose.msra.mxu0 0.0
    %7149 = vmatprep.subr.mxu0 0.0
    %7150 = vmatpush1.xpose.msra.mxu0 0.0
    %7151 = vmatprep.subr.mxu0 0.0
    %7152 = vmatpush1.xpose.msra.mxu0 0.0
    %7153 = vmatprep.subr.mxu0 0.0
    %7154 = vmatpush1.xpose.msra.mxu0 0.0
    %7155 = vmatprep.subr.mxu0 0.0
    %7156 = vmatpush1.xpose.msra.mxu0 0.0
    %7157 = vmatprep.subr.mxu0 0.0
    %7158 = vmatpush1.xpose.msra.mxu0 0.0
    %7159 = vmatprep.subr.mxu0 0.0
    %7160 = vmatpush1.xpose.msra.mxu0 0.0
    %7161 = vmatprep.subr.mxu0 0.0
    %7162 = vmatpush1.xpose.msra.mxu0 0.0
    %7163 = vmatprep.subr.mxu0 0.0
    %7164 = vmatpush1.xpose.msra.mxu0 0.0
    %7165 = vmatprep.subr.mxu0 0.0
    %7166 = vmatpush1.xpose.msra.mxu0 0.0
    %7167 = vmatprep.subr.mxu0 0.0
    %7168 = vmatpush1.xpose.msra.mxu0 0.0
    %7169 = vmatprep.subr.mxu0 0.0
    %7170 = vmatpush1.xpose.msra.mxu0 0.0
    %7171 = vmatprep.subr.mxu0 0.0
    %7172 = vmatpush1.xpose.msra.mxu0 0.0
    %7173 = vmatprep.subr.mxu0 0.0
    %7174 = vmatpush1.xpose.msra.mxu0 0.0
    %7175 = vmatprep.subr.mxu0 0.0
    %7176 = vmatpush1.xpose.msra.mxu0 0.0
    %7177 = vmatprep.subr.mxu0 0.0
    %7178 = vmatpush1.xpose.msra.mxu0 0.0
    %7179 = vmatprep.subr.mxu0 0.0
    %7180 = vmatpush1.xpose.msra.mxu0 0.0
    %7181 = vmatprep.subr.mxu0 0.0
    %7182 = vmatpush1.xpose.msra.mxu0 0.0
    %7183 = vmatprep.subr.mxu0 0.0
    %7184 = vmatpush1.xpose.msra.mxu0 0.0
    %7185 = vmatprep.subr.mxu0 0.0
    %7186 = vmatpush1.xpose.msra.mxu0 0.0
    %7187 = vmatprep.subr.mxu0 0.0
    %7188 = vmatpush1.xpose.msra.mxu0 0.0
    %7189 = vmatprep.subr.mxu0 0.0
    %7190 = vmatpush1.xpose.msra.mxu0 0.0
    %7191 = vmatprep.subr.mxu0 0.0
    %7192 = vmatpush1.xpose.msra.mxu0 0.0
    %7193 = vmatprep.subr.mxu0 0.0
    %7194 = vmatpush1.xpose.msra.mxu0 0.0
    %7195 = vmatprep.mubr.f32.mxu0 0.0
    %7196 = vmatmul.mubr.f32.gmra.mrb[0].mxu0 %v7126
    %v7197 = vpop.f32.mrb[0].mxu0
    %v7198 = vadd.f32 0.0, %v7197
    %v7199 = vpop.f32.mrb[0].mxu0
    %7200 = vdwg.mxu0
    %v7201 = vsel %vm2680, -1e+09, %v7198
    %v7202 = vsel %vm424, %v7201, -inf
    %7203 = vmax.xlane.f32.xlu0 %v7202
    %v7204 = vpop.xlane.xlu0 %7203
    %v7205 = vsub.f32 %v7201, %v7204
    %v7206 = vmul.f32 %v7205, 1.442695
    %v7207 = vpow.pop %v7206
    %v7208 = vsel %vm424, %v7207, 0.0
    %7209 = vadd.xlane.f32.xlu0 %v7208
    %v7210 = vpop.xlane.xlu0 %7209
    %v7211 = vrcp.pop %v7210
    %v7212 = vmul.f32 %v7207, %v7211
    %7213 = vrot.lane.b32.xlu0 %v7108, 96
    %v7214 = vpop.permute.xlu0 %7213
    %v7217 = vsel %vm424, %v7212, 0
    %7219 = vmatprep.subr.mxu0 0.0
    %7220 = vmatpush1.msra.mxu0 %v7214
    %7221 = vmatprep.subr.mxu0 0.0
    %7222 = vmatpush1.msra.mxu0 0.0
    %7223 = vmatprep.subr.mxu0 0.0
    %7224 = vmatpush1.msra.mxu0 0.0
    %7225 = vmatprep.subr.mxu0 0.0
    %7226 = vmatpush1.msra.mxu0 0.0
    %7227 = vmatprep.subr.mxu0 0.0
    %7228 = vmatpush1.msra.mxu0 0.0
    %7229 = vmatprep.subr.mxu0 0.0
    %7230 = vmatpush1.msra.mxu0 0.0
    %7231 = vmatprep.subr.mxu0 0.0
    %7232 = vmatpush1.msra.mxu0 0.0
    %7233 = vmatprep.subr.mxu0 0.0
    %7234 = vmatpush1.msra.mxu0 0.0
    %7235 = vmatprep.subr.mxu0 0.0
    %7236 = vmatpush1.msra.mxu0 0.0
    %7237 = vmatprep.subr.mxu0 0.0
    %7238 = vmatpush1.msra.mxu0 0.0
    %7239 = vmatprep.subr.mxu0 0.0
    %7240 = vmatpush1.msra.mxu0 0.0
    %7241 = vmatprep.subr.mxu0 0.0
    %7242 = vmatpush1.msra.mxu0 0.0
    %7243 = vmatprep.subr.mxu0 0.0
    %7244 = vmatpush1.msra.mxu0 0.0
    %7245 = vmatprep.subr.mxu0 0.0
    %7246 = vmatpush1.msra.mxu0 0.0
    %7247 = vmatprep.subr.mxu0 0.0
    %7248 = vmatpush1.msra.mxu0 0.0
    %7249 = vmatprep.subr.mxu0 0.0
    %7250 = vmatpush1.msra.mxu0 0.0
    %7251 = vmatprep.subr.mxu0 0.0
    %7252 = vmatpush1.msra.mxu0 0.0
    %7253 = vmatprep.subr.mxu0 0.0
    %7254 = vmatpush1.msra.mxu0 0.0
    %7255 = vmatprep.subr.mxu0 0.0
    %7256 = vmatpush1.msra.mxu0 0.0
    %7257 = vmatprep.subr.mxu0 0.0
    %7258 = vmatpush1.msra.mxu0 0.0
    %7259 = vmatprep.subr.mxu0 0.0
    %7260 = vmatpush1.msra.mxu0 0.0
    %7261 = vmatprep.subr.mxu0 0.0
    %7262 = vmatpush1.msra.mxu0 0.0
    %7263 = vmatprep.subr.mxu0 0.0
    %7264 = vmatpush1.msra.mxu0 0.0
    %7265 = vmatprep.subr.mxu0 0.0
    %7266 = vmatpush1.msra.mxu0 0.0
    %7267 = vmatprep.subr.mxu0 0.0
    %7268 = vmatpush1.msra.mxu0 0.0
    %7269 = vmatprep.subr.mxu0 0.0
    %7270 = vmatpush1.msra.mxu0 0.0
    %7271 = vmatprep.subr.mxu0 0.0
    %7272 = vmatpush1.msra.mxu0 0.0
    %7273 = vmatprep.subr.mxu0 0.0
    %7274 = vmatpush1.msra.mxu0 0.0
    %7275 = vmatprep.subr.mxu0 0.0
    %7276 = vmatpush1.msra.mxu0 0.0
    %7277 = vmatprep.subr.mxu0 0.0
    %7278 = vmatpush1.msra.mxu0 0.0
    %7279 = vmatprep.subr.mxu0 0.0
    %7280 = vmatpush1.msra.mxu0 0.0
    %7281 = vmatprep.subr.mxu0 0.0
    %7282 = vmatpush1.msra.mxu0 0.0
    %7283 = vmatprep.mubr.f32.mxu0 0.0
    %7284 = vmatmul.mubr.f32.gmra.mrb[0].mxu0 %v7217
    %v7285 = vpop.f32.mrb[0].mxu0
    %v7286 = vadd.f32 0.0, %v7285
    %v7287 = vpop.f32.mrb[0].mxu0
    %7288 = vdwg.mxu0
    %7289 = vrot.lane.b32.xlu0 %v7123, 120
    %v7290 = vpop.permute.xlu0 %7289
    %7291 = vrot.lane.b32.xlu0 %v7108, 120
    %v7292 = vpop.permute.xlu0 %7291
    %v7293 = vsel %vm424, %v7290, 0
    %v7295 = vsel %vm424, %v7292, 0
    %7297 = vmatprep.subr.mxu0 0.0
    %7298 = vmatpush1.xpose.msra.mxu0 %v7295
    %7299 = vmatprep.subr.mxu0 0.0
    %7300 = vmatpush1.xpose.msra.mxu0 0.0
    %7301 = vmatprep.subr.mxu0 0.0
    %7302 = vmatpush1.xpose.msra.mxu0 0.0
    %7303 = vmatprep.subr.mxu0 0.0
    %7304 = vmatpush1.xpose.msra.mxu0 0.0
    %7305 = vmatprep.subr.mxu0 0.0
    %7306 = vmatpush1.xpose.msra.mxu0 0.0
    %7307 = vmatprep.subr.mxu0 0.0
    %7308 = vmatpush1.xpose.msra.mxu0 0.0
    %7309 = vmatprep.subr.mxu0 0.0
    %7310 = vmatpush1.xpose.msra.mxu0 0.0
    %7311 = vmatprep.subr.mxu0 0.0
    %7312 = vmatpush1.xpose.msra.mxu0 0.0
    %7313 = vmatprep.subr.mxu0 0.0
    %7314 = vmatpush1.xpose.msra.mxu0 0.0
    %7315 = vmatprep.subr.mxu0 0.0
    %7316 = vmatpush1.xpose.msra.mxu0 0.0
    %7317 = vmatprep.subr.mxu0 0.0
    %7318 = vmatpush1.xpose.msra.mxu0 0.0
    %7319 = vmatprep.subr.mxu0 0.0
    %7320 = vmatpush1.xpose.msra.mxu0 0.0
    %7321 = vmatprep.subr.mxu0 0.0
    %7322 = vmatpush1.xpose.msra.mxu0 0.0
    %7323 = vmatprep.subr.mxu0 0.0
    %7324 = vmatpush1.xpose.msra.mxu0 0.0
    %7325 = vmatprep.subr.mxu0 0.0
    %7326 = vmatpush1.xpose.msra.mxu0 0.0
    %7327 = vmatprep.subr.mxu0 0.0
    %7328 = vmatpush1.xpose.msra.mxu0 0.0
    %7329 = vmatprep.subr.mxu0 0.0
    %7330 = vmatpush1.xpose.msra.mxu0 0.0
    %7331 = vmatprep.subr.mxu0 0.0
    %7332 = vmatpush1.xpose.msra.mxu0 0.0
    %7333 = vmatprep.subr.mxu0 0.0
    %7334 = vmatpush1.xpose.msra.mxu0 0.0
    %7335 = vmatprep.subr.mxu0 0.0
    %7336 = vmatpush1.xpose.msra.mxu0 0.0
    %7337 = vmatprep.subr.mxu0 0.0
    %7338 = vmatpush1.xpose.msra.mxu0 0.0
    %7339 = vmatprep.subr.mxu0 0.0
    %7340 = vmatpush1.xpose.msra.mxu0 0.0
    %7341 = vmatprep.subr.mxu0 0.0
    %7342 = vmatpush1.xpose.msra.mxu0 0.0
    %7343 = vmatprep.subr.mxu0 0.0
    %7344 = vmatpush1.xpose.msra.mxu0 0.0
    %7345 = vmatprep.subr.mxu0 0.0
    %7346 = vmatpush1.xpose.msra.mxu0 0.0
    %7347 = vmatprep.subr.mxu0 0.0
    %7348 = vmatpush1.xpose.msra.mxu0 0.0
    %7349 = vmatprep.subr.mxu0 0.0
    %7350 = vmatpush1.xpose.msra.mxu0 0.0
    %7351 = vmatprep.subr.mxu0 0.0
    %7352 = vmatpush1.xpose.msra.mxu0 0.0
    %7353 = vmatprep.subr.mxu0 0.0
    %7354 = vmatpush1.xpose.msra.mxu0 0.0
    %7355 = vmatprep.subr.mxu0 0.0
    %7356 = vmatpush1.xpose.msra.mxu0 0.0
    %7357 = vmatprep.subr.mxu0 0.0
    %7358 = vmatpush1.xpose.msra.mxu0 0.0
    %7359 = vmatprep.subr.mxu0 0.0
    %7360 = vmatpush1.xpose.msra.mxu0 0.0
    %7361 = vmatprep.mubr.f32.mxu0 0.0
    %7362 = vmatmul.mubr.f32.gmra.mrb[0].mxu0 %v7293
    %v7363 = vpop.f32.mrb[0].mxu0
    %v7364 = vadd.f32 0.0, %v7363
    %v7365 = vpop.f32.mrb[0].mxu0
    %7366 = vdwg.mxu0
    %v7367 = vsel %vm2680, -1e+09, %v7364
    %v7368 = vsel %vm424, %v7367, -inf
    %7369 = vmax.xlane.f32.xlu0 %v7368
    %v7370 = vpop.xlane.xlu0 %7369
    %v7371 = vsub.f32 %v7367, %v7370
    %v7372 = vmul.f32 %v7371, 1.442695
    %v7373 = vpow.pop %v7372
    %v7374 = vsel %vm424, %v7373, 0.0
    %7375 = vadd.xlane.f32.xlu0 %v7374
    %v7376 = vpop.xlane.xlu0 %7375
    %v7377 = vrcp.pop %v7376
    %v7378 = vmul.f32 %v7373, %v7377
    %7379 = vrot.lane.b32.xlu0 %v7108, 88
    %v7380 = vpop.permute.xlu0 %7379
    %v7383 = vsel %vm424, %v7378, 0
    %7385 = vmatprep.subr.mxu0 0.0
    %7386 = vmatpush1.msra.mxu0 %v7380
    %7387 = vmatprep.subr.mxu0 0.0
    %7388 = vmatpush1.msra.mxu0 0.0
    %7389 = vmatprep.subr.mxu0 0.0
    %7390 = vmatpush1.msra.mxu0 0.0
    %7391 = vmatprep.subr.mxu0 0.0
    %7392 = vmatpush1.msra.mxu0 0.0
    %7393 = vmatprep.subr.mxu0 0.0
    %7394 = vmatpush1.msra.mxu0 0.0
    %7395 = vmatprep.subr.mxu0 0.0
    %7396 = vmatpush1.msra.mxu0 0.0
    %7397 = vmatprep.subr.mxu0 0.0
    %7398 = vmatpush1.msra.mxu0 0.0
    %7399 = vmatprep.subr.mxu0 0.0
    %7400 = vmatpush1.msra.mxu0 0.0
    %7401 = vmatprep.subr.mxu0 0.0
    %7402 = vmatpush1.msra.mxu0 0.0
    %7403 = vmatprep.subr.mxu0 0.0
    %7404 = vmatpush1.msra.mxu0 0.0
    %7405 = vmatprep.subr.mxu0 0.0
    %7406 = vmatpush1.msra.mxu0 0.0
    %7407 = vmatprep.subr.mxu0 0.0
    %7408 = vmatpush1.msra.mxu0 0.0
    %7409 = vmatprep.subr.mxu0 0.0
    %7410 = vmatpush1.msra.mxu0 0.0
    %7411 = vmatprep.subr.mxu0 0.0
    %7412 = vmatpush1.msra.mxu0 0.0
    %7413 = vmatprep.subr.mxu0 0.0
    %7414 = vmatpush1.msra.mxu0 0.0
    %7415 = vmatprep.subr.mxu0 0.0
    %7416 = vmatpush1.msra.mxu0 0.0
    %7417 = vmatprep.subr.mxu0 0.0
    %7418 = vmatpush1.msra.mxu0 0.0
    %7419 = vmatprep.subr.mxu0 0.0
    %7420 = vmatpush1.msra.mxu0 0.0
    %7421 = vmatprep.subr.mxu0 0.0
    %7422 = vmatpush1.msra.mxu0 0.0
    %7423 = vmatprep.subr.mxu0 0.0
    %7424 = vmatpush1.msra.mxu0 0.0
    %7425 = vmatprep.subr.mxu0 0.0
    %7426 = vmatpush1.msra.mxu0 0.0
    %7427 = vmatprep.subr.mxu0 0.0
    %7428 = vmatpush1.msra.mxu0 0.0
    %7429 = vmatprep.subr.mxu0 0.0
    %7430 = vmatpush1.msra.mxu0 0.0
    %7431 = vmatprep.subr.mxu0 0.0
    %7432 = vmatpush1.msra.mxu0 0.0
    %7433 = vmatprep.subr.mxu0 0.0
    %7434 = vmatpush1.msra.mxu0 0.0
    %7435 = vmatprep.subr.mxu0 0.0
    %7436 = vmatpush1.msra.mxu0 0.0
    %7437 = vmatprep.subr.mxu0 0.0
    %7438 = vmatpush1.msra.mxu0 0.0
    %7439 = vmatprep.subr.mxu0 0.0
    %7440 = vmatpush1.msra.mxu0 0.0
    %7441 = vmatprep.subr.mxu0 0.0
    %7442 = vmatpush1.msra.mxu0 0.0
    %7443 = vmatprep.subr.mxu0 0.0
    %7444 = vmatpush1.msra.mxu0 0.0
    %7445 = vmatprep.subr.mxu0 0.0
    %7446 = vmatpush1.msra.mxu0 0.0
    %7447 = vmatprep.subr.mxu0 0.0
    %7448 = vmatpush1.msra.mxu0 0.0
    %7449 = vmatprep.mubr.f32.mxu0 0.0
    %7450 = vmatmul.mubr.f32.gmra.mrb[0].mxu0 %v7383
    %v7451 = vpop.f32.mrb[0].mxu0
    %v7452 = vadd.f32 0.0, %v7451
    %v7453 = vpop.f32.mrb[0].mxu0
    %7454 = vdwg.mxu0
    %v7456 = vsel %vm424, %v7452, 0
    %7458 = vmatprep.subr.mxu0 0.0
    %7459 = vmatpush1.msra.mxu0 %v7118
    %7460 = vmatprep.subr.mxu0 0.0
    %7461 = vmatpush1.msra.mxu0 0.0
    %7462 = vmatprep.subr.mxu0 0.0
    %7463 = vmatpush1.msra.mxu0 0.0
    %7464 = vmatprep.subr.mxu0 0.0
    %7465 = vmatpush1.msra.mxu0 0.0
    %7466 = vmatprep.subr.mxu0 0.0
    %7467 = vmatpush1.msra.mxu0 0.0
    %7468 = vmatprep.subr.mxu0 0.0
    %7469 = vmatpush1.msra.mxu0 0.0
    %7470 = vmatprep.subr.mxu0 0.0
    %7471 = vmatpush1.msra.mxu0 0.0
    %7472 = vmatprep.subr.mxu0 0.0
    %7473 = vmatpush1.msra.mxu0 0.0
    %7474 = vmatprep.subr.mxu0 0.0
    %7475 = vmatpush1.msra.mxu0 0.0
    %7476 = vmatprep.subr.mxu0 0.0
    %7477 = vmatpush1.msra.mxu0 0.0
    %7478 = vmatprep.subr.mxu0 0.0
    %7479 = vmatpush1.msra.mxu0 0.0
    %7480 = vmatprep.subr.mxu0 0.0
    %7481 = vmatpush1.msra.mxu0 0.0
    %7482 = vmatprep.subr.mxu0 0.0
    %7483 = vmatpush1.msra.mxu0 0.0
    %7484 = vmatprep.subr.mxu0 0.0
    %7485 = vmatpush1.msra.mxu0 0.0
    %7486 = vmatprep.subr.mxu0 0.0
    %7487 = vmatpush1.msra.mxu0 0.0
    %7488 = vmatprep.subr.mxu0 0.0
    %7489 = vmatpush1.msra.mxu0 0.0
    %7490 = vmatprep.subr.mxu0 0.0
    %7491 = vmatpush1.msra.mxu0 0.0
    %7492 = vmatprep.subr.mxu0 0.0
    %7493 = vmatpush1.msra.mxu0 0.0
    %7494 = vmatprep.subr.mxu0 0.0
    %7495 = vmatpush1.msra.mxu0 0.0
    %7496 = vmatprep.subr.mxu0 0.0
    %7497 = vmatpush1.msra.mxu0 0.0
    %7498 = vmatprep.subr.mxu0 0.0
    %7499 = vmatpush1.msra.mxu0 0.0
    %7500 = vmatprep.subr.mxu0 0.0
    %7501 = vmatpush1.msra.mxu0 0.0
    %7502 = vmatprep.subr.mxu0 0.0
    %7503 = vmatpush1.msra.mxu0 0.0
    %7504 = vmatprep.subr.mxu0 0.0
    %7505 = vmatpush1.msra.mxu0 0.0
    %7506 = vmatprep.subr.mxu0 0.0
    %7507 = vmatpush1.msra.mxu0 0.0
    %7508 = vmatprep.subr.mxu0 0.0
    %7509 = vmatpush1.msra.mxu0 0.0
    %7510 = vmatprep.subr.mxu0 0.0
    %7511 = vmatpush1.msra.mxu0 0.0
    %7512 = vmatprep.subr.mxu0 0.0
    %7513 = vmatpush1.msra.mxu0 0.0
    %7514 = vmatprep.subr.mxu0 0.0
    %7515 = vmatpush1.msra.mxu0 0.0
    %7516 = vmatprep.subr.mxu0 0.0
    %7517 = vmatpush1.msra.mxu0 0.0
    %7518 = vmatprep.subr.mxu0 0.0
    %7519 = vmatpush1.msra.mxu0 0.0
    %7520 = vmatprep.subr.mxu0 0.0
    %7521 = vmatpush1.msra.mxu0 0.0
    %7522 = vmatprep.mubr.f32.mxu0 0.0
    %7523 = vmatmul.mubr.f32.gmra.mrb[0].mxu0 %v7456
    %v7524 = vpop.f32.mrb[0].mxu0
    %v7525 = vadd.f32 0.0, %v7524
    %v7526 = vpop.f32.mrb[0].mxu0
    %7527 = vdwg.mxu0
    %v7529 = vsel %vm424, %v7286, 0
    %7531 = vmatprep.subr.mxu0 0.0
    %7532 = vmatpush1.msra.mxu0 %v7117
    %7533 = vmatprep.subr.mxu0 0.0
    %7534 = vmatpush1.msra.mxu0 0.0
    %7535 = vmatprep.subr.mxu0 0.0
    %7536 = vmatpush1.msra.mxu0 0.0
    %7537 = vmatprep.subr.mxu0 0.0
    %7538 = vmatpush1.msra.mxu0 0.0
    %7539 = vmatprep.subr.mxu0 0.0
    %7540 = vmatpush1.msra.mxu0 0.0
    %7541 = vmatprep.subr.mxu0 0.0
    %7542 = vmatpush1.msra.mxu0 0.0
    %7543 = vmatprep.subr.mxu0 0.0
    %7544 = vmatpush1.msra.mxu0 0.0
    %7545 = vmatprep.subr.mxu0 0.0
    %7546 = vmatpush1.msra.mxu0 0.0
    %7547 = vmatprep.subr.mxu0 0.0
    %7548 = vmatpush1.msra.mxu0 0.0
    %7549 = vmatprep.subr.mxu0 0.0
    %7550 = vmatpush1.msra.mxu0 0.0
    %7551 = vmatprep.subr.mxu0 0.0
    %7552 = vmatpush1.msra.mxu0 0.0
    %7553 = vmatprep.subr.mxu0 0.0
    %7554 = vmatpush1.msra.mxu0 0.0
    %7555 = vmatprep.subr.mxu0 0.0
    %7556 = vmatpush1.msra.mxu0 0.0
    %7557 = vmatprep.subr.mxu0 0.0
    %7558 = vmatpush1.msra.mxu0 0.0
    %7559 = vmatprep.subr.mxu0 0.0
    %7560 = vmatpush1.msra.mxu0 0.0
    %7561 = vmatprep.subr.mxu0 0.0
    %7562 = vmatpush1.msra.mxu0 0.0
    %7563 = vmatprep.subr.mxu0 0.0
    %7564 = vmatpush1.msra.mxu0 0.0
    %7565 = vmatprep.subr.mxu0 0.0
    %7566 = vmatpush1.msra.mxu0 0.0
    %7567 = vmatprep.subr.mxu0 0.0
    %7568 = vmatpush1.msra.mxu0 0.0
    %7569 = vmatprep.subr.mxu0 0.0
    %7570 = vmatpush1.msra.mxu0 0.0
    %7571 = vmatprep.subr.mxu0 0.0
    %7572 = vmatpush1.msra.mxu0 0.0
    %7573 = vmatprep.subr.mxu0 0.0
    %7574 = vmatpush1.msra.mxu0 0.0
    %7575 = vmatprep.subr.mxu0 0.0
    %7576 = vmatpush1.msra.mxu0 0.0
    %7577 = vmatprep.subr.mxu0 0.0
    %7578 = vmatpush1.msra.mxu0 0.0
    %7579 = vmatprep.subr.mxu0 0.0
    %7580 = vmatpush1.msra.mxu0 0.0
    %7581 = vmatprep.subr.mxu0 0.0
    %7582 = vmatpush1.msra.mxu0 0.0
    %7583 = vmatprep.subr.mxu0 0.0
    %7584 = vmatpush1.msra.mxu0 0.0
    %7585 = vmatprep.subr.mxu0 0.0
    %7586 = vmatpush1.msra.mxu0 0.0
    %7587 = vmatprep.subr.mxu0 0.0
    %7588 = vmatpush1.msra.mxu0 0.0
    %7589 = vmatprep.subr.mxu0 0.0
    %7590 = vmatpush1.msra.mxu0 0.0
    %7591 = vmatprep.subr.mxu0 0.0
    %7592 = vmatpush1.msra.mxu0 0.0
    %7593 = vmatprep.subr.mxu0 0.0
    %7594 = vmatpush1.msra.mxu0 0.0
    %7595 = vmatprep.mubr.f32.mxu0 0.0
    %7596 = vmatmul.mubr.f32.gmra.mrb[0].mxu0 %v7529
    %v7597 = vpop.f32.mrb[0].mxu0
    %v7598 = vadd.f32 %v7525, %v7597
    %v7599 = vpop.f32.mrb[0].mxu0
    %7600 = vdwg.mxu0
    %7601 = vrot.lane.b32.xlu0 %v7123, 112
    %v7602 = vpop.permute.xlu0 %7601
    %7603 = vrot.lane.b32.xlu0 %v7108, 112
    %v7604 = vpop.permute.xlu0 %7603
    %v7605 = vsel %vm424, %v7602, 0
    %v7607 = vsel %vm424, %v7604, 0
    %7609 = vmatprep.subr.mxu0 0.0
    %7610 = vmatpush1.xpose.msra.mxu0 %v7607
    %7611 = vmatprep.subr.mxu0 0.0
    %7612 = vmatpush1.xpose.msra.mxu0 0.0
    %7613 = vmatprep.subr.mxu0 0.0
    %7614 = vmatpush1.xpose.msra.mxu0 0.0
    %7615 = vmatprep.subr.mxu0 0.0
    %7616 = vmatpush1.xpose.msra.mxu0 0.0
    %7617 = vmatprep.subr.mxu0 0.0
    %7618 = vmatpush1.xpose.msra.mxu0 0.0
    %7619 = vmatprep.subr.mxu0 0.0
    %7620 = vmatpush1.xpose.msra.mxu0 0.0
    %7621 = vmatprep.subr.mxu0 0.0
    %7622 = vmatpush1.xpose.msra.mxu0 0.0
    %7623 = vmatprep.subr.mxu0 0.0
    %7624 = vmatpush1.xpose.msra.mxu0 0.0
    %7625 = vmatprep.subr.mxu0 0.0
    %7626 = vmatpush1.xpose.msra.mxu0 0.0
    %7627 = vmatprep.subr.mxu0 0.0
    %7628 = vmatpush1.xpose.msra.mxu0 0.0
    %7629 = vmatprep.subr.mxu0 0.0
    %7630 = vmatpush1.xpose.msra.mxu0 0.0
    %7631 = vmatprep.subr.mxu0 0.0
    %7632 = vmatpush1.xpose.msra.mxu0 0.0
    %7633 = vmatprep.subr.mxu0 0.0
    %7634 = vmatpush1.xpose.msra.mxu0 0.0
    %7635 = vmatprep.subr.mxu0 0.0
    %7636 = vmatpush1.xpose.msra.mxu0 0.0
    %7637 = vmatprep.subr.mxu0 0.0
    %7638 = vmatpush1.xpose.msra.mxu0 0.0
    %7639 = vmatprep.subr.mxu0 0.0
    %7640 = vmatpush1.xpose.msra.mxu0 0.0
    %7641 = vmatprep.subr.mxu0 0.0
    %7642 = vmatpush1.xpose.msra.mxu0 0.0
    %7643 = vmatprep.subr.mxu0 0.0
    %7644 = vmatpush1.xpose.msra.mxu0 0.0
    %7645 = vmatprep.subr.mxu0 0.0
    %7646 = vmatpush1.xpose.msra.mxu0 0.0
    %7647 = vmatprep.subr.mxu0 0.0
    %7648 = vmatpush1.xpose.msra.mxu0 0.0
    %7649 = vmatprep.subr.mxu0 0.0
    %7650 = vmatpush1.xpose.msra.mxu0 0.0
    %7651 = vmatprep.subr.mxu0 0.0
    %7652 = vmatpush1.xpose.msra.mxu0 0.0
    %7653 = vmatprep.subr.mxu0 0.0
    %7654 = vmatpush1.xpose.msra.mxu0 0.0
    %7655 = vmatprep.subr.mxu0 0.0
    %7656 = vmatpush1.xpose.msra.mxu0 0.0
    %7657 = vmatprep.subr.mxu0 0.0
    %7658 = vmatpush1.xpose.msra.mxu0 0.0
    %7659 = vmatprep.subr.mxu0 0.0
    %7660 = vmatpush1.xpose.msra.mxu0 0.0
    %7661 = vmatprep.subr.mxu0 0.0
    %7662 = vmatpush1.xpose.msra.mxu0 0.0
    %7663 = vmatprep.subr.mxu0 0.0
    %7664 = vmatpush1.xpose.msra.mxu0 0.0
    %7665 = vmatprep.subr.mxu0 0.0
    %7666 = vmatpush1.xpose.msra.mxu0 0.0
    %7667 = vmatprep.subr.mxu0 0.0
    %7668 = vmatpush1.xpose.msra.mxu0 0.0
    %7669 = vmatprep.subr.mxu0 0.0
    %7670 = vmatpush1.xpose.msra.mxu0 0.0
    %7671 = vmatprep.subr.mxu0 0.0
    %7672 = vmatpush1.xpose.msra.mxu0 0.0
    %7673 = vmatprep.mubr.f32.mxu0 0.0
    %7674 = vmatmul.mubr.f32.gmra.mrb[0].mxu0 %v7605
    %v7675 = vpop.f32.mrb[0].mxu0
    %v7676 = vadd.f32 0.0, %v7675
    %v7677 = vpop.f32.mrb[0].mxu0
    %7678 = vdwg.mxu0
    %v7679 = vsel %vm2680, -1e+09, %v7676
    %v7680 = vsel %vm424, %v7679, -inf
    %7681 = vmax.xlane.f32.xlu0 %v7680
    %v7682 = vpop.xlane.xlu0 %7681
    %v7683 = vsub.f32 %v7679, %v7682
    %v7684 = vmul.f32 %v7683, 1.442695
    %v7685 = vpow.pop %v7684
    %v7686 = vsel %vm424, %v7685, 0.0
    %7687 = vadd.xlane.f32.xlu0 %v7686
    %v7688 = vpop.xlane.xlu0 %7687
    %v7689 = vrcp.pop %v7688
    %v7690 = vmul.f32 %v7685, %v7689
    %7691 = vrot.lane.b32.xlu0 %v7108, 80
    %v7692 = vpop.permute.xlu0 %7691
    %v7695 = vsel %vm424, %v7690, 0
    %7697 = vmatprep.subr.mxu0 0.0
    %7698 = vmatpush1.msra.mxu0 %v7692
    %7699 = vmatprep.subr.mxu0 0.0
    %7700 = vmatpush1.msra.mxu0 0.0
    %7701 = vmatprep.subr.mxu0 0.0
    %7702 = vmatpush1.msra.mxu0 0.0
    %7703 = vmatprep.subr.mxu0 0.0
    %7704 = vmatpush1.msra.mxu0 0.0
    %7705 = vmatprep.subr.mxu0 0.0
    %7706 = vmatpush1.msra.mxu0 0.0
    %7707 = vmatprep.subr.mxu0 0.0
    %7708 = vmatpush1.msra.mxu0 0.0
    %7709 = vmatprep.subr.mxu0 0.0
    %7710 = vmatpush1.msra.mxu0 0.0
    %7711 = vmatprep.subr.mxu0 0.0
    %7712 = vmatpush1.msra.mxu0 0.0
    %7713 = vmatprep.subr.mxu0 0.0
    %7714 = vmatpush1.msra.mxu0 0.0
    %7715 = vmatprep.subr.mxu0 0.0
    %7716 = vmatpush1.msra.mxu0 0.0
    %7717 = vmatprep.subr.mxu0 0.0
    %7718 = vmatpush1.msra.mxu0 0.0
    %7719 = vmatprep.subr.mxu0 0.0
    %7720 = vmatpush1.msra.mxu0 0.0
    %7721 = vmatprep.subr.mxu0 0.0
    %7722 = vmatpush1.msra.mxu0 0.0
    %7723 = vmatprep.subr.mxu0 0.0
    %7724 = vmatpush1.msra.mxu0 0.0
    %7725 = vmatprep.subr.mxu0 0.0
    %7726 = vmatpush1.msra.mxu0 0.0
    %7727 = vmatprep.subr.mxu0 0.0
    %7728 = vmatpush1.msra.mxu0 0.0
    %7729 = vmatprep.subr.mxu0 0.0
    %7730 = vmatpush1.msra.mxu0 0.0
    %7731 = vmatprep.subr.mxu0 0.0
    %7732 = vmatpush1.msra.mxu0 0.0
    %7733 = vmatprep.subr.mxu0 0.0
    %7734 = vmatpush1.msra.mxu0 0.0
    %7735 = vmatprep.subr.mxu0 0.0
    %7736 = vmatpush1.msra.mxu0 0.0
    %7737 = vmatprep.subr.mxu0 0.0
    %7738 = vmatpush1.msra.mxu0 0.0
    %7739 = vmatprep.subr.mxu0 0.0
    %7740 = vmatpush1.msra.mxu0 0.0
    %7741 = vmatprep.subr.mxu0 0.0
    %7742 = vmatpush1.msra.mxu0 0.0
    %7743 = vmatprep.subr.mxu0 0.0
    %7744 = vmatpush1.msra.mxu0 0.0
    %7745 = vmatprep.subr.mxu0 0.0
    %7746 = vmatpush1.msra.mxu0 0.0
    %7747 = vmatprep.subr.mxu0 0.0
    %7748 = vmatpush1.msra.mxu0 0.0
    %7749 = vmatprep.subr.mxu0 0.0
    %7750 = vmatpush1.msra.mxu0 0.0
    %7751 = vmatprep.subr.mxu0 0.0
    %7752 = vmatpush1.msra.mxu0 0.0
    %7753 = vmatprep.subr.mxu0 0.0
    %7754 = vmatpush1.msra.mxu0 0.0
    %7755 = vmatprep.subr.mxu0 0.0
    %7756 = vmatpush1.msra.mxu0 0.0
    %7757 = vmatprep.subr.mxu0 0.0
    %7758 = vmatpush1.msra.mxu0 0.0
    %7759 = vmatprep.subr.mxu0 0.0
    %7760 = vmatpush1.msra.mxu0 0.0
    %7761 = vmatprep.mubr.f32.mxu0 0.0
    %7762 = vmatmul.mubr.f32.gmra.mrb[0].mxu0 %v7695
    %v7763 = vpop.f32.mrb[0].mxu0
    %v7764 = vadd.f32 0.0, %v7763
    %v7765 = vpop.f32.mrb[0].mxu0
    %7766 = vdwg.mxu0
    %v7768 = vsel %vm424, %v7764, 0
    %7770 = vmatprep.subr.mxu0 0.0
    %7771 = vmatpush1.msra.mxu0 %v7119
    %7772 = vmatprep.subr.mxu0 0.0
    %7773 = vmatpush1.msra.mxu0 0.0
    %7774 = vmatprep.subr.mxu0 0.0
    %7775 = vmatpush1.msra.mxu0 0.0
    %7776 = vmatprep.subr.mxu0 0.0
    %7777 = vmatpush1.msra.mxu0 0.0
    %7778 = vmatprep.subr.mxu0 0.0
    %7779 = vmatpush1.msra.mxu0 0.0
    %7780 = vmatprep.subr.mxu0 0.0
    %7781 = vmatpush1.msra.mxu0 0.0
    %7782 = vmatprep.subr.mxu0 0.0
    %7783 = vmatpush1.msra.mxu0 0.0
    %7784 = vmatprep.subr.mxu0 0.0
    %7785 = vmatpush1.msra.mxu0 0.0
    %7786 = vmatprep.subr.mxu0 0.0
    %7787 = vmatpush1.msra.mxu0 0.0
    %7788 = vmatprep.subr.mxu0 0.0
    %7789 = vmatpush1.msra.mxu0 0.0
    %7790 = vmatprep.subr.mxu0 0.0
    %7791 = vmatpush1.msra.mxu0 0.0
    %7792 = vmatprep.subr.mxu0 0.0
    %7793 = vmatpush1.msra.mxu0 0.0
    %7794 = vmatprep.subr.mxu0 0.0
    %7795 = vmatpush1.msra.mxu0 0.0
    %7796 = vmatprep.subr.mxu0 0.0
    %7797 = vmatpush1.msra.mxu0 0.0
    %7798 = vmatprep.subr.mxu0 0.0
    %7799 = vmatpush1.msra.mxu0 0.0
    %7800 = vmatprep.subr.mxu0 0.0
    %7801 = vmatpush1.msra.mxu0 0.0
    %7802 = vmatprep.subr.mxu0 0.0
    %7803 = vmatpush1.msra.mxu0 0.0
    %7804 = vmatprep.subr.mxu0 0.0
    %7805 = vmatpush1.msra.mxu0 0.0
    %7806 = vmatprep.subr.mxu0 0.0
    %7807 = vmatpush1.msra.mxu0 0.0
    %7808 = vmatprep.subr.mxu0 0.0
    %7809 = vmatpush1.msra.mxu0 0.0
    %7810 = vmatprep.subr.mxu0 0.0
    %7811 = vmatpush1.msra.mxu0 0.0
    %7812 = vmatprep.subr.mxu0 0.0
    %7813 = vmatpush1.msra.mxu0 0.0
    %7814 = vmatprep.subr.mxu0 0.0
    %7815 = vmatpush1.msra.mxu0 0.0
    %7816 = vmatprep.subr.mxu0 0.0
    %7817 = vmatpush1.msra.mxu0 0.0
    %7818 = vmatprep.subr.mxu0 0.0
    %7819 = vmatpush1.msra.mxu0 0.0
    %7820 = vmatprep.subr.mxu0 0.0
    %7821 = vmatpush1.msra.mxu0 0.0
    %7822 = vmatprep.subr.mxu0 0.0
    %7823 = vmatpush1.msra.mxu0 0.0
    %7824 = vmatprep.subr.mxu0 0.0
    %7825 = vmatpush1.msra.mxu0 0.0
    %7826 = vmatprep.subr.mxu0 0.0
    %7827 = vmatpush1.msra.mxu0 0.0
    %7828 = vmatprep.subr.mxu0 0.0
    %7829 = vmatpush1.msra.mxu0 0.0
    %7830 = vmatprep.subr.mxu0 0.0
    %7831 = vmatpush1.msra.mxu0 0.0
    %7832 = vmatprep.subr.mxu0 0.0
    %7833 = vmatpush1.msra.mxu0 0.0
    %7834 = vmatprep.mubr.f32.mxu0 0.0
    %7835 = vmatmul.mubr.f32.gmra.mrb[0].mxu0 %v7768
    %v7836 = vpop.f32.mrb[0].mxu0
    %v7837 = vadd.f32 0.0, %v7836
    %v7838 = vpop.f32.mrb[0].mxu0
    %7839 = vdwg.mxu0
    %v7840 = vadd.f32 %v7598, %v7837
    %7841 = vrot.lane.b32.xlu0 %v7123, 104
    %v7842 = vpop.permute.xlu0 %7841
    %7843 = vrot.lane.b32.xlu0 %v7108, 104
    %v7844 = vpop.permute.xlu0 %7843
    %v7845 = vsel %vm424, %v7842, 0
    %v7847 = vsel %vm424, %v7844, 0
    %7849 = vmatprep.subr.mxu0 0.0
    %7850 = vmatpush1.xpose.msra.mxu0 %v7847
    %7851 = vmatprep.subr.mxu0 0.0
    %7852 = vmatpush1.xpose.msra.mxu0 0.0
    %7853 = vmatprep.subr.mxu0 0.0
    %7854 = vmatpush1.xpose.msra.mxu0 0.0
    %7855 = vmatprep.subr.mxu0 0.0
    %7856 = vmatpush1.xpose.msra.mxu0 0.0
    %7857 = vmatprep.subr.mxu0 0.0
    %7858 = vmatpush1.xpose.msra.mxu0 0.0
    %7859 = vmatprep.subr.mxu0 0.0
    %7860 = vmatpush1.xpose.msra.mxu0 0.0
    %7861 = vmatprep.subr.mxu0 0.0
    %7862 = vmatpush1.xpose.msra.mxu0 0.0
    %7863 = vmatprep.subr.mxu0 0.0
    %7864 = vmatpush1.xpose.msra.mxu0 0.0
    %7865 = vmatprep.subr.mxu0 0.0
    %7866 = vmatpush1.xpose.msra.mxu0 0.0
    %7867 = vmatprep.subr.mxu0 0.0
    %7868 = vmatpush1.xpose.msra.mxu0 0.0
    %7869 = vmatprep.subr.mxu0 0.0
    %7870 = vmatpush1.xpose.msra.mxu0 0.0
    %7871 = vmatprep.subr.mxu0 0.0
    %7872 = vmatpush1.xpose.msra.mxu0 0.0
    %7873 = vmatprep.subr.mxu0 0.0
    %7874 = vmatpush1.xpose.msra.mxu0 0.0
    %7875 = vmatprep.subr.mxu0 0.0
    %7876 = vmatpush1.xpose.msra.mxu0 0.0
    %7877 = vmatprep.subr.mxu0 0.0
    %7878 = vmatpush1.xpose.msra.mxu0 0.0
    %7879 = vmatprep.subr.mxu0 0.0
    %7880 = vmatpush1.xpose.msra.mxu0 0.0
    %7881 = vmatprep.subr.mxu0 0.0
    %7882 = vmatpush1.xpose.msra.mxu0 0.0
    %7883 = vmatprep.subr.mxu0 0.0
    %7884 = vmatpush1.xpose.msra.mxu0 0.0
    %7885 = vmatprep.subr.mxu0 0.0
    %7886 = vmatpush1.xpose.msra.mxu0 0.0
    %7887 = vmatprep.subr.mxu0 0.0
    %7888 = vmatpush1.xpose.msra.mxu0 0.0
    %7889 = vmatprep.subr.mxu0 0.0
    %7890 = vmatpush1.xpose.msra.mxu0 0.0
    %7891 = vmatprep.subr.mxu0 0.0
    %7892 = vmatpush1.xpose.msra.mxu0 0.0
    %7893 = vmatprep.subr.mxu0 0.0
    %7894 = vmatpush1.xpose.msra.mxu0 0.0
    %7895 = vmatprep.subr.mxu0 0.0
    %7896 = vmatpush1.xpose.msra.mxu0 0.0
    %7897 = vmatprep.subr.mxu0 0.0
    %7898 = vmatpush1.xpose.msra.mxu0 0.0
    %7899 = vmatprep.subr.mxu0 0.0
    %7900 = vmatpush1.xpose.msra.mxu0 0.0
    %7901 = vmatprep.subr.mxu0 0.0
    %7902 = vmatpush1.xpose.msra.mxu0 0.0
    %7903 = vmatprep.subr.mxu0 0.0
    %7904 = vmatpush1.xpose.msra.mxu0 0.0
    %7905 = vmatprep.subr.mxu0 0.0
    %7906 = vmatpush1.xpose.msra.mxu0 0.0
    %7907 = vmatprep.subr.mxu0 0.0
    %7908 = vmatpush1.xpose.msra.mxu0 0.0
    %7909 = vmatprep.subr.mxu0 0.0
    %7910 = vmatpush1.xpose.msra.mxu0 0.0
    %7911 = vmatprep.subr.mxu0 0.0
    %7912 = vmatpush1.xpose.msra.mxu0 0.0
    %7913 = vmatprep.mubr.f32.mxu0 0.0
    %7914 = vmatmul.mubr.f32.gmra.mrb[0].mxu0 %v7845
    %v7915 = vpop.f32.mrb[0].mxu0
    %v7916 = vadd.f32 0.0, %v7915
    %v7917 = vpop.f32.mrb[0].mxu0
    %7918 = vdwg.mxu0
    %v7919 = vsel %vm2680, -1e+09, %v7916
    %v7920 = vsel %vm424, %v7919, -inf
    %7921 = vmax.xlane.f32.xlu0 %v7920
    %v7922 = vpop.xlane.xlu0 %7921
    %v7923 = vsub.f32 %v7919, %v7922
    %v7924 = vmul.f32 %v7923, 1.442695
    %v7925 = vpow.pop %v7924
    %v7926 = vsel %vm424, %v7925, 0.0
    %7927 = vadd.xlane.f32.xlu0 %v7926
    %v7928 = vpop.xlane.xlu0 %7927
    %v7929 = vrcp.pop %v7928
    %v7930 = vmul.f32 %v7925, %v7929
    %7931 = vrot.lane.b32.xlu0 %v7108, 72
    %v7932 = vpop.permute.xlu0 %7931
    %v7935 = vsel %vm424, %v7930, 0
    %7937 = vmatprep.subr.mxu0 0.0
    %7938 = vmatpush1.msra.mxu0 %v7932
    %7939 = vmatprep.subr.mxu0 0.0
    %7940 = vmatpush1.msra.mxu0 0.0
    %7941 = vmatprep.subr.mxu0 0.0
    %7942 = vmatpush1.msra.mxu0 0.0
    %7943 = vmatprep.subr.mxu0 0.0
    %7944 = vmatpush1.msra.mxu0 0.0
    %7945 = vmatprep.subr.mxu0 0.0
    %7946 = vmatpush1.msra.mxu0 0.0
    %7947 = vmatprep.subr.mxu0 0.0
    %7948 = vmatpush1.msra.mxu0 0.0
    %7949 = vmatprep.subr.mxu0 0.0
    %7950 = vmatpush1.msra.mxu0 0.0
    %7951 = vmatprep.subr.mxu0 0.0
    %7952 = vmatpush1.msra.mxu0 0.0
    %7953 = vmatprep.subr.mxu0 0.0
    %7954 = vmatpush1.msra.mxu0 0.0
    %7955 = vmatprep.subr.mxu0 0.0
    %7956 = vmatpush1.msra.mxu0 0.0
    %7957 = vmatprep.subr.mxu0 0.0
    %7958 = vmatpush1.msra.mxu0 0.0
    %7959 = vmatprep.subr.mxu0 0.0
    %7960 = vmatpush1.msra.mxu0 0.0
    %7961 = vmatprep.subr.mxu0 0.0
    %7962 = vmatpush1.msra.mxu0 0.0
    %7963 = vmatprep.subr.mxu0 0.0
    %7964 = vmatpush1.msra.mxu0 0.0
    %7965 = vmatprep.subr.mxu0 0.0
    %7966 = vmatpush1.msra.mxu0 0.0
    %7967 = vmatprep.subr.mxu0 0.0
    %7968 = vmatpush1.msra.mxu0 0.0
    %7969 = vmatprep.subr.mxu0 0.0
    %7970 = vmatpush1.msra.mxu0 0.0
    %7971 = vmatprep.subr.mxu0 0.0
    %7972 = vmatpush1.msra.mxu0 0.0
    %7973 = vmatprep.subr.mxu0 0.0
    %7974 = vmatpush1.msra.mxu0 0.0
    %7975 = vmatprep.subr.mxu0 0.0
    %7976 = vmatpush1.msra.mxu0 0.0
    %7977 = vmatprep.subr.mxu0 0.0
    %7978 = vmatpush1.msra.mxu0 0.0
    %7979 = vmatprep.subr.mxu0 0.0
    %7980 = vmatpush1.msra.mxu0 0.0
    %7981 = vmatprep.subr.mxu0 0.0
    %7982 = vmatpush1.msra.mxu0 0.0
    %7983 = vmatprep.subr.mxu0 0.0
    %7984 = vmatpush1.msra.mxu0 0.0
    %7985 = vmatprep.subr.mxu0 0.0
    %7986 = vmatpush1.msra.mxu0 0.0
    %7987 = vmatprep.subr.mxu0 0.0
    %7988 = vmatpush1.msra.mxu0 0.0
    %7989 = vmatprep.subr.mxu0 0.0
    %7990 = vmatpush1.msra.mxu0 0.0
    %7991 = vmatprep.subr.mxu0 0.0
    %7992 = vmatpush1.msra.mxu0 0.0
    %7993 = vmatprep.subr.mxu0 0.0
    %7994 = vmatpush1.msra.mxu0 0.0
    %7995 = vmatprep.subr.mxu0 0.0
    %7996 = vmatpush1.msra.mxu0 0.0
    %7997 = vmatprep.subr.mxu0 0.0
    %7998 = vmatpush1.msra.mxu0 0.0
    %7999 = vmatprep.subr.mxu0 0.0
    %8000 = vmatpush1.msra.mxu0 0.0
    %8001 = vmatprep.mubr.f32.mxu0 0.0
    %8002 = vmatmul.mubr.f32.gmra.mrb[0].mxu0 %v7935
    %v8003 = vpop.f32.mrb[0].mxu0
    %v8004 = vadd.f32 0.0, %v8003
    %v8005 = vpop.f32.mrb[0].mxu0
    %8006 = vdwg.mxu0
    %v8008 = vsel %vm424, %v8004, 0
    %8010 = vmatprep.subr.mxu0 0.0
    %8011 = vmatpush1.msra.mxu0 %v7120
    %8012 = vmatprep.subr.mxu0 0.0
    %8013 = vmatpush1.msra.mxu0 0.0
    %8014 = vmatprep.subr.mxu0 0.0
    %8015 = vmatpush1.msra.mxu0 0.0
    %8016 = vmatprep.subr.mxu0 0.0
    %8017 = vmatpush1.msra.mxu0 0.0
    %8018 = vmatprep.subr.mxu0 0.0
    %8019 = vmatpush1.msra.mxu0 0.0
    %8020 = vmatprep.subr.mxu0 0.0
    %8021 = vmatpush1.msra.mxu0 0.0
    %8022 = vmatprep.subr.mxu0 0.0
    %8023 = vmatpush1.msra.mxu0 0.0
    %8024 = vmatprep.subr.mxu0 0.0
    %8025 = vmatpush1.msra.mxu0 0.0
    %8026 = vmatprep.subr.mxu0 0.0
    %8027 = vmatpush1.msra.mxu0 0.0
    %8028 = vmatprep.subr.mxu0 0.0
    %8029 = vmatpush1.msra.mxu0 0.0
    %8030 = vmatprep.subr.mxu0 0.0
    %8031 = vmatpush1.msra.mxu0 0.0
    %8032 = vmatprep.subr.mxu0 0.0
    %8033 = vmatpush1.msra.mxu0 0.0
    %8034 = vmatprep.subr.mxu0 0.0
    %8035 = vmatpush1.msra.mxu0 0.0
    %8036 = vmatprep.subr.mxu0 0.0
    %8037 = vmatpush1.msra.mxu0 0.0
    %8038 = vmatprep.subr.mxu0 0.0
    %8039 = vmatpush1.msra.mxu0 0.0
    %8040 = vmatprep.subr.mxu0 0.0
    %8041 = vmatpush1.msra.mxu0 0.0
    %8042 = vmatprep.subr.mxu0 0.0
    %8043 = vmatpush1.msra.mxu0 0.0
    %8044 = vmatprep.subr.mxu0 0.0
    %8045 = vmatpush1.msra.mxu0 0.0
    %8046 = vmatprep.subr.mxu0 0.0
    %8047 = vmatpush1.msra.mxu0 0.0
    %8048 = vmatprep.subr.mxu0 0.0
    %8049 = vmatpush1.msra.mxu0 0.0
    %8050 = vmatprep.subr.mxu0 0.0
    %8051 = vmatpush1.msra.mxu0 0.0
    %8052 = vmatprep.subr.mxu0 0.0
    %8053 = vmatpush1.msra.mxu0 0.0
    %8054 = vmatprep.subr.mxu0 0.0
    %8055 = vmatpush1.msra.mxu0 0.0
    %8056 = vmatprep.subr.mxu0 0.0
    %8057 = vmatpush1.msra.mxu0 0.0
    %8058 = vmatprep.subr.mxu0 0.0
    %8059 = vmatpush1.msra.mxu0 0.0
    %8060 = vmatprep.subr.mxu0 0.0
    %8061 = vmatpush1.msra.mxu0 0.0
    %8062 = vmatprep.subr.mxu0 0.0
    %8063 = vmatpush1.msra.mxu0 0.0
    %8064 = vmatprep.subr.mxu0 0.0
    %8065 = vmatpush1.msra.mxu0 0.0
    %8066 = vmatprep.subr.mxu0 0.0
    %8067 = vmatpush1.msra.mxu0 0.0
    %8068 = vmatprep.subr.mxu0 0.0
    %8069 = vmatpush1.msra.mxu0 0.0
    %8070 = vmatprep.subr.mxu0 0.0
    %8071 = vmatpush1.msra.mxu0 0.0
    %8072 = vmatprep.subr.mxu0 0.0
    %8073 = vmatpush1.msra.mxu0 0.0
    %8074 = vmatprep.mubr.f32.mxu0 0.0
    %8075 = vmatmul.mubr.f32.gmra.mrb[0].mxu0 %v8008
    %v8076 = vpop.f32.mrb[0].mxu0
    %v8077 = vadd.f32 0.0, %v8076
    %v8078 = vpop.f32.mrb[0].mxu0
    %8079 = vdwg.mxu0
    %v8080 = vadd.f32 %v7840, %v8077
    %v8082 = vlaneseq
    %v8083 = vshrl.u32 %v8082, 7
    %v8084 = vsub.s32 0, %v8083
    %v8085 = vrot.slane %v7122, %v8084
    %v8087 = vadd.f32 %v8080, %v8085
    %v8089 = vsel %vm424, %v7124, 0
    %v8092 = vsel %vm424, %v7113, 0
    %8094 = vmatprep.subr.mxu0 0.0
    %8095 = vmatpush1.xpose.msra.mxu0 %v8092
    %8096 = vmatprep.subr.mxu0 0.0
    %8097 = vmatpush1.xpose.msra.mxu0 0.0
    %8098 = vmatprep.subr.mxu0 0.0
    %8099 = vmatpush1.xpose.msra.mxu0 0.0
    %8100 = vmatprep.subr.mxu0 0.0
    %8101 = vmatpush1.xpose.msra.mxu0 0.0
    %8102 = vmatprep.subr.mxu0 0.0
    %8103 = vmatpush1.xpose.msra.mxu0 0.0
    %8104 = vmatprep.subr.mxu0 0.0
    %8105 = vmatpush1.xpose.msra.mxu0 0.0
    %8106 = vmatprep.subr.mxu0 0.0
    %8107 = vmatpush1.xpose.msra.mxu0 0.0
    %8108 = vmatprep.subr.mxu0 0.0
    %8109 = vmatpush1.xpose.msra.mxu0 0.0
    %8110 = vmatprep.subr.mxu0 0.0
    %8111 = vmatpush1.xpose.msra.mxu0 0.0
    %8112 = vmatprep.subr.mxu0 0.0
    %8113 = vmatpush1.xpose.msra.mxu0 0.0
    %8114 = vmatprep.subr.mxu0 0.0
    %8115 = vmatpush1.xpose.msra.mxu0 0.0
    %8116 = vmatprep.subr.mxu0 0.0
    %8117 = vmatpush1.xpose.msra.mxu0 0.0
    %8118 = vmatprep.subr.mxu0 0.0
    %8119 = vmatpush1.xpose.msra.mxu0 0.0
    %8120 = vmatprep.subr.mxu0 0.0
    %8121 = vmatpush1.xpose.msra.mxu0 0.0
    %8122 = vmatprep.subr.mxu0 0.0
    %8123 = vmatpush1.xpose.msra.mxu0 0.0
    %8124 = vmatprep.subr.mxu0 0.0
    %8125 = vmatpush1.xpose.msra.mxu0 0.0
    %8126 = vmatprep.subr.mxu0 0.0
    %8127 = vmatpush1.xpose.msra.mxu0 0.0
    %8128 = vmatprep.subr.mxu0 0.0
    %8129 = vmatpush1.xpose.msra.mxu0 0.0
    %8130 = vmatprep.subr.mxu0 0.0
    %8131 = vmatpush1.xpose.msra.mxu0 0.0
    %8132 = vmatprep.subr.mxu0 0.0
    %8133 = vmatpush1.xpose.msra.mxu0 0.0
    %8134 = vmatprep.subr.mxu0 0.0
    %8135 = vmatpush1.xpose.msra.mxu0 0.0
    %8136 = vmatprep.subr.mxu0 0.0
    %8137 = vmatpush1.xpose.msra.mxu0 0.0
    %8138 = vmatprep.subr.mxu0 0.0
    %8139 = vmatpush1.xpose.msra.mxu0 0.0
    %8140 = vmatprep.subr.mxu0 0.0
    %8141 = vmatpush1.xpose.msra.mxu0 0.0
    %8142 = vmatprep.subr.mxu0 0.0
    %8143 = vmatpush1.xpose.msra.mxu0 0.0
    %8144 = vmatprep.subr.mxu0 0.0
    %8145 = vmatpush1.xpose.msra.mxu0 0.0
    %8146 = vmatprep.subr.mxu0 0.0
    %8147 = vmatpush1.xpose.msra.mxu0 0.0
    %8148 = vmatprep.subr.mxu0 0.0
    %8149 = vmatpush1.xpose.msra.mxu0 0.0
    %8150 = vmatprep.subr.mxu0 0.0
    %8151 = vmatpush1.xpose.msra.mxu0 0.0
    %8152 = vmatprep.subr.mxu0 0.0
    %8153 = vmatpush1.xpose.msra.mxu0 0.0
    %8154 = vmatprep.subr.mxu0 0.0
    %8155 = vmatpush1.xpose.msra.mxu0 0.0
    %8156 = vmatprep.subr.mxu0 0.0
    %8157 = vmatpush1.xpose.msra.mxu0 0.0
    %8158 = vmatprep.mubr.f32.mxu0 0.0
    %8159 = vmatmul.mubr.f32.gmra.mrb[0].mxu0 %v8089
    %v8160 = vpop.f32.mrb[0].mxu0
    %v8161 = vadd.f32 0.0, %v8160
    %v8162 = vpop.f32.mrb[0].mxu0
    %8163 = vdwg.mxu0
    %v8164 = vsel %vm3646, -1e+09, %v8161
    %v8165 = vsel %vm424, %v8164, -inf
    %8166 = vmax.xlane.f32.xlu0 %v8165
    %v8167 = vpop.xlane.xlu0 %8166
    %v8168 = vsub.f32 %v8164, %v8167
    %v8169 = vmul.f32 %v8168, 1.442695
    %v8170 = vpow.pop %v8169
    %v8171 = vsel %vm424, %v8170, 0.0
    %8172 = vadd.xlane.f32.xlu0 %v8171
    %v8173 = vpop.xlane.xlu0 %8172
    %v8174 = vrcp.pop %v8173
    %v8175 = vmul.f32 %v8170, %v8174
    %8176 = vrot.lane.b32.xlu0 %v7113, 96
    %v8177 = vpop.permute.xlu0 %8176
    %v8180 = vsel %vm424, %v8175, 0
    %8182 = vmatprep.subr.mxu0 0.0
    %8183 = vmatpush1.msra.mxu0 %v8177
    %8184 = vmatprep.subr.mxu0 0.0
    %8185 = vmatpush1.msra.mxu0 0.0
    %8186 = vmatprep.subr.mxu0 0.0
    %8187 = vmatpush1.msra.mxu0 0.0
    %8188 = vmatprep.subr.mxu0 0.0
    %8189 = vmatpush1.msra.mxu0 0.0
    %8190 = vmatprep.subr.mxu0 0.0
    %8191 = vmatpush1.msra.mxu0 0.0
    %8192 = vmatprep.subr.mxu0 0.0
    %8193 = vmatpush1.msra.mxu0 0.0
    %8194 = vmatprep.subr.mxu0 0.0
    %8195 = vmatpush1.msra.mxu0 0.0
    %8196 = vmatprep.subr.mxu0 0.0
    %8197 = vmatpush1.msra.mxu0 0.0
    %8198 = vmatprep.subr.mxu0 0.0
    %8199 = vmatpush1.msra.mxu0 0.0
    %8200 = vmatprep.subr.mxu0 0.0
    %8201 = vmatpush1.msra.mxu0 0.0
    %8202 = vmatprep.subr.mxu0 0.0
    %8203 = vmatpush1.msra.mxu0 0.0
    %8204 = vmatprep.subr.mxu0 0.0
    %8205 = vmatpush1.msra.mxu0 0.0
    %8206 = vmatprep.subr.mxu0 0.0
    %8207 = vmatpush1.msra.mxu0 0.0
    %8208 = vmatprep.subr.mxu0 0.0
    %8209 = vmatpush1.msra.mxu0 0.0
    %8210 = vmatprep.subr.mxu0 0.0
    %8211 = vmatpush1.msra.mxu0 0.0
    %8212 = vmatprep.subr.mxu0 0.0
    %8213 = vmatpush1.msra.mxu0 0.0
    %8214 = vmatprep.subr.mxu0 0.0
    %8215 = vmatpush1.msra.mxu0 0.0
    %8216 = vmatprep.subr.mxu0 0.0
    %8217 = vmatpush1.msra.mxu0 0.0
    %8218 = vmatprep.subr.mxu0 0.0
    %8219 = vmatpush1.msra.mxu0 0.0
    %8220 = vmatprep.subr.mxu0 0.0
    %8221 = vmatpush1.msra.mxu0 0.0
    %8222 = vmatprep.subr.mxu0 0.0
    %8223 = vmatpush1.msra.mxu0 0.0
    %8224 = vmatprep.subr.mxu0 0.0
    %8225 = vmatpush1.msra.mxu0 0.0
    %8226 = vmatprep.subr.mxu0 0.0
    %8227 = vmatpush1.msra.mxu0 0.0
    %8228 = vmatprep.subr.mxu0 0.0
    %8229 = vmatpush1.msra.mxu0 0.0
    %8230 = vmatprep.subr.mxu0 0.0
    %8231 = vmatpush1.msra.mxu0 0.0
    %8232 = vmatprep.subr.mxu0 0.0
    %8233 = vmatpush1.msra.mxu0 0.0
    %8234 = vmatprep.subr.mxu0 0.0
    %8235 = vmatpush1.msra.mxu0 0.0
    %8236 = vmatprep.subr.mxu0 0.0
    %8237 = vmatpush1.msra.mxu0 0.0
    %8238 = vmatprep.subr.mxu0 0.0
    %8239 = vmatpush1.msra.mxu0 0.0
    %8240 = vmatprep.subr.mxu0 0.0
    %8241 = vmatpush1.msra.mxu0 0.0
    %8242 = vmatprep.subr.mxu0 0.0
    %8243 = vmatpush1.msra.mxu0 0.0
    %8244 = vmatprep.subr.mxu0 0.0
    %8245 = vmatpush1.msra.mxu0 0.0
    %8246 = vmatprep.mubr.f32.mxu0 0.0
    %8247 = vmatmul.mubr.f32.gmra.mrb[0].mxu0 %v8180
    %v8248 = vpop.f32.mrb[0].mxu0
    %v8249 = vadd.f32 0.0, %v8248
    %v8250 = vpop.f32.mrb[0].mxu0
    %8251 = vdwg.mxu0
    %8252 = vrot.lane.b32.xlu0 %v7124, 120
    %v8253 = vpop.permute.xlu0 %8252
    %8254 = vrot.lane.b32.xlu0 %v7113, 120
    %v8255 = vpop.permute.xlu0 %8254
    %v8256 = vsel %vm424, %v8253, 0
    %v8258 = vsel %vm424, %v8255, 0
    %8260 = vmatprep.subr.mxu0 0.0
    %8261 = vmatpush1.xpose.msra.mxu0 %v8258
    %8262 = vmatprep.subr.mxu0 0.0
    %8263 = vmatpush1.xpose.msra.mxu0 0.0
    %8264 = vmatprep.subr.mxu0 0.0
    %8265 = vmatpush1.xpose.msra.mxu0 0.0
    %8266 = vmatprep.subr.mxu0 0.0
    %8267 = vmatpush1.xpose.msra.mxu0 0.0
    %8268 = vmatprep.subr.mxu0 0.0
    %8269 = vmatpush1.xpose.msra.mxu0 0.0
    %8270 = vmatprep.subr.mxu0 0.0
    %8271 = vmatpush1.xpose.msra.mxu0 0.0
    %8272 = vmatprep.subr.mxu0 0.0
    %8273 = vmatpush1.xpose.msra.mxu0 0.0
    %8274 = vmatprep.subr.mxu0 0.0
    %8275 = vmatpush1.xpose.msra.mxu0 0.0
    %8276 = vmatprep.subr.mxu0 0.0
    %8277 = vmatpush1.xpose.msra.mxu0 0.0
    %8278 = vmatprep.subr.mxu0 0.0
    %8279 = vmatpush1.xpose.msra.mxu0 0.0
    %8280 = vmatprep.subr.mxu0 0.0
    %8281 = vmatpush1.xpose.msra.mxu0 0.0
    %8282 = vmatprep.subr.mxu0 0.0
    %8283 = vmatpush1.xpose.msra.mxu0 0.0
    %8284 = vmatprep.subr.mxu0 0.0
    %8285 = vmatpush1.xpose.msra.mxu0 0.0
    %8286 = vmatprep.subr.mxu0 0.0
    %8287 = vmatpush1.xpose.msra.mxu0 0.0
    %8288 = vmatprep.subr.mxu0 0.0
    %8289 = vmatpush1.xpose.msra.mxu0 0.0
    %8290 = vmatprep.subr.mxu0 0.0
    %8291 = vmatpush1.xpose.msra.mxu0 0.0
    %8292 = vmatprep.subr.mxu0 0.0
    %8293 = vmatpush1.xpose.msra.mxu0 0.0
    %8294 = vmatprep.subr.mxu0 0.0
    %8295 = vmatpush1.xpose.msra.mxu0 0.0
    %8296 = vmatprep.subr.mxu0 0.0
    %8297 = vmatpush1.xpose.msra.mxu0 0.0
    %8298 = vmatprep.subr.mxu0 0.0
    %8299 = vmatpush1.xpose.msra.mxu0 0.0
    %8300 = vmatprep.subr.mxu0 0.0
    %8301 = vmatpush1.xpose.msra.mxu0 0.0
    %8302 = vmatprep.subr.mxu0 0.0
    %8303 = vmatpush1.xpose.msra.mxu0 0.0
    %8304 = vmatprep.subr.mxu0 0.0
    %8305 = vmatpush1.xpose.msra.mxu0 0.0
    %8306 = vmatprep.subr.mxu0 0.0
    %8307 = vmatpush1.xpose.msra.mxu0 0.0
    %8308 = vmatprep.subr.mxu0 0.0
    %8309 = vmatpush1.xpose.msra.mxu0 0.0
    %8310 = vmatprep.subr.mxu0 0.0
    %8311 = vmatpush1.xpose.msra.mxu0 0.0
    %8312 = vmatprep.subr.mxu0 0.0
    %8313 = vmatpush1.xpose.msra.mxu0 0.0
    %8314 = vmatprep.subr.mxu0 0.0
    %8315 = vmatpush1.xpose.msra.mxu0 0.0
    %8316 = vmatprep.subr.mxu0 0.0
    %8317 = vmatpush1.xpose.msra.mxu0 0.0
    %8318 = vmatprep.subr.mxu0 0.0
    %8319 = vmatpush1.xpose.msra.mxu0 0.0
    %8320 = vmatprep.subr.mxu0 0.0
    %8321 = vmatpush1.xpose.msra.mxu0 0.0
    %8322 = vmatprep.subr.mxu0 0.0
    %8323 = vmatpush1.xpose.msra.mxu0 0.0
    %8324 = vmatprep.mubr.f32.mxu0 0.0
    %8325 = vmatmul.mubr.f32.gmra.mrb[0].mxu0 %v8256
    %v8326 = vpop.f32.mrb[0].mxu0
    %v8327 = vadd.f32 0.0, %v8326
    %v8328 = vpop.f32.mrb[0].mxu0
    %8329 = vdwg.mxu0
    %v8330 = vsel %vm3646, -1e+09, %v8327
    %v8331 = vsel %vm424, %v8330, -inf
    %8332 = vmax.xlane.f32.xlu0 %v8331
    %v8333 = vpop.xlane.xlu0 %8332
    %v8334 = vsub.f32 %v8330, %v8333
    %v8335 = vmul.f32 %v8334, 1.442695
    %v8336 = vpow.pop %v8335
    %v8337 = vsel %vm424, %v8336, 0.0
    %8338 = vadd.xlane.f32.xlu0 %v8337
    %v8339 = vpop.xlane.xlu0 %8338
    %v8340 = vrcp.pop %v8339
    %v8341 = vmul.f32 %v8336, %v8340
    %8342 = vrot.lane.b32.xlu0 %v7113, 88
    %v8343 = vpop.permute.xlu0 %8342
    %v8346 = vsel %vm424, %v8341, 0
    %8348 = vmatprep.subr.mxu0 0.0
    %8349 = vmatpush1.msra.mxu0 %v8343
    %8350 = vmatprep.subr.mxu0 0.0
    %8351 = vmatpush1.msra.mxu0 0.0
    %8352 = vmatprep.subr.mxu0 0.0
    %8353 = vmatpush1.msra.mxu0 0.0
    %8354 = vmatprep.subr.mxu0 0.0
    %8355 = vmatpush1.msra.mxu0 0.0
    %8356 = vmatprep.subr.mxu0 0.0
    %8357 = vmatpush1.msra.mxu0 0.0
    %8358 = vmatprep.subr.mxu0 0.0
    %8359 = vmatpush1.msra.mxu0 0.0
    %8360 = vmatprep.subr.mxu0 0.0
    %8361 = vmatpush1.msra.mxu0 0.0
    %8362 = vmatprep.subr.mxu0 0.0
    %8363 = vmatpush1.msra.mxu0 0.0
    %8364 = vmatprep.subr.mxu0 0.0
    %8365 = vmatpush1.msra.mxu0 0.0
    %8366 = vmatprep.subr.mxu0 0.0
    %8367 = vmatpush1.msra.mxu0 0.0
    %8368 = vmatprep.subr.mxu0 0.0
    %8369 = vmatpush1.msra.mxu0 0.0
    %8370 = vmatprep.subr.mxu0 0.0
    %8371 = vmatpush1.msra.mxu0 0.0
    %8372 = vmatprep.subr.mxu0 0.0
    %8373 = vmatpush1.msra.mxu0 0.0
    %8374 = vmatprep.subr.mxu0 0.0
    %8375 = vmatpush1.msra.mxu0 0.0
    %8376 = vmatprep.subr.mxu0 0.0
    %8377 = vmatpush1.msra.mxu0 0.0
    %8378 = vmatprep.subr.mxu0 0.0
    %8379 = vmatpush1.msra.mxu0 0.0
    %8380 = vmatprep.subr.mxu0 0.0
    %8381 = vmatpush1.msra.mxu0 0.0
    %8382 = vmatprep.subr.mxu0 0.0
    %8383 = vmatpush1.msra.mxu0 0.0
    %8384 = vmatprep.subr.mxu0 0.0
    %8385 = vmatpush1.msra.mxu0 0.0
    %8386 = vmatprep.subr.mxu0 0.0
    %8387 = vmatpush1.msra.mxu0 0.0
    %8388 = vmatprep.subr.mxu0 0.0
    %8389 = vmatpush1.msra.mxu0 0.0
    %8390 = vmatprep.subr.mxu0 0.0
    %8391 = vmatpush1.msra.mxu0 0.0
    %8392 = vmatprep.subr.mxu0 0.0
    %8393 = vmatpush1.msra.mxu0 0.0
    %8394 = vmatprep.subr.mxu0 0.0
    %8395 = vmatpush1.msra.mxu0 0.0
    %8396 = vmatprep.subr.mxu0 0.0
    %8397 = vmatpush1.msra.mxu0 0.0
    %8398 = vmatprep.subr.mxu0 0.0
    %8399 = vmatpush1.msra.mxu0 0.0
    %8400 = vmatprep.subr.mxu0 0.0
    %8401 = vmatpush1.msra.mxu0 0.0
    %8402 = vmatprep.subr.mxu0 0.0
    %8403 = vmatpush1.msra.mxu0 0.0
    %8404 = vmatprep.subr.mxu0 0.0
    %8405 = vmatpush1.msra.mxu0 0.0
    %8406 = vmatprep.subr.mxu0 0.0
    %8407 = vmatpush1.msra.mxu0 0.0
    %8408 = vmatprep.subr.mxu0 0.0
    %8409 = vmatpush1.msra.mxu0 0.0
    %8410 = vmatprep.subr.mxu0 0.0
    %8411 = vmatpush1.msra.mxu0 0.0
    %8412 = vmatprep.mubr.f32.mxu0 0.0
    %8413 = vmatmul.mubr.f32.gmra.mrb[0].mxu0 %v8346
    %v8414 = vpop.f32.mrb[0].mxu0
    %v8415 = vadd.f32 0.0, %v8414
    %v8416 = vpop.f32.mrb[0].mxu0
    %8417 = vdwg.mxu0
    %v8419 = vsel %vm424, %v8415, 0
    %8421 = vmatprep.subr.mxu0 0.0
    %8422 = vmatpush1.msra.mxu0 %v7118
    %8423 = vmatprep.subr.mxu0 0.0
    %8424 = vmatpush1.msra.mxu0 0.0
    %8425 = vmatprep.subr.mxu0 0.0
    %8426 = vmatpush1.msra.mxu0 0.0
    %8427 = vmatprep.subr.mxu0 0.0
    %8428 = vmatpush1.msra.mxu0 0.0
    %8429 = vmatprep.subr.mxu0 0.0
    %8430 = vmatpush1.msra.mxu0 0.0
    %8431 = vmatprep.subr.mxu0 0.0
    %8432 = vmatpush1.msra.mxu0 0.0
    %8433 = vmatprep.subr.mxu0 0.0
    %8434 = vmatpush1.msra.mxu0 0.0
    %8435 = vmatprep.subr.mxu0 0.0
    %8436 = vmatpush1.msra.mxu0 0.0
    %8437 = vmatprep.subr.mxu0 0.0
    %8438 = vmatpush1.msra.mxu0 0.0
    %8439 = vmatprep.subr.mxu0 0.0
    %8440 = vmatpush1.msra.mxu0 0.0
    %8441 = vmatprep.subr.mxu0 0.0
    %8442 = vmatpush1.msra.mxu0 0.0
    %8443 = vmatprep.subr.mxu0 0.0
    %8444 = vmatpush1.msra.mxu0 0.0
    %8445 = vmatprep.subr.mxu0 0.0
    %8446 = vmatpush1.msra.mxu0 0.0
    %8447 = vmatprep.subr.mxu0 0.0
    %8448 = vmatpush1.msra.mxu0 0.0
    %8449 = vmatprep.subr.mxu0 0.0
    %8450 = vmatpush1.msra.mxu0 0.0
    %8451 = vmatprep.subr.mxu0 0.0
    %8452 = vmatpush1.msra.mxu0 0.0
    %8453 = vmatprep.subr.mxu0 0.0
    %8454 = vmatpush1.msra.mxu0 0.0
    %8455 = vmatprep.subr.mxu0 0.0
    %8456 = vmatpush1.msra.mxu0 0.0
    %8457 = vmatprep.subr.mxu0 0.0
    %8458 = vmatpush1.msra.mxu0 0.0
    %8459 = vmatprep.subr.mxu0 0.0
    %8460 = vmatpush1.msra.mxu0 0.0
    %8461 = vmatprep.subr.mxu0 0.0
    %8462 = vmatpush1.msra.mxu0 0.0
    %8463 = vmatprep.subr.mxu0 0.0
    %8464 = vmatpush1.msra.mxu0 0.0
    %8465 = vmatprep.subr.mxu0 0.0
    %8466 = vmatpush1.msra.mxu0 0.0
    %8467 = vmatprep.subr.mxu0 0.0
    %8468 = vmatpush1.msra.mxu0 0.0
    %8469 = vmatprep.subr.mxu0 0.0
    %8470 = vmatpush1.msra.mxu0 0.0
    %8471 = vmatprep.subr.mxu0 0.0
    %8472 = vmatpush1.msra.mxu0 0.0
    %8473 = vmatprep.subr.mxu0 0.0
    %8474 = vmatpush1.msra.mxu0 0.0
    %8475 = vmatprep.subr.mxu0 0.0
    %8476 = vmatpush1.msra.mxu0 0.0
    %8477 = vmatprep.subr.mxu0 0.0
    %8478 = vmatpush1.msra.mxu0 0.0
    %8479 = vmatprep.subr.mxu0 0.0
    %8480 = vmatpush1.msra.mxu0 0.0
    %8481 = vmatprep.subr.mxu0 0.0
    %8482 = vmatpush1.msra.mxu0 0.0
    %8483 = vmatprep.subr.mxu0 0.0
    %8484 = vmatpush1.msra.mxu0 0.0
    %8485 = vmatprep.mubr.f32.mxu0 0.0
    %8486 = vmatmul.mubr.f32.gmra.mrb[0].mxu0 %v8419
    %v8487 = vpop.f32.mrb[0].mxu0
    %v8488 = vadd.f32 0.0, %v8487
    %v8489 = vpop.f32.mrb[0].mxu0
    %8490 = vdwg.mxu0
    %v8492 = vsel %vm424, %v8249, 0
    %8494 = vmatprep.subr.mxu0 0.0
    %8495 = vmatpush1.msra.mxu0 %v7117
    %8496 = vmatprep.subr.mxu0 0.0
    %8497 = vmatpush1.msra.mxu0 0.0
    %8498 = vmatprep.subr.mxu0 0.0
    %8499 = vmatpush1.msra.mxu0 0.0
    %8500 = vmatprep.subr.mxu0 0.0
    %8501 = vmatpush1.msra.mxu0 0.0
    %8502 = vmatprep.subr.mxu0 0.0
    %8503 = vmatpush1.msra.mxu0 0.0
    %8504 = vmatprep.subr.mxu0 0.0
    %8505 = vmatpush1.msra.mxu0 0.0
    %8506 = vmatprep.subr.mxu0 0.0
    %8507 = vmatpush1.msra.mxu0 0.0
    %8508 = vmatprep.subr.mxu0 0.0
    %8509 = vmatpush1.msra.mxu0 0.0
    %8510 = vmatprep.subr.mxu0 0.0
    %8511 = vmatpush1.msra.mxu0 0.0
    %8512 = vmatprep.subr.mxu0 0.0
    %8513 = vmatpush1.msra.mxu0 0.0
    %8514 = vmatprep.subr.mxu0 0.0
    %8515 = vmatpush1.msra.mxu0 0.0
    %8516 = vmatprep.subr.mxu0 0.0
    %8517 = vmatpush1.msra.mxu0 0.0
    %8518 = vmatprep.subr.mxu0 0.0
    %8519 = vmatpush1.msra.mxu0 0.0
    %8520 = vmatprep.subr.mxu0 0.0
    %8521 = vmatpush1.msra.mxu0 0.0
    %8522 = vmatprep.subr.mxu0 0.0
    %8523 = vmatpush1.msra.mxu0 0.0
    %8524 = vmatprep.subr.mxu0 0.0
    %8525 = vmatpush1.msra.mxu0 0.0
    %8526 = vmatprep.subr.mxu0 0.0
    %8527 = vmatpush1.msra.mxu0 0.0
    %8528 = vmatprep.subr.mxu0 0.0
    %8529 = vmatpush1.msra.mxu0 0.0
    %8530 = vmatprep.subr.mxu0 0.0
    %8531 = vmatpush1.msra.mxu0 0.0
    %8532 = vmatprep.subr.mxu0 0.0
    %8533 = vmatpush1.msra.mxu0 0.0
    %8534 = vmatprep.subr.mxu0 0.0
    %8535 = vmatpush1.msra.mxu0 0.0
    %8536 = vmatprep.subr.mxu0 0.0
    %8537 = vmatpush1.msra.mxu0 0.0
    %8538 = vmatprep.subr.mxu0 0.0
    %8539 = vmatpush1.msra.mxu0 0.0
    %8540 = vmatprep.subr.mxu0 0.0
    %8541 = vmatpush1.msra.mxu0 0.0
    %8542 = vmatprep.subr.mxu0 0.0
    %8543 = vmatpush1.msra.mxu0 0.0
    %8544 = vmatprep.subr.mxu0 0.0
    %8545 = vmatpush1.msra.mxu0 0.0
    %8546 = vmatprep.subr.mxu0 0.0
    %8547 = vmatpush1.msra.mxu0 0.0
    %8548 = vmatprep.subr.mxu0 0.0
    %8549 = vmatpush1.msra.mxu0 0.0
    %8550 = vmatprep.subr.mxu0 0.0
    %8551 = vmatpush1.msra.mxu0 0.0
    %8552 = vmatprep.subr.mxu0 0.0
    %8553 = vmatpush1.msra.mxu0 0.0
    %8554 = vmatprep.subr.mxu0 0.0
    %8555 = vmatpush1.msra.mxu0 0.0
    %8556 = vmatprep.subr.mxu0 0.0
    %8557 = vmatpush1.msra.mxu0 0.0
    %8558 = vmatprep.mubr.f32.mxu0 0.0
    %8559 = vmatmul.mubr.f32.gmra.mrb[0].mxu0 %v8492
    %v8560 = vpop.f32.mrb[0].mxu0
    %v8561 = vadd.f32 %v8488, %v8560
    %v8562 = vpop.f32.mrb[0].mxu0
    %8563 = vdwg.mxu0
    %8564 = vrot.lane.b32.xlu0 %v7124, 112
    %v8565 = vpop.permute.xlu0 %8564
    %8566 = vrot.lane.b32.xlu0 %v7113, 112
    %v8567 = vpop.permute.xlu0 %8566
    %v8568 = vsel %vm424, %v8565, 0
    %v8570 = vsel %vm424, %v8567, 0
    %8572 = vmatprep.subr.mxu0 0.0
    %8573 = vmatpush1.xpose.msra.mxu0 %v8570
    %8574 = vmatprep.subr.mxu0 0.0
    %8575 = vmatpush1.xpose.msra.mxu0 0.0
    %8576 = vmatprep.subr.mxu0 0.0
    %8577 = vmatpush1.xpose.msra.mxu0 0.0
    %8578 = vmatprep.subr.mxu0 0.0
    %8579 = vmatpush1.xpose.msra.mxu0 0.0
    %8580 = vmatprep.subr.mxu0 0.0
    %8581 = vmatpush1.xpose.msra.mxu0 0.0
    %8582 = vmatprep.subr.mxu0 0.0
    %8583 = vmatpush1.xpose.msra.mxu0 0.0
    %8584 = vmatprep.subr.mxu0 0.0
    %8585 = vmatpush1.xpose.msra.mxu0 0.0
    %8586 = vmatprep.subr.mxu0 0.0
    %8587 = vmatpush1.xpose.msra.mxu0 0.0
    %8588 = vmatprep.subr.mxu0 0.0
    %8589 = vmatpush1.xpose.msra.mxu0 0.0
    %8590 = vmatprep.subr.mxu0 0.0
    %8591 = vmatpush1.xpose.msra.mxu0 0.0
    %8592 = vmatprep.subr.mxu0 0.0
    %8593 = vmatpush1.xpose.msra.mxu0 0.0
    %8594 = vmatprep.subr.mxu0 0.0
    %8595 = vmatpush1.xpose.msra.mxu0 0.0
    %8596 = vmatprep.subr.mxu0 0.0
    %8597 = vmatpush1.xpose.msra.mxu0 0.0
    %8598 = vmatprep.subr.mxu0 0.0
    %8599 = vmatpush1.xpose.msra.mxu0 0.0
    %8600 = vmatprep.subr.mxu0 0.0
    %8601 = vmatpush1.xpose.msra.mxu0 0.0
    %8602 = vmatprep.subr.mxu0 0.0
    %8603 = vmatpush1.xpose.msra.mxu0 0.0
    %8604 = vmatprep.subr.mxu0 0.0
    %8605 = vmatpush1.xpose.msra.mxu0 0.0
    %8606 = vmatprep.subr.mxu0 0.0
    %8607 = vmatpush1.xpose.msra.mxu0 0.0
    %8608 = vmatprep.subr.mxu0 0.0
    %8609 = vmatpush1.xpose.msra.mxu0 0.0
    %8610 = vmatprep.subr.mxu0 0.0
    %8611 = vmatpush1.xpose.msra.mxu0 0.0
    %8612 = vmatprep.subr.mxu0 0.0
    %8613 = vmatpush1.xpose.msra.mxu0 0.0
    %8614 = vmatprep.subr.mxu0 0.0
    %8615 = vmatpush1.xpose.msra.mxu0 0.0
    %8616 = vmatprep.subr.mxu0 0.0
    %8617 = vmatpush1.xpose.msra.mxu0 0.0
    %8618 = vmatprep.subr.mxu0 0.0
    %8619 = vmatpush1.xpose.msra.mxu0 0.0
    %8620 = vmatprep.subr.mxu0 0.0
    %8621 = vmatpush1.xpose.msra.mxu0 0.0
    %8622 = vmatprep.subr.mxu0 0.0
    %8623 = vmatpush1.xpose.msra.mxu0 0.0
    %8624 = vmatprep.subr.mxu0 0.0
    %8625 = vmatpush1.xpose.msra.mxu0 0.0
    %8626 = vmatprep.subr.mxu0 0.0
    %8627 = vmatpush1.xpose.msra.mxu0 0.0
    %8628 = vmatprep.subr.mxu0 0.0
    %8629 = vmatpush1.xpose.msra.mxu0 0.0
    %8630 = vmatprep.subr.mxu0 0.0
    %8631 = vmatpush1.xpose.msra.mxu0 0.0
    %8632 = vmatprep.subr.mxu0 0.0
    %8633 = vmatpush1.xpose.msra.mxu0 0.0
    %8634 = vmatprep.subr.mxu0 0.0
    %8635 = vmatpush1.xpose.msra.mxu0 0.0
    %8636 = vmatprep.mubr.f32.mxu0 0.0
    %8637 = vmatmul.mubr.f32.gmra.mrb[0].mxu0 %v8568
    %v8638 = vpop.f32.mrb[0].mxu0
    %v8639 = vadd.f32 0.0, %v8638
    %v8640 = vpop.f32.mrb[0].mxu0
    %8641 = vdwg.mxu0
    %v8642 = vsel %vm3646, -1e+09, %v8639
    %v8643 = vsel %vm424, %v8642, -inf
    %8644 = vmax.xlane.f32.xlu0 %v8643
    %v8645 = vpop.xlane.xlu0 %8644
    %v8646 = vsub.f32 %v8642, %v8645
    %v8647 = vmul.f32 %v8646, 1.442695
    %v8648 = vpow.pop %v8647
    %v8649 = vsel %vm424, %v8648, 0.0
    %8650 = vadd.xlane.f32.xlu0 %v8649
    %v8651 = vpop.xlane.xlu0 %8650
    %v8652 = vrcp.pop %v8651
    %v8653 = vmul.f32 %v8648, %v8652
    %8654 = vrot.lane.b32.xlu0 %v7113, 80
    %v8655 = vpop.permute.xlu0 %8654
    %v8658 = vsel %vm424, %v8653, 0
    %8660 = vmatprep.subr.mxu0 0.0
    %8661 = vmatpush1.msra.mxu0 %v8655
    %8662 = vmatprep.subr.mxu0 0.0
    %8663 = vmatpush1.msra.mxu0 0.0
    %8664 = vmatprep.subr.mxu0 0.0
    %8665 = vmatpush1.msra.mxu0 0.0
    %8666 = vmatprep.subr.mxu0 0.0
    %8667 = vmatpush1.msra.mxu0 0.0
    %8668 = vmatprep.subr.mxu0 0.0
    %8669 = vmatpush1.msra.mxu0 0.0
    %8670 = vmatprep.subr.mxu0 0.0
    %8671 = vmatpush1.msra.mxu0 0.0
    %8672 = vmatprep.subr.mxu0 0.0
    %8673 = vmatpush1.msra.mxu0 0.0
    %8674 = vmatprep.subr.mxu0 0.0
    %8675 = vmatpush1.msra.mxu0 0.0
    %8676 = vmatprep.subr.mxu0 0.0
    %8677 = vmatpush1.msra.mxu0 0.0
    %8678 = vmatprep.subr.mxu0 0.0
    %8679 = vmatpush1.msra.mxu0 0.0
    %8680 = vmatprep.subr.mxu0 0.0
    %8681 = vmatpush1.msra.mxu0 0.0
    %8682 = vmatprep.subr.mxu0 0.0
    %8683 = vmatpush1.msra.mxu0 0.0
    %8684 = vmatprep.subr.mxu0 0.0
    %8685 = vmatpush1.msra.mxu0 0.0
    %8686 = vmatprep.subr.mxu0 0.0
    %8687 = vmatpush1.msra.mxu0 0.0
    %8688 = vmatprep.subr.mxu0 0.0
    %8689 = vmatpush1.msra.mxu0 0.0
    %8690 = vmatprep.subr.mxu0 0.0
    %8691 = vmatpush1.msra.mxu0 0.0
    %8692 = vmatprep.subr.mxu0 0.0
    %8693 = vmatpush1.msra.mxu0 0.0
    %8694 = vmatprep.subr.mxu0 0.0
    %8695 = vmatpush1.msra.mxu0 0.0
    %8696 = vmatprep.subr.mxu0 0.0
    %8697 = vmatpush1.msra.mxu0 0.0
    %8698 = vmatprep.subr.mxu0 0.0
    %8699 = vmatpush1.msra.mxu0 0.0
    %8700 = vmatprep.subr.mxu0 0.0
    %8701 = vmatpush1.msra.mxu0 0.0
    %8702 = vmatprep.subr.mxu0 0.0
    %8703 = vmatpush1.msra.mxu0 0.0
    %8704 = vmatprep.subr.mxu0 0.0
    %8705 = vmatpush1.msra.mxu0 0.0
    %8706 = vmatprep.subr.mxu0 0.0
    %8707 = vmatpush1.msra.mxu0 0.0
    %8708 = vmatprep.subr.mxu0 0.0
    %8709 = vmatpush1.msra.mxu0 0.0
    %8710 = vmatprep.subr.mxu0 0.0
    %8711 = vmatpush1.msra.mxu0 0.0
    %8712 = vmatprep.subr.mxu0 0.0
    %8713 = vmatpush1.msra.mxu0 0.0
    %8714 = vmatprep.subr.mxu0 0.0
    %8715 = vmatpush1.msra.mxu0 0.0
    %8716 = vmatprep.subr.mxu0 0.0
    %8717 = vmatpush1.msra.mxu0 0.0
    %8718 = vmatprep.subr.mxu0 0.0
    %8719 = vmatpush1.msra.mxu0 0.0
    %8720 = vmatprep.subr.mxu0 0.0
    %8721 = vmatpush1.msra.mxu0 0.0
    %8722 = vmatprep.subr.mxu0 0.0
    %8723 = vmatpush1.msra.mxu0 0.0
    %8724 = vmatprep.mubr.f32.mxu0 0.0
    %8725 = vmatmul.mubr.f32.gmra.mrb[0].mxu0 %v8658
    %v8726 = vpop.f32.mrb[0].mxu0
    %v8727 = vadd.f32 0.0, %v8726
    %v8728 = vpop.f32.mrb[0].mxu0
    %8729 = vdwg.mxu0
    %v8731 = vsel %vm424, %v8727, 0
    %8733 = vmatprep.subr.mxu0 0.0
    %8734 = vmatpush1.msra.mxu0 %v7119
    %8735 = vmatprep.subr.mxu0 0.0
    %8736 = vmatpush1.msra.mxu0 0.0
    %8737 = vmatprep.subr.mxu0 0.0
    %8738 = vmatpush1.msra.mxu0 0.0
    %8739 = vmatprep.subr.mxu0 0.0
    %8740 = vmatpush1.msra.mxu0 0.0
    %8741 = vmatprep.subr.mxu0 0.0
    %8742 = vmatpush1.msra.mxu0 0.0
    %8743 = vmatprep.subr.mxu0 0.0
    %8744 = vmatpush1.msra.mxu0 0.0
    %8745 = vmatprep.subr.mxu0 0.0
    %8746 = vmatpush1.msra.mxu0 0.0
    %8747 = vmatprep.subr.mxu0 0.0
    %8748 = vmatpush1.msra.mxu0 0.0
    %8749 = vmatprep.subr.mxu0 0.0
    %8750 = vmatpush1.msra.mxu0 0.0
    %8751 = vmatprep.subr.mxu0 0.0
    %8752 = vmatpush1.msra.mxu0 0.0
    %8753 = vmatprep.subr.mxu0 0.0
    %8754 = vmatpush1.msra.mxu0 0.0
    %8755 = vmatprep.subr.mxu0 0.0
    %8756 = vmatpush1.msra.mxu0 0.0
    %8757 = vmatprep.subr.mxu0 0.0
    %8758 = vmatpush1.msra.mxu0 0.0
    %8759 = vmatprep.subr.mxu0 0.0
    %8760 = vmatpush1.msra.mxu0 0.0
    %8761 = vmatprep.subr.mxu0 0.0
    %8762 = vmatpush1.msra.mxu0 0.0
    %8763 = vmatprep.subr.mxu0 0.0
    %8764 = vmatpush1.msra.mxu0 0.0
    %8765 = vmatprep.subr.mxu0 0.0
    %8766 = vmatpush1.msra.mxu0 0.0
    %8767 = vmatprep.subr.mxu0 0.0
    %8768 = vmatpush1.msra.mxu0 0.0
    %8769 = vmatprep.subr.mxu0 0.0
    %8770 = vmatpush1.msra.mxu0 0.0
    %8771 = vmatprep.subr.mxu0 0.0
    %8772 = vmatpush1.msra.mxu0 0.0
    %8773 = vmatprep.subr.mxu0 0.0
    %8774 = vmatpush1.msra.mxu0 0.0
    %8775 = vmatprep.subr.mxu0 0.0
    %8776 = vmatpush1.msra.mxu0 0.0
    %8777 = vmatprep.subr.mxu0 0.0
    %8778 = vmatpush1.msra.mxu0 0.0
    %8779 = vmatprep.subr.mxu0 0.0
    %8780 = vmatpush1.msra.mxu0 0.0
    %8781 = vmatprep.subr.mxu0 0.0
    %8782 = vmatpush1.msra.mxu0 0.0
    %8783 = vmatprep.subr.mxu0 0.0
    %8784 = vmatpush1.msra.mxu0 0.0
    %8785 = vmatprep.subr.mxu0 0.0
    %8786 = vmatpush1.msra.mxu0 0.0
    %8787 = vmatprep.subr.mxu0 0.0
    %8788 = vmatpush1.msra.mxu0 0.0
    %8789 = vmatprep.subr.mxu0 0.0
    %8790 = vmatpush1.msra.mxu0 0.0
    %8791 = vmatprep.subr.mxu0 0.0
    %8792 = vmatpush1.msra.mxu0 0.0
    %8793 = vmatprep.subr.mxu0 0.0
    %8794 = vmatpush1.msra.mxu0 0.0
    %8795 = vmatprep.subr.mxu0 0.0
    %8796 = vmatpush1.msra.mxu0 0.0
    %8797 = vmatprep.mubr.f32.mxu0 0.0
    %8798 = vmatmul.mubr.f32.gmra.mrb[0].mxu0 %v8731
    %v8799 = vpop.f32.mrb[0].mxu0
    %v8800 = vadd.f32 0.0, %v8799
    %v8801 = vpop.f32.mrb[0].mxu0
    %8802 = vdwg.mxu0
    %v8803 = vadd.f32 %v8561, %v8800
    %8804 = vrot.lane.b32.xlu0 %v7124, 104
    %v8805 = vpop.permute.xlu0 %8804
    %8806 = vrot.lane.b32.xlu0 %v7113, 104
    %v8807 = vpop.permute.xlu0 %8806
    %v8808 = vsel %vm424, %v8805, 0
    %v8810 = vsel %vm424, %v8807, 0
    %8812 = vmatprep.subr.mxu0 0.0
    %8813 = vmatpush1.xpose.msra.mxu0 %v8810
    %8814 = vmatprep.subr.mxu0 0.0
    %8815 = vmatpush1.xpose.msra.mxu0 0.0
    %8816 = vmatprep.subr.mxu0 0.0
    %8817 = vmatpush1.xpose.msra.mxu0 0.0
    %8818 = vmatprep.subr.mxu0 0.0
    %8819 = vmatpush1.xpose.msra.mxu0 0.0
    %8820 = vmatprep.subr.mxu0 0.0
    %8821 = vmatpush1.xpose.msra.mxu0 0.0
    %8822 = vmatprep.subr.mxu0 0.0
    %8823 = vmatpush1.xpose.msra.mxu0 0.0
    %8824 = vmatprep.subr.mxu0 0.0
    %8825 = vmatpush1.xpose.msra.mxu0 0.0
    %8826 = vmatprep.subr.mxu0 0.0
    %8827 = vmatpush1.xpose.msra.mxu0 0.0
    %8828 = vmatprep.subr.mxu0 0.0
    %8829 = vmatpush1.xpose.msra.mxu0 0.0
    %8830 = vmatprep.subr.mxu0 0.0
    %8831 = vmatpush1.xpose.msra.mxu0 0.0
    %8832 = vmatprep.subr.mxu0 0.0
    %8833 = vmatpush1.xpose.msra.mxu0 0.0
    %8834 = vmatprep.subr.mxu0 0.0
    %8835 = vmatpush1.xpose.msra.mxu0 0.0
    %8836 = vmatprep.subr.mxu0 0.0
    %8837 = vmatpush1.xpose.msra.mxu0 0.0
    %8838 = vmatprep.subr.mxu0 0.0
    %8839 = vmatpush1.xpose.msra.mxu0 0.0
    %8840 = vmatprep.subr.mxu0 0.0
    %8841 = vmatpush1.xpose.msra.mxu0 0.0
    %8842 = vmatprep.subr.mxu0 0.0
    %8843 = vmatpush1.xpose.msra.mxu0 0.0
    %8844 = vmatprep.subr.mxu0 0.0
    %8845 = vmatpush1.xpose.msra.mxu0 0.0
    %8846 = vmatprep.subr.mxu0 0.0
    %8847 = vmatpush1.xpose.msra.mxu0 0.0
    %8848 = vmatprep.subr.mxu0 0.0
    %8849 = vmatpush1.xpose.msra.mxu0 0.0
    %8850 = vmatprep.subr.mxu0 0.0
    %8851 = vmatpush1.xpose.msra.mxu0 0.0
    %8852 = vmatprep.subr.mxu0 0.0
    %8853 = vmatpush1.xpose.msra.mxu0 0.0
    %8854 = vmatprep.subr.mxu0 0.0
    %8855 = vmatpush1.xpose.msra.mxu0 0.0
    %8856 = vmatprep.subr.mxu0 0.0
    %8857 = vmatpush1.xpose.msra.mxu0 0.0
    %8858 = vmatprep.subr.mxu0 0.0
    %8859 = vmatpush1.xpose.msra.mxu0 0.0
    %8860 = vmatprep.subr.mxu0 0.0
    %8861 = vmatpush1.xpose.msra.mxu0 0.0
    %8862 = vmatprep.subr.mxu0 0.0
    %8863 = vmatpush1.xpose.msra.mxu0 0.0
    %8864 = vmatprep.subr.mxu0 0.0
    %8865 = vmatpush1.xpose.msra.mxu0 0.0
    %8866 = vmatprep.subr.mxu0 0.0
    %8867 = vmatpush1.xpose.msra.mxu0 0.0
    %8868 = vmatprep.subr.mxu0 0.0
    %8869 = vmatpush1.xpose.msra.mxu0 0.0
    %8870 = vmatprep.subr.mxu0 0.0
    %8871 = vmatpush1.xpose.msra.mxu0 0.0
    %8872 = vmatprep.subr.mxu0 0.0
    %8873 = vmatpush1.xpose.msra.mxu0 0.0
    %8874 = vmatprep.subr.mxu0 0.0
    %8875 = vmatpush1.xpose.msra.mxu0 0.0
    %8876 = vmatprep.mubr.f32.mxu0 0.0
    %8877 = vmatmul.mubr.f32.gmra.mrb[0].mxu0 %v8808
    %v8878 = vpop.f32.mrb[0].mxu0
    %v8879 = vadd.f32 0.0, %v8878
    %v8880 = vpop.f32.mrb[0].mxu0
    %8881 = vdwg.mxu0
    %v8882 = vsel %vm3646, -1e+09, %v8879
    %v8883 = vsel %vm424, %v8882, -inf
    %8884 = vmax.xlane.f32.xlu0 %v8883
    %v8885 = vpop.xlane.xlu0 %8884
    %v8886 = vsub.f32 %v8882, %v8885
    %v8887 = vmul.f32 %v8886, 1.442695
    %v8888 = vpow.pop %v8887
    %v8889 = vsel %vm424, %v8888, 0.0
    %8890 = vadd.xlane.f32.xlu0 %v8889
    %v8891 = vpop.xlane.xlu0 %8890
    %v8892 = vrcp.pop %v8891
    %v8893 = vmul.f32 %v8888, %v8892
    %8894 = vrot.lane.b32.xlu0 %v7113, 72
    %v8895 = vpop.permute.xlu0 %8894
    %v8898 = vsel %vm424, %v8893, 0
    %8900 = vmatprep.subr.mxu0 0.0
    %8901 = vmatpush1.msra.mxu0 %v8895
    %8902 = vmatprep.subr.mxu0 0.0
    %8903 = vmatpush1.msra.mxu0 0.0
    %8904 = vmatprep.subr.mxu0 0.0
    %8905 = vmatpush1.msra.mxu0 0.0
    %8906 = vmatprep.subr.mxu0 0.0
    %8907 = vmatpush1.msra.mxu0 0.0
    %8908 = vmatprep.subr.mxu0 0.0
    %8909 = vmatpush1.msra.mxu0 0.0
    %8910 = vmatprep.subr.mxu0 0.0
    %8911 = vmatpush1.msra.mxu0 0.0
    %8912 = vmatprep.subr.mxu0 0.0
    %8913 = vmatpush1.msra.mxu0 0.0
    %8914 = vmatprep.subr.mxu0 0.0
    %8915 = vmatpush1.msra.mxu0 0.0
    %8916 = vmatprep.subr.mxu0 0.0
    %8917 = vmatpush1.msra.mxu0 0.0
    %8918 = vmatprep.subr.mxu0 0.0
    %8919 = vmatpush1.msra.mxu0 0.0
    %8920 = vmatprep.subr.mxu0 0.0
    %8921 = vmatpush1.msra.mxu0 0.0
    %8922 = vmatprep.subr.mxu0 0.0
    %8923 = vmatpush1.msra.mxu0 0.0
    %8924 = vmatprep.subr.mxu0 0.0
    %8925 = vmatpush1.msra.mxu0 0.0
    %8926 = vmatprep.subr.mxu0 0.0
    %8927 = vmatpush1.msra.mxu0 0.0
    %8928 = vmatprep.subr.mxu0 0.0
    %8929 = vmatpush1.msra.mxu0 0.0
    %8930 = vmatprep.subr.mxu0 0.0
    %8931 = vmatpush1.msra.mxu0 0.0
    %8932 = vmatprep.subr.mxu0 0.0
    %8933 = vmatpush1.msra.mxu0 0.0
    %8934 = vmatprep.subr.mxu0 0.0
    %8935 = vmatpush1.msra.mxu0 0.0
    %8936 = vmatprep.subr.mxu0 0.0
    %8937 = vmatpush1.msra.mxu0 0.0
    %8938 = vmatprep.subr.mxu0 0.0
    %8939 = vmatpush1.msra.mxu0 0.0
    %8940 = vmatprep.subr.mxu0 0.0
    %8941 = vmatpush1.msra.mxu0 0.0
    %8942 = vmatprep.subr.mxu0 0.0
    %8943 = vmatpush1.msra.mxu0 0.0
    %8944 = vmatprep.subr.mxu0 0.0
    %8945 = vmatpush1.msra.mxu0 0.0
    %8946 = vmatprep.subr.mxu0 0.0
    %8947 = vmatpush1.msra.mxu0 0.0
    %8948 = vmatprep.subr.mxu0 0.0
    %8949 = vmatpush1.msra.mxu0 0.0
    %8950 = vmatprep.subr.mxu0 0.0
    %8951 = vmatpush1.msra.mxu0 0.0
    %8952 = vmatprep.subr.mxu0 0.0
    %8953 = vmatpush1.msra.mxu0 0.0
    %8954 = vmatprep.subr.mxu0 0.0
    %8955 = vmatpush1.msra.mxu0 0.0
    %8956 = vmatprep.subr.mxu0 0.0
    %8957 = vmatpush1.msra.mxu0 0.0
    %8958 = vmatprep.subr.mxu0 0.0
    %8959 = vmatpush1.msra.mxu0 0.0
    %8960 = vmatprep.subr.mxu0 0.0
    %8961 = vmatpush1.msra.mxu0 0.0
    %8962 = vmatprep.subr.mxu0 0.0
    %8963 = vmatpush1.msra.mxu0 0.0
    %8964 = vmatprep.mubr.f32.mxu0 0.0
    %8965 = vmatmul.mubr.f32.gmra.mrb[0].mxu0 %v8898
    %v8966 = vpop.f32.mrb[0].mxu0
    %v8967 = vadd.f32 0.0, %v8966
    %v8968 = vpop.f32.mrb[0].mxu0
    %8969 = vdwg.mxu0
    %v8971 = vsel %vm424, %v8967, 0
    %8973 = vmatprep.subr.mxu0 0.0
    %8974 = vmatpush1.msra.mxu0 %v7120
    %8975 = vmatprep.subr.mxu0 0.0
    %8976 = vmatpush1.msra.mxu0 0.0
    %8977 = vmatprep.subr.mxu0 0.0
    %8978 = vmatpush1.msra.mxu0 0.0
    %8979 = vmatprep.subr.mxu0 0.0
    %8980 = vmatpush1.msra.mxu0 0.0
    %8981 = vmatprep.subr.mxu0 0.0
    %8982 = vmatpush1.msra.mxu0 0.0
    %8983 = vmatprep.subr.mxu0 0.0
    %8984 = vmatpush1.msra.mxu0 0.0
    %8985 = vmatprep.subr.mxu0 0.0
    %8986 = vmatpush1.msra.mxu0 0.0
    %8987 = vmatprep.subr.mxu0 0.0
    %8988 = vmatpush1.msra.mxu0 0.0
    %8989 = vmatprep.subr.mxu0 0.0
    %8990 = vmatpush1.msra.mxu0 0.0
    %8991 = vmatprep.subr.mxu0 0.0
    %8992 = vmatpush1.msra.mxu0 0.0
    %8993 = vmatprep.subr.mxu0 0.0
    %8994 = vmatpush1.msra.mxu0 0.0
    %8995 = vmatprep.subr.mxu0 0.0
    %8996 = vmatpush1.msra.mxu0 0.0
    %8997 = vmatprep.subr.mxu0 0.0
    %8998 = vmatpush1.msra.mxu0 0.0
    %8999 = vmatprep.subr.mxu0 0.0
    %9000 = vmatpush1.msra.mxu0 0.0
    %9001 = vmatprep.subr.mxu0 0.0
    %9002 = vmatpush1.msra.mxu0 0.0
    %9003 = vmatprep.subr.mxu0 0.0
    %9004 = vmatpush1.msra.mxu0 0.0
    %9005 = vmatprep.subr.mxu0 0.0
    %9006 = vmatpush1.msra.mxu0 0.0
    %9007 = vmatprep.subr.mxu0 0.0
    %9008 = vmatpush1.msra.mxu0 0.0
    %9009 = vmatprep.subr.mxu0 0.0
    %9010 = vmatpush1.msra.mxu0 0.0
    %9011 = vmatprep.subr.mxu0 0.0
    %9012 = vmatpush1.msra.mxu0 0.0
    %9013 = vmatprep.subr.mxu0 0.0
    %9014 = vmatpush1.msra.mxu0 0.0
    %9015 = vmatprep.subr.mxu0 0.0
    %9016 = vmatpush1.msra.mxu0 0.0
    %9017 = vmatprep.subr.mxu0 0.0
    %9018 = vmatpush1.msra.mxu0 0.0
    %9019 = vmatprep.subr.mxu0 0.0
    %9020 = vmatpush1.msra.mxu0 0.0
    %9021 = vmatprep.subr.mxu0 0.0
    %9022 = vmatpush1.msra.mxu0 0.0
    %9023 = vmatprep.subr.mxu0 0.0
    %9024 = vmatpush1.msra.mxu0 0.0
    %9025 = vmatprep.subr.mxu0 0.0
    %9026 = vmatpush1.msra.mxu0 0.0
    %9027 = vmatprep.subr.mxu0 0.0
    %9028 = vmatpush1.msra.mxu0 0.0
    %9029 = vmatprep.subr.mxu0 0.0
    %9030 = vmatpush1.msra.mxu0 0.0
    %9031 = vmatprep.subr.mxu0 0.0
    %9032 = vmatpush1.msra.mxu0 0.0
    %9033 = vmatprep.subr.mxu0 0.0
    %9034 = vmatpush1.msra.mxu0 0.0
    %9035 = vmatprep.subr.mxu0 0.0
    %9036 = vmatpush1.msra.mxu0 0.0
    %9037 = vmatprep.mubr.f32.mxu0 0.0
    %9038 = vmatmul.mubr.f32.gmra.mrb[0].mxu0 %v8971
    %v9039 = vpop.f32.mrb[0].mxu0
    %v9040 = vadd.f32 0.0, %v9039
    %v9041 = vpop.f32.mrb[0].mxu0
    %9042 = vdwg.mxu0
    %v9043 = vadd.f32 %v8803, %v9040
    %v9044 = vadd.f32 %v9043, %v8085
    %v9045 = vadd.f32 %v6872, %v8087
    %v9046 = vadd.f32 %v6873, %v9044
    %s9047 = scalar_lea.vmem %s18, 5
    %v9048 = vld [vmem:[%s9047] sm:$0x1]
    %s9049 = scalar_lea.vmem %s19, 5
    %v9050 = vld [vmem:[%s9049] sm:$0x1]
    %v9051 = vsel %vm262, %v9045, 0.0
    %9052 = vadd.xlane.f32.xlu0 %v9051
    %v9053 = vpop.xlane.xlu0 %9052
    %v9054 = vsel %vm262, %v9046, 0.0
    %9055 = vadd.xlane.f32.xlu0 %v9054
    %v9056 = vpop.xlane.xlu0 %9055
    %v9057 = vmul.f32 %v9053, %v269
    %v9058 = vmul.f32 %v9056, %v269
    %v9059 = vsub.f32 %v9045, %v9057
    %v9060 = vsub.f32 %v9046, %v9058
    %v9061 = vmul.f32 %v9059, %v9059
    %v9062 = vmul.f32 %v9060, %v9060
    %v9063 = vsel %vm262, %v9061, 0.0
    %9064 = vadd.xlane.f32.xlu0 %v9063
    %v9065 = vpop.xlane.xlu0 %9064
    %v9066 = vsel %vm262, %v9062, 0.0
    %9067 = vadd.xlane.f32.xlu0 %v9066
    %v9068 = vpop.xlane.xlu0 %9067
    %v9069 = vmul.f32 %v9065, %v282
    %v9070 = vmul.f32 %v9068, %v282
    %v9071 = vrsqrt.pop %v9069
    %v9072 = vmul.f32 %v9069, %v9071
    %vm9073 = vcmp.eq.f32.partialorder %v9069, inf
    %v9074 = vsel %vm9073, %v9069, %v9072
    %vm9075 = vcmp.eq.f32.partialorder %v9069, 0.0
    %v9076 = vand.u32 %v9069, 2147483648
    %v9077 = vsel %vm9075, %v9076, %v9074
    %v9078 = vrsqrt.pop %v9070
    %v9079 = vmul.f32 %v9070, %v9078
    %vm9080 = vcmp.eq.f32.partialorder %v9070, inf
    %v9081 = vsel %vm9080, %v9070, %v9079
    %vm9082 = vcmp.eq.f32.partialorder %v9070, 0.0
    %v9083 = vand.u32 %v9070, 2147483648
    %v9084 = vsel %vm9082, %v9083, %v9081
    %v9086 = vlaneseq
    %v9087 = vshrl.u32 %v9086, 7
    %v9088 = vsub.s32 0, %v9087
    %v9089 = vrot.slane %v9048, %v9088
    %v9091 = vmul.f32 %v9089, %v9059
    %v9092 = vmul.f32 %v9089, %v9060
    %v9093 = vadd.f32 %v9077, 1e-06
    %v9094 = vadd.f32 %v9084, 1e-06
    %v9095 = vrcp.pop %v9093
    %v9096 = vmul.f32 %v9091, %v9095
    %v9097 = vrcp.pop %v9094
    %v9098 = vmul.f32 %v9092, %v9097
    %v9100 = vlaneseq
    %v9101 = vshrl.u32 %v9100, 7
    %v9102 = vsub.s32 0, %v9101
    %v9103 = vrot.slane %v9050, %v9102
    %v9105 = vadd.f32 %v9096, %v9103
    %v9106 = vadd.f32 %v9098, %v9103
    %s9107 = scalar_lea.vmem %s14, 32
    %v9108 = vld [vmem:[%s9107] sm:$0xff]
    %v9109 = vld [vmem:[%s9107 + $0x8] sm:$0xff]
    %v9110 = vld [vmem:[%s9107 + $0x10] sm:$0xff]
    %v9111 = vld [vmem:[%s9107 + $0x18] sm:$0xff]
    %s9112 = scalar_lea.vmem %s15, 1
    %v9113 = vld [vmem:[%s9112] sm:$0x1]
    %v9115 = vlaneseq
    %v9116 = vshrl.u32 %v9115, 7
    %v9117 = vsub.s32 0, %v9116
    %v9118 = vrot.slane %v9113, %v9117
    %v9121 = vsel %vm262, %v9105, 0
    %v9124 = vsel %vm262, %v9106, 0
    %9126 = vmatprep.subr.mxu0 0.0
    %9127 = vmatpush1.msra.mxu0 %v9108
    %9128 = vmatprep.subr.mxu0 0.0
    %9129 = vmatpush1.msra.mxu0 %v9109
    %9130 = vmatprep.subr.mxu0 0.0
    %9131 = vmatpush1.msra.mxu0 %v9110
    %9132 = vmatprep.subr.mxu0 0.0
    %9133 = vmatpush1.msra.mxu0 %v9111
    %9134 = vmatprep.subr.mxu0 0.0
    %9135 = vmatpush1.msra.mxu0 0.0
    %9136 = vmatprep.subr.mxu0 0.0
    %9137 = vmatpush1.msra.mxu0 0.0
    %9138 = vmatprep.subr.mxu0 0.0
    %9139 = vmatpush1.msra.mxu0 0.0
    %9140 = vmatprep.subr.mxu0 0.0
    %9141 = vmatpush1.msra.mxu0 0.0
    %9142 = vmatprep.subr.mxu0 0.0
    %9143 = vmatpush1.msra.mxu0 0.0
    %9144 = vmatprep.subr.mxu0 0.0
    %9145 = vmatpush1.msra.mxu0 0.0
    %9146 = vmatprep.subr.mxu0 0.0
    %9147 = vmatpush1.msra.mxu0 0.0
    %9148 = vmatprep.subr.mxu0 0.0
    %9149 = vmatpush1.msra.mxu0 0.0
    %9150 = vmatprep.subr.mxu0 0.0
    %9151 = vmatpush1.msra.mxu0 0.0
    %9152 = vmatprep.subr.mxu0 0.0
    %9153 = vmatpush1.msra.mxu0 0.0
    %9154 = vmatprep.subr.mxu0 0.0
    %9155 = vmatpush1.msra.mxu0 0.0
    %9156 = vmatprep.subr.mxu0 0.0
    %9157 = vmatpush1.msra.mxu0 0.0
    %9158 = vmatprep.subr.mxu0 0.0
    %9159 = vmatpush1.msra.mxu0 0.0
    %9160 = vmatprep.subr.mxu0 0.0
    %9161 = vmatpush1.msra.mxu0 0.0
    %9162 = vmatprep.subr.mxu0 0.0
    %9163 = vmatpush1.msra.mxu0 0.0
    %9164 = vmatprep.subr.mxu0 0.0
    %9165 = vmatpush1.msra.mxu0 0.0
    %9166 = vmatprep.subr.mxu0 0.0
    %9167 = vmatpush1.msra.mxu0 0.0
    %9168 = vmatprep.subr.mxu0 0.0
    %9169 = vmatpush1.msra.mxu0 0.0
    %9170 = vmatprep.subr.mxu0 0.0
    %9171 = vmatpush1.msra.mxu0 0.0
    %9172 = vmatprep.subr.mxu0 0.0
    %9173 = vmatpush1.msra.mxu0 0.0
    %9174 = vmatprep.subr.mxu0 0.0
    %9175 = vmatpush1.msra.mxu0 0.0
    %9176 = vmatprep.subr.mxu0 0.0
    %9177 = vmatpush1.msra.mxu0 0.0
    %9178 = vmatprep.subr.mxu0 0.0
    %9179 = vmatpush1.msra.mxu0 0.0
    %9180 = vmatprep.subr.mxu0 0.0
    %9181 = vmatpush1.msra.mxu0 0.0
    %9182 = vmatprep.subr.mxu0 0.0
    %9183 = vmatpush1.msra.mxu0 0.0
    %9184 = vmatprep.subr.mxu0 0.0
    %9185 = vmatpush1.msra.mxu0 0.0
    %9186 = vmatprep.subr.mxu0 0.0
    %9187 = vmatpush1.msra.mxu0 0.0
    %9188 = vmatprep.subr.mxu0 0.0
    %9189 = vmatpush1.msra.mxu0 0.0
    %9190 = vmatprep.mubr.f32.mxu0 0.0
    %9191 = vmatmul.mubr.f32.gmra.mrb[0].mxu0 %v9121
    %v9192 = vpop.f32.mrb[0].mxu0
    %v9193 = vadd.f32 %v9118, %v9192
    %v9194 = vpop.f32.mrb[0].mxu0
    %9195 = vmatprep.mubr.f32.mxu0 0.0
    %9196 = vmatmul.mubr.f32.gmra.mrb[0].mxu0 %v9124
    %v9197 = vpop.f32.mrb[0].mxu0
    %v9198 = vadd.f32 %v9118, %v9197
    %v9199 = vpop.f32.mrb[0].mxu0
    %9200 = vdwg.mxu0
    %v9201 = vmax.f32 %v9193, 0.0
    %v9202 = vmax.f32 %v9198, 0.0
    %s9203 = scalar_lea.vmem [#allocation23], 64
    %v9204 = vld [vmem:[%s9203] sm:$0xff]
    %v9205 = vld [vmem:[%s9203 + $0x8] sm:$0xff]
    %v9206 = vld [vmem:[%s9203 + $0x10] sm:$0xff]
    %v9207 = vld [vmem:[%s9203 + $0x18] sm:$0xff]
    %v9208 = vld [vmem:[%s9203 + $0x20] sm:$0xff]
    %v9209 = vld [vmem:[%s9203 + $0x28] sm:$0xff]
    %v9210 = vld [vmem:[%s9203 + $0x30] sm:$0xff]
    %v9211 = vld [vmem:[%s9203 + $0x38] sm:$0xff]
    %v9213 = vsel %vm4692, %v9201, 0
    %v9216 = vsel %vm4692, %v9202, 0
    %9218 = vmatprep.subr.mxu0 0.0
    %9219 = vmatpush1.msra.mxu0 %v9204
    %9220 = vmatprep.subr.mxu0 0.0
    %9221 = vmatpush1.msra.mxu0 %v9205
    %9222 = vmatprep.subr.mxu0 0.0
    %9223 = vmatpush1.msra.mxu0 %v9206
    %9224 = vmatprep.subr.mxu0 0.0
    %9225 = vmatpush1.msra.mxu0 %v9207
    %9226 = vmatprep.subr.mxu0 0.0
    %9227 = vmatpush1.msra.mxu0 %v9208
    %9228 = vmatprep.subr.mxu0 0.0
    %9229 = vmatpush1.msra.mxu0 %v9209
    %9230 = vmatprep.subr.mxu0 0.0
    %9231 = vmatpush1.msra.mxu0 %v9210
    %9232 = vmatprep.subr.mxu0 0.0
    %9233 = vmatpush1.msra.mxu0 %v9211
    %9234 = vmatprep.subr.mxu0 0.0
    %9235 = vmatpush1.msra.mxu0 0.0
    %9236 = vmatprep.subr.mxu0 0.0
    %9237 = vmatpush1.msra.mxu0 0.0
    %9238 = vmatprep.subr.mxu0 0.0
    %9239 = vmatpush1.msra.mxu0 0.0
    %9240 = vmatprep.subr.mxu0 0.0
    %9241 = vmatpush1.msra.mxu0 0.0
    %9242 = vmatprep.subr.mxu0 0.0
    %9243 = vmatpush1.msra.mxu0 0.0
    %9244 = vmatprep.subr.mxu0 0.0
    %9245 = vmatpush1.msra.mxu0 0.0
    %9246 = vmatprep.subr.mxu0 0.0
    %9247 = vmatpush1.msra.mxu0 0.0
    %9248 = vmatprep.subr.mxu0 0.0
    %9249 = vmatpush1.msra.mxu0 0.0
    %9250 = vmatprep.subr.mxu0 0.0
    %9251 = vmatpush1.msra.mxu0 0.0
    %9252 = vmatprep.subr.mxu0 0.0
    %9253 = vmatpush1.msra.mxu0 0.0
    %9254 = vmatprep.subr.mxu0 0.0
    %9255 = vmatpush1.msra.mxu0 0.0
    %9256 = vmatprep.subr.mxu0 0.0
    %9257 = vmatpush1.msra.mxu0 0.0
    %9258 = vmatprep.subr.mxu0 0.0
    %9259 = vmatpush1.msra.mxu0 0.0
    %9260 = vmatprep.subr.mxu0 0.0
    %9261 = vmatpush1.msra.mxu0 0.0
    %9262 = vmatprep.subr.mxu0 0.0
    %9263 = vmatpush1.msra.mxu0 0.0
    %9264 = vmatprep.subr.mxu0 0.0
    %9265 = vmatpush1.msra.mxu0 0.0
    %9266 = vmatprep.subr.mxu0 0.0
    %9267 = vmatpush1.msra.mxu0 0.0
    %9268 = vmatprep.subr.mxu0 0.0
    %9269 = vmatpush1.msra.mxu0 0.0
    %9270 = vmatprep.subr.mxu0 0.0
    %9271 = vmatpush1.msra.mxu0 0.0
    %9272 = vmatprep.subr.mxu0 0.0
    %9273 = vmatpush1.msra.mxu0 0.0
    %9274 = vmatprep.subr.mxu0 0.0
    %9275 = vmatpush1.msra.mxu0 0.0
    %9276 = vmatprep.subr.mxu0 0.0
    %9277 = vmatpush1.msra.mxu0 0.0
    %9278 = vmatprep.subr.mxu0 0.0
    %9279 = vmatpush1.msra.mxu0 0.0
    %9280 = vmatprep.subr.mxu0 0.0
    %9281 = vmatpush1.msra.mxu0 0.0
    %9282 = vmatprep.mubr.f32.mxu0 0.0
    %9283 = vmatmul.mubr.f32.gmra.mrb[0].mxu0 %v9213
    %v9284 = vpop.f32.mrb[0].mxu0
    %v9285 = vadd.f32 0.0, %v9284
    %v9286 = vpop.f32.mrb[0].mxu0
    %9287 = vmatprep.mubr.f32.mxu0 0.0
    %9288 = vmatmul.mubr.f32.gmra.mrb[0].mxu0 %v9216
    %v9289 = vpop.f32.mrb[0].mxu0
    %v9290 = vadd.f32 0.0, %v9289
    %v9291 = vpop.f32.mrb[0].mxu0
    %9292 = vdwg.mxu0
    %v9293 = vadd.f32 %v9045, %v9285
    %v9294 = vadd.f32 %v9046, %v9290
    %s9295 = scalar_lea.vmem %s17, 1
    %v9296 = vld [vmem:[%s9295] sm:$0x1]
    %v9298 = vlaneseq
    %v9299 = vshrl.u32 %v9298, 7
    %v9300 = vsub.s32 0, %v9299
    %v9301 = vrot.slane %v9296, %v9300
    %v9303 = vadd.f32 %v9293, %v9301
    %v9304 = vadd.f32 %v9294, %v9301
    %s9305 = scalar_lea.vmem %s18, 6
    %v9306 = vld [vmem:[%s9305] sm:$0x1]
    %s9307 = scalar_lea.vmem %s19, 6
    %v9308 = vld [vmem:[%s9307] sm:$0x1]
    %v9309 = vsel %vm262, %v9303, 0.0
    %9310 = vadd.xlane.f32.xlu0 %v9309
    %v9311 = vpop.xlane.xlu0 %9310
    %v9312 = vsel %vm262, %v9304, 0.0
    %9313 = vadd.xlane.f32.xlu0 %v9312
    %v9314 = vpop.xlane.xlu0 %9313
    %v9315 = vmul.f32 %v9311, %v269
    %v9316 = vmul.f32 %v9314, %v269
    %v9317 = vsub.f32 %v9303, %v9315
    %v9318 = vsub.f32 %v9304, %v9316
    %v9319 = vmul.f32 %v9317, %v9317
    %v9320 = vmul.f32 %v9318, %v9318
    %v9321 = vsel %vm262, %v9319, 0.0
    %9322 = vadd.xlane.f32.xlu0 %v9321
    %v9323 = vpop.xlane.xlu0 %9322
    %v9324 = vsel %vm262, %v9320, 0.0
    %9325 = vadd.xlane.f32.xlu0 %v9324
    %v9326 = vpop.xlane.xlu0 %9325
    %v9327 = vmul.f32 %v9323, %v282
    %v9328 = vmul.f32 %v9326, %v282
    %v9329 = vrsqrt.pop %v9327
    %v9330 = vmul.f32 %v9327, %v9329
    %vm9331 = vcmp.eq.f32.partialorder %v9327, inf
    %v9332 = vsel %vm9331, %v9327, %v9330
    %vm9333 = vcmp.eq.f32.partialorder %v9327, 0.0
    %v9334 = vand.u32 %v9327, 2147483648
    %v9335 = vsel %vm9333, %v9334, %v9332
    %v9336 = vrsqrt.pop %v9328
    %v9337 = vmul.f32 %v9328, %v9336
    %vm9338 = vcmp.eq.f32.partialorder %v9328, inf
    %v9339 = vsel %vm9338, %v9328, %v9337
    %vm9340 = vcmp.eq.f32.partialorder %v9328, 0.0
    %v9341 = vand.u32 %v9328, 2147483648
    %v9342 = vsel %vm9340, %v9341, %v9339
    %v9344 = vlaneseq
    %v9345 = vshrl.u32 %v9344, 7
    %v9346 = vsub.s32 0, %v9345
    %v9347 = vrot.slane %v9306, %v9346
    %v9349 = vmul.f32 %v9347, %v9317
    %v9350 = vmul.f32 %v9347, %v9318
    %v9351 = vadd.f32 %v9335, 1e-06
    %v9352 = vadd.f32 %v9342, 1e-06
    %v9353 = vrcp.pop %v9351
    %v9354 = vmul.f32 %v9349, %v9353
    %v9355 = vrcp.pop %v9352
    %v9356 = vmul.f32 %v9350, %v9355
    %v9358 = vlaneseq
    %v9359 = vshrl.u32 %v9358, 7
    %v9360 = vsub.s32 0, %v9359
    %v9361 = vrot.slane %v9308, %v9360
    %v9363 = vadd.f32 %v9354, %v9361
    %v9364 = vadd.f32 %v9356, %v9361
    %9365 = vst.msk [vmem:[#allocation25] sm:$0xff] %vm262, %v9363
    %9366 = vst.msk [vmem:[#allocation25 + $0x8] sm:$0xff] %vm262, %v9364
    // Predicated region
    $region138: #{decoder_forward.1} parent=1 // pred_check
      _
    $region139: #{decoder_forward.1} parent=1 // pred_check_branch
      %9368 = sbr.rel (0) target = $region141
    $region140: #{decoder_forward.1} parent=1 // pred_region
      %s9370 = ssub.s32 256, 256
      %9371 = vsyncadd [#allocation4], %s9370
      %s9372 = sshll.u32 [#allocation25], 4
      %s9373 = int_to_ptr.vmem [resolvable:$true] %s9372
      %9378 = dma.vmem_to_hbm [thread:$0]  %s9373, 256, %s20, [#allocation4], 128, 128, 8
    $region141: #{decoder_forward.1} parent=1 // pred_fallthru
      _
    // Predicated region
    $region142: #{decoder_forward.1} parent=1 // pred_check
      _
    $region143: #{decoder_forward.1} parent=1 // pred_check_branch
      %9380 = sbr.rel (0) target = $region145
    $region144: #{decoder_forward.1} parent=1 // pred_region
      %9381 = dma.done [#allocation4], 256
    $region145: #{decoder_forward.1} parent=1 // pred_fallthru
      _
    %9382 = vsyncpa [#allocation3], 1
    %9383 = vsyncpa [#allocation6], 1
    %9384 = vsyncpa [#allocation9], 1
    %9385 = vsyncpa [#allocation12], 1
    %9386 = vsyncpa [#allocation15], 1
    %9387 = vsyncpa [#allocation18], 1
    %9388 = vsyncpa [#allocation21], 1
    %9389 = vsyncpa [#allocation24], 1
    %9390 = vsyncpa [#allocation4], 1

</llo_original>
